<compile_context>
chip_gen: v5e
topology: v5e:2x2
jax: 0.10.0
libtpu: 0.0.40
codegen_flags: <defaults>
</compile_context>

<pallas_src>
import functools

import jax
import jax.numpy as jnp
from jax import lax
from jax.experimental import pallas as pl
from jax.experimental.pallas import tpu as pltpu


def _diff_attn_kernel(lamb_ref, xq_ref, xkv_ref, wq_ref, wkv_ref, gamma_ref,
                      beta_ref, out_ref,
                      qproj_ref, m1_ref, l1_ref, acc1_ref, m2_ref, l2_ref,
                      acc2_ref, *, num_heads, head_size, eps):
    ki = pl.program_id(2)
    hs = head_size
    C = num_heads * head_size

    @pl.when(ki == 0)
    def _init():
        # q projections only depend on the q tile -> compute once per q tile
        # and cache in VMEM (bf16) across all kv steps.
        qproj_ref[...] = jnp.dot(
            xq_ref[0], wq_ref[...],
            preferred_element_type=jnp.float32).astype(jnp.bfloat16)
        m1_ref[...] = jnp.full_like(m1_ref, -jnp.inf)
        m2_ref[...] = jnp.full_like(m2_ref, -jnp.inf)
        l1_ref[...] = jnp.zeros_like(l1_ref)
        l2_ref[...] = jnp.zeros_like(l2_ref)
        acc1_ref[...] = jnp.zeros_like(acc1_ref)
        acc2_ref[...] = jnp.zeros_like(acc2_ref)

    # One lane-dense (tk, C) x (C, 3C) matmul for all k1/k2/v heads.
    kv_proj = jnp.dot(xkv_ref[0], wkv_ref[...],
                      preferred_element_type=jnp.float32).astype(jnp.bfloat16)
    q_proj = qproj_ref[...]                                   # (tq, 2C) bf16

    def online_update(q, k, v, m_ref, l_ref, acc_ref, h):
        # q @ k^T without materializing the transpose.
        s = lax.dot_general(q, k,
                            dimension_numbers=(((1,), (1,)), ((), ())),
                            preferred_element_type=jnp.float32)  # (tq, tk) f32
        m_prev = m_ref[h]                                        # (tq, 1)
        m_new = jnp.maximum(m_prev, jnp.max(s, axis=-1, keepdims=True))
        alpha = jnp.exp(m_prev - m_new)
        p = jnp.exp(s - m_new)
        l_ref[h] = alpha * l_ref[h] + jnp.sum(p, axis=-1, keepdims=True)
        acc_ref[h] = alpha * acc_ref[h] + jnp.dot(
            p.astype(jnp.bfloat16), v, preferred_element_type=jnp.float32)
        m_ref[h] = m_new

    for h in range(num_heads):                 # static unrolled loop, H small
        c0 = h * hs
        q1 = q_proj[:, c0:c0 + hs]             # already scaled by hs**-0.5
        q2 = q_proj[:, C + c0:C + c0 + hs]
        k1 = kv_proj[:, c0:c0 + hs]
        k2 = kv_proj[:, C + c0:C + c0 + hs]
        v = kv_proj[:, 2 * C + c0:2 * C + c0 + hs]
        online_update(q1, k1, v, m1_ref, l1_ref, acc1_ref, h)
        online_update(q2, k2, v, m2_ref, l2_ref, acc2_ref, h)

    @pl.when(ki == pl.num_programs(2) - 1)
    def _finalize():
        lamb = lamb_ref[0, 0]
        # Write each head's combined output into column slices of the resident
        # output block (no concatenate, no extra scratch).
        for h in range(num_heads):
            o1 = acc1_ref[h] * pl.reciprocal(l1_ref[h], approx=True)
            o2 = acc2_ref[h] * pl.reciprocal(l2_ref[h], approx=True)
            out_ref[0, :, h * hs:(h + 1) * hs] = o1 - lamb * o2

        cat = out_ref[0]                                        # (tq, C) f32
        # LayerNorm over the embedding dim (biased variance, eps=1e-5).
        mean = jnp.mean(cat, axis=-1, keepdims=True)
        var = jnp.mean(jnp.square(cat - mean), axis=-1, keepdims=True)
        normed = (cat - mean) * lax.rsqrt(var + eps)
        normed = normed * gamma_ref[...] + beta_ref[...]
        out_ref[0] = (1.0 - lamb) * normed


def _pool_fc_kernel(attn_ref, wfc_ref, bfc_ref, out_ref, acc_ref, *, seq_len):
    t = pl.program_id(0)

    @pl.when(t == 0)
    def _init():
        acc_ref[...] = jnp.zeros_like(acc_ref)

    acc_ref[...] += jnp.sum(attn_ref[...], axis=1)              # (B, C)

    @pl.when(t == pl.num_programs(0) - 1)
    def _finalize():
        pooled = (acc_ref[...] * (1.0 / seq_len)).astype(jnp.bfloat16)
        out_ref[...] = (jnp.dot(pooled, wfc_ref[...],
                                preferred_element_type=jnp.float32)
                        + bfc_ref[...])


def tweet_encoder_forward(x, params, *, q_tile=128, kv_tile=128, pool_tile=128):
    B, T, C = x.shape
    H, _, hs = params["wq1"].shape
    assert C == H * hs
    tq = min(q_tile, T)
    tk = min(kv_tile, T)
    tp = min(pool_tile, T)
    assert T % tq == 0 and T % tk == 0 and T % tp == 0
    nq, nk = T // tq, T // tk
    scale = hs ** (-0.5)

    def cat_heads(w):                      # (H, C, hs) -> (C, H*hs) == (C, C)
        return jnp.transpose(w, (1, 0, 2)).reshape(C, C)

    # Fused, pre-scaled projection weights in bf16.
    w_q = jnp.concatenate(
        [cat_heads(params["wq1"]) * scale,
         cat_heads(params["wq2"]) * scale], axis=1).astype(jnp.bfloat16)
    w_kv = jnp.concatenate(
        [cat_heads(params["wk1"]), cat_heads(params["wk2"]),
         cat_heads(params["wv"])], axis=1).astype(jnp.bfloat16)

    lamb = jnp.reshape(params["lamb"], (1, 1)).astype(jnp.float32)
    x_bf = x.astype(jnp.bfloat16)

    attn_kernel = functools.partial(
        _diff_attn_kernel, num_heads=H, head_size=hs, eps=1e-5)

    cost = pl.CostEstimate(
        flops=int(2 * B * T * C * 5 * C + 8 * B * T * T * C),
        transcendentals=int(2 * H * B * T * T),
        bytes_accessed=int(4 * B * T * C * 2 + 2 * 5 * C * C + 4 * B * T * C))

    attn = pl.pallas_call(
        attn_kernel,
        out_shape=jax.ShapeDtypeStruct((B, T, C), jnp.float32),
        grid=(B, nq, nk),
        in_specs=[
            pl.BlockSpec(memory_space=pltpu.MemorySpace.SMEM),       # lamb
            pl.BlockSpec((1, tq, C), lambda b, qi, ki: (b, qi, 0)),  # x (q side)
            pl.BlockSpec((1, tk, C), lambda b, qi, ki: (b, ki, 0)),  # x (kv side)
            pl.BlockSpec((C, 2 * C), lambda b, qi, ki: (0, 0)),      # W_q
            pl.BlockSpec((C, 3 * C), lambda b, qi, ki: (0, 0)),      # W_kv
            pl.BlockSpec((1, C), lambda b, qi, ki: (0, 0)),          # gamma
            pl.BlockSpec((1, C), lambda b, qi, ki: (0, 0)),          # beta
        ],
        out_specs=pl.BlockSpec((1, tq, C), lambda b, qi, ki: (b, qi, 0)),
        scratch_shapes=[
            pltpu.VMEM((tq, 2 * C), jnp.bfloat16),   # cached q projections
            pltpu.VMEM((H, tq, 1), jnp.float32),     # m  (branch 1)
            pltpu.VMEM((H, tq, 1), jnp.float32),     # l  (branch 1)
            pltpu.VMEM((H, tq, hs), jnp.float32),    # acc(branch 1)
            pltpu.VMEM((H, tq, 1), jnp.float32),     # m  (branch 2)
            pltpu.VMEM((H, tq, 1), jnp.float32),     # l  (branch 2)
            pltpu.VMEM((H, tq, hs), jnp.float32),    # acc(branch 2)
        ],
        compiler_params=pltpu.CompilerParams(
            dimension_semantics=("parallel", "parallel", "arbitrary")),
        cost_estimate=cost,
    )(lamb, x_bf, x_bf, w_q, w_kv, params["gamma"], params["beta"])

    pool_kernel = functools.partial(_pool_fc_kernel, seq_len=T)
    out = pl.pallas_call(
        pool_kernel,
        out_shape=jax.ShapeDtypeStruct((B, C), jnp.float32),
        grid=(T // tp,),
        in_specs=[
            pl.BlockSpec((B, tp, C), lambda t: (0, t, 0)),
            pl.BlockSpec((C, C), lambda t: (0, 0)),
            pl.BlockSpec((1, C), lambda t: (0, 0)),
        ],
        out_specs=pl.BlockSpec((B, C), lambda t: (0, 0)),
        scratch_shapes=[pltpu.VMEM((B, C), jnp.float32)],
        compiler_params=pltpu.CompilerParams(
            dimension_semantics=("arbitrary",)),
    )(attn, params["w_fc"].astype(jnp.bfloat16), params["b_fc"])

    return out


def reference_forward(x, params):
    """Pure-JAX (f32) reference mirroring the torch forward semantics."""
    lamb = params["lamb"]
    H, _, hs = params["wq1"].shape
    scale = hs ** (-0.5)
    outs = []
    for h in range(H):
        q1 = x @ params["wq1"][h]
        k1 = x @ params["wk1"][h]
        q2 = x @ params["wq2"][h]
        k2 = x @ params["wk2"][h]
        v = x @ params["wv"][h]
        w1 = jax.nn.softmax(jnp.einsum("btd,bsd->bts", q1, k1) * scale, axis=-1)
        w2 = jax.nn.softmax(jnp.einsum("btd,bsd->bts", q2, k2) * scale, axis=-1)
        outs.append((w1 - lamb * w2) @ v)
    cat = jnp.concatenate(outs, axis=-1)
    mean = jnp.mean(cat, axis=-1, keepdims=True)
    var = jnp.mean(jnp.square(cat - mean), axis=-1, keepdims=True)
    normed = (cat - mean) / jnp.sqrt(var + 1e-5)
    normed = normed * params["gamma"][0] + params["beta"][0]
    attn = (1.0 - lamb) * normed
    pooled = jnp.mean(attn, axis=1)
    return pooled @ params["w_fc"] + params["b_fc"][0]


def init_params(key, embedding_dim, num_heads, lambda_init=0.8):
    hs = embedding_dim // num_heads
    bound = 1.0 / (embedding_dim ** 0.5)     # nn.Linear default init range
    keys = jax.random.split(key, 7)
    shape = (num_heads, embedding_dim, hs)
    u = lambda k, s: jax.random.uniform(k, s, jnp.float32, -bound, bound)
    return {
        "wq1": u(keys[0], shape),
        "wk1": u(keys[1], shape),
        "wq2": u(keys[2], shape),
        "wk2": u(keys[3], shape),
        "wv": u(keys[4], shape),
        "gamma": jnp.ones((1, embedding_dim), jnp.float32),
        "beta": jnp.zeros((1, embedding_dim), jnp.float32),
        "lamb": jnp.float32(lambda_init),
        "w_fc": u(keys[5], (embedding_dim, embedding_dim)),  # x @ W orientation
        "b_fc": u(keys[6], (1, embedding_dim)),
    }


if __name__ == "__main__":
    # Small but lane-dense shapes (T, C multiples of 128).
    B, T, C, H = 2, 128, 128, 4
    key = jax.random.PRNGKey(0)
    k_x, k_p = jax.random.split(key)
    x = jax.random.normal(k_x, (B, T, C), jnp.float32)
    params = init_params(k_p, C, H, lambda_init=0.8)

    out = tweet_encoder_forward(x, params)
    out = jax.block_until_ready(out)

    ref = reference_forward(x, params)
    assert out.shape == (B, C)
    err = float(jnp.max(jnp.abs(out - ref)))
    # bf16 matmul operands + approx reciprocal vs f32 reference -> loose tol.
    assert jnp.allclose(out, ref, rtol=3e-2, atol=3e-2), f"max abs err = {err}"

    print("KERNEL_OK")
</pallas_src>

<mosaic_0001>
module attributes {stable_mosaic.version = 11 : i64} {
  func.func @_diff_attn_kernel(%arg0: i32, %arg1: i32, %arg2: i32, %arg3: memref<1x1xf32, #tpu.memory_space<smem>>, %arg4: memref<1x128x128xbf16, #tpu.memory_space<vmem>>, %arg5: memref<1x128x128xbf16, #tpu.memory_space<vmem>>, %arg6: memref<128x256xbf16, #tpu.memory_space<vmem>>, %arg7: memref<128x384xbf16, #tpu.memory_space<vmem>>, %arg8: memref<1x128xf32, #tpu.memory_space<vmem>>, %arg9: memref<1x128xf32, #tpu.memory_space<vmem>>, %arg10: memref<1x128x128xf32, #tpu.memory_space<vmem>>, %arg11: memref<128x256xbf16, #tpu.memory_space<vmem>>, %arg12: memref<4x128x1xf32, #tpu.memory_space<vmem>>, %arg13: memref<4x128x1xf32, #tpu.memory_space<vmem>>, %arg14: memref<4x128x32xf32, #tpu.memory_space<vmem>>, %arg15: memref<4x128x1xf32, #tpu.memory_space<vmem>>, %arg16: memref<4x128x1xf32, #tpu.memory_space<vmem>>, %arg17: memref<4x128x32xf32, #tpu.memory_space<vmem>>) attributes {dimension_semantics = [#tpu.dimension_semantics<parallel>, #tpu.dimension_semantics<parallel>, #tpu.dimension_semantics<arbitrary>], iteration_bounds = array<i64: 2, 1, 1>, scalar_prefetch = 0 : i64, scratch_operands = 7 : i64, tpu.core_type = #tpu.core_type<tc>, window_params = [{transform_indices = @transform_0, window_bounds = array<i64: 1, 1>}, {transform_indices = @transform_1, window_bounds = array<i64: 1, 128, 128>}, {transform_indices = @transform_2, window_bounds = array<i64: 1, 128, 128>}, {pipeline_mode = #tpu.pipeline_mode<synchronous>, transform_indices = @transform_3, window_bounds = array<i64: 128, 256>}, {pipeline_mode = #tpu.pipeline_mode<synchronous>, transform_indices = @transform_4, window_bounds = array<i64: 128, 384>}, {pipeline_mode = #tpu.pipeline_mode<synchronous>, transform_indices = @transform_5, window_bounds = array<i64: 1, 128>}, {pipeline_mode = #tpu.pipeline_mode<synchronous>, transform_indices = @transform_6, window_bounds = array<i64: 1, 128>}, {transform_indices = @transform_7, window_bounds = array<i64: 1, 128, 128>}]} {
    %c0_i32 = arith.constant 0 : i32
    %0 = arith.cmpi eq, %arg2, %c0_i32 : i32
    %1 = arith.extui %0 : i1 to i32
    %c0_i32_0 = arith.constant 0 : i32
    %2 = arith.cmpi ne, %1, %c0_i32_0 : i32
    scf.if %2 {
      %c0_182 = arith.constant 0 : index
      %c0_183 = arith.constant 0 : index
      %c0_184 = arith.constant 0 : index
      %296 = vector.load %arg4[%c0_182, %c0_183, %c0_184] : memref<1x128x128xbf16, #tpu.memory_space<vmem>>, vector<1x128x128xbf16>
      %297 = vector.shape_cast %296 : vector<1x128x128xbf16> to vector<128x128xbf16>
      %c0_185 = arith.constant 0 : index
      %c0_186 = arith.constant 0 : index
      %298 = vector.load %arg6[%c0_185, %c0_186] : memref<128x256xbf16, #tpu.memory_space<vmem>>, vector<128x256xbf16>
      %cst_187 = arith.constant dense<0.000000e+00> : vector<128x256xf32>
      %299 = tpu.matmul %297, %298, %cst_187 {dimension_numbers = #tpu.dot_dimension_numbers<[1], [0], [0], [1], [0, 0, 1, 1], [], []>} : vector<128x128xbf16>, vector<128x256xbf16>, vector<128x256xf32> -> vector<128x256xf32>
      %300 = arith.truncf %299 : vector<128x256xf32> to vector<128x256xbf16>
      %c0_188 = arith.constant 0 : index
      %c0_189 = arith.constant 0 : index
      %301 = vector.load %arg11[%c0_188, %c0_189] : memref<128x256xbf16, #tpu.memory_space<vmem>>, vector<128x256xbf16>
      tpu.vector_store %arg11[%c0_188, %c0_189], %300 {strides = array<i32>} : memref<128x256xbf16, #tpu.memory_space<vmem>>, vector<128x256xbf16>,
      %cst_190 = arith.constant 0xFF800000 : f32
      %302 = vector.broadcast %cst_190 : f32 to vector<4x128x1xf32>
      %c0_191 = arith.constant 0 : index
      %c0_192 = arith.constant 0 : index
      %c0_193 = arith.constant 0 : index
      %303 = vector.load %arg12[%c0_191, %c0_192, %c0_193] : memref<4x128x1xf32, #tpu.memory_space<vmem>>, vector<4x128x1xf32>
      tpu.vector_store %arg12[%c0_191, %c0_192, %c0_193], %302 {strides = array<i32>} : memref<4x128x1xf32, #tpu.memory_space<vmem>>, vector<4x128x1xf32>,
      %cst_194 = arith.constant 0xFF800000 : f32
      %304 = vector.broadcast %cst_194 : f32 to vector<4x128x1xf32>
      %c0_195 = arith.constant 0 : index
      %c0_196 = arith.constant 0 : index
      %c0_197 = arith.constant 0 : index
      %305 = vector.load %arg15[%c0_195, %c0_196, %c0_197] : memref<4x128x1xf32, #tpu.memory_space<vmem>>, vector<4x128x1xf32>
      tpu.vector_store %arg15[%c0_195, %c0_196, %c0_197], %304 {strides = array<i32>} : memref<4x128x1xf32, #tpu.memory_space<vmem>>, vector<4x128x1xf32>,
      %cst_198 = arith.constant 0.000000e+00 : f32
      %306 = vector.broadcast %cst_198 : f32 to vector<4x128x1xf32>
      %c0_199 = arith.constant 0 : index
      %c0_200 = arith.constant 0 : index
      %c0_201 = arith.constant 0 : index
      %307 = vector.load %arg13[%c0_199, %c0_200, %c0_201] : memref<4x128x1xf32, #tpu.memory_space<vmem>>, vector<4x128x1xf32>
      tpu.vector_store %arg13[%c0_199, %c0_200, %c0_201], %306 {strides = array<i32>} : memref<4x128x1xf32, #tpu.memory_space<vmem>>, vector<4x128x1xf32>,
      %cst_202 = arith.constant 0.000000e+00 : f32
      %308 = vector.broadcast %cst_202 : f32 to vector<4x128x1xf32>
      %c0_203 = arith.constant 0 : index
      %c0_204 = arith.constant 0 : index
      %c0_205 = arith.constant 0 : index
      %309 = vector.load %arg16[%c0_203, %c0_204, %c0_205] : memref<4x128x1xf32, #tpu.memory_space<vmem>>, vector<4x128x1xf32>
      tpu.vector_store %arg16[%c0_203, %c0_204, %c0_205], %308 {strides = array<i32>} : memref<4x128x1xf32, #tpu.memory_space<vmem>>, vector<4x128x1xf32>,
      %cst_206 = arith.constant 0.000000e+00 : f32
      %310 = vector.broadcast %cst_206 : f32 to vector<4x128x32xf32>
      %c0_207 = arith.constant 0 : index
      %c0_208 = arith.constant 0 : index
      %c0_209 = arith.constant 0 : index
      %311 = vector.load %arg14[%c0_207, %c0_208, %c0_209] : memref<4x128x32xf32, #tpu.memory_space<vmem>>, vector<4x128x32xf32>
      tpu.vector_store %arg14[%c0_207, %c0_208, %c0_209], %310 {strides = array<i32>} : memref<4x128x32xf32, #tpu.memory_space<vmem>>, vector<4x128x32xf32>,
      %cst_210 = arith.constant 0.000000e+00 : f32
      %312 = vector.broadcast %cst_210 : f32 to vector<4x128x32xf32>
      %c0_211 = arith.constant 0 : index
      %c0_212 = arith.constant 0 : index
      %c0_213 = arith.constant 0 : index
      %313 = vector.load %arg17[%c0_211, %c0_212, %c0_213] : memref<4x128x32xf32, #tpu.memory_space<vmem>>, vector<4x128x32xf32>
      tpu.vector_store %arg17[%c0_211, %c0_212, %c0_213], %312 {strides = array<i32>} : memref<4x128x32xf32, #tpu.memory_space<vmem>>, vector<4x128x32xf32>,
    } else {
    }
    %c0 = arith.constant 0 : index
    %c0_1 = arith.constant 0 : index
    %c0_2 = arith.constant 0 : index
    %3 = vector.load %arg5[%c0, %c0_1, %c0_2] : memref<1x128x128xbf16, #tpu.memory_space<vmem>>, vector<1x128x128xbf16>
    %4 = vector.shape_cast %3 : vector<1x128x128xbf16> to vector<128x128xbf16>
    %c0_3 = arith.constant 0 : index
    %c0_4 = arith.constant 0 : index
    %5 = vector.load %arg7[%c0_3, %c0_4] : memref<128x384xbf16, #tpu.memory_space<vmem>>, vector<128x384xbf16>
    %cst = arith.constant dense<0.000000e+00> : vector<128x384xf32>
    %6 = tpu.matmul %4, %5, %cst {dimension_numbers = #tpu.dot_dimension_numbers<[1], [0], [0], [1], [0, 0, 1, 1], [], []>} : vector<128x128xbf16>, vector<128x384xbf16>, vector<128x384xf32> -> vector<128x384xf32>
    %7 = arith.truncf %6 : vector<128x384xf32> to vector<128x384xbf16>
    %c0_5 = arith.constant 0 : index
    %c0_6 = arith.constant 0 : index
    %8 = vector.load %arg11[%c0_5, %c0_6] : memref<128x256xbf16, #tpu.memory_space<vmem>>, vector<128x256xbf16>
    %9 = vector.extract_strided_slice %8 {offsets = [0, 0], sizes = [128, 32], strides = [1, 1]} : vector<128x256xbf16> to vector<128x32xbf16>
    %10 = vector.extract_strided_slice %8 {offsets = [0, 128], sizes = [128, 32], strides = [1, 1]} : vector<128x256xbf16> to vector<128x32xbf16>
    %11 = vector.extract_strided_slice %7 {offsets = [0, 0], sizes = [128, 32], strides = [1, 1]} : vector<128x384xbf16> to vector<128x32xbf16>
    %12 = vector.extract_strided_slice %7 {offsets = [0, 128], sizes = [128, 32], strides = [1, 1]} : vector<128x384xbf16> to vector<128x32xbf16>
    %13 = vector.extract_strided_slice %7 {offsets = [0, 256], sizes = [128, 32], strides = [1, 1]} : vector<128x384xbf16> to vector<128x32xbf16>
    %cst_7 = arith.constant dense<0.000000e+00> : vector<128x128xf32>
    %14 = tpu.matmul %9, %11, %cst_7 {dimension_numbers = #tpu.dot_dimension_numbers<[1], [1], [0], [0], [0, 0, 1, 0], [], []>} : vector<128x32xbf16>, vector<128x32xbf16>, vector<128x128xf32> -> vector<128x128xf32>
    %c0_8 = arith.constant 0 : index
    %c0_9 = arith.constant 0 : index
    %c0_10 = arith.constant 0 : index
    %15 = vector.load %arg12[%c0_8, %c0_9, %c0_10] : memref<4x128x1xf32, #tpu.memory_space<vmem>>, vector<1x128x1xf32>
    %16 = vector.shape_cast %15 : vector<1x128x1xf32> to vector<128x1xf32>
    %cst_11 = arith.constant dense<0xFF800000> : vector<128xf32>
    %17 = vector.multi_reduction <maximumf>, %14, %cst_11 [1] : vector<128x128xf32> to vector<128xf32>
    %18 = vector.shape_cast %17 : vector<128xf32> to vector<128x1xf32>
    %19 = arith.maximumf %16, %18 : vector<128x1xf32>
    %20 = arith.subf %16, %19 : vector<128x1xf32>
    %21 = math.exp %20 : vector<128x1xf32>
    %22 = vector.broadcast %19 : vector<128x1xf32> to vector<128x128xf32>
    %23 = arith.subf %14, %22 : vector<128x128xf32>
    %24 = math.exp %23 : vector<128x128xf32>
    %c0_12 = arith.constant 0 : index
    %c0_13 = arith.constant 0 : index
    %c0_14 = arith.constant 0 : index
    %25 = vector.load %arg13[%c0_12, %c0_13, %c0_14] : memref<4x128x1xf32, #tpu.memory_space<vmem>>, vector<1x128x1xf32>
    %26 = vector.shape_cast %25 : vector<1x128x1xf32> to vector<128x1xf32>
    %27 = arith.mulf %21, %26 : vector<128x1xf32>
    %cst_15 = arith.constant dense<0.000000e+00> : vector<128xf32>
    %28 = vector.multi_reduction <add>, %24, %cst_15 [1] : vector<128x128xf32> to vector<128xf32>
    %29 = vector.shape_cast %28 : vector<128xf32> to vector<128x1xf32>
    %30 = arith.addf %27, %29 : vector<128x1xf32>
    %c0_16 = arith.constant 0 : index
    %c0_17 = arith.constant 0 : index
    %c0_18 = arith.constant 0 : index
    %31 = vector.load %arg13[%c0_16, %c0_17, %c0_18] : memref<4x128x1xf32, #tpu.memory_space<vmem>>, vector<1x128x1xf32>
    %32 = vector.shape_cast %31 : vector<1x128x1xf32> to vector<128x1xf32>
    %33 = vector.shape_cast %30 : vector<128x1xf32> to vector<1x128x1xf32>
    tpu.vector_store %arg13[%c0_16, %c0_17, %c0_18], %33 {strides = array<i32>} : memref<4x128x1xf32, #tpu.memory_space<vmem>>, vector<1x128x1xf32>,
    %c0_19 = arith.constant 0 : index
    %c0_20 = arith.constant 0 : index
    %c0_21 = arith.constant 0 : index
    %34 = vector.load %arg14[%c0_19, %c0_20, %c0_21] : memref<4x128x32xf32, #tpu.memory_space<vmem>>, vector<1x128x32xf32>
    %35 = vector.shape_cast %34 : vector<1x128x32xf32> to vector<128x32xf32>
    %36 = vector.broadcast %21 : vector<128x1xf32> to vector<128x32xf32>
    %37 = arith.mulf %36, %35 : vector<128x32xf32>
    %38 = arith.truncf %24 : vector<128x128xf32> to vector<128x128xbf16>
    %cst_22 = arith.constant dense<0.000000e+00> : vector<128x32xf32>
    %39 = tpu.matmul %38, %13, %cst_22 {dimension_numbers = #tpu.dot_dimension_numbers<[1], [0], [0], [1], [0, 0, 1, 1], [], []>} : vector<128x128xbf16>, vector<128x32xbf16>, vector<128x32xf32> -> vector<128x32xf32>
    %40 = arith.addf %37, %39 : vector<128x32xf32>
    %c0_23 = arith.constant 0 : index
    %c0_24 = arith.constant 0 : index
    %c0_25 = arith.constant 0 : index
    %41 = vector.load %arg14[%c0_23, %c0_24, %c0_25] : memref<4x128x32xf32, #tpu.memory_space<vmem>>, vector<1x128x32xf32>
    %42 = vector.shape_cast %41 : vector<1x128x32xf32> to vector<128x32xf32>
    %43 = vector.shape_cast %40 : vector<128x32xf32> to vector<1x128x32xf32>
    tpu.vector_store %arg14[%c0_23, %c0_24, %c0_25], %43 {strides = array<i32>} : memref<4x128x32xf32, #tpu.memory_space<vmem>>, vector<1x128x32xf32>,
    %c0_26 = arith.constant 0 : index
    %c0_27 = arith.constant 0 : index
    %c0_28 = arith.constant 0 : index
    %44 = vector.load %arg12[%c0_26, %c0_27, %c0_28] : memref<4x128x1xf32, #tpu.memory_space<vmem>>, vector<1x128x1xf32>
    %45 = vector.shape_cast %44 : vector<1x128x1xf32> to vector<128x1xf32>
    %46 = vector.shape_cast %19 : vector<128x1xf32> to vector<1x128x1xf32>
    tpu.vector_store %arg12[%c0_26, %c0_27, %c0_28], %46 {strides = array<i32>} : memref<4x128x1xf32, #tpu.memory_space<vmem>>, vector<1x128x1xf32>,
    %cst_29 = arith.constant dense<0.000000e+00> : vector<128x128xf32>
    %47 = tpu.matmul %10, %12, %cst_29 {dimension_numbers = #tpu.dot_dimension_numbers<[1], [1], [0], [0], [0, 0, 1, 0], [], []>} : vector<128x32xbf16>, vector<128x32xbf16>, vector<128x128xf32> -> vector<128x128xf32>
    %c0_30 = arith.constant 0 : index
    %c0_31 = arith.constant 0 : index
    %c0_32 = arith.constant 0 : index
    %48 = vector.load %arg15[%c0_30, %c0_31, %c0_32] : memref<4x128x1xf32, #tpu.memory_space<vmem>>, vector<1x128x1xf32>
    %49 = vector.shape_cast %48 : vector<1x128x1xf32> to vector<128x1xf32>
    %cst_33 = arith.constant dense<0xFF800000> : vector<128xf32>
    %50 = vector.multi_reduction <maximumf>, %47, %cst_33 [1] : vector<128x128xf32> to vector<128xf32>
    %51 = vector.shape_cast %50 : vector<128xf32> to vector<128x1xf32>
    %52 = arith.maximumf %49, %51 : vector<128x1xf32>
    %53 = arith.subf %49, %52 : vector<128x1xf32>
    %54 = math.exp %53 : vector<128x1xf32>
    %55 = vector.broadcast %52 : vector<128x1xf32> to vector<128x128xf32>
    %56 = arith.subf %47, %55 : vector<128x128xf32>
    %57 = math.exp %56 : vector<128x128xf32>
    %c0_34 = arith.constant 0 : index
    %c0_35 = arith.constant 0 : index
    %c0_36 = arith.constant 0 : index
    %58 = vector.load %arg16[%c0_34, %c0_35, %c0_36] : memref<4x128x1xf32, #tpu.memory_space<vmem>>, vector<1x128x1xf32>
    %59 = vector.shape_cast %58 : vector<1x128x1xf32> to vector<128x1xf32>
    %60 = arith.mulf %54, %59 : vector<128x1xf32>
    %cst_37 = arith.constant dense<0.000000e+00> : vector<128xf32>
    %61 = vector.multi_reduction <add>, %57, %cst_37 [1] : vector<128x128xf32> to vector<128xf32>
    %62 = vector.shape_cast %61 : vector<128xf32> to vector<128x1xf32>
    %63 = arith.addf %60, %62 : vector<128x1xf32>
    %c0_38 = arith.constant 0 : index
    %c0_39 = arith.constant 0 : index
    %c0_40 = arith.constant 0 : index
    %64 = vector.load %arg16[%c0_38, %c0_39, %c0_40] : memref<4x128x1xf32, #tpu.memory_space<vmem>>, vector<1x128x1xf32>
    %65 = vector.shape_cast %64 : vector<1x128x1xf32> to vector<128x1xf32>
    %66 = vector.shape_cast %63 : vector<128x1xf32> to vector<1x128x1xf32>
    tpu.vector_store %arg16[%c0_38, %c0_39, %c0_40], %66 {strides = array<i32>} : memref<4x128x1xf32, #tpu.memory_space<vmem>>, vector<1x128x1xf32>,
    %c0_41 = arith.constant 0 : index
    %c0_42 = arith.constant 0 : index
    %c0_43 = arith.constant 0 : index
    %67 = vector.load %arg17[%c0_41, %c0_42, %c0_43] : memref<4x128x32xf32, #tpu.memory_space<vmem>>, vector<1x128x32xf32>
    %68 = vector.shape_cast %67 : vector<1x128x32xf32> to vector<128x32xf32>
    %69 = vector.broadcast %54 : vector<128x1xf32> to vector<128x32xf32>
    %70 = arith.mulf %69, %68 : vector<128x32xf32>
    %71 = arith.truncf %57 : vector<128x128xf32> to vector<128x128xbf16>
    %cst_44 = arith.constant dense<0.000000e+00> : vector<128x32xf32>
    %72 = tpu.matmul %71, %13, %cst_44 {dimension_numbers = #tpu.dot_dimension_numbers<[1], [0], [0], [1], [0, 0, 1, 1], [], []>} : vector<128x128xbf16>, vector<128x32xbf16>, vector<128x32xf32> -> vector<128x32xf32>
    %73 = arith.addf %70, %72 : vector<128x32xf32>
    %c0_45 = arith.constant 0 : index
    %c0_46 = arith.constant 0 : index
    %c0_47 = arith.constant 0 : index
    %74 = vector.load %arg17[%c0_45, %c0_46, %c0_47] : memref<4x128x32xf32, #tpu.memory_space<vmem>>, vector<1x128x32xf32>
    %75 = vector.shape_cast %74 : vector<1x128x32xf32> to vector<128x32xf32>
    %76 = vector.shape_cast %73 : vector<128x32xf32> to vector<1x128x32xf32>
    tpu.vector_store %arg17[%c0_45, %c0_46, %c0_47], %76 {strides = array<i32>} : memref<4x128x32xf32, #tpu.memory_space<vmem>>, vector<1x128x32xf32>,
    %c0_48 = arith.constant 0 : index
    %c0_49 = arith.constant 0 : index
    %c0_50 = arith.constant 0 : index
    %77 = vector.load %arg15[%c0_48, %c0_49, %c0_50] : memref<4x128x1xf32, #tpu.memory_space<vmem>>, vector<1x128x1xf32>
    %78 = vector.shape_cast %77 : vector<1x128x1xf32> to vector<128x1xf32>
    %79 = vector.shape_cast %52 : vector<128x1xf32> to vector<1x128x1xf32>
    tpu.vector_store %arg15[%c0_48, %c0_49, %c0_50], %79 {strides = array<i32>} : memref<4x128x1xf32, #tpu.memory_space<vmem>>, vector<1x128x1xf32>,
    %80 = vector.extract_strided_slice %8 {offsets = [0, 32], sizes = [128, 32], strides = [1, 1]} : vector<128x256xbf16> to vector<128x32xbf16>
    %81 = vector.extract_strided_slice %8 {offsets = [0, 160], sizes = [128, 32], strides = [1, 1]} : vector<128x256xbf16> to vector<128x32xbf16>
    %82 = vector.extract_strided_slice %7 {offsets = [0, 32], sizes = [128, 32], strides = [1, 1]} : vector<128x384xbf16> to vector<128x32xbf16>
    %83 = vector.extract_strided_slice %7 {offsets = [0, 160], sizes = [128, 32], strides = [1, 1]} : vector<128x384xbf16> to vector<128x32xbf16>
    %84 = vector.extract_strided_slice %7 {offsets = [0, 288], sizes = [128, 32], strides = [1, 1]} : vector<128x384xbf16> to vector<128x32xbf16>
    %cst_51 = arith.constant dense<0.000000e+00> : vector<128x128xf32>
    %85 = tpu.matmul %80, %82, %cst_51 {dimension_numbers = #tpu.dot_dimension_numbers<[1], [1], [0], [0], [0, 0, 1, 0], [], []>} : vector<128x32xbf16>, vector<128x32xbf16>, vector<128x128xf32> -> vector<128x128xf32>
    %c1 = arith.constant 1 : index
    %c0_52 = arith.constant 0 : index
    %c0_53 = arith.constant 0 : index
    %86 = vector.load %arg12[%c1, %c0_52, %c0_53] : memref<4x128x1xf32, #tpu.memory_space<vmem>>, vector<1x128x1xf32>
    %87 = vector.shape_cast %86 : vector<1x128x1xf32> to vector<128x1xf32>
    %cst_54 = arith.constant dense<0xFF800000> : vector<128xf32>
    %88 = vector.multi_reduction <maximumf>, %85, %cst_54 [1] : vector<128x128xf32> to vector<128xf32>
    %89 = vector.shape_cast %88 : vector<128xf32> to vector<128x1xf32>
    %90 = arith.maximumf %87, %89 : vector<128x1xf32>
    %91 = arith.subf %87, %90 : vector<128x1xf32>
    %92 = math.exp %91 : vector<128x1xf32>
    %93 = vector.broadcast %90 : vector<128x1xf32> to vector<128x128xf32>
    %94 = arith.subf %85, %93 : vector<128x128xf32>
    %95 = math.exp %94 : vector<128x128xf32>
    %c1_55 = arith.constant 1 : index
    %c0_56 = arith.constant 0 : index
    %c0_57 = arith.constant 0 : index
    %96 = vector.load %arg13[%c1_55, %c0_56, %c0_57] : memref<4x128x1xf32, #tpu.memory_space<vmem>>, vector<1x128x1xf32>
    %97 = vector.shape_cast %96 : vector<1x128x1xf32> to vector<128x1xf32>
    %98 = arith.mulf %92, %97 : vector<128x1xf32>
    %cst_58 = arith.constant dense<0.000000e+00> : vector<128xf32>
    %99 = vector.multi_reduction <add>, %95, %cst_58 [1] : vector<128x128xf32> to vector<128xf32>
    %100 = vector.shape_cast %99 : vector<128xf32> to vector<128x1xf32>
    %101 = arith.addf %98, %100 : vector<128x1xf32>
    %c1_59 = arith.constant 1 : index
    %c0_60 = arith.constant 0 : index
    %c0_61 = arith.constant 0 : index
    %102 = vector.load %arg13[%c1_59, %c0_60, %c0_61] : memref<4x128x1xf32, #tpu.memory_space<vmem>>, vector<1x128x1xf32>
    %103 = vector.shape_cast %102 : vector<1x128x1xf32> to vector<128x1xf32>
    %104 = vector.shape_cast %101 : vector<128x1xf32> to vector<1x128x1xf32>
    tpu.vector_store %arg13[%c1_59, %c0_60, %c0_61], %104 {strides = array<i32>} : memref<4x128x1xf32, #tpu.memory_space<vmem>>, vector<1x128x1xf32>,
    %c1_62 = arith.constant 1 : index
    %c0_63 = arith.constant 0 : index
    %c0_64 = arith.constant 0 : index
    %105 = vector.load %arg14[%c1_62, %c0_63, %c0_64] : memref<4x128x32xf32, #tpu.memory_space<vmem>>, vector<1x128x32xf32>
    %106 = vector.shape_cast %105 : vector<1x128x32xf32> to vector<128x32xf32>
    %107 = vector.broadcast %92 : vector<128x1xf32> to vector<128x32xf32>
    %108 = arith.mulf %107, %106 : vector<128x32xf32>
    %109 = arith.truncf %95 : vector<128x128xf32> to vector<128x128xbf16>
    %cst_65 = arith.constant dense<0.000000e+00> : vector<128x32xf32>
    %110 = tpu.matmul %109, %84, %cst_65 {dimension_numbers = #tpu.dot_dimension_numbers<[1], [0], [0], [1], [0, 0, 1, 1], [], []>} : vector<128x128xbf16>, vector<128x32xbf16>, vector<128x32xf32> -> vector<128x32xf32>
    %111 = arith.addf %108, %110 : vector<128x32xf32>
    %c1_66 = arith.constant 1 : index
    %c0_67 = arith.constant 0 : index
    %c0_68 = arith.constant 0 : index
    %112 = vector.load %arg14[%c1_66, %c0_67, %c0_68] : memref<4x128x32xf32, #tpu.memory_space<vmem>>, vector<1x128x32xf32>
    %113 = vector.shape_cast %112 : vector<1x128x32xf32> to vector<128x32xf32>
    %114 = vector.shape_cast %111 : vector<128x32xf32> to vector<1x128x32xf32>
    tpu.vector_store %arg14[%c1_66, %c0_67, %c0_68], %114 {strides = array<i32>} : memref<4x128x32xf32, #tpu.memory_space<vmem>>, vector<1x128x32xf32>,
    %c1_69 = arith.constant 1 : index
    %c0_70 = arith.constant 0 : index
    %c0_71 = arith.constant 0 : index
    %115 = vector.load %arg12[%c1_69, %c0_70, %c0_71] : memref<4x128x1xf32, #tpu.memory_space<vmem>>, vector<1x128x1xf32>
    %116 = vector.shape_cast %115 : vector<1x128x1xf32> to vector<128x1xf32>
    %117 = vector.shape_cast %90 : vector<128x1xf32> to vector<1x128x1xf32>
    tpu.vector_store %arg12[%c1_69, %c0_70, %c0_71], %117 {strides = array<i32>} : memref<4x128x1xf32, #tpu.memory_space<vmem>>, vector<1x128x1xf32>,
    %cst_72 = arith.constant dense<0.000000e+00> : vector<128x128xf32>
    %118 = tpu.matmul %81, %83, %cst_72 {dimension_numbers = #tpu.dot_dimension_numbers<[1], [1], [0], [0], [0, 0, 1, 0], [], []>} : vector<128x32xbf16>, vector<128x32xbf16>, vector<128x128xf32> -> vector<128x128xf32>
    %c1_73 = arith.constant 1 : index
    %c0_74 = arith.constant 0 : index
    %c0_75 = arith.constant 0 : index
    %119 = vector.load %arg15[%c1_73, %c0_74, %c0_75] : memref<4x128x1xf32, #tpu.memory_space<vmem>>, vector<1x128x1xf32>
    %120 = vector.shape_cast %119 : vector<1x128x1xf32> to vector<128x1xf32>
    %cst_76 = arith.constant dense<0xFF800000> : vector<128xf32>
    %121 = vector.multi_reduction <maximumf>, %118, %cst_76 [1] : vector<128x128xf32> to vector<128xf32>
    %122 = vector.shape_cast %121 : vector<128xf32> to vector<128x1xf32>
    %123 = arith.maximumf %120, %122 : vector<128x1xf32>
    %124 = arith.subf %120, %123 : vector<128x1xf32>
    %125 = math.exp %124 : vector<128x1xf32>
    %126 = vector.broadcast %123 : vector<128x1xf32> to vector<128x128xf32>
    %127 = arith.subf %118, %126 : vector<128x128xf32>
    %128 = math.exp %127 : vector<128x128xf32>
    %c1_77 = arith.constant 1 : index
    %c0_78 = arith.constant 0 : index
    %c0_79 = arith.constant 0 : index
    %129 = vector.load %arg16[%c1_77, %c0_78, %c0_79] : memref<4x128x1xf32, #tpu.memory_space<vmem>>, vector<1x128x1xf32>
    %130 = vector.shape_cast %129 : vector<1x128x1xf32> to vector<128x1xf32>
    %131 = arith.mulf %125, %130 : vector<128x1xf32>
    %cst_80 = arith.constant dense<0.000000e+00> : vector<128xf32>
    %132 = vector.multi_reduction <add>, %128, %cst_80 [1] : vector<128x128xf32> to vector<128xf32>
    %133 = vector.shape_cast %132 : vector<128xf32> to vector<128x1xf32>
    %134 = arith.addf %131, %133 : vector<128x1xf32>
    %c1_81 = arith.constant 1 : index
    %c0_82 = arith.constant 0 : index
    %c0_83 = arith.constant 0 : index
    %135 = vector.load %arg16[%c1_81, %c0_82, %c0_83] : memref<4x128x1xf32, #tpu.memory_space<vmem>>, vector<1x128x1xf32>
    %136 = vector.shape_cast %135 : vector<1x128x1xf32> to vector<128x1xf32>
    %137 = vector.shape_cast %134 : vector<128x1xf32> to vector<1x128x1xf32>
    tpu.vector_store %arg16[%c1_81, %c0_82, %c0_83], %137 {strides = array<i32>} : memref<4x128x1xf32, #tpu.memory_space<vmem>>, vector<1x128x1xf32>,
    %c1_84 = arith.constant 1 : index
    %c0_85 = arith.constant 0 : index
    %c0_86 = arith.constant 0 : index
    %138 = vector.load %arg17[%c1_84, %c0_85, %c0_86] : memref<4x128x32xf32, #tpu.memory_space<vmem>>, vector<1x128x32xf32>
    %139 = vector.shape_cast %138 : vector<1x128x32xf32> to vector<128x32xf32>
    %140 = vector.broadcast %125 : vector<128x1xf32> to vector<128x32xf32>
    %141 = arith.mulf %140, %139 : vector<128x32xf32>
    %142 = arith.truncf %128 : vector<128x128xf32> to vector<128x128xbf16>
    %cst_87 = arith.constant dense<0.000000e+00> : vector<128x32xf32>
    %143 = tpu.matmul %142, %84, %cst_87 {dimension_numbers = #tpu.dot_dimension_numbers<[1], [0], [0], [1], [0, 0, 1, 1], [], []>} : vector<128x128xbf16>, vector<128x32xbf16>, vector<128x32xf32> -> vector<128x32xf32>
    %144 = arith.addf %141, %143 : vector<128x32xf32>
    %c1_88 = arith.constant 1 : index
    %c0_89 = arith.constant 0 : index
    %c0_90 = arith.constant 0 : index
    %145 = vector.load %arg17[%c1_88, %c0_89, %c0_90] : memref<4x128x32xf32, #tpu.memory_space<vmem>>, vector<1x128x32xf32>
    %146 = vector.shape_cast %145 : vector<1x128x32xf32> to vector<128x32xf32>
    %147 = vector.shape_cast %144 : vector<128x32xf32> to vector<1x128x32xf32>
    tpu.vector_store %arg17[%c1_88, %c0_89, %c0_90], %147 {strides = array<i32>} : memref<4x128x32xf32, #tpu.memory_space<vmem>>, vector<1x128x32xf32>,
    %c1_91 = arith.constant 1 : index
    %c0_92 = arith.constant 0 : index
    %c0_93 = arith.constant 0 : index
    %148 = vector.load %arg15[%c1_91, %c0_92, %c0_93] : memref<4x128x1xf32, #tpu.memory_space<vmem>>, vector<1x128x1xf32>
    %149 = vector.shape_cast %148 : vector<1x128x1xf32> to vector<128x1xf32>
    %150 = vector.shape_cast %123 : vector<128x1xf32> to vector<1x128x1xf32>
    tpu.vector_store %arg15[%c1_91, %c0_92, %c0_93], %150 {strides = array<i32>} : memref<4x128x1xf32, #tpu.memory_space<vmem>>, vector<1x128x1xf32>,
    %151 = vector.extract_strided_slice %8 {offsets = [0, 64], sizes = [128, 32], strides = [1, 1]} : vector<128x256xbf16> to vector<128x32xbf16>
    %152 = vector.extract_strided_slice %8 {offsets = [0, 192], sizes = [128, 32], strides = [1, 1]} : vector<128x256xbf16> to vector<128x32xbf16>
    %153 = vector.extract_strided_slice %7 {offsets = [0, 64], sizes = [128, 32], strides = [1, 1]} : vector<128x384xbf16> to vector<128x32xbf16>
    %154 = vector.extract_strided_slice %7 {offsets = [0, 192], sizes = [128, 32], strides = [1, 1]} : vector<128x384xbf16> to vector<128x32xbf16>
    %155 = vector.extract_strided_slice %7 {offsets = [0, 320], sizes = [128, 32], strides = [1, 1]} : vector<128x384xbf16> to vector<128x32xbf16>
    %cst_94 = arith.constant dense<0.000000e+00> : vector<128x128xf32>
    %156 = tpu.matmul %151, %153, %cst_94 {dimension_numbers = #tpu.dot_dimension_numbers<[1], [1], [0], [0], [0, 0, 1, 0], [], []>} : vector<128x32xbf16>, vector<128x32xbf16>, vector<128x128xf32> -> vector<128x128xf32>
    %c2 = arith.constant 2 : index
    %c0_95 = arith.constant 0 : index
    %c0_96 = arith.constant 0 : index
    %157 = vector.load %arg12[%c2, %c0_95, %c0_96] : memref<4x128x1xf32, #tpu.memory_space<vmem>>, vector<1x128x1xf32>
    %158 = vector.shape_cast %157 : vector<1x128x1xf32> to vector<128x1xf32>
    %cst_97 = arith.constant dense<0xFF800000> : vector<128xf32>
    %159 = vector.multi_reduction <maximumf>, %156, %cst_97 [1] : vector<128x128xf32> to vector<128xf32>
    %160 = vector.shape_cast %159 : vector<128xf32> to vector<128x1xf32>
    %161 = arith.maximumf %158, %160 : vector<128x1xf32>
    %162 = arith.subf %158, %161 : vector<128x1xf32>
    %163 = math.exp %162 : vector<128x1xf32>
    %164 = vector.broadcast %161 : vector<128x1xf32> to vector<128x128xf32>
    %165 = arith.subf %156, %164 : vector<128x128xf32>
    %166 = math.exp %165 : vector<128x128xf32>
    %c2_98 = arith.constant 2 : index
    %c0_99 = arith.constant 0 : index
    %c0_100 = arith.constant 0 : index
    %167 = vector.load %arg13[%c2_98, %c0_99, %c0_100] : memref<4x128x1xf32, #tpu.memory_space<vmem>>, vector<1x128x1xf32>
    %168 = vector.shape_cast %167 : vector<1x128x1xf32> to vector<128x1xf32>
    %169 = arith.mulf %163, %168 : vector<128x1xf32>
    %cst_101 = arith.constant dense<0.000000e+00> : vector<128xf32>
    %170 = vector.multi_reduction <add>, %166, %cst_101 [1] : vector<128x128xf32> to vector<128xf32>
    %171 = vector.shape_cast %170 : vector<128xf32> to vector<128x1xf32>
    %172 = arith.addf %169, %171 : vector<128x1xf32>
    %c2_102 = arith.constant 2 : index
    %c0_103 = arith.constant 0 : index
    %c0_104 = arith.constant 0 : index
    %173 = vector.load %arg13[%c2_102, %c0_103, %c0_104] : memref<4x128x1xf32, #tpu.memory_space<vmem>>, vector<1x128x1xf32>
    %174 = vector.shape_cast %173 : vector<1x128x1xf32> to vector<128x1xf32>
    %175 = vector.shape_cast %172 : vector<128x1xf32> to vector<1x128x1xf32>
    tpu.vector_store %arg13[%c2_102, %c0_103, %c0_104], %175 {strides = array<i32>} : memref<4x128x1xf32, #tpu.memory_space<vmem>>, vector<1x128x1xf32>,
    %c2_105 = arith.constant 2 : index
    %c0_106 = arith.constant 0 : index
    %c0_107 = arith.constant 0 : index
    %176 = vector.load %arg14[%c2_105, %c0_106, %c0_107] : memref<4x128x32xf32, #tpu.memory_space<vmem>>, vector<1x128x32xf32>
    %177 = vector.shape_cast %176 : vector<1x128x32xf32> to vector<128x32xf32>
    %178 = vector.broadcast %163 : vector<128x1xf32> to vector<128x32xf32>
    %179 = arith.mulf %178, %177 : vector<128x32xf32>
    %180 = arith.truncf %166 : vector<128x128xf32> to vector<128x128xbf16>
    %cst_108 = arith.constant dense<0.000000e+00> : vector<128x32xf32>
    %181 = tpu.matmul %180, %155, %cst_108 {dimension_numbers = #tpu.dot_dimension_numbers<[1], [0], [0], [1], [0, 0, 1, 1], [], []>} : vector<128x128xbf16>, vector<128x32xbf16>, vector<128x32xf32> -> vector<128x32xf32>
    %182 = arith.addf %179, %181 : vector<128x32xf32>
    %c2_109 = arith.constant 2 : index
    %c0_110 = arith.constant 0 : index
    %c0_111 = arith.constant 0 : index
    %183 = vector.load %arg14[%c2_109, %c0_110, %c0_111] : memref<4x128x32xf32, #tpu.memory_space<vmem>>, vector<1x128x32xf32>
    %184 = vector.shape_cast %183 : vector<1x128x32xf32> to vector<128x32xf32>
    %185 = vector.shape_cast %182 : vector<128x32xf32> to vector<1x128x32xf32>
    tpu.vector_store %arg14[%c2_109, %c0_110, %c0_111], %185 {strides = array<i32>} : memref<4x128x32xf32, #tpu.memory_space<vmem>>, vector<1x128x32xf32>,
    %c2_112 = arith.constant 2 : index
    %c0_113 = arith.constant 0 : index
    %c0_114 = arith.constant 0 : index
    %186 = vector.load %arg12[%c2_112, %c0_113, %c0_114] : memref<4x128x1xf32, #tpu.memory_space<vmem>>, vector<1x128x1xf32>
    %187 = vector.shape_cast %186 : vector<1x128x1xf32> to vector<128x1xf32>
    %188 = vector.shape_cast %161 : vector<128x1xf32> to vector<1x128x1xf32>
    tpu.vector_store %arg12[%c2_112, %c0_113, %c0_114], %188 {strides = array<i32>} : memref<4x128x1xf32, #tpu.memory_space<vmem>>, vector<1x128x1xf32>,
    %cst_115 = arith.constant dense<0.000000e+00> : vector<128x128xf32>
    %189 = tpu.matmul %152, %154, %cst_115 {dimension_numbers = #tpu.dot_dimension_numbers<[1], [1], [0], [0], [0, 0, 1, 0], [], []>} : vector<128x32xbf16>, vector<128x32xbf16>, vector<128x128xf32> -> vector<128x128xf32>
    %c2_116 = arith.constant 2 : index
    %c0_117 = arith.constant 0 : index
    %c0_118 = arith.constant 0 : index
    %190 = vector.load %arg15[%c2_116, %c0_117, %c0_118] : memref<4x128x1xf32, #tpu.memory_space<vmem>>, vector<1x128x1xf32>
    %191 = vector.shape_cast %190 : vector<1x128x1xf32> to vector<128x1xf32>
    %cst_119 = arith.constant dense<0xFF800000> : vector<128xf32>
    %192 = vector.multi_reduction <maximumf>, %189, %cst_119 [1] : vector<128x128xf32> to vector<128xf32>
    %193 = vector.shape_cast %192 : vector<128xf32> to vector<128x1xf32>
    %194 = arith.maximumf %191, %193 : vector<128x1xf32>
    %195 = arith.subf %191, %194 : vector<128x1xf32>
    %196 = math.exp %195 : vector<128x1xf32>
    %197 = vector.broadcast %194 : vector<128x1xf32> to vector<128x128xf32>
    %198 = arith.subf %189, %197 : vector<128x128xf32>
    %199 = math.exp %198 : vector<128x128xf32>
    %c2_120 = arith.constant 2 : index
    %c0_121 = arith.constant 0 : index
    %c0_122 = arith.constant 0 : index
    %200 = vector.load %arg16[%c2_120, %c0_121, %c0_122] : memref<4x128x1xf32, #tpu.memory_space<vmem>>, vector<1x128x1xf32>
    %201 = vector.shape_cast %200 : vector<1x128x1xf32> to vector<128x1xf32>
    %202 = arith.mulf %196, %201 : vector<128x1xf32>
    %cst_123 = arith.constant dense<0.000000e+00> : vector<128xf32>
    %203 = vector.multi_reduction <add>, %199, %cst_123 [1] : vector<128x128xf32> to vector<128xf32>
    %204 = vector.shape_cast %203 : vector<128xf32> to vector<128x1xf32>
    %205 = arith.addf %202, %204 : vector<128x1xf32>
    %c2_124 = arith.constant 2 : index
    %c0_125 = arith.constant 0 : index
    %c0_126 = arith.constant 0 : index
    %206 = vector.load %arg16[%c2_124, %c0_125, %c0_126] : memref<4x128x1xf32, #tpu.memory_space<vmem>>, vector<1x128x1xf32>
    %207 = vector.shape_cast %206 : vector<1x128x1xf32> to vector<128x1xf32>
    %208 = vector.shape_cast %205 : vector<128x1xf32> to vector<1x128x1xf32>
    tpu.vector_store %arg16[%c2_124, %c0_125, %c0_126], %208 {strides = array<i32>} : memref<4x128x1xf32, #tpu.memory_space<vmem>>, vector<1x128x1xf32>,
    %c2_127 = arith.constant 2 : index
    %c0_128 = arith.constant 0 : index
    %c0_129 = arith.constant 0 : index
    %209 = vector.load %arg17[%c2_127, %c0_128, %c0_129] : memref<4x128x32xf32, #tpu.memory_space<vmem>>, vector<1x128x32xf32>
    %210 = vector.shape_cast %209 : vector<1x128x32xf32> to vector<128x32xf32>
    %211 = vector.broadcast %196 : vector<128x1xf32> to vector<128x32xf32>
    %212 = arith.mulf %211, %210 : vector<128x32xf32>
    %213 = arith.truncf %199 : vector<128x128xf32> to vector<128x128xbf16>
    %cst_130 = arith.constant dense<0.000000e+00> : vector<128x32xf32>
    %214 = tpu.matmul %213, %155, %cst_130 {dimension_numbers = #tpu.dot_dimension_numbers<[1], [0], [0], [1], [0, 0, 1, 1], [], []>} : vector<128x128xbf16>, vector<128x32xbf16>, vector<128x32xf32> -> vector<128x32xf32>
    %215 = arith.addf %212, %214 : vector<128x32xf32>
    %c2_131 = arith.constant 2 : index
    %c0_132 = arith.constant 0 : index
    %c0_133 = arith.constant 0 : index
    %216 = vector.load %arg17[%c2_131, %c0_132, %c0_133] : memref<4x128x32xf32, #tpu.memory_space<vmem>>, vector<1x128x32xf32>
    %217 = vector.shape_cast %216 : vector<1x128x32xf32> to vector<128x32xf32>
    %218 = vector.shape_cast %215 : vector<128x32xf32> to vector<1x128x32xf32>
    tpu.vector_store %arg17[%c2_131, %c0_132, %c0_133], %218 {strides = array<i32>} : memref<4x128x32xf32, #tpu.memory_space<vmem>>, vector<1x128x32xf32>,
    %c2_134 = arith.constant 2 : index
    %c0_135 = arith.constant 0 : index
    %c0_136 = arith.constant 0 : index
    %219 = vector.load %arg15[%c2_134, %c0_135, %c0_136] : memref<4x128x1xf32, #tpu.memory_space<vmem>>, vector<1x128x1xf32>
    %220 = vector.shape_cast %219 : vector<1x128x1xf32> to vector<128x1xf32>
    %221 = vector.shape_cast %194 : vector<128x1xf32> to vector<1x128x1xf32>
    tpu.vector_store %arg15[%c2_134, %c0_135, %c0_136], %221 {strides = array<i32>} : memref<4x128x1xf32, #tpu.memory_space<vmem>>, vector<1x128x1xf32>,
    %222 = vector.extract_strided_slice %8 {offsets = [0, 96], sizes = [128, 32], strides = [1, 1]} : vector<128x256xbf16> to vector<128x32xbf16>
    %223 = vector.extract_strided_slice %8 {offsets = [0, 224], sizes = [128, 32], strides = [1, 1]} : vector<128x256xbf16> to vector<128x32xbf16>
    %224 = vector.extract_strided_slice %7 {offsets = [0, 96], sizes = [128, 32], strides = [1, 1]} : vector<128x384xbf16> to vector<128x32xbf16>
    %225 = vector.extract_strided_slice %7 {offsets = [0, 224], sizes = [128, 32], strides = [1, 1]} : vector<128x384xbf16> to vector<128x32xbf16>
    %226 = vector.extract_strided_slice %7 {offsets = [0, 352], sizes = [128, 32], strides = [1, 1]} : vector<128x384xbf16> to vector<128x32xbf16>
    %cst_137 = arith.constant dense<0.000000e+00> : vector<128x128xf32>
    %227 = tpu.matmul %222, %224, %cst_137 {dimension_numbers = #tpu.dot_dimension_numbers<[1], [1], [0], [0], [0, 0, 1, 0], [], []>} : vector<128x32xbf16>, vector<128x32xbf16>, vector<128x128xf32> -> vector<128x128xf32>
    %c3 = arith.constant 3 : index
    %c0_138 = arith.constant 0 : index
    %c0_139 = arith.constant 0 : index
    %228 = vector.load %arg12[%c3, %c0_138, %c0_139] : memref<4x128x1xf32, #tpu.memory_space<vmem>>, vector<1x128x1xf32>
    %229 = vector.shape_cast %228 : vector<1x128x1xf32> to vector<128x1xf32>
    %cst_140 = arith.constant dense<0xFF800000> : vector<128xf32>
    %230 = vector.multi_reduction <maximumf>, %227, %cst_140 [1] : vector<128x128xf32> to vector<128xf32>
    %231 = vector.shape_cast %230 : vector<128xf32> to vector<128x1xf32>
    %232 = arith.maximumf %229, %231 : vector<128x1xf32>
    %233 = arith.subf %229, %232 : vector<128x1xf32>
    %234 = math.exp %233 : vector<128x1xf32>
    %235 = vector.broadcast %232 : vector<128x1xf32> to vector<128x128xf32>
    %236 = arith.subf %227, %235 : vector<128x128xf32>
    %237 = math.exp %236 : vector<128x128xf32>
    %c3_141 = arith.constant 3 : index
    %c0_142 = arith.constant 0 : index
    %c0_143 = arith.constant 0 : index
    %238 = vector.load %arg13[%c3_141, %c0_142, %c0_143] : memref<4x128x1xf32, #tpu.memory_space<vmem>>, vector<1x128x1xf32>
    %239 = vector.shape_cast %238 : vector<1x128x1xf32> to vector<128x1xf32>
    %240 = arith.mulf %234, %239 : vector<128x1xf32>
    %cst_144 = arith.constant dense<0.000000e+00> : vector<128xf32>
    %241 = vector.multi_reduction <add>, %237, %cst_144 [1] : vector<128x128xf32> to vector<128xf32>
    %242 = vector.shape_cast %241 : vector<128xf32> to vector<128x1xf32>
    %243 = arith.addf %240, %242 : vector<128x1xf32>
    %c3_145 = arith.constant 3 : index
    %c0_146 = arith.constant 0 : index
    %c0_147 = arith.constant 0 : index
    %244 = vector.load %arg13[%c3_145, %c0_146, %c0_147] : memref<4x128x1xf32, #tpu.memory_space<vmem>>, vector<1x128x1xf32>
    %245 = vector.shape_cast %244 : vector<1x128x1xf32> to vector<128x1xf32>
    %246 = vector.shape_cast %243 : vector<128x1xf32> to vector<1x128x1xf32>
    tpu.vector_store %arg13[%c3_145, %c0_146, %c0_147], %246 {strides = array<i32>} : memref<4x128x1xf32, #tpu.memory_space<vmem>>, vector<1x128x1xf32>,
    %c3_148 = arith.constant 3 : index
    %c0_149 = arith.constant 0 : index
    %c0_150 = arith.constant 0 : index
    %247 = vector.load %arg14[%c3_148, %c0_149, %c0_150] : memref<4x128x32xf32, #tpu.memory_space<vmem>>, vector<1x128x32xf32>
    %248 = vector.shape_cast %247 : vector<1x128x32xf32> to vector<128x32xf32>
    %249 = vector.broadcast %234 : vector<128x1xf32> to vector<128x32xf32>
    %250 = arith.mulf %249, %248 : vector<128x32xf32>
    %251 = arith.truncf %237 : vector<128x128xf32> to vector<128x128xbf16>
    %cst_151 = arith.constant dense<0.000000e+00> : vector<128x32xf32>
    %252 = tpu.matmul %251, %226, %cst_151 {dimension_numbers = #tpu.dot_dimension_numbers<[1], [0], [0], [1], [0, 0, 1, 1], [], []>} : vector<128x128xbf16>, vector<128x32xbf16>, vector<128x32xf32> -> vector<128x32xf32>
    %253 = arith.addf %250, %252 : vector<128x32xf32>
    %c3_152 = arith.constant 3 : index
    %c0_153 = arith.constant 0 : index
    %c0_154 = arith.constant 0 : index
    %254 = vector.load %arg14[%c3_152, %c0_153, %c0_154] : memref<4x128x32xf32, #tpu.memory_space<vmem>>, vector<1x128x32xf32>
    %255 = vector.shape_cast %254 : vector<1x128x32xf32> to vector<128x32xf32>
    %256 = vector.shape_cast %253 : vector<128x32xf32> to vector<1x128x32xf32>
    tpu.vector_store %arg14[%c3_152, %c0_153, %c0_154], %256 {strides = array<i32>} : memref<4x128x32xf32, #tpu.memory_space<vmem>>, vector<1x128x32xf32>,
    %c3_155 = arith.constant 3 : index
    %c0_156 = arith.constant 0 : index
    %c0_157 = arith.constant 0 : index
    %257 = vector.load %arg12[%c3_155, %c0_156, %c0_157] : memref<4x128x1xf32, #tpu.memory_space<vmem>>, vector<1x128x1xf32>
    %258 = vector.shape_cast %257 : vector<1x128x1xf32> to vector<128x1xf32>
    %259 = vector.shape_cast %232 : vector<128x1xf32> to vector<1x128x1xf32>
    tpu.vector_store %arg12[%c3_155, %c0_156, %c0_157], %259 {strides = array<i32>} : memref<4x128x1xf32, #tpu.memory_space<vmem>>, vector<1x128x1xf32>,
    %cst_158 = arith.constant dense<0.000000e+00> : vector<128x128xf32>
    %260 = tpu.matmul %223, %225, %cst_158 {dimension_numbers = #tpu.dot_dimension_numbers<[1], [1], [0], [0], [0, 0, 1, 0], [], []>} : vector<128x32xbf16>, vector<128x32xbf16>, vector<128x128xf32> -> vector<128x128xf32>
    %c3_159 = arith.constant 3 : index
    %c0_160 = arith.constant 0 : index
    %c0_161 = arith.constant 0 : index
    %261 = vector.load %arg15[%c3_159, %c0_160, %c0_161] : memref<4x128x1xf32, #tpu.memory_space<vmem>>, vector<1x128x1xf32>
    %262 = vector.shape_cast %261 : vector<1x128x1xf32> to vector<128x1xf32>
    %cst_162 = arith.constant dense<0xFF800000> : vector<128xf32>
    %263 = vector.multi_reduction <maximumf>, %260, %cst_162 [1] : vector<128x128xf32> to vector<128xf32>
    %264 = vector.shape_cast %263 : vector<128xf32> to vector<128x1xf32>
    %265 = arith.maximumf %262, %264 : vector<128x1xf32>
    %266 = arith.subf %262, %265 : vector<128x1xf32>
    %267 = math.exp %266 : vector<128x1xf32>
    %268 = vector.broadcast %265 : vector<128x1xf32> to vector<128x128xf32>
    %269 = arith.subf %260, %268 : vector<128x128xf32>
    %270 = math.exp %269 : vector<128x128xf32>
    %c3_163 = arith.constant 3 : index
    %c0_164 = arith.constant 0 : index
    %c0_165 = arith.constant 0 : index
    %271 = vector.load %arg16[%c3_163, %c0_164, %c0_165] : memref<4x128x1xf32, #tpu.memory_space<vmem>>, vector<1x128x1xf32>
    %272 = vector.shape_cast %271 : vector<1x128x1xf32> to vector<128x1xf32>
    %273 = arith.mulf %267, %272 : vector<128x1xf32>
    %cst_166 = arith.constant dense<0.000000e+00> : vector<128xf32>
    %274 = vector.multi_reduction <add>, %270, %cst_166 [1] : vector<128x128xf32> to vector<128xf32>
    %275 = vector.shape_cast %274 : vector<128xf32> to vector<128x1xf32>
    %276 = arith.addf %273, %275 : vector<128x1xf32>
    %c3_167 = arith.constant 3 : index
    %c0_168 = arith.constant 0 : index
    %c0_169 = arith.constant 0 : index
    %277 = vector.load %arg16[%c3_167, %c0_168, %c0_169] : memref<4x128x1xf32, #tpu.memory_space<vmem>>, vector<1x128x1xf32>
    %278 = vector.shape_cast %277 : vector<1x128x1xf32> to vector<128x1xf32>
    %279 = vector.shape_cast %276 : vector<128x1xf32> to vector<1x128x1xf32>
    tpu.vector_store %arg16[%c3_167, %c0_168, %c0_169], %279 {strides = array<i32>} : memref<4x128x1xf32, #tpu.memory_space<vmem>>, vector<1x128x1xf32>,
    %c3_170 = arith.constant 3 : index
    %c0_171 = arith.constant 0 : index
    %c0_172 = arith.constant 0 : index
    %280 = vector.load %arg17[%c3_170, %c0_171, %c0_172] : memref<4x128x32xf32, #tpu.memory_space<vmem>>, vector<1x128x32xf32>
    %281 = vector.shape_cast %280 : vector<1x128x32xf32> to vector<128x32xf32>
    %282 = vector.broadcast %267 : vector<128x1xf32> to vector<128x32xf32>
    %283 = arith.mulf %282, %281 : vector<128x32xf32>
    %284 = arith.truncf %270 : vector<128x128xf32> to vector<128x128xbf16>
    %cst_173 = arith.constant dense<0.000000e+00> : vector<128x32xf32>
    %285 = tpu.matmul %284, %226, %cst_173 {dimension_numbers = #tpu.dot_dimension_numbers<[1], [0], [0], [1], [0, 0, 1, 1], [], []>} : vector<128x128xbf16>, vector<128x32xbf16>, vector<128x32xf32> -> vector<128x32xf32>
    %286 = arith.addf %283, %285 : vector<128x32xf32>
    %c3_174 = arith.constant 3 : index
    %c0_175 = arith.constant 0 : index
    %c0_176 = arith.constant 0 : index
    %287 = vector.load %arg17[%c3_174, %c0_175, %c0_176] : memref<4x128x32xf32, #tpu.memory_space<vmem>>, vector<1x128x32xf32>
    %288 = vector.shape_cast %287 : vector<1x128x32xf32> to vector<128x32xf32>
    %289 = vector.shape_cast %286 : vector<128x32xf32> to vector<1x128x32xf32>
    tpu.vector_store %arg17[%c3_174, %c0_175, %c0_176], %289 {strides = array<i32>} : memref<4x128x32xf32, #tpu.memory_space<vmem>>, vector<1x128x32xf32>,
    %c3_177 = arith.constant 3 : index
    %c0_178 = arith.constant 0 : index
    %c0_179 = arith.constant 0 : index
    %290 = vector.load %arg15[%c3_177, %c0_178, %c0_179] : memref<4x128x1xf32, #tpu.memory_space<vmem>>, vector<1x128x1xf32>
    %291 = vector.shape_cast %290 : vector<1x128x1xf32> to vector<128x1xf32>
    %292 = vector.shape_cast %265 : vector<128x1xf32> to vector<1x128x1xf32>
    tpu.vector_store %arg15[%c3_177, %c0_178, %c0_179], %292 {strides = array<i32>} : memref<4x128x1xf32, #tpu.memory_space<vmem>>, vector<1x128x1xf32>,
    %c0_i32_180 = arith.constant 0 : i32
    %293 = arith.cmpi eq, %arg2, %c0_i32_180 : i32
    %294 = arith.extui %293 : i1 to i32
    %c0_i32_181 = arith.constant 0 : i32
    %295 = arith.cmpi ne, %294, %c0_i32_181 : i32
    scf.if %295 {
      %c0_182 = arith.constant 0 : index
      %c0_183 = arith.constant 0 : index
      %296 = memref.load %arg3[%c0_182, %c0_183] : memref<1x1xf32, #tpu.memory_space<smem>>
      %c0_184 = arith.constant 0 : index
      %c0_185 = arith.constant 0 : index
      %c0_186 = arith.constant 0 : index
      %297 = vector.load %arg14[%c0_184, %c0_185, %c0_186] : memref<4x128x32xf32, #tpu.memory_space<vmem>>, vector<1x128x32xf32>
      %298 = vector.shape_cast %297 : vector<1x128x32xf32> to vector<128x32xf32>
      %c0_187 = arith.constant 0 : index
      %c0_188 = arith.constant 0 : index
      %c0_189 = arith.constant 0 : index
      %299 = vector.load %arg13[%c0_187, %c0_188, %c0_189] : memref<4x128x1xf32, #tpu.memory_space<vmem>>, vector<1x128x1xf32>
      %300 = vector.shape_cast %299 : vector<1x128x1xf32> to vector<128x1xf32>
      %301 = tpu.reciprocal %300 {approx = true} : vector<128x1xf32> -> vector<128x1xf32>
      %302 = vector.broadcast %301 : vector<128x1xf32> to vector<128x32xf32>
      %303 = arith.mulf %298, %302 : vector<128x32xf32>
      %c0_190 = arith.constant 0 : index
      %c0_191 = arith.constant 0 : index
      %c0_192 = arith.constant 0 : index
      %304 = vector.load %arg17[%c0_190, %c0_191, %c0_192] : memref<4x128x32xf32, #tpu.memory_space<vmem>>, vector<1x128x32xf32>
      %305 = vector.shape_cast %304 : vector<1x128x32xf32> to vector<128x32xf32>
      %c0_193 = arith.constant 0 : index
      %c0_194 = arith.constant 0 : index
      %c0_195 = arith.constant 0 : index
      %306 = vector.load %arg16[%c0_193, %c0_194, %c0_195] : memref<4x128x1xf32, #tpu.memory_space<vmem>>, vector<1x128x1xf32>
      %307 = vector.shape_cast %306 : vector<1x128x1xf32> to vector<128x1xf32>
      %308 = tpu.reciprocal %307 {approx = true} : vector<128x1xf32> -> vector<128x1xf32>
      %309 = vector.broadcast %308 : vector<128x1xf32> to vector<128x32xf32>
      %310 = arith.mulf %305, %309 : vector<128x32xf32>
      %311 = vector.broadcast %296 : f32 to vector<128x32xf32>
      %312 = arith.mulf %311, %310 : vector<128x32xf32>
      %313 = arith.subf %303, %312 : vector<128x32xf32>
      %c0_196 = arith.constant 0 : index
      %c0_197 = arith.constant 0 : index
      %c0_198 = arith.constant 0 : index
      %314 = vector.load %arg10[%c0_196, %c0_197, %c0_198] : memref<1x128x128xf32, #tpu.memory_space<vmem>>, vector<1x128x32xf32>
      %315 = vector.shape_cast %314 : vector<1x128x32xf32> to vector<128x32xf32>
      %316 = vector.shape_cast %313 : vector<128x32xf32> to vector<1x128x32xf32>
      tpu.vector_store %arg10[%c0_196, %c0_197, %c0_198], %316 {strides = array<i32>} : memref<1x128x128xf32, #tpu.memory_space<vmem>>, vector<1x128x32xf32>,
      %c1_199 = arith.constant 1 : index
      %c0_200 = arith.constant 0 : index
      %c0_201 = arith.constant 0 : index
      %317 = vector.load %arg14[%c1_199, %c0_200, %c0_201] : memref<4x128x32xf32, #tpu.memory_space<vmem>>, vector<1x128x32xf32>
      %318 = vector.shape_cast %317 : vector<1x128x32xf32> to vector<128x32xf32>
      %c1_202 = arith.constant 1 : index
      %c0_203 = arith.constant 0 : index
      %c0_204 = arith.constant 0 : index
      %319 = vector.load %arg13[%c1_202, %c0_203, %c0_204] : memref<4x128x1xf32, #tpu.memory_space<vmem>>, vector<1x128x1xf32>
      %320 = vector.shape_cast %319 : vector<1x128x1xf32> to vector<128x1xf32>
      %321 = tpu.reciprocal %320 {approx = true} : vector<128x1xf32> -> vector<128x1xf32>
      %322 = vector.broadcast %321 : vector<128x1xf32> to vector<128x32xf32>
      %323 = arith.mulf %318, %322 : vector<128x32xf32>
      %c1_205 = arith.constant 1 : index
      %c0_206 = arith.constant 0 : index
      %c0_207 = arith.constant 0 : index
      %324 = vector.load %arg17[%c1_205, %c0_206, %c0_207] : memref<4x128x32xf32, #tpu.memory_space<vmem>>, vector<1x128x32xf32>
      %325 = vector.shape_cast %324 : vector<1x128x32xf32> to vector<128x32xf32>
      %c1_208 = arith.constant 1 : index
      %c0_209 = arith.constant 0 : index
      %c0_210 = arith.constant 0 : index
      %326 = vector.load %arg16[%c1_208, %c0_209, %c0_210] : memref<4x128x1xf32, #tpu.memory_space<vmem>>, vector<1x128x1xf32>
      %327 = vector.shape_cast %326 : vector<1x128x1xf32> to vector<128x1xf32>
      %328 = tpu.reciprocal %327 {approx = true} : vector<128x1xf32> -> vector<128x1xf32>
      %329 = vector.broadcast %328 : vector<128x1xf32> to vector<128x32xf32>
      %330 = arith.mulf %325, %329 : vector<128x32xf32>
      %331 = vector.broadcast %296 : f32 to vector<128x32xf32>
      %332 = arith.mulf %331, %330 : vector<128x32xf32>
      %333 = arith.subf %323, %332 : vector<128x32xf32>
      %c0_211 = arith.constant 0 : index
      %c0_212 = arith.constant 0 : index
      %c32 = arith.constant 32 : index
      %334 = vector.load %arg10[%c0_211, %c0_212, %c32] : memref<1x128x128xf32, #tpu.memory_space<vmem>>, vector<1x128x32xf32>
      %335 = vector.shape_cast %334 : vector<1x128x32xf32> to vector<128x32xf32>
      %336 = vector.shape_cast %333 : vector<128x32xf32> to vector<1x128x32xf32>
      tpu.vector_store %arg10[%c0_211, %c0_212, %c32], %336 {strides = array<i32>} : memref<1x128x128xf32, #tpu.memory_space<vmem>>, vector<1x128x32xf32>,
      %c2_213 = arith.constant 2 : index
      %c0_214 = arith.constant 0 : index
      %c0_215 = arith.constant 0 : index
      %337 = vector.load %arg14[%c2_213, %c0_214, %c0_215] : memref<4x128x32xf32, #tpu.memory_space<vmem>>, vector<1x128x32xf32>
      %338 = vector.shape_cast %337 : vector<1x128x32xf32> to vector<128x32xf32>
      %c2_216 = arith.constant 2 : index
      %c0_217 = arith.constant 0 : index
      %c0_218 = arith.constant 0 : index
      %339 = vector.load %arg13[%c2_216, %c0_217, %c0_218] : memref<4x128x1xf32, #tpu.memory_space<vmem>>, vector<1x128x1xf32>
      %340 = vector.shape_cast %339 : vector<1x128x1xf32> to vector<128x1xf32>
      %341 = tpu.reciprocal %340 {approx = true} : vector<128x1xf32> -> vector<128x1xf32>
      %342 = vector.broadcast %341 : vector<128x1xf32> to vector<128x32xf32>
      %343 = arith.mulf %338, %342 : vector<128x32xf32>
      %c2_219 = arith.constant 2 : index
      %c0_220 = arith.constant 0 : index
      %c0_221 = arith.constant 0 : index
      %344 = vector.load %arg17[%c2_219, %c0_220, %c0_221] : memref<4x128x32xf32, #tpu.memory_space<vmem>>, vector<1x128x32xf32>
      %345 = vector.shape_cast %344 : vector<1x128x32xf32> to vector<128x32xf32>
      %c2_222 = arith.constant 2 : index
      %c0_223 = arith.constant 0 : index
      %c0_224 = arith.constant 0 : index
      %346 = vector.load %arg16[%c2_222, %c0_223, %c0_224] : memref<4x128x1xf32, #tpu.memory_space<vmem>>, vector<1x128x1xf32>
      %347 = vector.shape_cast %346 : vector<1x128x1xf32> to vector<128x1xf32>
      %348 = tpu.reciprocal %347 {approx = true} : vector<128x1xf32> -> vector<128x1xf32>
      %349 = vector.broadcast %348 : vector<128x1xf32> to vector<128x32xf32>
      %350 = arith.mulf %345, %349 : vector<128x32xf32>
      %351 = vector.broadcast %296 : f32 to vector<128x32xf32>
      %352 = arith.mulf %351, %350 : vector<128x32xf32>
      %353 = arith.subf %343, %352 : vector<128x32xf32>
      %c0_225 = arith.constant 0 : index
      %c0_226 = arith.constant 0 : index
      %c64 = arith.constant 64 : index
      %354 = vector.load %arg10[%c0_225, %c0_226, %c64] : memref<1x128x128xf32, #tpu.memory_space<vmem>>, vector<1x128x32xf32>
      %355 = vector.shape_cast %354 : vector<1x128x32xf32> to vector<128x32xf32>
      %356 = vector.shape_cast %353 : vector<128x32xf32> to vector<1x128x32xf32>
      tpu.vector_store %arg10[%c0_225, %c0_226, %c64], %356 {strides = array<i32>} : memref<1x128x128xf32, #tpu.memory_space<vmem>>, vector<1x128x32xf32>,
      %c3_227 = arith.constant 3 : index
      %c0_228 = arith.constant 0 : index
      %c0_229 = arith.constant 0 : index
      %357 = vector.load %arg14[%c3_227, %c0_228, %c0_229] : memref<4x128x32xf32, #tpu.memory_space<vmem>>, vector<1x128x32xf32>
      %358 = vector.shape_cast %357 : vector<1x128x32xf32> to vector<128x32xf32>
      %c3_230 = arith.constant 3 : index
      %c0_231 = arith.constant 0 : index
      %c0_232 = arith.constant 0 : index
      %359 = vector.load %arg13[%c3_230, %c0_231, %c0_232] : memref<4x128x1xf32, #tpu.memory_space<vmem>>, vector<1x128x1xf32>
      %360 = vector.shape_cast %359 : vector<1x128x1xf32> to vector<128x1xf32>
      %361 = tpu.reciprocal %360 {approx = true} : vector<128x1xf32> -> vector<128x1xf32>
      %362 = vector.broadcast %361 : vector<128x1xf32> to vector<128x32xf32>
      %363 = arith.mulf %358, %362 : vector<128x32xf32>
      %c3_233 = arith.constant 3 : index
      %c0_234 = arith.constant 0 : index
      %c0_235 = arith.constant 0 : index
      %364 = vector.load %arg17[%c3_233, %c0_234, %c0_235] : memref<4x128x32xf32, #tpu.memory_space<vmem>>, vector<1x128x32xf32>
      %365 = vector.shape_cast %364 : vector<1x128x32xf32> to vector<128x32xf32>
      %c3_236 = arith.constant 3 : index
      %c0_237 = arith.constant 0 : index
      %c0_238 = arith.constant 0 : index
      %366 = vector.load %arg16[%c3_236, %c0_237, %c0_238] : memref<4x128x1xf32, #tpu.memory_space<vmem>>, vector<1x128x1xf32>
      %367 = vector.shape_cast %366 : vector<1x128x1xf32> to vector<128x1xf32>
      %368 = tpu.reciprocal %367 {approx = true} : vector<128x1xf32> -> vector<128x1xf32>
      %369 = vector.broadcast %368 : vector<128x1xf32> to vector<128x32xf32>
      %370 = arith.mulf %365, %369 : vector<128x32xf32>
      %371 = vector.broadcast %296 : f32 to vector<128x32xf32>
      %372 = arith.mulf %371, %370 : vector<128x32xf32>
      %373 = arith.subf %363, %372 : vector<128x32xf32>
      %c0_239 = arith.constant 0 : index
      %c0_240 = arith.constant 0 : index
      %c96 = arith.constant 96 : index
      %374 = vector.load %arg10[%c0_239, %c0_240, %c96] : memref<1x128x128xf32, #tpu.memory_space<vmem>>, vector<1x128x32xf32>
      %375 = vector.shape_cast %374 : vector<1x128x32xf32> to vector<128x32xf32>
      %376 = vector.shape_cast %373 : vector<128x32xf32> to vector<1x128x32xf32>
      tpu.vector_store %arg10[%c0_239, %c0_240, %c96], %376 {strides = array<i32>} : memref<1x128x128xf32, #tpu.memory_space<vmem>>, vector<1x128x32xf32>,
      %c0_241 = arith.constant 0 : index
      %c0_242 = arith.constant 0 : index
      %c0_243 = arith.constant 0 : index
      %377 = vector.load %arg10[%c0_241, %c0_242, %c0_243] : memref<1x128x128xf32, #tpu.memory_space<vmem>>, vector<1x128x128xf32>
      %378 = vector.shape_cast %377 : vector<1x128x128xf32> to vector<128x128xf32>
      %cst_244 = arith.constant dense<0.000000e+00> : vector<128xf32>
      %379 = vector.multi_reduction <add>, %378, %cst_244 [1] : vector<128x128xf32> to vector<128xf32>
      %380 = vector.shape_cast %379 : vector<128xf32> to vector<128x1xf32>
      %cst_245 = arith.constant 1.280000e+02 : f32
      %381 = vector.broadcast %cst_245 : f32 to vector<128x1xf32>
      %382 = arith.divf %380, %381 : vector<128x1xf32>
      %383 = vector.broadcast %382 : vector<128x1xf32> to vector<128x128xf32>
      %384 = arith.subf %378, %383 : vector<128x128xf32>
      %385 = arith.mulf %384, %384 : vector<128x128xf32>
      %cst_246 = arith.constant dense<0.000000e+00> : vector<128xf32>
      %386 = vector.multi_reduction <add>, %385, %cst_246 [1] : vector<128x128xf32> to vector<128xf32>
      %387 = vector.shape_cast %386 : vector<128xf32> to vector<128x1xf32>
      %cst_247 = arith.constant 1.280000e+02 : f32
      %388 = vector.broadcast %cst_247 : f32 to vector<128x1xf32>
      %389 = arith.divf %387, %388 : vector<128x1xf32>
      %390 = vector.broadcast %382 : vector<128x1xf32> to vector<128x128xf32>
      %391 = arith.subf %378, %390 : vector<128x128xf32>
      %cst_248 = arith.constant 9.99999974E-6 : f32
      %392 = vector.broadcast %cst_248 : f32 to vector<128x1xf32>
      %393 = arith.addf %389, %392 : vector<128x1xf32>
      %394 = math.rsqrt %393 : vector<128x1xf32>
      %395 = vector.broadcast %394 : vector<128x1xf32> to vector<128x128xf32>
      %396 = arith.mulf %391, %395 : vector<128x128xf32>
      %c0_249 = arith.constant 0 : index
      %c0_250 = arith.constant 0 : index
      %397 = vector.load %arg8[%c0_249, %c0_250] : memref<1x128xf32, #tpu.memory_space<vmem>>, vector<1x128xf32>
      %398 = vector.broadcast %397 : vector<1x128xf32> to vector<128x128xf32>
      %399 = arith.mulf %396, %398 : vector<128x128xf32>
      %c0_251 = arith.constant 0 : index
      %c0_252 = arith.constant 0 : index
      %400 = vector.load %arg9[%c0_251, %c0_252] : memref<1x128xf32, #tpu.memory_space<vmem>>, vector<1x128xf32>
      %401 = vector.broadcast %400 : vector<1x128xf32> to vector<128x128xf32>
      %402 = arith.addf %399, %401 : vector<128x128xf32>
      %cst_253 = arith.constant 1.000000e+00 : f32
      %403 = arith.subf %cst_253, %296 : f32
      %404 = vector.broadcast %403 : f32 to vector<128x128xf32>
      %405 = arith.mulf %404, %402 : vector<128x128xf32>
      %c0_254 = arith.constant 0 : index
      %c0_255 = arith.constant 0 : index
      %c0_256 = arith.constant 0 : index
      %406 = vector.load %arg10[%c0_254, %c0_255, %c0_256] : memref<1x128x128xf32, #tpu.memory_space<vmem>>, vector<1x128x128xf32>
      %407 = vector.shape_cast %406 : vector<1x128x128xf32> to vector<128x128xf32>
      %408 = vector.shape_cast %405 : vector<128x128xf32> to vector<1x128x128xf32>
      tpu.vector_store %arg10[%c0_254, %c0_255, %c0_256], %408 {strides = array<i32>} : memref<1x128x128xf32, #tpu.memory_space<vmem>>, vector<1x128x128xf32>,
    } else {
    }
    return
  }
  func.func @transform_0(%arg0: i32, %arg1: i32, %arg2: i32) -> (i32, i32) {
    %c0_i32 = arith.constant 0 : i32
    %c0_i32_0 = arith.constant 0 : i32
    %c0_i32_1 = arith.constant 0 : i32
    return %c0_i32, %c0_i32_0 : i32, i32
  }
  func.func @transform_1(%arg0: i32, %arg1: i32, %arg2: i32) -> (i32, i32, i32) {
    %c0_i32 = arith.constant 0 : i32
    %c0_i32_0 = arith.constant 0 : i32
    return %arg0, %arg1, %c0_i32 : i32, i32, i32
  }
  func.func @transform_2(%arg0: i32, %arg1: i32, %arg2: i32) -> (i32, i32, i32) {
    %c0_i32 = arith.constant 0 : i32
    %c0_i32_0 = arith.constant 0 : i32
    return %arg0, %arg2, %c0_i32 : i32, i32, i32
  }
  func.func @transform_3(%arg0: i32, %arg1: i32, %arg2: i32) -> (i32, i32) {
    %c0_i32 = arith.constant 0 : i32
    %c0_i32_0 = arith.constant 0 : i32
    %c0_i32_1 = arith.constant 0 : i32
    return %c0_i32, %c0_i32_0 : i32, i32
  }
  func.func @transform_4(%arg0: i32, %arg1: i32, %arg2: i32) -> (i32, i32) {
    %c0_i32 = arith.constant 0 : i32
    %c0_i32_0 = arith.constant 0 : i32
    %c0_i32_1 = arith.constant 0 : i32
    return %c0_i32, %c0_i32_0 : i32, i32
  }
  func.func @transform_5(%arg0: i32, %arg1: i32, %arg2: i32) -> (i32, i32) {
    %c0_i32 = arith.constant 0 : i32
    %c0_i32_0 = arith.constant 0 : i32
    %c0_i32_1 = arith.constant 0 : i32
    return %c0_i32, %c0_i32_0 : i32, i32
  }
  func.func @transform_6(%arg0: i32, %arg1: i32, %arg2: i32) -> (i32, i32) {
    %c0_i32 = arith.constant 0 : i32
    %c0_i32_0 = arith.constant 0 : i32
    %c0_i32_1 = arith.constant 0 : i32
    return %c0_i32, %c0_i32_0 : i32, i32
  }
  func.func @transform_7(%arg0: i32, %arg1: i32, %arg2: i32) -> (i32, i32, i32) {
    %c0_i32 = arith.constant 0 : i32
    %c0_i32_0 = arith.constant 0 : i32
    return %arg0, %arg1, %c0_i32 : i32, i32, i32
  }
}

</mosaic_0001>

<llo_original>
// kernel: tpu_custom_call.1
$region0: #{tpu_custom_call.1}
  #allocation0 [shape = 'u32[]', space=smem, size = 0x4, offset = 0x4, fixed_abs, tag = 'smem constant byte address 0x4 - core index']
  #allocation1 [shape = 'u32[72,128]{1,0:T(1,128)}', space=vmem, size = 0x9000, scoped, tag = 'internal scratch']
  #allocation2 [shape = 'bf16[128,256]{1,0:T(8,128)(2,1)}', space=vmem, size = 0x10000, scoped, tag = 'scratch operand']
  #allocation3 [shape = 'f32[4,128,1]{2,1,0:T(8,128)}', space=vmem, size = 0x40000, scoped, tag = 'scratch operand']
  #allocation4 [shape = 'f32[4,128,1]{2,1,0:T(8,128)}', space=vmem, size = 0x40000, scoped, tag = 'scratch operand']
  #allocation5 [shape = 'f32[4,128,32]{2,1,0:T(8,128)}', space=vmem, size = 0x40000, scoped, tag = 'scratch operand']
  #allocation6 [shape = 'f32[4,128,1]{2,1,0:T(8,128)}', space=vmem, size = 0x40000, scoped, tag = 'scratch operand']
  #allocation7 [shape = 'f32[4,128,1]{2,1,0:T(8,128)}', space=vmem, size = 0x40000, scoped, tag = 'scratch operand']
  #allocation8 [shape = 'f32[4,128,32]{2,1,0:T(8,128)}', space=vmem, size = 0x40000, scoped, tag = 'scratch operand']
  #allocation9 [shape = 'f32[1,1]{1,0:T(1,128)S(6)}', space=smem, size = 0x200, scoped, tag = 'scoped memory for tpu_custom_call.1']
  %s0 = inlined_call_operand.<no memory space> [shape: f32[1,1], index: 0, kind: input, shape index: {}]
  %s1 = inlined_call_operand.hbm [shape: bf16[2,128,128], index: 1, kind: input, shape index: {}]
  %s2 = inlined_call_operand.hbm [shape: bf16[2,128,128], index: 2, kind: input, shape index: {}]
  %s3 = inlined_call_operand.hbm [shape: bf16[128,256], index: 3, kind: input, shape index: {}]
  %s4 = inlined_call_operand.hbm [shape: bf16[128,384], index: 4, kind: input, shape index: {}]
  %s5 = inlined_call_operand.vmem [shape: f32[1,128], index: 5, kind: input, shape index: {}]
  %s6 = inlined_call_operand.vmem [shape: f32[1,128], index: 6, kind: input, shape index: {}]
  %s7 = inlined_call_operand.hbm [shape: f32[2,128,128], index: 7, kind: output, shape index: {}]
  %s8 = sld [smem:[#allocation0]]
  $region85: #{tpu_custom_call.1} parent=0
    _
  %s10 = ssub.s32 1, %s8
  %s11 = scalar_select 0, %s10, %s8
  %12 = sst [smem:[#allocation9]] %s0
  $region1: #{tpu_custom_call.1} parent=0
    #allocation10 [shape = 'u8[65536]{0}', space=vmem, size = 0x10000, scoped, tag = 'input window, operand 1']
    #allocation11 [shape = 's32[2]{0}', space=sflag, size = 0x8, scoped, tag = 'scoped memory for tpu_custom_call.1']
    #allocation12 [shape = 's32[2]{0}', space=sflag, size = 0x8, scoped, tag = 'scoped memory for tpu_custom_call.1']
    #allocation13 [shape = 'u8[65536]{0}', space=vmem, size = 0x10000, scoped, tag = 'input window, operand 2']
    #allocation14 [shape = 's32[2]{0}', space=sflag, size = 0x8, scoped, tag = 'scoped memory for tpu_custom_call.1']
    #allocation15 [shape = 'u8[65536]{0}', space=vmem, size = 0x10000, scoped, tag = 'input window, operand 3, single buffered']
    #allocation16 [shape = 'u8[98304]{0}', space=vmem, size = 0x18000, scoped, tag = 'input window, operand 4, single buffered']
    #allocation17 [shape = 's32[1]{0}', space=sflag, size = 0x4, scoped, tag = 'scoped memory for tpu_custom_call.1']
    #allocation18 [shape = 'u8[131072]{0}', space=vmem, size = 0x20000, scoped, tag = 'output window, operand 0']
    %13 = vsyncpa [#allocation11], 0
    %s14 = scalar_lea.sflag [#allocation11], 1
    %15 = vsyncpa %s14, 0
    %16 = vsyncpa [#allocation14], 0
    %s17 = scalar_lea.sflag [#allocation14], 1
    %18 = vsyncpa %s17, 0
    %19 = vsyncpa [#allocation17], 0
    %20 = vsyncpa [#allocation12], 0
    %s21 = scalar_lea.sflag [#allocation12], 1
    %22 = vsyncpa %s21, 0
    loop: start=0, step=1, limit=4
    $region2: #{tpu_custom_call.1} parent=1 // loop_pre_header
      _
    $region3: #{tpu_custom_call.1} parent=1 // loop_header
      %s24 = sphi 0, %s28
      %p25 = scmp.ge.s32.totalorder %s24, 4
      %s31 = sphi 0, %s50
      %s32 = sphi 0, %s46
      %s33 = sphi 0, %s42
      %s34 = sphi 0, %s31
      %s35 = sphi 0, %s32
      %s36 = sphi 0, %s33
      %s37 = sphi 0, %s34
      %s38 = sphi 0, %s35
      %s39 = sphi 0, %s36
      %s51 = sphi 0, %s51
      %s53 = sphi 0, %s51
      %s54 = sphi 0, %s53
      %s68 = sphi 0, %s54
      %s76 = sphi 0, %s78
      %s79 = sphi 0, %s76
      %s80 = sphi 0, %s79
      %s96 = sphi 0, %s80
      %s104 = sphi 0, %s106
      %s107 = sphi 0, %s104
      %s108 = sphi 0, %s107
      %s124 = sphi 0, %s108
      %s128 = sphi 0, %s128
      %s130 = sphi 0, %s128
      %s131 = sphi 0, %s130
      %s145 = sphi 0, %s131
      %s149 = sphi 0, %s149
      %s151 = sphi 0, %s149
      %s152 = sphi 0, %s151
      %s166 = sphi 0, %s152
      %s170 = sphi 0, %s170
      %s172 = sphi 0, %s170
      %s173 = sphi 0, %s172
      %s187 = sphi 0, %s173
      %s191 = sphi 0, %s191
      %s193 = sphi 0, %s191
      %s194 = sphi 0, %s193
      %s208 = sphi 0, %s194
      %s216 = sphi 0, %s218
      %s219 = sphi 0, %s216
      %s220 = sphi 0, %s219
      %s236 = sphi 0, %s220
    $region4: #{tpu_custom_call.1} parent=1 // loop_header_branch
      %27 = sbr.rel (%p25) target = $region8
    $region5: #{tpu_custom_call.1} parent=1 // loop_body
      %s29 = ssub.s32 %s24, 1
      %s30 = ssub.s32 %s24, 2
      %s40 = sadd.s32 1, %s33
      %p41 = scmp.ge.s32.totalorder %s40, 1
      %s42 = scalar_select %p41, 0, %s40
      %s43 = sadd.s32 1, %s32
      %s44 = scalar_select %p41, %s43, %s32
      %p45 = scmp.ge.s32.totalorder %s44, 1
      %s46 = scalar_select %p45, 0, %s44
      %s47 = sadd.s32 1, %s31
      %s48 = scalar_select %p45, %s47, %s31
      %p49 = scmp.ge.s32.totalorder %s48, 2
      %s50 = scalar_select %p49, 0, %s48
      %s52 = sadd.s32 %s51, 1
      %p55 = scmp.eq.s32.totalorder %s24, 1
      %p56 = scmp.ne.s32.totalorder %s51, %s53
      %p57 = scmp.eq.s32.totalorder %s24, 0
      %p58 = por %p56, %p57
      %p59 = scmp.ne.s32.totalorder %s51, %s53
      %p60 = scmp.eq.s32.totalorder %s29, 1
      %p61 = por %p59, %p60
      %p62 = scmp.ne.s32.totalorder %s53, %s54
      %p63 = scmp.eq.s32.totalorder %s29, 0
      %p64 = por %p62, %p63
      %p65 = scmp.ne.s32.totalorder %s53, %s54
      %p66 = scmp.eq.s32.totalorder %s30, 1
      %p67 = por %p65, %p66
      %p69 = scmp.ne.s32.totalorder %s54, %s68
      %p70 = scmp.eq.s32.totalorder %s30, 0
      %p71 = por %p69, %p70
      %s72 = ssub.s32 %s31, %s50
      %s73 = ssub.s32 %s32, %s46
      %s74 = sor.u32 %s72, %s73
      %p75 = scmp.eq.s32.totalorder %s74, 0
      %s77 = sadd.s32 %s76, 1
      %s78 = scalar_select %p75, %s76, %s77
      %p81 = pneg %p75
      %p82 = scmp.eq.s32.totalorder %s24, 1
      %p83 = por %p81, %p82
      %p84 = scmp.ne.s32.totalorder %s76, %s79
      %p85 = scmp.eq.s32.totalorder %s24, 0
      %p86 = por %p84, %p85
      %p87 = scmp.ne.s32.totalorder %s76, %s79
      %p88 = scmp.eq.s32.totalorder %s29, 1
      %p89 = por %p87, %p88
      %p90 = scmp.ne.s32.totalorder %s79, %s80
      %p91 = scmp.eq.s32.totalorder %s29, 0
      %p92 = por %p90, %p91
      %p93 = scmp.ne.s32.totalorder %s79, %s80
      %p94 = scmp.eq.s32.totalorder %s30, 1
      %p95 = por %p93, %p94
      %p97 = scmp.ne.s32.totalorder %s80, %s96
      %p98 = scmp.eq.s32.totalorder %s30, 0
      %p99 = por %p97, %p98
      %s100 = ssub.s32 %s31, %s50
      %s101 = ssub.s32 %s33, %s42
      %s102 = sor.u32 %s100, %s101
      %p103 = scmp.eq.s32.totalorder %s102, 0
      %s105 = sadd.s32 %s104, 1
      %s106 = scalar_select %p103, %s104, %s105
      %p109 = pneg %p103
      %p110 = scmp.eq.s32.totalorder %s24, 1
      %p111 = por %p109, %p110
      %p112 = scmp.ne.s32.totalorder %s104, %s107
      %p113 = scmp.eq.s32.totalorder %s24, 0
      %p114 = por %p112, %p113
      %p115 = scmp.ne.s32.totalorder %s104, %s107
      %p116 = scmp.eq.s32.totalorder %s29, 1
      %p117 = por %p115, %p116
      %p118 = scmp.ne.s32.totalorder %s107, %s108
      %p119 = scmp.eq.s32.totalorder %s29, 0
      %p120 = por %p118, %p119
      %p121 = scmp.ne.s32.totalorder %s107, %s108
      %p122 = scmp.eq.s32.totalorder %s30, 1
      %p123 = por %p121, %p122
      %p125 = scmp.ne.s32.totalorder %s108, %s124
      %p126 = scmp.eq.s32.totalorder %s30, 0
      %p127 = por %p125, %p126
      %s129 = sadd.s32 %s128, 1
      %p132 = scmp.eq.s32.totalorder %s24, 1
      %p133 = scmp.ne.s32.totalorder %s128, %s130
      %p134 = scmp.eq.s32.totalorder %s24, 0
      %p135 = por %p133, %p134
      %p136 = scmp.ne.s32.totalorder %s128, %s130
      %p137 = scmp.eq.s32.totalorder %s29, 1
      %p138 = por %p136, %p137
      %p139 = scmp.ne.s32.totalorder %s130, %s131
      %p140 = scmp.eq.s32.totalorder %s29, 0
      %p141 = por %p139, %p140
      %p142 = scmp.ne.s32.totalorder %s130, %s131
      %p143 = scmp.eq.s32.totalorder %s30, 1
      %p144 = por %p142, %p143
      %p146 = scmp.ne.s32.totalorder %s131, %s145
      %p147 = scmp.eq.s32.totalorder %s30, 0
      %p148 = por %p146, %p147
      %s150 = sadd.s32 %s149, 1
      %p153 = scmp.eq.s32.totalorder %s24, 1
      %p154 = scmp.ne.s32.totalorder %s149, %s151
      %p155 = scmp.eq.s32.totalorder %s24, 0
      %p156 = por %p154, %p155
      %p157 = scmp.ne.s32.totalorder %s149, %s151
      %p158 = scmp.eq.s32.totalorder %s29, 1
      %p159 = por %p157, %p158
      %p160 = scmp.ne.s32.totalorder %s151, %s152
      %p161 = scmp.eq.s32.totalorder %s29, 0
      %p162 = por %p160, %p161
      %p163 = scmp.ne.s32.totalorder %s151, %s152
      %p164 = scmp.eq.s32.totalorder %s30, 1
      %p165 = por %p163, %p164
      %p167 = scmp.ne.s32.totalorder %s152, %s166
      %p168 = scmp.eq.s32.totalorder %s30, 0
      %p169 = por %p167, %p168
      %s171 = sadd.s32 %s170, 1
      %p174 = scmp.eq.s32.totalorder %s24, 1
      %p175 = scmp.ne.s32.totalorder %s170, %s172
      %p176 = scmp.eq.s32.totalorder %s24, 0
      %p177 = por %p175, %p176
      %p178 = scmp.ne.s32.totalorder %s170, %s172
      %p179 = scmp.eq.s32.totalorder %s29, 1
      %p180 = por %p178, %p179
      %p181 = scmp.ne.s32.totalorder %s172, %s173
      %p182 = scmp.eq.s32.totalorder %s29, 0
      %p183 = por %p181, %p182
      %p184 = scmp.ne.s32.totalorder %s172, %s173
      %p185 = scmp.eq.s32.totalorder %s30, 1
      %p186 = por %p184, %p185
      %p188 = scmp.ne.s32.totalorder %s173, %s187
      %p189 = scmp.eq.s32.totalorder %s30, 0
      %p190 = por %p188, %p189
      %s192 = sadd.s32 %s191, 1
      %p195 = scmp.eq.s32.totalorder %s24, 1
      %p196 = scmp.ne.s32.totalorder %s191, %s193
      %p197 = scmp.eq.s32.totalorder %s24, 0
      %p198 = por %p196, %p197
      %p199 = scmp.ne.s32.totalorder %s191, %s193
      %p200 = scmp.eq.s32.totalorder %s29, 1
      %p201 = por %p199, %p200
      %p202 = scmp.ne.s32.totalorder %s193, %s194
      %p203 = scmp.eq.s32.totalorder %s29, 0
      %p204 = por %p202, %p203
      %p205 = scmp.ne.s32.totalorder %s193, %s194
      %p206 = scmp.eq.s32.totalorder %s30, 1
      %p207 = por %p205, %p206
      %p209 = scmp.ne.s32.totalorder %s194, %s208
      %p210 = scmp.eq.s32.totalorder %s30, 0
      %p211 = por %p209, %p210
      %s212 = ssub.s32 %s31, %s50
      %s213 = ssub.s32 %s32, %s46
      %s214 = sor.u32 %s212, %s213
      %p215 = scmp.eq.s32.totalorder %s214, 0
      %s217 = sadd.s32 %s216, 1
      %s218 = scalar_select %p215, %s216, %s217
      %p221 = pneg %p215
      %p222 = scmp.eq.s32.totalorder %s24, 1
      %p223 = por %p221, %p222
      %p224 = scmp.ne.s32.totalorder %s216, %s219
      %p225 = scmp.eq.s32.totalorder %s24, 0
      %p226 = por %p224, %p225
      %p227 = scmp.ne.s32.totalorder %s216, %s219
      %p228 = scmp.eq.s32.totalorder %s29, 1
      %p229 = por %p227, %p228
      %p230 = scmp.ne.s32.totalorder %s219, %s220
      %p231 = scmp.eq.s32.totalorder %s29, 0
      %p232 = por %p230, %p231
      %p233 = scmp.ne.s32.totalorder %s219, %s220
      %p234 = scmp.eq.s32.totalorder %s30, 1
      %p235 = por %p233, %p234
      %p237 = scmp.ne.s32.totalorder %s220, %s236
      %p238 = scmp.eq.s32.totalorder %s30, 0
      %p239 = por %p237, %p238
      %p240 = scmp.le.s32.totalorder 1, %s24
      %p241 = scmp.lt.s32.totalorder %s24, 3
      %p242 = pnand %p240, %p241
      %p243 = pneg %p242
      // Predicated region
      $region9: #{tpu_custom_call.1} parent=5 // pred_check
        _
      $region10: #{tpu_custom_call.1} parent=5 // pred_check_branch
        %245 = sbr.rel (%p242) target = $region12
      $region11: #{tpu_custom_call.1} parent=5 // pred_region
        %s246 = ssub.s32 %s24, 1
        // Predicated region
        $region13: #{tpu_custom_call.1} parent=11 // pred_check
          %p247 = pneg %p64
        $region14: #{tpu_custom_call.1} parent=11 // pred_check_branch
          %249 = sbr.rel (%p247) target = $region16
        $region15: #{tpu_custom_call.1} parent=11 // pred_region
          _
        $region16: #{tpu_custom_call.1} parent=11 // pred_fallthru
          _
        // Predicated region
        $region17: #{tpu_custom_call.1} parent=11 // pred_check
          %p250 = pneg %p141
        $region18: #{tpu_custom_call.1} parent=11 // pred_check_branch
          %252 = sbr.rel (%p250) target = $region20
        $region19: #{tpu_custom_call.1} parent=11 // pred_region
          %254 = vsyncadd [#allocation14], 0
          %s255 = sshll.u32 %s3, 4
          %s256 = int_to_ptr.hbm [resolvable:$true] %s255
          %s257 = sshll.u32 [#allocation15], 4
          %s258 = int_to_ptr.vmem [resolvable:$true] %s257
          %263 = dma.hbm_to_vmem [thread:$0]  %s256, 2048, %s258, [#allocation14], 128, 128, 8
        $region20: #{tpu_custom_call.1} parent=11 // pred_fallthru
          _
        // Predicated region
        $region21: #{tpu_custom_call.1} parent=11 // pred_check
          %p264 = pneg %p162
        $region22: #{tpu_custom_call.1} parent=11 // pred_check_branch
          %266 = sbr.rel (%p264) target = $region24
        $region23: #{tpu_custom_call.1} parent=11 // pred_region
          %268 = vsyncadd [#allocation17], 0
          %s269 = sshll.u32 %s4, 4
          %s270 = int_to_ptr.hbm [resolvable:$true] %s269
          %s271 = sshll.u32 [#allocation16], 4
          %s272 = int_to_ptr.vmem [resolvable:$true] %s271
          %277 = dma.hbm_to_vmem [thread:$0]  %s270, 3072, %s272, [#allocation17], 192, 192, 12
        $region24: #{tpu_custom_call.1} parent=11 // pred_fallthru
          _
        // Predicated region
        $region25: #{tpu_custom_call.1} parent=11 // pred_check
          %p278 = pneg %p183
        $region26: #{tpu_custom_call.1} parent=11 // pred_check_branch
          %280 = sbr.rel (%p278) target = $region28
        $region27: #{tpu_custom_call.1} parent=11 // pred_region
          _
        $region28: #{tpu_custom_call.1} parent=11 // pred_fallthru
          _
        // Predicated region
        $region29: #{tpu_custom_call.1} parent=11 // pred_check
          %p281 = pneg %p204
        $region30: #{tpu_custom_call.1} parent=11 // pred_check_branch
          %283 = sbr.rel (%p281) target = $region32
        $region31: #{tpu_custom_call.1} parent=11 // pred_region
          _
        $region32: #{tpu_custom_call.1} parent=11 // pred_fallthru
          _
      $region12: #{tpu_custom_call.1} parent=5 // pred_fallthru
        _
      %p284 = scmp.lt.s32.totalorder %s24, 2
      // Predicated region
      $region33: #{tpu_custom_call.1} parent=5 // pred_check
        %p285 = pneg %p284
      $region34: #{tpu_custom_call.1} parent=5 // pred_check_branch
        %287 = sbr.rel (%p285) target = $region36
      $region35: #{tpu_custom_call.1} parent=5 // pred_region
        // Predicated region
        $region37: #{tpu_custom_call.1} parent=35 // pred_check
          %p288 = pneg %p86
        $region38: #{tpu_custom_call.1} parent=35 // pred_check_branch
          %290 = sbr.rel (%p288) target = $region40
        $region39: #{tpu_custom_call.1} parent=35 // pred_region
          %s291 = sand.u32 %s76, 1
          %s292 = scalar_lea.sflag [#allocation11], %s291
          %s293 = sand.u32 %s76, 1
          %s294 = smul.addr %s293, 64
          %s295 = scalar_lea.vmem [#allocation10], %s294
          %s296 = smul.u32 16, %s32
          %298 = vsyncadd %s292, 0
          %s299 = smul.addr %s31, 16
          %s300 = sadd.s32 %s296, %s299
          %s301 = smul.addr %s300, 4
          %s302 = scalar_lea.hbm %s1, %s301
          %s303 = sshll.u32 %s302, 4
          %s304 = int_to_ptr.hbm [resolvable:$true] %s303
          %s305 = sshll.u32 %s295, 4
          %s306 = int_to_ptr.vmem [resolvable:$true] %s305
          %311 = dma.hbm_to_vmem [thread:$0]  %s304, 1024, %s306, %s292, 64, 64, 4
        $region40: #{tpu_custom_call.1} parent=35 // pred_fallthru
          _
        // Predicated region
        $region41: #{tpu_custom_call.1} parent=35 // pred_check
          %p312 = pneg %p114
        $region42: #{tpu_custom_call.1} parent=35 // pred_check_branch
          %314 = sbr.rel (%p312) target = $region44
        $region43: #{tpu_custom_call.1} parent=35 // pred_region
          %s315 = sand.u32 %s24, 1
          %s316 = scalar_lea.sflag [#allocation14], %s315
          %s317 = sand.u32 %s104, 1
          %s318 = smul.addr %s317, 64
          %s319 = scalar_lea.vmem [#allocation13], %s318
          %s320 = smul.u32 16, %s33
          %322 = vsyncadd %s316, 0
          %s323 = smul.addr %s31, 16
          %s324 = sadd.s32 %s320, %s323
          %s325 = smul.addr %s324, 4
          %s326 = scalar_lea.hbm %s2, %s325
          %s327 = sshll.u32 %s326, 4
          %s328 = int_to_ptr.hbm [resolvable:$true] %s327
          %s329 = sshll.u32 %s319, 4
          %s330 = int_to_ptr.vmem [resolvable:$true] %s329
          %335 = dma.hbm_to_vmem [thread:$0]  %s328, 1024, %s330, %s316, 64, 64, 4
        $region44: #{tpu_custom_call.1} parent=35 // pred_fallthru
          _
      $region36: #{tpu_custom_call.1} parent=5 // pred_fallthru
        _
      %p336 = scmp.le.s32.totalorder 1, %s24
      %p337 = scmp.lt.s32.totalorder %s24, 3
      %p338 = pnand %p336, %p337
      %p339 = pneg %p338
      // Predicated region
      $region45: #{tpu_custom_call.1} parent=5 // pred_check
        _
      $region46: #{tpu_custom_call.1} parent=5 // pred_check_branch
        %341 = sbr.rel (%p338) target = $region48
      $region47: #{tpu_custom_call.1} parent=5 // pred_region
        %s342 = ssub.s32 %s24, 1
        %s343 = sand.u32 %s79, 1
        %s344 = scalar_lea.sflag [#allocation11], %s343
        %s345 = sand.u32 %s79, 1
        %s346 = smul.addr %s345, 64
        %s347 = scalar_lea.vmem [#allocation10], %s346
        // Predicated region
        $region49: #{tpu_custom_call.1} parent=47 // pred_check
          %p348 = pneg %p92
        $region50: #{tpu_custom_call.1} parent=47 // pred_check_branch
          %350 = sbr.rel (%p348) target = $region52
        $region51: #{tpu_custom_call.1} parent=47 // pred_region
          %352 = dma.done %s344, 1024
        $region52: #{tpu_custom_call.1} parent=47 // pred_fallthru
          _
        %s353 = sand.u32 %s29, 1
        %s354 = scalar_lea.sflag [#allocation14], %s353
        %s355 = sand.u32 %s107, 1
        %s356 = smul.addr %s355, 64
        %s357 = scalar_lea.vmem [#allocation13], %s356
        // Predicated region
        $region53: #{tpu_custom_call.1} parent=47 // pred_check
          %p358 = pneg %p120
        $region54: #{tpu_custom_call.1} parent=47 // pred_check_branch
          %360 = sbr.rel (%p358) target = $region56
        $region55: #{tpu_custom_call.1} parent=47 // pred_region
          %362 = dma.done %s354, 1024
        $region56: #{tpu_custom_call.1} parent=47 // pred_fallthru
          _
        // Predicated region
        $region57: #{tpu_custom_call.1} parent=47 // pred_check
          %p363 = pneg %p141
        $region58: #{tpu_custom_call.1} parent=47 // pred_check_branch
          %365 = sbr.rel (%p363) target = $region60
        $region59: #{tpu_custom_call.1} parent=47 // pred_region
          %367 = dma.done [#allocation14], 2048
        $region60: #{tpu_custom_call.1} parent=47 // pred_fallthru
          _
        // Predicated region
        $region61: #{tpu_custom_call.1} parent=47 // pred_check
          %p368 = pneg %p162
        $region62: #{tpu_custom_call.1} parent=47 // pred_check_branch
          %370 = sbr.rel (%p368) target = $region64
        $region63: #{tpu_custom_call.1} parent=47 // pred_region
          %372 = dma.done [#allocation17], 3072
        $region64: #{tpu_custom_call.1} parent=47 // pred_fallthru
          _
        %p373 = pneg %p64
        %p374 = pneg %p61
        %s375 = sand.u32 %s79, 1
        %s376 = scalar_lea.sflag [#allocation11], %s375
        %s377 = sand.u32 %s79, 1
        %s378 = smul.addr %s377, 64
        %s379 = scalar_lea.vmem [#allocation10], %s378
        %p380 = pneg %p92
        %p381 = pneg %p89
        %s382 = sand.u32 %s29, 1
        %s383 = scalar_lea.sflag [#allocation14], %s382
        %s384 = sand.u32 %s107, 1
        %s385 = smul.addr %s384, 64
        %s386 = scalar_lea.vmem [#allocation13], %s385
        %p387 = pneg %p120
        %p388 = pneg %p117
        %p389 = pneg %p141
        %p390 = pneg %p138
        %p391 = pneg %p162
        %p392 = pneg %p159
        %p393 = pneg %p183
        %p394 = pneg %p180
        %p395 = pneg %p204
        %p396 = pneg %p201
        %p397 = pneg %p232
        %p398 = pneg %p229
        %s399 = sand.u32 %s219, 1
        %s400 = scalar_lea.sflag [#allocation12], %s399
        %s401 = sand.u32 %s219, 1
        %s402 = smul.addr %s401, 128
        %s403 = scalar_lea.vmem [#allocation18], %s402
        %s404 = smul.u32 16, %s35
        %s405 = smul.u32 16, %s36
        %s406 = smul.u32 16, %s35
        %p407 = scmp.eq.s32.totalorder %s36, 0
        // Predicated region
        $region65: #{tpu_custom_call.1} parent=47 // pred_check
          %p408 = pneg %p407
        $region66: #{tpu_custom_call.1} parent=47 // pred_check_branch
          %410 = sbr.rel (%p408) target = $region68
        $region67: #{tpu_custom_call.1} parent=47 // pred_region
          %v411 = vld [vmem:[%s347] sm:$0xf]
          %v412 = vld [vmem:[%s347 + $0x4] sm:$0xf]
          %v413 = vld [vmem:[%s347 + $0x8] sm:$0xf]
          %v414 = vld [vmem:[%s347 + $0xc] sm:$0xf]
          %v415 = vld [vmem:[%s347 + $0x10] sm:$0xf]
          %v416 = vld [vmem:[%s347 + $0x14] sm:$0xf]
          %v417 = vld [vmem:[%s347 + $0x18] sm:$0xf]
          %v418 = vld [vmem:[%s347 + $0x1c] sm:$0xf]
          %v419 = vld [vmem:[%s347 + $0x20] sm:$0xf]
          %v420 = vld [vmem:[%s347 + $0x24] sm:$0xf]
          %v421 = vld [vmem:[%s347 + $0x28] sm:$0xf]
          %v422 = vld [vmem:[%s347 + $0x2c] sm:$0xf]
          %v423 = vld [vmem:[%s347 + $0x30] sm:$0xf]
          %v424 = vld [vmem:[%s347 + $0x34] sm:$0xf]
          %v425 = vld [vmem:[%s347 + $0x38] sm:$0xf]
          %v426 = vld [vmem:[%s347 + $0x3c] sm:$0xf]
          %v427 = vld [vmem:[#allocation15] sm:$0xff]
          %v428 = vld [vmem:[#allocation15 + $0x8] sm:$0xff]
          %v429 = vld [vmem:[#allocation15 + $0x10] sm:$0xff]
          %v430 = vld [vmem:[#allocation15 + $0x18] sm:$0xff]
          %v431 = vld [vmem:[#allocation15 + $0x20] sm:$0xff]
          %v432 = vld [vmem:[#allocation15 + $0x28] sm:$0xff]
          %v433 = vld [vmem:[#allocation15 + $0x30] sm:$0xff]
          %v434 = vld [vmem:[#allocation15 + $0x38] sm:$0xff]
          %v435 = vld [vmem:[#allocation15 + $0x40] sm:$0xff]
          %v436 = vld [vmem:[#allocation15 + $0x48] sm:$0xff]
          %v437 = vld [vmem:[#allocation15 + $0x50] sm:$0xff]
          %v438 = vld [vmem:[#allocation15 + $0x58] sm:$0xff]
          %v439 = vld [vmem:[#allocation15 + $0x60] sm:$0xff]
          %v440 = vld [vmem:[#allocation15 + $0x68] sm:$0xff]
          %v441 = vld [vmem:[#allocation15 + $0x70] sm:$0xff]
          %v442 = vld [vmem:[#allocation15 + $0x78] sm:$0xff]
          %v459 = vunpack.c.l.b16 %v411
          %v460 = vunpack.c.l.b16 %v412
          %v461 = vunpack.c.l.b16 %v413
          %v462 = vunpack.c.l.b16 %v414
          %v463 = vunpack.c.l.b16 %v415
          %v464 = vunpack.c.l.b16 %v416
          %v465 = vunpack.c.l.b16 %v417
          %v466 = vunpack.c.l.b16 %v418
          %v467 = vunpack.c.l.b16 %v419
          %v468 = vunpack.c.l.b16 %v420
          %v469 = vunpack.c.l.b16 %v421
          %v470 = vunpack.c.l.b16 %v422
          %v471 = vunpack.c.l.b16 %v423
          %v472 = vunpack.c.l.b16 %v424
          %v473 = vunpack.c.l.b16 %v425
          %v474 = vunpack.c.l.b16 %v426
          %v475 = vpack.c.b16 %v460, %v459
          %v476 = vpack.c.b16 %v462, %v461
          %v477 = vpack.c.b16 %v464, %v463
          %v478 = vpack.c.b16 %v466, %v465
          %v479 = vpack.c.b16 %v468, %v467
          %v480 = vpack.c.b16 %v470, %v469
          %v481 = vpack.c.b16 %v472, %v471
          %v482 = vpack.c.b16 %v474, %v473
          %v507 = vunpack.c.l.b16 %v427
          %v508 = vunpack.c.h.b16 %v427
          %v509 = vunpack.c.l.b16 %v428
          %v510 = vunpack.c.h.b16 %v428
          %v511 = vunpack.c.l.b16 %v429
          %v512 = vunpack.c.h.b16 %v429
          %v513 = vunpack.c.l.b16 %v430
          %v514 = vunpack.c.h.b16 %v430
          %v515 = vunpack.c.l.b16 %v431
          %v516 = vunpack.c.h.b16 %v431
          %v517 = vunpack.c.l.b16 %v432
          %v518 = vunpack.c.h.b16 %v432
          %v519 = vunpack.c.l.b16 %v433
          %v520 = vunpack.c.h.b16 %v433
          %v521 = vunpack.c.l.b16 %v434
          %v522 = vunpack.c.h.b16 %v434
          %v523 = vunpack.c.l.b16 %v435
          %v524 = vunpack.c.h.b16 %v435
          %v525 = vunpack.c.l.b16 %v436
          %v526 = vunpack.c.h.b16 %v436
          %v527 = vunpack.c.l.b16 %v437
          %v528 = vunpack.c.h.b16 %v437
          %v529 = vunpack.c.l.b16 %v438
          %v530 = vunpack.c.h.b16 %v438
          %v531 = vunpack.c.l.b16 %v439
          %v532 = vunpack.c.h.b16 %v439
          %v533 = vunpack.c.l.b16 %v440
          %v534 = vunpack.c.h.b16 %v440
          %v535 = vunpack.c.l.b16 %v441
          %v536 = vunpack.c.h.b16 %v441
          %v537 = vunpack.c.l.b16 %v442
          %v538 = vunpack.c.h.b16 %v442
          %v539 = vpack.c.b16 %v509, %v507
          %v540 = vpack.c.b16 %v510, %v508
          %v541 = vpack.c.b16 %v513, %v511
          %v542 = vpack.c.b16 %v514, %v512
          %v543 = vpack.c.b16 %v517, %v515
          %v544 = vpack.c.b16 %v518, %v516
          %v545 = vpack.c.b16 %v521, %v519
          %v546 = vpack.c.b16 %v522, %v520
          %v547 = vpack.c.b16 %v525, %v523
          %v548 = vpack.c.b16 %v526, %v524
          %v549 = vpack.c.b16 %v529, %v527
          %v550 = vpack.c.b16 %v530, %v528
          %v551 = vpack.c.b16 %v533, %v531
          %v552 = vpack.c.b16 %v534, %v532
          %v553 = vpack.c.b16 %v537, %v535
          %v554 = vpack.c.b16 %v538, %v536
          %571 = vmatpush.bf16.msra.mxu0 %v553
          %572 = vmatpush.bf16.msra.mxu0 %v551
          %573 = vmatpush.bf16.msra.mxu0 %v549
          %574 = vmatpush.bf16.msra.mxu0 %v547
          %575 = vmatpush.bf16.msra.mxu0 %v545
          %576 = vmatpush.bf16.msra.mxu0 %v543
          %577 = vmatpush.bf16.msra.mxu0 %v541
          %578 = vmatpush.bf16.msra.mxu0 %v539
          %579 = vmatmul.bf16.gmra.mxu0 %v475
          %v580 = vpop.f32.mrf.mxu0
          %v581 = vadd.f32 0.0, %v580
          %v582 = vpop.f32.mrf.mxu0
          %v583 = vadd.f32 0.0, %v582
          %584 = vmatmul.bf16.gmra.mxu0 %v476
          %v585 = vpop.f32.mrf.mxu0
          %v586 = vadd.f32 0.0, %v585
          %v587 = vpop.f32.mrf.mxu0
          %v588 = vadd.f32 0.0, %v587
          %589 = vmatmul.bf16.gmra.mxu0 %v477
          %v590 = vpop.f32.mrf.mxu0
          %v591 = vadd.f32 0.0, %v590
          %v592 = vpop.f32.mrf.mxu0
          %v593 = vadd.f32 0.0, %v592
          %594 = vmatmul.bf16.gmra.mxu0 %v478
          %v595 = vpop.f32.mrf.mxu0
          %v596 = vadd.f32 0.0, %v595
          %v597 = vpop.f32.mrf.mxu0
          %v598 = vadd.f32 0.0, %v597
          %599 = vmatmul.bf16.gmra.mxu0 %v479
          %v600 = vpop.f32.mrf.mxu0
          %v601 = vadd.f32 0.0, %v600
          %v602 = vpop.f32.mrf.mxu0
          %v603 = vadd.f32 0.0, %v602
          %604 = vmatmul.bf16.gmra.mxu0 %v480
          %v605 = vpop.f32.mrf.mxu0
          %v606 = vadd.f32 0.0, %v605
          %v607 = vpop.f32.mrf.mxu0
          %v608 = vadd.f32 0.0, %v607
          %609 = vmatmul.bf16.gmra.mxu0 %v481
          %v610 = vpop.f32.mrf.mxu0
          %v611 = vadd.f32 0.0, %v610
          %v612 = vpop.f32.mrf.mxu0
          %v613 = vadd.f32 0.0, %v612
          %614 = vmatmul.bf16.gmra.mxu0 %v482
          %v615 = vpop.f32.mrf.mxu0
          %v616 = vadd.f32 0.0, %v615
          %v617 = vpop.f32.mrf.mxu0
          %v618 = vadd.f32 0.0, %v617
          %619 = vdwg.mxu0
          %620 = vmatpush.bf16.msra.mxu0 %v554
          %621 = vmatpush.bf16.msra.mxu0 %v552
          %622 = vmatpush.bf16.msra.mxu0 %v550
          %623 = vmatpush.bf16.msra.mxu0 %v548
          %624 = vmatpush.bf16.msra.mxu0 %v546
          %625 = vmatpush.bf16.msra.mxu0 %v544
          %626 = vmatpush.bf16.msra.mxu0 %v542
          %627 = vmatpush.bf16.msra.mxu0 %v540
          %628 = vmatmul.bf16.gmra.mxu0 %v475
          %v629 = vpop.f32.mrf.mxu0
          %v630 = vadd.f32 0.0, %v629
          %v631 = vpop.f32.mrf.mxu0
          %v632 = vadd.f32 0.0, %v631
          %633 = vmatmul.bf16.gmra.mxu0 %v476
          %v634 = vpop.f32.mrf.mxu0
          %v635 = vadd.f32 0.0, %v634
          %v636 = vpop.f32.mrf.mxu0
          %v637 = vadd.f32 0.0, %v636
          %638 = vmatmul.bf16.gmra.mxu0 %v477
          %v639 = vpop.f32.mrf.mxu0
          %v640 = vadd.f32 0.0, %v639
          %v641 = vpop.f32.mrf.mxu0
          %v642 = vadd.f32 0.0, %v641
          %643 = vmatmul.bf16.gmra.mxu0 %v478
          %v644 = vpop.f32.mrf.mxu0
          %v645 = vadd.f32 0.0, %v644
          %v646 = vpop.f32.mrf.mxu0
          %v647 = vadd.f32 0.0, %v646
          %648 = vmatmul.bf16.gmra.mxu0 %v479
          %v649 = vpop.f32.mrf.mxu0
          %v650 = vadd.f32 0.0, %v649
          %v651 = vpop.f32.mrf.mxu0
          %v652 = vadd.f32 0.0, %v651
          %653 = vmatmul.bf16.gmra.mxu0 %v480
          %v654 = vpop.f32.mrf.mxu0
          %v655 = vadd.f32 0.0, %v654
          %v656 = vpop.f32.mrf.mxu0
          %v657 = vadd.f32 0.0, %v656
          %658 = vmatmul.bf16.gmra.mxu0 %v481
          %v659 = vpop.f32.mrf.mxu0
          %v660 = vadd.f32 0.0, %v659
          %v661 = vpop.f32.mrf.mxu0
          %v662 = vadd.f32 0.0, %v661
          %663 = vmatmul.bf16.gmra.mxu0 %v482
          %v664 = vpop.f32.mrf.mxu0
          %v665 = vadd.f32 0.0, %v664
          %v666 = vpop.f32.mrf.mxu0
          %v667 = vadd.f32 0.0, %v666
          %668 = vdwg.mxu0
          %v669 = vpack.c.bf16 %v630, %v581
          %v670 = vpack.c.bf16 %v632, %v583
          %v671 = vpack.c.bf16 %v635, %v586
          %v672 = vpack.c.bf16 %v637, %v588
          %v673 = vpack.c.bf16 %v640, %v591
          %v674 = vpack.c.bf16 %v642, %v593
          %v675 = vpack.c.bf16 %v645, %v596
          %v676 = vpack.c.bf16 %v647, %v598
          %v677 = vpack.c.bf16 %v650, %v601
          %v678 = vpack.c.bf16 %v652, %v603
          %v679 = vpack.c.bf16 %v655, %v606
          %v680 = vpack.c.bf16 %v657, %v608
          %v681 = vpack.c.bf16 %v660, %v611
          %v682 = vpack.c.bf16 %v662, %v613
          %v683 = vpack.c.bf16 %v665, %v616
          %v684 = vpack.c.bf16 %v667, %v618
          %685 = vst [vmem:[#allocation2] sm:$0xff] %v669
          %686 = vst [vmem:[#allocation2 + $0x8] sm:$0xff] %v670
          %687 = vst [vmem:[#allocation2 + $0x10] sm:$0xff] %v671
          %688 = vst [vmem:[#allocation2 + $0x18] sm:$0xff] %v672
          %689 = vst [vmem:[#allocation2 + $0x20] sm:$0xff] %v673
          %690 = vst [vmem:[#allocation2 + $0x28] sm:$0xff] %v674
          %691 = vst [vmem:[#allocation2 + $0x30] sm:$0xff] %v675
          %692 = vst [vmem:[#allocation2 + $0x38] sm:$0xff] %v676
          %693 = vst [vmem:[#allocation2 + $0x40] sm:$0xff] %v677
          %694 = vst [vmem:[#allocation2 + $0x48] sm:$0xff] %v678
          %695 = vst [vmem:[#allocation2 + $0x50] sm:$0xff] %v679
          %696 = vst [vmem:[#allocation2 + $0x58] sm:$0xff] %v680
          %697 = vst [vmem:[#allocation2 + $0x60] sm:$0xff] %v681
          %698 = vst [vmem:[#allocation2 + $0x68] sm:$0xff] %v682
          %699 = vst [vmem:[#allocation2 + $0x70] sm:$0xff] %v683
          %700 = vst [vmem:[#allocation2 + $0x78] sm:$0xff] %v684
          %vm701 = vcmask 7168
          %702 = vst.msk [vmem:[#allocation3] sm:$0xff] %vm701, -inf
          %703 = vst.msk [vmem:[#allocation3 + $0x8] sm:$0xff] %vm701, -inf
          %704 = vst.msk [vmem:[#allocation3 + $0x10] sm:$0xff] %vm701, -inf
          %705 = vst.msk [vmem:[#allocation3 + $0x18] sm:$0xff] %vm701, -inf
          %706 = vst.msk [vmem:[#allocation3 + $0x20] sm:$0xff] %vm701, -inf
          %707 = vst.msk [vmem:[#allocation3 + $0x28] sm:$0xff] %vm701, -inf
          %708 = vst.msk [vmem:[#allocation3 + $0x30] sm:$0xff] %vm701, -inf
          %709 = vst.msk [vmem:[#allocation3 + $0x38] sm:$0xff] %vm701, -inf
          %710 = vst.msk [vmem:[#allocation3 + $0x40] sm:$0xff] %vm701, -inf
          %711 = vst.msk [vmem:[#allocation3 + $0x48] sm:$0xff] %vm701, -inf
          %712 = vst.msk [vmem:[#allocation3 + $0x50] sm:$0xff] %vm701, -inf
          %713 = vst.msk [vmem:[#allocation3 + $0x58] sm:$0xff] %vm701, -inf
          %714 = vst.msk [vmem:[#allocation3 + $0x60] sm:$0xff] %vm701, -inf
          %715 = vst.msk [vmem:[#allocation3 + $0x68] sm:$0xff] %vm701, -inf
          %716 = vst.msk [vmem:[#allocation3 + $0x70] sm:$0xff] %vm701, -inf
          %717 = vst.msk [vmem:[#allocation3 + $0x78] sm:$0xff] %vm701, -inf
          %718 = vst.msk [vmem:[#allocation3 + $0x80] sm:$0xff] %vm701, -inf
          %719 = vst.msk [vmem:[#allocation3 + $0x88] sm:$0xff] %vm701, -inf
          %720 = vst.msk [vmem:[#allocation3 + $0x90] sm:$0xff] %vm701, -inf
          %721 = vst.msk [vmem:[#allocation3 + $0x98] sm:$0xff] %vm701, -inf
          %722 = vst.msk [vmem:[#allocation3 + $0xa0] sm:$0xff] %vm701, -inf
          %723 = vst.msk [vmem:[#allocation3 + $0xa8] sm:$0xff] %vm701, -inf
          %724 = vst.msk [vmem:[#allocation3 + $0xb0] sm:$0xff] %vm701, -inf
          %725 = vst.msk [vmem:[#allocation3 + $0xb8] sm:$0xff] %vm701, -inf
          %726 = vst.msk [vmem:[#allocation3 + $0xc0] sm:$0xff] %vm701, -inf
          %727 = vst.msk [vmem:[#allocation3 + $0xc8] sm:$0xff] %vm701, -inf
          %728 = vst.msk [vmem:[#allocation3 + $0xd0] sm:$0xff] %vm701, -inf
          %729 = vst.msk [vmem:[#allocation3 + $0xd8] sm:$0xff] %vm701, -inf
          %730 = vst.msk [vmem:[#allocation3 + $0xe0] sm:$0xff] %vm701, -inf
          %731 = vst.msk [vmem:[#allocation3 + $0xe8] sm:$0xff] %vm701, -inf
          %732 = vst.msk [vmem:[#allocation3 + $0xf0] sm:$0xff] %vm701, -inf
          %733 = vst.msk [vmem:[#allocation3 + $0xf8] sm:$0xff] %vm701, -inf
          %734 = vst.msk [vmem:[#allocation3 + $0x100] sm:$0xff] %vm701, -inf
          %735 = vst.msk [vmem:[#allocation3 + $0x108] sm:$0xff] %vm701, -inf
          %736 = vst.msk [vmem:[#allocation3 + $0x110] sm:$0xff] %vm701, -inf
          %737 = vst.msk [vmem:[#allocation3 + $0x118] sm:$0xff] %vm701, -inf
          %738 = vst.msk [vmem:[#allocation3 + $0x120] sm:$0xff] %vm701, -inf
          %739 = vst.msk [vmem:[#allocation3 + $0x128] sm:$0xff] %vm701, -inf
          %740 = vst.msk [vmem:[#allocation3 + $0x130] sm:$0xff] %vm701, -inf
          %741 = vst.msk [vmem:[#allocation3 + $0x138] sm:$0xff] %vm701, -inf
          %742 = vst.msk [vmem:[#allocation3 + $0x140] sm:$0xff] %vm701, -inf
          %743 = vst.msk [vmem:[#allocation3 + $0x148] sm:$0xff] %vm701, -inf
          %744 = vst.msk [vmem:[#allocation3 + $0x150] sm:$0xff] %vm701, -inf
          %745 = vst.msk [vmem:[#allocation3 + $0x158] sm:$0xff] %vm701, -inf
          %746 = vst.msk [vmem:[#allocation3 + $0x160] sm:$0xff] %vm701, -inf
          %747 = vst.msk [vmem:[#allocation3 + $0x168] sm:$0xff] %vm701, -inf
          %748 = vst.msk [vmem:[#allocation3 + $0x170] sm:$0xff] %vm701, -inf
          %749 = vst.msk [vmem:[#allocation3 + $0x178] sm:$0xff] %vm701, -inf
          %750 = vst.msk [vmem:[#allocation3 + $0x180] sm:$0xff] %vm701, -inf
          %751 = vst.msk [vmem:[#allocation3 + $0x188] sm:$0xff] %vm701, -inf
          %752 = vst.msk [vmem:[#allocation3 + $0x190] sm:$0xff] %vm701, -inf
          %753 = vst.msk [vmem:[#allocation3 + $0x198] sm:$0xff] %vm701, -inf
          %754 = vst.msk [vmem:[#allocation3 + $0x1a0] sm:$0xff] %vm701, -inf
          %755 = vst.msk [vmem:[#allocation3 + $0x1a8] sm:$0xff] %vm701, -inf
          %756 = vst.msk [vmem:[#allocation3 + $0x1b0] sm:$0xff] %vm701, -inf
          %757 = vst.msk [vmem:[#allocation3 + $0x1b8] sm:$0xff] %vm701, -inf
          %758 = vst.msk [vmem:[#allocation3 + $0x1c0] sm:$0xff] %vm701, -inf
          %759 = vst.msk [vmem:[#allocation3 + $0x1c8] sm:$0xff] %vm701, -inf
          %760 = vst.msk [vmem:[#allocation3 + $0x1d0] sm:$0xff] %vm701, -inf
          %761 = vst.msk [vmem:[#allocation3 + $0x1d8] sm:$0xff] %vm701, -inf
          %762 = vst.msk [vmem:[#allocation3 + $0x1e0] sm:$0xff] %vm701, -inf
          %763 = vst.msk [vmem:[#allocation3 + $0x1e8] sm:$0xff] %vm701, -inf
          %764 = vst.msk [vmem:[#allocation3 + $0x1f0] sm:$0xff] %vm701, -inf
          %765 = vst.msk [vmem:[#allocation3 + $0x1f8] sm:$0xff] %vm701, -inf
          %766 = vst.msk [vmem:[#allocation6] sm:$0xff] %vm701, -inf
          %767 = vst.msk [vmem:[#allocation6 + $0x8] sm:$0xff] %vm701, -inf
          %768 = vst.msk [vmem:[#allocation6 + $0x10] sm:$0xff] %vm701, -inf
          %769 = vst.msk [vmem:[#allocation6 + $0x18] sm:$0xff] %vm701, -inf
          %770 = vst.msk [vmem:[#allocation6 + $0x20] sm:$0xff] %vm701, -inf
          %771 = vst.msk [vmem:[#allocation6 + $0x28] sm:$0xff] %vm701, -inf
          %772 = vst.msk [vmem:[#allocation6 + $0x30] sm:$0xff] %vm701, -inf
          %773 = vst.msk [vmem:[#allocation6 + $0x38] sm:$0xff] %vm701, -inf
          %774 = vst.msk [vmem:[#allocation6 + $0x40] sm:$0xff] %vm701, -inf
          %775 = vst.msk [vmem:[#allocation6 + $0x48] sm:$0xff] %vm701, -inf
          %776 = vst.msk [vmem:[#allocation6 + $0x50] sm:$0xff] %vm701, -inf
          %777 = vst.msk [vmem:[#allocation6 + $0x58] sm:$0xff] %vm701, -inf
          %778 = vst.msk [vmem:[#allocation6 + $0x60] sm:$0xff] %vm701, -inf
          %779 = vst.msk [vmem:[#allocation6 + $0x68] sm:$0xff] %vm701, -inf
          %780 = vst.msk [vmem:[#allocation6 + $0x70] sm:$0xff] %vm701, -inf
          %781 = vst.msk [vmem:[#allocation6 + $0x78] sm:$0xff] %vm701, -inf
          %782 = vst.msk [vmem:[#allocation6 + $0x80] sm:$0xff] %vm701, -inf
          %783 = vst.msk [vmem:[#allocation6 + $0x88] sm:$0xff] %vm701, -inf
          %784 = vst.msk [vmem:[#allocation6 + $0x90] sm:$0xff] %vm701, -inf
          %785 = vst.msk [vmem:[#allocation6 + $0x98] sm:$0xff] %vm701, -inf
          %786 = vst.msk [vmem:[#allocation6 + $0xa0] sm:$0xff] %vm701, -inf
          %787 = vst.msk [vmem:[#allocation6 + $0xa8] sm:$0xff] %vm701, -inf
          %788 = vst.msk [vmem:[#allocation6 + $0xb0] sm:$0xff] %vm701, -inf
          %789 = vst.msk [vmem:[#allocation6 + $0xb8] sm:$0xff] %vm701, -inf
          %790 = vst.msk [vmem:[#allocation6 + $0xc0] sm:$0xff] %vm701, -inf
          %791 = vst.msk [vmem:[#allocation6 + $0xc8] sm:$0xff] %vm701, -inf
          %792 = vst.msk [vmem:[#allocation6 + $0xd0] sm:$0xff] %vm701, -inf
          %793 = vst.msk [vmem:[#allocation6 + $0xd8] sm:$0xff] %vm701, -inf
          %794 = vst.msk [vmem:[#allocation6 + $0xe0] sm:$0xff] %vm701, -inf
          %795 = vst.msk [vmem:[#allocation6 + $0xe8] sm:$0xff] %vm701, -inf
          %796 = vst.msk [vmem:[#allocation6 + $0xf0] sm:$0xff] %vm701, -inf
          %797 = vst.msk [vmem:[#allocation6 + $0xf8] sm:$0xff] %vm701, -inf
          %798 = vst.msk [vmem:[#allocation6 + $0x100] sm:$0xff] %vm701, -inf
          %799 = vst.msk [vmem:[#allocation6 + $0x108] sm:$0xff] %vm701, -inf
          %800 = vst.msk [vmem:[#allocation6 + $0x110] sm:$0xff] %vm701, -inf
          %801 = vst.msk [vmem:[#allocation6 + $0x118] sm:$0xff] %vm701, -inf
          %802 = vst.msk [vmem:[#allocation6 + $0x120] sm:$0xff] %vm701, -inf
          %803 = vst.msk [vmem:[#allocation6 + $0x128] sm:$0xff] %vm701, -inf
          %804 = vst.msk [vmem:[#allocation6 + $0x130] sm:$0xff] %vm701, -inf
          %805 = vst.msk [vmem:[#allocation6 + $0x138] sm:$0xff] %vm701, -inf
          %806 = vst.msk [vmem:[#allocation6 + $0x140] sm:$0xff] %vm701, -inf
          %807 = vst.msk [vmem:[#allocation6 + $0x148] sm:$0xff] %vm701, -inf
          %808 = vst.msk [vmem:[#allocation6 + $0x150] sm:$0xff] %vm701, -inf
          %809 = vst.msk [vmem:[#allocation6 + $0x158] sm:$0xff] %vm701, -inf
          %810 = vst.msk [vmem:[#allocation6 + $0x160] sm:$0xff] %vm701, -inf
          %811 = vst.msk [vmem:[#allocation6 + $0x168] sm:$0xff] %vm701, -inf
          %812 = vst.msk [vmem:[#allocation6 + $0x170] sm:$0xff] %vm701, -inf
          %813 = vst.msk [vmem:[#allocation6 + $0x178] sm:$0xff] %vm701, -inf
          %814 = vst.msk [vmem:[#allocation6 + $0x180] sm:$0xff] %vm701, -inf
          %815 = vst.msk [vmem:[#allocation6 + $0x188] sm:$0xff] %vm701, -inf
          %816 = vst.msk [vmem:[#allocation6 + $0x190] sm:$0xff] %vm701, -inf
          %817 = vst.msk [vmem:[#allocation6 + $0x198] sm:$0xff] %vm701, -inf
          %818 = vst.msk [vmem:[#allocation6 + $0x1a0] sm:$0xff] %vm701, -inf
          %819 = vst.msk [vmem:[#allocation6 + $0x1a8] sm:$0xff] %vm701, -inf
          %820 = vst.msk [vmem:[#allocation6 + $0x1b0] sm:$0xff] %vm701, -inf
          %821 = vst.msk [vmem:[#allocation6 + $0x1b8] sm:$0xff] %vm701, -inf
          %822 = vst.msk [vmem:[#allocation6 + $0x1c0] sm:$0xff] %vm701, -inf
          %823 = vst.msk [vmem:[#allocation6 + $0x1c8] sm:$0xff] %vm701, -inf
          %824 = vst.msk [vmem:[#allocation6 + $0x1d0] sm:$0xff] %vm701, -inf
          %825 = vst.msk [vmem:[#allocation6 + $0x1d8] sm:$0xff] %vm701, -inf
          %826 = vst.msk [vmem:[#allocation6 + $0x1e0] sm:$0xff] %vm701, -inf
          %827 = vst.msk [vmem:[#allocation6 + $0x1e8] sm:$0xff] %vm701, -inf
          %828 = vst.msk [vmem:[#allocation6 + $0x1f0] sm:$0xff] %vm701, -inf
          %829 = vst.msk [vmem:[#allocation6 + $0x1f8] sm:$0xff] %vm701, -inf
          %830 = vst.msk [vmem:[#allocation4] sm:$0xff] %vm701, 0.0
          %831 = vst.msk [vmem:[#allocation4 + $0x8] sm:$0xff] %vm701, 0.0
          %832 = vst.msk [vmem:[#allocation4 + $0x10] sm:$0xff] %vm701, 0.0
          %833 = vst.msk [vmem:[#allocation4 + $0x18] sm:$0xff] %vm701, 0.0
          %834 = vst.msk [vmem:[#allocation4 + $0x20] sm:$0xff] %vm701, 0.0
          %835 = vst.msk [vmem:[#allocation4 + $0x28] sm:$0xff] %vm701, 0.0
          %836 = vst.msk [vmem:[#allocation4 + $0x30] sm:$0xff] %vm701, 0.0
          %837 = vst.msk [vmem:[#allocation4 + $0x38] sm:$0xff] %vm701, 0.0
          %838 = vst.msk [vmem:[#allocation4 + $0x40] sm:$0xff] %vm701, 0.0
          %839 = vst.msk [vmem:[#allocation4 + $0x48] sm:$0xff] %vm701, 0.0
          %840 = vst.msk [vmem:[#allocation4 + $0x50] sm:$0xff] %vm701, 0.0
          %841 = vst.msk [vmem:[#allocation4 + $0x58] sm:$0xff] %vm701, 0.0
          %842 = vst.msk [vmem:[#allocation4 + $0x60] sm:$0xff] %vm701, 0.0
          %843 = vst.msk [vmem:[#allocation4 + $0x68] sm:$0xff] %vm701, 0.0
          %844 = vst.msk [vmem:[#allocation4 + $0x70] sm:$0xff] %vm701, 0.0
          %845 = vst.msk [vmem:[#allocation4 + $0x78] sm:$0xff] %vm701, 0.0
          %846 = vst.msk [vmem:[#allocation4 + $0x80] sm:$0xff] %vm701, 0.0
          %847 = vst.msk [vmem:[#allocation4 + $0x88] sm:$0xff] %vm701, 0.0
          %848 = vst.msk [vmem:[#allocation4 + $0x90] sm:$0xff] %vm701, 0.0
          %849 = vst.msk [vmem:[#allocation4 + $0x98] sm:$0xff] %vm701, 0.0
          %850 = vst.msk [vmem:[#allocation4 + $0xa0] sm:$0xff] %vm701, 0.0
          %851 = vst.msk [vmem:[#allocation4 + $0xa8] sm:$0xff] %vm701, 0.0
          %852 = vst.msk [vmem:[#allocation4 + $0xb0] sm:$0xff] %vm701, 0.0
          %853 = vst.msk [vmem:[#allocation4 + $0xb8] sm:$0xff] %vm701, 0.0
          %854 = vst.msk [vmem:[#allocation4 + $0xc0] sm:$0xff] %vm701, 0.0
          %855 = vst.msk [vmem:[#allocation4 + $0xc8] sm:$0xff] %vm701, 0.0
          %856 = vst.msk [vmem:[#allocation4 + $0xd0] sm:$0xff] %vm701, 0.0
          %857 = vst.msk [vmem:[#allocation4 + $0xd8] sm:$0xff] %vm701, 0.0
          %858 = vst.msk [vmem:[#allocation4 + $0xe0] sm:$0xff] %vm701, 0.0
          %859 = vst.msk [vmem:[#allocation4 + $0xe8] sm:$0xff] %vm701, 0.0
          %860 = vst.msk [vmem:[#allocation4 + $0xf0] sm:$0xff] %vm701, 0.0
          %861 = vst.msk [vmem:[#allocation4 + $0xf8] sm:$0xff] %vm701, 0.0
          %862 = vst.msk [vmem:[#allocation4 + $0x100] sm:$0xff] %vm701, 0.0
          %863 = vst.msk [vmem:[#allocation4 + $0x108] sm:$0xff] %vm701, 0.0
          %864 = vst.msk [vmem:[#allocation4 + $0x110] sm:$0xff] %vm701, 0.0
          %865 = vst.msk [vmem:[#allocation4 + $0x118] sm:$0xff] %vm701, 0.0
          %866 = vst.msk [vmem:[#allocation4 + $0x120] sm:$0xff] %vm701, 0.0
          %867 = vst.msk [vmem:[#allocation4 + $0x128] sm:$0xff] %vm701, 0.0
          %868 = vst.msk [vmem:[#allocation4 + $0x130] sm:$0xff] %vm701, 0.0
          %869 = vst.msk [vmem:[#allocation4 + $0x138] sm:$0xff] %vm701, 0.0
          %870 = vst.msk [vmem:[#allocation4 + $0x140] sm:$0xff] %vm701, 0.0
          %871 = vst.msk [vmem:[#allocation4 + $0x148] sm:$0xff] %vm701, 0.0
          %872 = vst.msk [vmem:[#allocation4 + $0x150] sm:$0xff] %vm701, 0.0
          %873 = vst.msk [vmem:[#allocation4 + $0x158] sm:$0xff] %vm701, 0.0
          %874 = vst.msk [vmem:[#allocation4 + $0x160] sm:$0xff] %vm701, 0.0
          %875 = vst.msk [vmem:[#allocation4 + $0x168] sm:$0xff] %vm701, 0.0
          %876 = vst.msk [vmem:[#allocation4 + $0x170] sm:$0xff] %vm701, 0.0
          %877 = vst.msk [vmem:[#allocation4 + $0x178] sm:$0xff] %vm701, 0.0
          %878 = vst.msk [vmem:[#allocation4 + $0x180] sm:$0xff] %vm701, 0.0
          %879 = vst.msk [vmem:[#allocation4 + $0x188] sm:$0xff] %vm701, 0.0
          %880 = vst.msk [vmem:[#allocation4 + $0x190] sm:$0xff] %vm701, 0.0
          %881 = vst.msk [vmem:[#allocation4 + $0x198] sm:$0xff] %vm701, 0.0
          %882 = vst.msk [vmem:[#allocation4 + $0x1a0] sm:$0xff] %vm701, 0.0
          %883 = vst.msk [vmem:[#allocation4 + $0x1a8] sm:$0xff] %vm701, 0.0
          %884 = vst.msk [vmem:[#allocation4 + $0x1b0] sm:$0xff] %vm701, 0.0
          %885 = vst.msk [vmem:[#allocation4 + $0x1b8] sm:$0xff] %vm701, 0.0
          %886 = vst.msk [vmem:[#allocation4 + $0x1c0] sm:$0xff] %vm701, 0.0
          %887 = vst.msk [vmem:[#allocation4 + $0x1c8] sm:$0xff] %vm701, 0.0
          %888 = vst.msk [vmem:[#allocation4 + $0x1d0] sm:$0xff] %vm701, 0.0
          %889 = vst.msk [vmem:[#allocation4 + $0x1d8] sm:$0xff] %vm701, 0.0
          %890 = vst.msk [vmem:[#allocation4 + $0x1e0] sm:$0xff] %vm701, 0.0
          %891 = vst.msk [vmem:[#allocation4 + $0x1e8] sm:$0xff] %vm701, 0.0
          %892 = vst.msk [vmem:[#allocation4 + $0x1f0] sm:$0xff] %vm701, 0.0
          %893 = vst.msk [vmem:[#allocation4 + $0x1f8] sm:$0xff] %vm701, 0.0
          %894 = vst.msk [vmem:[#allocation7] sm:$0xff] %vm701, 0.0
          %895 = vst.msk [vmem:[#allocation7 + $0x8] sm:$0xff] %vm701, 0.0
          %896 = vst.msk [vmem:[#allocation7 + $0x10] sm:$0xff] %vm701, 0.0
          %897 = vst.msk [vmem:[#allocation7 + $0x18] sm:$0xff] %vm701, 0.0
          %898 = vst.msk [vmem:[#allocation7 + $0x20] sm:$0xff] %vm701, 0.0
          %899 = vst.msk [vmem:[#allocation7 + $0x28] sm:$0xff] %vm701, 0.0
          %900 = vst.msk [vmem:[#allocation7 + $0x30] sm:$0xff] %vm701, 0.0
          %901 = vst.msk [vmem:[#allocation7 + $0x38] sm:$0xff] %vm701, 0.0
          %902 = vst.msk [vmem:[#allocation7 + $0x40] sm:$0xff] %vm701, 0.0
          %903 = vst.msk [vmem:[#allocation7 + $0x48] sm:$0xff] %vm701, 0.0
          %904 = vst.msk [vmem:[#allocation7 + $0x50] sm:$0xff] %vm701, 0.0
          %905 = vst.msk [vmem:[#allocation7 + $0x58] sm:$0xff] %vm701, 0.0
          %906 = vst.msk [vmem:[#allocation7 + $0x60] sm:$0xff] %vm701, 0.0
          %907 = vst.msk [vmem:[#allocation7 + $0x68] sm:$0xff] %vm701, 0.0
          %908 = vst.msk [vmem:[#allocation7 + $0x70] sm:$0xff] %vm701, 0.0
          %909 = vst.msk [vmem:[#allocation7 + $0x78] sm:$0xff] %vm701, 0.0
          %910 = vst.msk [vmem:[#allocation7 + $0x80] sm:$0xff] %vm701, 0.0
          %911 = vst.msk [vmem:[#allocation7 + $0x88] sm:$0xff] %vm701, 0.0
          %912 = vst.msk [vmem:[#allocation7 + $0x90] sm:$0xff] %vm701, 0.0
          %913 = vst.msk [vmem:[#allocation7 + $0x98] sm:$0xff] %vm701, 0.0
          %914 = vst.msk [vmem:[#allocation7 + $0xa0] sm:$0xff] %vm701, 0.0
          %915 = vst.msk [vmem:[#allocation7 + $0xa8] sm:$0xff] %vm701, 0.0
          %916 = vst.msk [vmem:[#allocation7 + $0xb0] sm:$0xff] %vm701, 0.0
          %917 = vst.msk [vmem:[#allocation7 + $0xb8] sm:$0xff] %vm701, 0.0
          %918 = vst.msk [vmem:[#allocation7 + $0xc0] sm:$0xff] %vm701, 0.0
          %919 = vst.msk [vmem:[#allocation7 + $0xc8] sm:$0xff] %vm701, 0.0
          %920 = vst.msk [vmem:[#allocation7 + $0xd0] sm:$0xff] %vm701, 0.0
          %921 = vst.msk [vmem:[#allocation7 + $0xd8] sm:$0xff] %vm701, 0.0
          %922 = vst.msk [vmem:[#allocation7 + $0xe0] sm:$0xff] %vm701, 0.0
          %923 = vst.msk [vmem:[#allocation7 + $0xe8] sm:$0xff] %vm701, 0.0
          %924 = vst.msk [vmem:[#allocation7 + $0xf0] sm:$0xff] %vm701, 0.0
          %925 = vst.msk [vmem:[#allocation7 + $0xf8] sm:$0xff] %vm701, 0.0
          %926 = vst.msk [vmem:[#allocation7 + $0x100] sm:$0xff] %vm701, 0.0
          %927 = vst.msk [vmem:[#allocation7 + $0x108] sm:$0xff] %vm701, 0.0
          %928 = vst.msk [vmem:[#allocation7 + $0x110] sm:$0xff] %vm701, 0.0
          %929 = vst.msk [vmem:[#allocation7 + $0x118] sm:$0xff] %vm701, 0.0
          %930 = vst.msk [vmem:[#allocation7 + $0x120] sm:$0xff] %vm701, 0.0
          %931 = vst.msk [vmem:[#allocation7 + $0x128] sm:$0xff] %vm701, 0.0
          %932 = vst.msk [vmem:[#allocation7 + $0x130] sm:$0xff] %vm701, 0.0
          %933 = vst.msk [vmem:[#allocation7 + $0x138] sm:$0xff] %vm701, 0.0
          %934 = vst.msk [vmem:[#allocation7 + $0x140] sm:$0xff] %vm701, 0.0
          %935 = vst.msk [vmem:[#allocation7 + $0x148] sm:$0xff] %vm701, 0.0
          %936 = vst.msk [vmem:[#allocation7 + $0x150] sm:$0xff] %vm701, 0.0
          %937 = vst.msk [vmem:[#allocation7 + $0x158] sm:$0xff] %vm701, 0.0
          %938 = vst.msk [vmem:[#allocation7 + $0x160] sm:$0xff] %vm701, 0.0
          %939 = vst.msk [vmem:[#allocation7 + $0x168] sm:$0xff] %vm701, 0.0
          %940 = vst.msk [vmem:[#allocation7 + $0x170] sm:$0xff] %vm701, 0.0
          %941 = vst.msk [vmem:[#allocation7 + $0x178] sm:$0xff] %vm701, 0.0
          %942 = vst.msk [vmem:[#allocation7 + $0x180] sm:$0xff] %vm701, 0.0
          %943 = vst.msk [vmem:[#allocation7 + $0x188] sm:$0xff] %vm701, 0.0
          %944 = vst.msk [vmem:[#allocation7 + $0x190] sm:$0xff] %vm701, 0.0
          %945 = vst.msk [vmem:[#allocation7 + $0x198] sm:$0xff] %vm701, 0.0
          %946 = vst.msk [vmem:[#allocation7 + $0x1a0] sm:$0xff] %vm701, 0.0
          %947 = vst.msk [vmem:[#allocation7 + $0x1a8] sm:$0xff] %vm701, 0.0
          %948 = vst.msk [vmem:[#allocation7 + $0x1b0] sm:$0xff] %vm701, 0.0
          %949 = vst.msk [vmem:[#allocation7 + $0x1b8] sm:$0xff] %vm701, 0.0
          %950 = vst.msk [vmem:[#allocation7 + $0x1c0] sm:$0xff] %vm701, 0.0
          %951 = vst.msk [vmem:[#allocation7 + $0x1c8] sm:$0xff] %vm701, 0.0
          %952 = vst.msk [vmem:[#allocation7 + $0x1d0] sm:$0xff] %vm701, 0.0
          %953 = vst.msk [vmem:[#allocation7 + $0x1d8] sm:$0xff] %vm701, 0.0
          %954 = vst.msk [vmem:[#allocation7 + $0x1e0] sm:$0xff] %vm701, 0.0
          %955 = vst.msk [vmem:[#allocation7 + $0x1e8] sm:$0xff] %vm701, 0.0
          %956 = vst.msk [vmem:[#allocation7 + $0x1f0] sm:$0xff] %vm701, 0.0
          %957 = vst.msk [vmem:[#allocation7 + $0x1f8] sm:$0xff] %vm701, 0.0
          %vm958 = vcmask 261120
          %959 = vst.msk [vmem:[#allocation5] sm:$0xff] %vm958, 0.0
          %960 = vst.msk [vmem:[#allocation5 + $0x8] sm:$0xff] %vm958, 0.0
          %961 = vst.msk [vmem:[#allocation5 + $0x10] sm:$0xff] %vm958, 0.0
          %962 = vst.msk [vmem:[#allocation5 + $0x18] sm:$0xff] %vm958, 0.0
          %963 = vst.msk [vmem:[#allocation5 + $0x20] sm:$0xff] %vm958, 0.0
          %964 = vst.msk [vmem:[#allocation5 + $0x28] sm:$0xff] %vm958, 0.0
          %965 = vst.msk [vmem:[#allocation5 + $0x30] sm:$0xff] %vm958, 0.0
          %966 = vst.msk [vmem:[#allocation5 + $0x38] sm:$0xff] %vm958, 0.0
          %967 = vst.msk [vmem:[#allocation5 + $0x40] sm:$0xff] %vm958, 0.0
          %968 = vst.msk [vmem:[#allocation5 + $0x48] sm:$0xff] %vm958, 0.0
          %969 = vst.msk [vmem:[#allocation5 + $0x50] sm:$0xff] %vm958, 0.0
          %970 = vst.msk [vmem:[#allocation5 + $0x58] sm:$0xff] %vm958, 0.0
          %971 = vst.msk [vmem:[#allocation5 + $0x60] sm:$0xff] %vm958, 0.0
          %972 = vst.msk [vmem:[#allocation5 + $0x68] sm:$0xff] %vm958, 0.0
          %973 = vst.msk [vmem:[#allocation5 + $0x70] sm:$0xff] %vm958, 0.0
          %974 = vst.msk [vmem:[#allocation5 + $0x78] sm:$0xff] %vm958, 0.0
          %975 = vst.msk [vmem:[#allocation5 + $0x80] sm:$0xff] %vm958, 0.0
          %976 = vst.msk [vmem:[#allocation5 + $0x88] sm:$0xff] %vm958, 0.0
          %977 = vst.msk [vmem:[#allocation5 + $0x90] sm:$0xff] %vm958, 0.0
          %978 = vst.msk [vmem:[#allocation5 + $0x98] sm:$0xff] %vm958, 0.0
          %979 = vst.msk [vmem:[#allocation5 + $0xa0] sm:$0xff] %vm958, 0.0
          %980 = vst.msk [vmem:[#allocation5 + $0xa8] sm:$0xff] %vm958, 0.0
          %981 = vst.msk [vmem:[#allocation5 + $0xb0] sm:$0xff] %vm958, 0.0
          %982 = vst.msk [vmem:[#allocation5 + $0xb8] sm:$0xff] %vm958, 0.0
          %983 = vst.msk [vmem:[#allocation5 + $0xc0] sm:$0xff] %vm958, 0.0
          %984 = vst.msk [vmem:[#allocation5 + $0xc8] sm:$0xff] %vm958, 0.0
          %985 = vst.msk [vmem:[#allocation5 + $0xd0] sm:$0xff] %vm958, 0.0
          %986 = vst.msk [vmem:[#allocation5 + $0xd8] sm:$0xff] %vm958, 0.0
          %987 = vst.msk [vmem:[#allocation5 + $0xe0] sm:$0xff] %vm958, 0.0
          %988 = vst.msk [vmem:[#allocation5 + $0xe8] sm:$0xff] %vm958, 0.0
          %989 = vst.msk [vmem:[#allocation5 + $0xf0] sm:$0xff] %vm958, 0.0
          %990 = vst.msk [vmem:[#allocation5 + $0xf8] sm:$0xff] %vm958, 0.0
          %991 = vst.msk [vmem:[#allocation5 + $0x100] sm:$0xff] %vm958, 0.0
          %992 = vst.msk [vmem:[#allocation5 + $0x108] sm:$0xff] %vm958, 0.0
          %993 = vst.msk [vmem:[#allocation5 + $0x110] sm:$0xff] %vm958, 0.0
          %994 = vst.msk [vmem:[#allocation5 + $0x118] sm:$0xff] %vm958, 0.0
          %995 = vst.msk [vmem:[#allocation5 + $0x120] sm:$0xff] %vm958, 0.0
          %996 = vst.msk [vmem:[#allocation5 + $0x128] sm:$0xff] %vm958, 0.0
          %997 = vst.msk [vmem:[#allocation5 + $0x130] sm:$0xff] %vm958, 0.0
          %998 = vst.msk [vmem:[#allocation5 + $0x138] sm:$0xff] %vm958, 0.0
          %999 = vst.msk [vmem:[#allocation5 + $0x140] sm:$0xff] %vm958, 0.0
          %1000 = vst.msk [vmem:[#allocation5 + $0x148] sm:$0xff] %vm958, 0.0
          %1001 = vst.msk [vmem:[#allocation5 + $0x150] sm:$0xff] %vm958, 0.0
          %1002 = vst.msk [vmem:[#allocation5 + $0x158] sm:$0xff] %vm958, 0.0
          %1003 = vst.msk [vmem:[#allocation5 + $0x160] sm:$0xff] %vm958, 0.0
          %1004 = vst.msk [vmem:[#allocation5 + $0x168] sm:$0xff] %vm958, 0.0
          %1005 = vst.msk [vmem:[#allocation5 + $0x170] sm:$0xff] %vm958, 0.0
          %1006 = vst.msk [vmem:[#allocation5 + $0x178] sm:$0xff] %vm958, 0.0
          %1007 = vst.msk [vmem:[#allocation5 + $0x180] sm:$0xff] %vm958, 0.0
          %1008 = vst.msk [vmem:[#allocation5 + $0x188] sm:$0xff] %vm958, 0.0
          %1009 = vst.msk [vmem:[#allocation5 + $0x190] sm:$0xff] %vm958, 0.0
          %1010 = vst.msk [vmem:[#allocation5 + $0x198] sm:$0xff] %vm958, 0.0
          %1011 = vst.msk [vmem:[#allocation5 + $0x1a0] sm:$0xff] %vm958, 0.0
          %1012 = vst.msk [vmem:[#allocation5 + $0x1a8] sm:$0xff] %vm958, 0.0
          %1013 = vst.msk [vmem:[#allocation5 + $0x1b0] sm:$0xff] %vm958, 0.0
          %1014 = vst.msk [vmem:[#allocation5 + $0x1b8] sm:$0xff] %vm958, 0.0
          %1015 = vst.msk [vmem:[#allocation5 + $0x1c0] sm:$0xff] %vm958, 0.0
          %1016 = vst.msk [vmem:[#allocation5 + $0x1c8] sm:$0xff] %vm958, 0.0
          %1017 = vst.msk [vmem:[#allocation5 + $0x1d0] sm:$0xff] %vm958, 0.0
          %1018 = vst.msk [vmem:[#allocation5 + $0x1d8] sm:$0xff] %vm958, 0.0
          %1019 = vst.msk [vmem:[#allocation5 + $0x1e0] sm:$0xff] %vm958, 0.0
          %1020 = vst.msk [vmem:[#allocation5 + $0x1e8] sm:$0xff] %vm958, 0.0
          %1021 = vst.msk [vmem:[#allocation5 + $0x1f0] sm:$0xff] %vm958, 0.0
          %1022 = vst.msk [vmem:[#allocation5 + $0x1f8] sm:$0xff] %vm958, 0.0
          %1023 = vst.msk [vmem:[#allocation8] sm:$0xff] %vm958, 0.0
          %1024 = vst.msk [vmem:[#allocation8 + $0x8] sm:$0xff] %vm958, 0.0
          %1025 = vst.msk [vmem:[#allocation8 + $0x10] sm:$0xff] %vm958, 0.0
          %1026 = vst.msk [vmem:[#allocation8 + $0x18] sm:$0xff] %vm958, 0.0
          %1027 = vst.msk [vmem:[#allocation8 + $0x20] sm:$0xff] %vm958, 0.0
          %1028 = vst.msk [vmem:[#allocation8 + $0x28] sm:$0xff] %vm958, 0.0
          %1029 = vst.msk [vmem:[#allocation8 + $0x30] sm:$0xff] %vm958, 0.0
          %1030 = vst.msk [vmem:[#allocation8 + $0x38] sm:$0xff] %vm958, 0.0
          %1031 = vst.msk [vmem:[#allocation8 + $0x40] sm:$0xff] %vm958, 0.0
          %1032 = vst.msk [vmem:[#allocation8 + $0x48] sm:$0xff] %vm958, 0.0
          %1033 = vst.msk [vmem:[#allocation8 + $0x50] sm:$0xff] %vm958, 0.0
          %1034 = vst.msk [vmem:[#allocation8 + $0x58] sm:$0xff] %vm958, 0.0
          %1035 = vst.msk [vmem:[#allocation8 + $0x60] sm:$0xff] %vm958, 0.0
          %1036 = vst.msk [vmem:[#allocation8 + $0x68] sm:$0xff] %vm958, 0.0
          %1037 = vst.msk [vmem:[#allocation8 + $0x70] sm:$0xff] %vm958, 0.0
          %1038 = vst.msk [vmem:[#allocation8 + $0x78] sm:$0xff] %vm958, 0.0
          %1039 = vst.msk [vmem:[#allocation8 + $0x80] sm:$0xff] %vm958, 0.0
          %1040 = vst.msk [vmem:[#allocation8 + $0x88] sm:$0xff] %vm958, 0.0
          %1041 = vst.msk [vmem:[#allocation8 + $0x90] sm:$0xff] %vm958, 0.0
          %1042 = vst.msk [vmem:[#allocation8 + $0x98] sm:$0xff] %vm958, 0.0
          %1043 = vst.msk [vmem:[#allocation8 + $0xa0] sm:$0xff] %vm958, 0.0
          %1044 = vst.msk [vmem:[#allocation8 + $0xa8] sm:$0xff] %vm958, 0.0
          %1045 = vst.msk [vmem:[#allocation8 + $0xb0] sm:$0xff] %vm958, 0.0
          %1046 = vst.msk [vmem:[#allocation8 + $0xb8] sm:$0xff] %vm958, 0.0
          %1047 = vst.msk [vmem:[#allocation8 + $0xc0] sm:$0xff] %vm958, 0.0
          %1048 = vst.msk [vmem:[#allocation8 + $0xc8] sm:$0xff] %vm958, 0.0
          %1049 = vst.msk [vmem:[#allocation8 + $0xd0] sm:$0xff] %vm958, 0.0
          %1050 = vst.msk [vmem:[#allocation8 + $0xd8] sm:$0xff] %vm958, 0.0
          %1051 = vst.msk [vmem:[#allocation8 + $0xe0] sm:$0xff] %vm958, 0.0
          %1052 = vst.msk [vmem:[#allocation8 + $0xe8] sm:$0xff] %vm958, 0.0
          %1053 = vst.msk [vmem:[#allocation8 + $0xf0] sm:$0xff] %vm958, 0.0
          %1054 = vst.msk [vmem:[#allocation8 + $0xf8] sm:$0xff] %vm958, 0.0
          %1055 = vst.msk [vmem:[#allocation8 + $0x100] sm:$0xff] %vm958, 0.0
          %1056 = vst.msk [vmem:[#allocation8 + $0x108] sm:$0xff] %vm958, 0.0
          %1057 = vst.msk [vmem:[#allocation8 + $0x110] sm:$0xff] %vm958, 0.0
          %1058 = vst.msk [vmem:[#allocation8 + $0x118] sm:$0xff] %vm958, 0.0
          %1059 = vst.msk [vmem:[#allocation8 + $0x120] sm:$0xff] %vm958, 0.0
          %1060 = vst.msk [vmem:[#allocation8 + $0x128] sm:$0xff] %vm958, 0.0
          %1061 = vst.msk [vmem:[#allocation8 + $0x130] sm:$0xff] %vm958, 0.0
          %1062 = vst.msk [vmem:[#allocation8 + $0x138] sm:$0xff] %vm958, 0.0
          %1063 = vst.msk [vmem:[#allocation8 + $0x140] sm:$0xff] %vm958, 0.0
          %1064 = vst.msk [vmem:[#allocation8 + $0x148] sm:$0xff] %vm958, 0.0
          %1065 = vst.msk [vmem:[#allocation8 + $0x150] sm:$0xff] %vm958, 0.0
          %1066 = vst.msk [vmem:[#allocation8 + $0x158] sm:$0xff] %vm958, 0.0
          %1067 = vst.msk [vmem:[#allocation8 + $0x160] sm:$0xff] %vm958, 0.0
          %1068 = vst.msk [vmem:[#allocation8 + $0x168] sm:$0xff] %vm958, 0.0
          %1069 = vst.msk [vmem:[#allocation8 + $0x170] sm:$0xff] %vm958, 0.0
          %1070 = vst.msk [vmem:[#allocation8 + $0x178] sm:$0xff] %vm958, 0.0
          %1071 = vst.msk [vmem:[#allocation8 + $0x180] sm:$0xff] %vm958, 0.0
          %1072 = vst.msk [vmem:[#allocation8 + $0x188] sm:$0xff] %vm958, 0.0
          %1073 = vst.msk [vmem:[#allocation8 + $0x190] sm:$0xff] %vm958, 0.0
          %1074 = vst.msk [vmem:[#allocation8 + $0x198] sm:$0xff] %vm958, 0.0
          %1075 = vst.msk [vmem:[#allocation8 + $0x1a0] sm:$0xff] %vm958, 0.0
          %1076 = vst.msk [vmem:[#allocation8 + $0x1a8] sm:$0xff] %vm958, 0.0
          %1077 = vst.msk [vmem:[#allocation8 + $0x1b0] sm:$0xff] %vm958, 0.0
          %1078 = vst.msk [vmem:[#allocation8 + $0x1b8] sm:$0xff] %vm958, 0.0
          %1079 = vst.msk [vmem:[#allocation8 + $0x1c0] sm:$0xff] %vm958, 0.0
          %1080 = vst.msk [vmem:[#allocation8 + $0x1c8] sm:$0xff] %vm958, 0.0
          %1081 = vst.msk [vmem:[#allocation8 + $0x1d0] sm:$0xff] %vm958, 0.0
          %1082 = vst.msk [vmem:[#allocation8 + $0x1d8] sm:$0xff] %vm958, 0.0
          %1083 = vst.msk [vmem:[#allocation8 + $0x1e0] sm:$0xff] %vm958, 0.0
          %1084 = vst.msk [vmem:[#allocation8 + $0x1e8] sm:$0xff] %vm958, 0.0
          %1085 = vst.msk [vmem:[#allocation8 + $0x1f0] sm:$0xff] %vm958, 0.0
          %1086 = vst.msk [vmem:[#allocation8 + $0x1f8] sm:$0xff] %vm958, 0.0
        $region68: #{tpu_custom_call.1} parent=47 // pred_fallthru
          _
        %v1087 = vld [vmem:[%s357] sm:$0xf]
        %v1088 = vld [vmem:[%s357 + $0x4] sm:$0xf]
        %v1089 = vld [vmem:[%s357 + $0x8] sm:$0xf]
        %v1090 = vld [vmem:[%s357 + $0xc] sm:$0xf]
        %v1091 = vld [vmem:[%s357 + $0x10] sm:$0xf]
        %v1092 = vld [vmem:[%s357 + $0x14] sm:$0xf]
        %v1093 = vld [vmem:[%s357 + $0x18] sm:$0xf]
        %v1094 = vld [vmem:[%s357 + $0x1c] sm:$0xf]
        %v1095 = vld [vmem:[%s357 + $0x20] sm:$0xf]
        %v1096 = vld [vmem:[%s357 + $0x24] sm:$0xf]
        %v1097 = vld [vmem:[%s357 + $0x28] sm:$0xf]
        %v1098 = vld [vmem:[%s357 + $0x2c] sm:$0xf]
        %v1099 = vld [vmem:[%s357 + $0x30] sm:$0xf]
        %v1100 = vld [vmem:[%s357 + $0x34] sm:$0xf]
        %v1101 = vld [vmem:[%s357 + $0x38] sm:$0xf]
        %v1102 = vld [vmem:[%s357 + $0x3c] sm:$0xf]
        %v1103 = vld [vmem:[#allocation16] sm:$0xff]
        %v1104 = vld [vmem:[#allocation16 + $0x8] sm:$0xf]
        %v1105 = vld [vmem:[#allocation16 + $0xc] sm:$0xff]
        %v1106 = vld [vmem:[#allocation16 + $0x14] sm:$0xf]
        %v1107 = vld [vmem:[#allocation16 + $0x18] sm:$0xff]
        %v1108 = vld [vmem:[#allocation16 + $0x20] sm:$0xf]
        %v1109 = vld [vmem:[#allocation16 + $0x24] sm:$0xff]
        %v1110 = vld [vmem:[#allocation16 + $0x2c] sm:$0xf]
        %v1111 = vld [vmem:[#allocation16 + $0x30] sm:$0xff]
        %v1112 = vld [vmem:[#allocation16 + $0x38] sm:$0xf]
        %v1113 = vld [vmem:[#allocation16 + $0x3c] sm:$0xff]
        %v1114 = vld [vmem:[#allocation16 + $0x44] sm:$0xf]
        %v1115 = vld [vmem:[#allocation16 + $0x48] sm:$0xff]
        %v1116 = vld [vmem:[#allocation16 + $0x50] sm:$0xf]
        %v1117 = vld [vmem:[#allocation16 + $0x54] sm:$0xff]
        %v1118 = vld [vmem:[#allocation16 + $0x5c] sm:$0xf]
        %v1119 = vld [vmem:[#allocation16 + $0x60] sm:$0xff]
        %v1120 = vld [vmem:[#allocation16 + $0x68] sm:$0xf]
        %v1121 = vld [vmem:[#allocation16 + $0x6c] sm:$0xff]
        %v1122 = vld [vmem:[#allocation16 + $0x74] sm:$0xf]
        %v1123 = vld [vmem:[#allocation16 + $0x78] sm:$0xff]
        %v1124 = vld [vmem:[#allocation16 + $0x80] sm:$0xf]
        %v1125 = vld [vmem:[#allocation16 + $0x84] sm:$0xff]
        %v1126 = vld [vmem:[#allocation16 + $0x8c] sm:$0xf]
        %v1127 = vld [vmem:[#allocation16 + $0x90] sm:$0xff]
        %v1128 = vld [vmem:[#allocation16 + $0x98] sm:$0xf]
        %v1129 = vld [vmem:[#allocation16 + $0x9c] sm:$0xff]
        %v1130 = vld [vmem:[#allocation16 + $0xa4] sm:$0xf]
        %v1131 = vld [vmem:[#allocation16 + $0xa8] sm:$0xff]
        %v1132 = vld [vmem:[#allocation16 + $0xb0] sm:$0xf]
        %v1133 = vld [vmem:[#allocation16 + $0xb4] sm:$0xff]
        %v1134 = vld [vmem:[#allocation16 + $0xbc] sm:$0xf]
        %v1151 = vunpack.c.l.b16 %v1087
        %v1152 = vunpack.c.l.b16 %v1088
        %v1153 = vunpack.c.l.b16 %v1089
        %v1154 = vunpack.c.l.b16 %v1090
        %v1155 = vunpack.c.l.b16 %v1091
        %v1156 = vunpack.c.l.b16 %v1092
        %v1157 = vunpack.c.l.b16 %v1093
        %v1158 = vunpack.c.l.b16 %v1094
        %v1159 = vunpack.c.l.b16 %v1095
        %v1160 = vunpack.c.l.b16 %v1096
        %v1161 = vunpack.c.l.b16 %v1097
        %v1162 = vunpack.c.l.b16 %v1098
        %v1163 = vunpack.c.l.b16 %v1099
        %v1164 = vunpack.c.l.b16 %v1100
        %v1165 = vunpack.c.l.b16 %v1101
        %v1166 = vunpack.c.l.b16 %v1102
        %v1167 = vpack.c.b16 %v1152, %v1151
        %v1168 = vpack.c.b16 %v1154, %v1153
        %v1169 = vpack.c.b16 %v1156, %v1155
        %v1170 = vpack.c.b16 %v1158, %v1157
        %v1171 = vpack.c.b16 %v1160, %v1159
        %v1172 = vpack.c.b16 %v1162, %v1161
        %v1173 = vpack.c.b16 %v1164, %v1163
        %v1174 = vpack.c.b16 %v1166, %v1165
        %v1215 = vunpack.c.l.b16 %v1103
        %v1216 = vunpack.c.h.b16 %v1103
        %v1217 = vunpack.c.l.b16 %v1104
        %v1218 = vunpack.c.l.b16 %v1105
        %v1219 = vunpack.c.h.b16 %v1105
        %v1220 = vunpack.c.l.b16 %v1106
        %v1221 = vunpack.c.l.b16 %v1107
        %v1222 = vunpack.c.h.b16 %v1107
        %v1223 = vunpack.c.l.b16 %v1108
        %v1224 = vunpack.c.l.b16 %v1109
        %v1225 = vunpack.c.h.b16 %v1109
        %v1226 = vunpack.c.l.b16 %v1110
        %v1227 = vunpack.c.l.b16 %v1111
        %v1228 = vunpack.c.h.b16 %v1111
        %v1229 = vunpack.c.l.b16 %v1112
        %v1230 = vunpack.c.l.b16 %v1113
        %v1231 = vunpack.c.h.b16 %v1113
        %v1232 = vunpack.c.l.b16 %v1114
        %v1233 = vunpack.c.l.b16 %v1115
        %v1234 = vunpack.c.h.b16 %v1115
        %v1235 = vunpack.c.l.b16 %v1116
        %v1236 = vunpack.c.l.b16 %v1117
        %v1237 = vunpack.c.h.b16 %v1117
        %v1238 = vunpack.c.l.b16 %v1118
        %v1239 = vunpack.c.l.b16 %v1119
        %v1240 = vunpack.c.h.b16 %v1119
        %v1241 = vunpack.c.l.b16 %v1120
        %v1242 = vunpack.c.l.b16 %v1121
        %v1243 = vunpack.c.h.b16 %v1121
        %v1244 = vunpack.c.l.b16 %v1122
        %v1245 = vunpack.c.l.b16 %v1123
        %v1246 = vunpack.c.h.b16 %v1123
        %v1247 = vunpack.c.l.b16 %v1124
        %v1248 = vunpack.c.l.b16 %v1125
        %v1249 = vunpack.c.h.b16 %v1125
        %v1250 = vunpack.c.l.b16 %v1126
        %v1251 = vunpack.c.l.b16 %v1127
        %v1252 = vunpack.c.h.b16 %v1127
        %v1253 = vunpack.c.l.b16 %v1128
        %v1254 = vunpack.c.l.b16 %v1129
        %v1255 = vunpack.c.h.b16 %v1129
        %v1256 = vunpack.c.l.b16 %v1130
        %v1257 = vunpack.c.l.b16 %v1131
        %v1258 = vunpack.c.h.b16 %v1131
        %v1259 = vunpack.c.l.b16 %v1132
        %v1260 = vunpack.c.l.b16 %v1133
        %v1261 = vunpack.c.h.b16 %v1133
        %v1262 = vunpack.c.l.b16 %v1134
        %v1263 = vpack.c.b16 %v1218, %v1215
        %v1264 = vpack.c.b16 %v1219, %v1216
        %v1265 = vpack.c.b16 %v1220, %v1217
        %v1266 = vpack.c.b16 %v1224, %v1221
        %v1267 = vpack.c.b16 %v1225, %v1222
        %v1268 = vpack.c.b16 %v1226, %v1223
        %v1269 = vpack.c.b16 %v1230, %v1227
        %v1270 = vpack.c.b16 %v1231, %v1228
        %v1271 = vpack.c.b16 %v1232, %v1229
        %v1272 = vpack.c.b16 %v1236, %v1233
        %v1273 = vpack.c.b16 %v1237, %v1234
        %v1274 = vpack.c.b16 %v1238, %v1235
        %v1275 = vpack.c.b16 %v1242, %v1239
        %v1276 = vpack.c.b16 %v1243, %v1240
        %v1277 = vpack.c.b16 %v1244, %v1241
        %v1278 = vpack.c.b16 %v1248, %v1245
        %v1279 = vpack.c.b16 %v1249, %v1246
        %v1280 = vpack.c.b16 %v1250, %v1247
        %v1281 = vpack.c.b16 %v1254, %v1251
        %v1282 = vpack.c.b16 %v1255, %v1252
        %v1283 = vpack.c.b16 %v1256, %v1253
        %v1284 = vpack.c.b16 %v1260, %v1257
        %v1285 = vpack.c.b16 %v1261, %v1258
        %v1286 = vpack.c.b16 %v1262, %v1259
        %1311 = vmatpush.bf16.msra.mxu0 %v1284
        %1312 = vmatpush.bf16.msra.mxu0 %v1281
        %1313 = vmatpush.bf16.msra.mxu0 %v1278
        %1314 = vmatpush.bf16.msra.mxu0 %v1275
        %1315 = vmatpush.bf16.msra.mxu0 %v1272
        %1316 = vmatpush.bf16.msra.mxu0 %v1269
        %1317 = vmatpush.bf16.msra.mxu0 %v1266
        %1318 = vmatpush.bf16.msra.mxu0 %v1263
        %1319 = vmatmul.bf16.gmra.mxu0 %v1167
        %v1320 = vpop.f32.mrf.mxu0
        %v1321 = vadd.f32 0.0, %v1320
        %v1322 = vpop.f32.mrf.mxu0
        %v1323 = vadd.f32 0.0, %v1322
        %1324 = vmatmul.bf16.gmra.mxu0 %v1168
        %v1325 = vpop.f32.mrf.mxu0
        %v1326 = vadd.f32 0.0, %v1325
        %v1327 = vpop.f32.mrf.mxu0
        %v1328 = vadd.f32 0.0, %v1327
        %1329 = vmatmul.bf16.gmra.mxu0 %v1169
        %v1330 = vpop.f32.mrf.mxu0
        %v1331 = vadd.f32 0.0, %v1330
        %v1332 = vpop.f32.mrf.mxu0
        %v1333 = vadd.f32 0.0, %v1332
        %1334 = vmatmul.bf16.gmra.mxu0 %v1170
        %v1335 = vpop.f32.mrf.mxu0
        %v1336 = vadd.f32 0.0, %v1335
        %v1337 = vpop.f32.mrf.mxu0
        %v1338 = vadd.f32 0.0, %v1337
        %1339 = vmatmul.bf16.gmra.mxu0 %v1171
        %v1340 = vpop.f32.mrf.mxu0
        %v1341 = vadd.f32 0.0, %v1340
        %v1342 = vpop.f32.mrf.mxu0
        %v1343 = vadd.f32 0.0, %v1342
        %1344 = vmatmul.bf16.gmra.mxu0 %v1172
        %v1345 = vpop.f32.mrf.mxu0
        %v1346 = vadd.f32 0.0, %v1345
        %v1347 = vpop.f32.mrf.mxu0
        %v1348 = vadd.f32 0.0, %v1347
        %1349 = vmatmul.bf16.gmra.mxu0 %v1173
        %v1350 = vpop.f32.mrf.mxu0
        %v1351 = vadd.f32 0.0, %v1350
        %v1352 = vpop.f32.mrf.mxu0
        %v1353 = vadd.f32 0.0, %v1352
        %1354 = vmatmul.bf16.gmra.mxu0 %v1174
        %v1355 = vpop.f32.mrf.mxu0
        %v1356 = vadd.f32 0.0, %v1355
        %v1357 = vpop.f32.mrf.mxu0
        %v1358 = vadd.f32 0.0, %v1357
        %1359 = vdwg.mxu0
        %1360 = vmatpush.bf16.msra.mxu0 %v1285
        %1361 = vmatpush.bf16.msra.mxu0 %v1282
        %1362 = vmatpush.bf16.msra.mxu0 %v1279
        %1363 = vmatpush.bf16.msra.mxu0 %v1276
        %1364 = vmatpush.bf16.msra.mxu0 %v1273
        %1365 = vmatpush.bf16.msra.mxu0 %v1270
        %1366 = vmatpush.bf16.msra.mxu0 %v1267
        %1367 = vmatpush.bf16.msra.mxu0 %v1264
        %1368 = vmatmul.bf16.gmra.mxu0 %v1167
        %v1369 = vpop.f32.mrf.mxu0
        %v1370 = vadd.f32 0.0, %v1369
        %v1371 = vpop.f32.mrf.mxu0
        %v1372 = vadd.f32 0.0, %v1371
        %1373 = vmatmul.bf16.gmra.mxu0 %v1168
        %v1374 = vpop.f32.mrf.mxu0
        %v1375 = vadd.f32 0.0, %v1374
        %v1376 = vpop.f32.mrf.mxu0
        %v1377 = vadd.f32 0.0, %v1376
        %1378 = vmatmul.bf16.gmra.mxu0 %v1169
        %v1379 = vpop.f32.mrf.mxu0
        %v1380 = vadd.f32 0.0, %v1379
        %v1381 = vpop.f32.mrf.mxu0
        %v1382 = vadd.f32 0.0, %v1381
        %1383 = vmatmul.bf16.gmra.mxu0 %v1170
        %v1384 = vpop.f32.mrf.mxu0
        %v1385 = vadd.f32 0.0, %v1384
        %v1386 = vpop.f32.mrf.mxu0
        %v1387 = vadd.f32 0.0, %v1386
        %1388 = vmatmul.bf16.gmra.mxu0 %v1171
        %v1389 = vpop.f32.mrf.mxu0
        %v1390 = vadd.f32 0.0, %v1389
        %v1391 = vpop.f32.mrf.mxu0
        %v1392 = vadd.f32 0.0, %v1391
        %1393 = vmatmul.bf16.gmra.mxu0 %v1172
        %v1394 = vpop.f32.mrf.mxu0
        %v1395 = vadd.f32 0.0, %v1394
        %v1396 = vpop.f32.mrf.mxu0
        %v1397 = vadd.f32 0.0, %v1396
        %1398 = vmatmul.bf16.gmra.mxu0 %v1173
        %v1399 = vpop.f32.mrf.mxu0
        %v1400 = vadd.f32 0.0, %v1399
        %v1401 = vpop.f32.mrf.mxu0
        %v1402 = vadd.f32 0.0, %v1401
        %1403 = vmatmul.bf16.gmra.mxu0 %v1174
        %v1404 = vpop.f32.mrf.mxu0
        %v1405 = vadd.f32 0.0, %v1404
        %v1406 = vpop.f32.mrf.mxu0
        %v1407 = vadd.f32 0.0, %v1406
        %1408 = vdwg.mxu0
        %1409 = vmatpush.bf16.msra.mxu0 %v1286
        %1410 = vmatpush.bf16.msra.mxu0 %v1283
        %1411 = vmatpush.bf16.msra.mxu0 %v1280
        %1412 = vmatpush.bf16.msra.mxu0 %v1277
        %1413 = vmatpush.bf16.msra.mxu0 %v1274
        %1414 = vmatpush.bf16.msra.mxu0 %v1271
        %1415 = vmatpush.bf16.msra.mxu0 %v1268
        %1416 = vmatpush.bf16.msra.mxu0 %v1265
        %1417 = vmatmul.bf16.gmra.mxu0 %v1167
        %v1418 = vpop.f32.mrf.mxu0
        %v1419 = vadd.f32 0.0, %v1418
        %v1420 = vpop.f32.mrf.mxu0
        %v1421 = vadd.f32 0.0, %v1420
        %1422 = vmatmul.bf16.gmra.mxu0 %v1168
        %v1423 = vpop.f32.mrf.mxu0
        %v1424 = vadd.f32 0.0, %v1423
        %v1425 = vpop.f32.mrf.mxu0
        %v1426 = vadd.f32 0.0, %v1425
        %1427 = vmatmul.bf16.gmra.mxu0 %v1169
        %v1428 = vpop.f32.mrf.mxu0
        %v1429 = vadd.f32 0.0, %v1428
        %v1430 = vpop.f32.mrf.mxu0
        %v1431 = vadd.f32 0.0, %v1430
        %1432 = vmatmul.bf16.gmra.mxu0 %v1170
        %v1433 = vpop.f32.mrf.mxu0
        %v1434 = vadd.f32 0.0, %v1433
        %v1435 = vpop.f32.mrf.mxu0
        %v1436 = vadd.f32 0.0, %v1435
        %1437 = vmatmul.bf16.gmra.mxu0 %v1171
        %v1438 = vpop.f32.mrf.mxu0
        %v1439 = vadd.f32 0.0, %v1438
        %v1440 = vpop.f32.mrf.mxu0
        %v1441 = vadd.f32 0.0, %v1440
        %1442 = vmatmul.bf16.gmra.mxu0 %v1172
        %v1443 = vpop.f32.mrf.mxu0
        %v1444 = vadd.f32 0.0, %v1443
        %v1445 = vpop.f32.mrf.mxu0
        %v1446 = vadd.f32 0.0, %v1445
        %1447 = vmatmul.bf16.gmra.mxu0 %v1173
        %v1448 = vpop.f32.mrf.mxu0
        %v1449 = vadd.f32 0.0, %v1448
        %v1450 = vpop.f32.mrf.mxu0
        %v1451 = vadd.f32 0.0, %v1450
        %1452 = vmatmul.bf16.gmra.mxu0 %v1174
        %v1453 = vpop.f32.mrf.mxu0
        %v1454 = vadd.f32 0.0, %v1453
        %v1455 = vpop.f32.mrf.mxu0
        %v1456 = vadd.f32 0.0, %v1455
        %1457 = vdwg.mxu0
        %v1458 = vpack.c.bf16 %v1370, %v1321
        %v1459 = vpack.c.bf16 %v1419, %v1419
        %v1460 = vpack.c.bf16 %v1372, %v1323
        %v1461 = vpack.c.bf16 %v1421, %v1421
        %v1462 = vpack.c.bf16 %v1375, %v1326
        %v1463 = vpack.c.bf16 %v1424, %v1424
        %v1464 = vpack.c.bf16 %v1377, %v1328
        %v1465 = vpack.c.bf16 %v1426, %v1426
        %v1466 = vpack.c.bf16 %v1380, %v1331
        %v1467 = vpack.c.bf16 %v1429, %v1429
        %v1468 = vpack.c.bf16 %v1382, %v1333
        %v1469 = vpack.c.bf16 %v1431, %v1431
        %v1470 = vpack.c.bf16 %v1385, %v1336
        %v1471 = vpack.c.bf16 %v1434, %v1434
        %v1472 = vpack.c.bf16 %v1387, %v1338
        %v1473 = vpack.c.bf16 %v1436, %v1436
        %v1474 = vpack.c.bf16 %v1390, %v1341
        %v1475 = vpack.c.bf16 %v1439, %v1439
        %v1476 = vpack.c.bf16 %v1392, %v1343
        %v1477 = vpack.c.bf16 %v1441, %v1441
        %v1478 = vpack.c.bf16 %v1395, %v1346
        %v1479 = vpack.c.bf16 %v1444, %v1444
        %v1480 = vpack.c.bf16 %v1397, %v1348
        %v1481 = vpack.c.bf16 %v1446, %v1446
        %v1482 = vpack.c.bf16 %v1400, %v1351
        %v1483 = vpack.c.bf16 %v1449, %v1449
        %v1484 = vpack.c.bf16 %v1402, %v1353
        %v1485 = vpack.c.bf16 %v1451, %v1451
        %v1486 = vpack.c.bf16 %v1405, %v1356
        %v1487 = vpack.c.bf16 %v1454, %v1454
        %v1488 = vpack.c.bf16 %v1407, %v1358
        %v1489 = vpack.c.bf16 %v1456, %v1456
        %v1490 = vld [vmem:[#allocation2] sm:$0xff]
        %v1491 = vld [vmem:[#allocation2 + $0x8] sm:$0xff]
        %v1492 = vld [vmem:[#allocation2 + $0x10] sm:$0xff]
        %v1493 = vld [vmem:[#allocation2 + $0x18] sm:$0xff]
        %v1494 = vld [vmem:[#allocation2 + $0x20] sm:$0xff]
        %v1495 = vld [vmem:[#allocation2 + $0x28] sm:$0xff]
        %v1496 = vld [vmem:[#allocation2 + $0x30] sm:$0xff]
        %v1497 = vld [vmem:[#allocation2 + $0x38] sm:$0xff]
        %v1498 = vld [vmem:[#allocation2 + $0x40] sm:$0xff]
        %v1499 = vld [vmem:[#allocation2 + $0x48] sm:$0xff]
        %v1500 = vld [vmem:[#allocation2 + $0x50] sm:$0xff]
        %v1501 = vld [vmem:[#allocation2 + $0x58] sm:$0xff]
        %v1502 = vld [vmem:[#allocation2 + $0x60] sm:$0xff]
        %v1503 = vld [vmem:[#allocation2 + $0x68] sm:$0xff]
        %v1504 = vld [vmem:[#allocation2 + $0x70] sm:$0xff]
        %v1505 = vld [vmem:[#allocation2 + $0x78] sm:$0xff]
        %v1522 = vunpack.c.l.b16 %v1490
        %v1523 = vunpack.c.l.b16 %v1491
        %v1524 = vunpack.c.l.b16 %v1492
        %v1525 = vunpack.c.l.b16 %v1493
        %v1526 = vunpack.c.l.b16 %v1494
        %v1527 = vunpack.c.l.b16 %v1495
        %v1528 = vunpack.c.l.b16 %v1496
        %v1529 = vunpack.c.l.b16 %v1497
        %v1530 = vunpack.c.l.b16 %v1498
        %v1531 = vunpack.c.l.b16 %v1499
        %v1532 = vunpack.c.l.b16 %v1500
        %v1533 = vunpack.c.l.b16 %v1501
        %v1534 = vunpack.c.l.b16 %v1502
        %v1535 = vunpack.c.l.b16 %v1503
        %v1536 = vunpack.c.l.b16 %v1504
        %v1537 = vunpack.c.l.b16 %v1505
        %v1538 = vpack.c.b16 %v1523, %v1522
        %v1539 = vpack.c.b16 %v1525, %v1524
        %v1540 = vpack.c.b16 %v1527, %v1526
        %v1541 = vpack.c.b16 %v1529, %v1528
        %v1542 = vpack.c.b16 %v1531, %v1530
        %v1543 = vpack.c.b16 %v1533, %v1532
        %v1544 = vpack.c.b16 %v1535, %v1534
        %v1545 = vpack.c.b16 %v1537, %v1536
        %v1562 = vunpack.c.l.b16 %v1458
        %v1563 = vunpack.c.l.b16 %v1460
        %v1564 = vunpack.c.l.b16 %v1462
        %v1565 = vunpack.c.l.b16 %v1464
        %v1566 = vunpack.c.l.b16 %v1466
        %v1567 = vunpack.c.l.b16 %v1468
        %v1568 = vunpack.c.l.b16 %v1470
        %v1569 = vunpack.c.l.b16 %v1472
        %v1570 = vunpack.c.l.b16 %v1474
        %v1571 = vunpack.c.l.b16 %v1476
        %v1572 = vunpack.c.l.b16 %v1478
        %v1573 = vunpack.c.l.b16 %v1480
        %v1574 = vunpack.c.l.b16 %v1482
        %v1575 = vunpack.c.l.b16 %v1484
        %v1576 = vunpack.c.l.b16 %v1486
        %v1577 = vunpack.c.l.b16 %v1488
        %v1578 = vpack.c.b16 %v1563, %v1562
        %v1579 = vpack.c.b16 %v1565, %v1564
        %v1580 = vpack.c.b16 %v1567, %v1566
        %v1581 = vpack.c.b16 %v1569, %v1568
        %v1582 = vpack.c.b16 %v1571, %v1570
        %v1583 = vpack.c.b16 %v1573, %v1572
        %v1584 = vpack.c.b16 %v1575, %v1574
        %v1585 = vpack.c.b16 %v1577, %v1576
        %vm1586 = vcmask 261120
        %v1588 = vsel %vm1586, %v1538, 0
        %v1591 = vsel %vm1586, %v1539, 0
        %v1594 = vsel %vm1586, %v1540, 0
        %v1597 = vsel %vm1586, %v1541, 0
        %v1600 = vsel %vm1586, %v1542, 0
        %v1603 = vsel %vm1586, %v1543, 0
        %v1606 = vsel %vm1586, %v1544, 0
        %v1609 = vsel %vm1586, %v1545, 0
        %v1612 = vsel %vm1586, %v1578, 0
        %v1615 = vsel %vm1586, %v1579, 0
        %v1618 = vsel %vm1586, %v1580, 0
        %v1621 = vsel %vm1586, %v1581, 0
        %v1624 = vsel %vm1586, %v1582, 0
        %v1627 = vsel %vm1586, %v1583, 0
        %v1630 = vsel %vm1586, %v1584, 0
        %v1633 = vsel %vm1586, %v1585, 0
        %1635 = vmatpush.bf16.xpose.msra.mxu0 %v1633
        %1636 = vmatpush.bf16.xpose.msra.mxu0 %v1630
        %1637 = vmatpush.bf16.xpose.msra.mxu0 %v1627
        %1638 = vmatpush.bf16.xpose.msra.mxu0 %v1624
        %1639 = vmatpush.bf16.xpose.msra.mxu0 %v1621
        %1640 = vmatpush.bf16.xpose.msra.mxu0 %v1618
        %1641 = vmatpush.bf16.xpose.msra.mxu0 %v1615
        %1642 = vmatpush.bf16.xpose.msra.mxu0 %v1612
        %1643 = vmatmul.bf16.gmra.mxu0 %v1588
        %v1644 = vpop.f32.mrf.mxu0
        %v1645 = vadd.f32 0.0, %v1644
        %v1646 = vpop.f32.mrf.mxu0
        %v1647 = vadd.f32 0.0, %v1646
        %1648 = vmatmul.bf16.gmra.mxu0 %v1591
        %v1649 = vpop.f32.mrf.mxu0
        %v1650 = vadd.f32 0.0, %v1649
        %v1651 = vpop.f32.mrf.mxu0
        %v1652 = vadd.f32 0.0, %v1651
        %1653 = vmatmul.bf16.gmra.mxu0 %v1594
        %v1654 = vpop.f32.mrf.mxu0
        %v1655 = vadd.f32 0.0, %v1654
        %v1656 = vpop.f32.mrf.mxu0
        %v1657 = vadd.f32 0.0, %v1656
        %1658 = vmatmul.bf16.gmra.mxu0 %v1597
        %v1659 = vpop.f32.mrf.mxu0
        %v1660 = vadd.f32 0.0, %v1659
        %v1661 = vpop.f32.mrf.mxu0
        %v1662 = vadd.f32 0.0, %v1661
        %1663 = vmatmul.bf16.gmra.mxu0 %v1600
        %v1664 = vpop.f32.mrf.mxu0
        %v1665 = vadd.f32 0.0, %v1664
        %v1666 = vpop.f32.mrf.mxu0
        %v1667 = vadd.f32 0.0, %v1666
        %1668 = vmatmul.bf16.gmra.mxu0 %v1603
        %v1669 = vpop.f32.mrf.mxu0
        %v1670 = vadd.f32 0.0, %v1669
        %v1671 = vpop.f32.mrf.mxu0
        %v1672 = vadd.f32 0.0, %v1671
        %1673 = vmatmul.bf16.gmra.mxu0 %v1606
        %v1674 = vpop.f32.mrf.mxu0
        %v1675 = vadd.f32 0.0, %v1674
        %v1676 = vpop.f32.mrf.mxu0
        %v1677 = vadd.f32 0.0, %v1676
        %1678 = vmatmul.bf16.gmra.mxu0 %v1609
        %v1679 = vpop.f32.mrf.mxu0
        %v1680 = vadd.f32 0.0, %v1679
        %v1681 = vpop.f32.mrf.mxu0
        %v1682 = vadd.f32 0.0, %v1681
        %1683 = vdwg.mxu0
        %v1684 = vld [vmem:[#allocation3] sm:$0xff]
        %v1685 = vld [vmem:[#allocation3 + $0x8] sm:$0xff]
        %v1686 = vld [vmem:[#allocation3 + $0x10] sm:$0xff]
        %v1687 = vld [vmem:[#allocation3 + $0x18] sm:$0xff]
        %v1688 = vld [vmem:[#allocation3 + $0x20] sm:$0xff]
        %v1689 = vld [vmem:[#allocation3 + $0x28] sm:$0xff]
        %v1690 = vld [vmem:[#allocation3 + $0x30] sm:$0xff]
        %v1691 = vld [vmem:[#allocation3 + $0x38] sm:$0xff]
        %v1692 = vld [vmem:[#allocation3 + $0x40] sm:$0xff]
        %v1693 = vld [vmem:[#allocation3 + $0x48] sm:$0xff]
        %v1694 = vld [vmem:[#allocation3 + $0x50] sm:$0xff]
        %v1695 = vld [vmem:[#allocation3 + $0x58] sm:$0xff]
        %v1696 = vld [vmem:[#allocation3 + $0x60] sm:$0xff]
        %v1697 = vld [vmem:[#allocation3 + $0x68] sm:$0xff]
        %v1698 = vld [vmem:[#allocation3 + $0x70] sm:$0xff]
        %v1699 = vld [vmem:[#allocation3 + $0x78] sm:$0xff]
        %1700 = vmax.xlane.f32.xlu0 %v1645
        %v1701 = vpop.xlane.xlu0 %1700
        %1702 = vmax.xlane.f32.xlu0 %v1647
        %v1703 = vpop.xlane.xlu0 %1702
        %1704 = vmax.xlane.f32.xlu0 %v1650
        %v1705 = vpop.xlane.xlu0 %1704
        %1706 = vmax.xlane.f32.xlu0 %v1652
        %v1707 = vpop.xlane.xlu0 %1706
        %1708 = vmax.xlane.f32.xlu0 %v1655
        %v1709 = vpop.xlane.xlu0 %1708
        %1710 = vmax.xlane.f32.xlu0 %v1657
        %v1711 = vpop.xlane.xlu0 %1710
        %1712 = vmax.xlane.f32.xlu0 %v1660
        %v1713 = vpop.xlane.xlu0 %1712
        %1714 = vmax.xlane.f32.xlu0 %v1662
        %v1715 = vpop.xlane.xlu0 %1714
        %1716 = vmax.xlane.f32.xlu0 %v1665
        %v1717 = vpop.xlane.xlu0 %1716
        %1718 = vmax.xlane.f32.xlu0 %v1667
        %v1719 = vpop.xlane.xlu0 %1718
        %1720 = vmax.xlane.f32.xlu0 %v1670
        %v1721 = vpop.xlane.xlu0 %1720
        %1722 = vmax.xlane.f32.xlu0 %v1672
        %v1723 = vpop.xlane.xlu0 %1722
        %1724 = vmax.xlane.f32.xlu0 %v1675
        %v1725 = vpop.xlane.xlu0 %1724
        %1726 = vmax.xlane.f32.xlu0 %v1677
        %v1727 = vpop.xlane.xlu0 %1726
        %1728 = vmax.xlane.f32.xlu0 %v1680
        %v1729 = vpop.xlane.xlu0 %1728
        %1730 = vmax.xlane.f32.xlu0 %v1682
        %v1731 = vpop.xlane.xlu0 %1730
        %v1732 = vmax.f32 %v1684, %v1701
        %v1733 = vmax.f32 %v1685, %v1703
        %v1734 = vmax.f32 %v1686, %v1705
        %v1735 = vmax.f32 %v1687, %v1707
        %v1736 = vmax.f32 %v1688, %v1709
        %v1737 = vmax.f32 %v1689, %v1711
        %v1738 = vmax.f32 %v1690, %v1713
        %v1739 = vmax.f32 %v1691, %v1715
        %v1740 = vmax.f32 %v1692, %v1717
        %v1741 = vmax.f32 %v1693, %v1719
        %v1742 = vmax.f32 %v1694, %v1721
        %v1743 = vmax.f32 %v1695, %v1723
        %v1744 = vmax.f32 %v1696, %v1725
        %v1745 = vmax.f32 %v1697, %v1727
        %v1746 = vmax.f32 %v1698, %v1729
        %v1747 = vmax.f32 %v1699, %v1731
        %v1748 = vsub.f32 %v1684, %v1732
        %v1749 = vsub.f32 %v1685, %v1733
        %v1750 = vsub.f32 %v1686, %v1734
        %v1751 = vsub.f32 %v1687, %v1735
        %v1752 = vsub.f32 %v1688, %v1736
        %v1753 = vsub.f32 %v1689, %v1737
        %v1754 = vsub.f32 %v1690, %v1738
        %v1755 = vsub.f32 %v1691, %v1739
        %v1756 = vsub.f32 %v1692, %v1740
        %v1757 = vsub.f32 %v1693, %v1741
        %v1758 = vsub.f32 %v1694, %v1742
        %v1759 = vsub.f32 %v1695, %v1743
        %v1760 = vsub.f32 %v1696, %v1744
        %v1761 = vsub.f32 %v1697, %v1745
        %v1762 = vsub.f32 %v1698, %v1746
        %v1763 = vsub.f32 %v1699, %v1747
        %v1764 = vmul.f32 %v1748, 1.442695
        %v1765 = vpow.pop %v1764
        %v1766 = vmul.f32 %v1749, 1.442695
        %v1767 = vpow.pop %v1766
        %v1768 = vmul.f32 %v1750, 1.442695
        %v1769 = vpow.pop %v1768
        %v1770 = vmul.f32 %v1751, 1.442695
        %v1771 = vpow.pop %v1770
        %v1772 = vmul.f32 %v1752, 1.442695
        %v1773 = vpow.pop %v1772
        %v1774 = vmul.f32 %v1753, 1.442695
        %v1775 = vpow.pop %v1774
        %v1776 = vmul.f32 %v1754, 1.442695
        %v1777 = vpow.pop %v1776
        %v1778 = vmul.f32 %v1755, 1.442695
        %v1779 = vpow.pop %v1778
        %v1780 = vmul.f32 %v1756, 1.442695
        %v1781 = vpow.pop %v1780
        %v1782 = vmul.f32 %v1757, 1.442695
        %v1783 = vpow.pop %v1782
        %v1784 = vmul.f32 %v1758, 1.442695
        %v1785 = vpow.pop %v1784
        %v1786 = vmul.f32 %v1759, 1.442695
        %v1787 = vpow.pop %v1786
        %v1788 = vmul.f32 %v1760, 1.442695
        %v1789 = vpow.pop %v1788
        %v1790 = vmul.f32 %v1761, 1.442695
        %v1791 = vpow.pop %v1790
        %v1792 = vmul.f32 %v1762, 1.442695
        %v1793 = vpow.pop %v1792
        %v1794 = vmul.f32 %v1763, 1.442695
        %v1795 = vpow.pop %v1794
        %1797 = vset.pattern.permute.xlu0 0
        %1798 = vperm.xlu0 %1797, %v1732
        %v1799 = vpop.permute.xlu0 %1798
        %1802 = vset.pattern.permute.xlu0 0
        %1803 = vperm.xlu0 %1802, %v1733
        %v1804 = vpop.permute.xlu0 %1803
        %1807 = vset.pattern.permute.xlu0 0
        %1808 = vperm.xlu0 %1807, %v1734
        %v1809 = vpop.permute.xlu0 %1808
        %1812 = vset.pattern.permute.xlu0 0
        %1813 = vperm.xlu0 %1812, %v1735
        %v1814 = vpop.permute.xlu0 %1813
        %1817 = vset.pattern.permute.xlu0 0
        %1818 = vperm.xlu0 %1817, %v1736
        %v1819 = vpop.permute.xlu0 %1818
        %1822 = vset.pattern.permute.xlu0 0
        %1823 = vperm.xlu0 %1822, %v1737
        %v1824 = vpop.permute.xlu0 %1823
        %1827 = vset.pattern.permute.xlu0 0
        %1828 = vperm.xlu0 %1827, %v1738
        %v1829 = vpop.permute.xlu0 %1828
        %1832 = vset.pattern.permute.xlu0 0
        %1833 = vperm.xlu0 %1832, %v1739
        %v1834 = vpop.permute.xlu0 %1833
        %1837 = vset.pattern.permute.xlu0 0
        %1838 = vperm.xlu0 %1837, %v1740
        %v1839 = vpop.permute.xlu0 %1838
        %1842 = vset.pattern.permute.xlu0 0
        %1843 = vperm.xlu0 %1842, %v1741
        %v1844 = vpop.permute.xlu0 %1843
        %1847 = vset.pattern.permute.xlu0 0
        %1848 = vperm.xlu0 %1847, %v1742
        %v1849 = vpop.permute.xlu0 %1848
        %1852 = vset.pattern.permute.xlu0 0
        %1853 = vperm.xlu0 %1852, %v1743
        %v1854 = vpop.permute.xlu0 %1853
        %1857 = vset.pattern.permute.xlu0 0
        %1858 = vperm.xlu0 %1857, %v1744
        %v1859 = vpop.permute.xlu0 %1858
        %1862 = vset.pattern.permute.xlu0 0
        %1863 = vperm.xlu0 %1862, %v1745
        %v1864 = vpop.permute.xlu0 %1863
        %1867 = vset.pattern.permute.xlu0 0
        %1868 = vperm.xlu0 %1867, %v1746
        %v1869 = vpop.permute.xlu0 %1868
        %1872 = vset.pattern.permute.xlu0 0
        %1873 = vperm.xlu0 %1872, %v1747
        %v1874 = vpop.permute.xlu0 %1873
        %v1876 = vsub.f32 %v1645, %v1799
        %v1877 = vsub.f32 %v1647, %v1804
        %v1878 = vsub.f32 %v1650, %v1809
        %v1879 = vsub.f32 %v1652, %v1814
        %v1880 = vsub.f32 %v1655, %v1819
        %v1881 = vsub.f32 %v1657, %v1824
        %v1882 = vsub.f32 %v1660, %v1829
        %v1883 = vsub.f32 %v1662, %v1834
        %v1884 = vsub.f32 %v1665, %v1839
        %v1885 = vsub.f32 %v1667, %v1844
        %v1886 = vsub.f32 %v1670, %v1849
        %v1887 = vsub.f32 %v1672, %v1854
        %v1888 = vsub.f32 %v1675, %v1859
        %v1889 = vsub.f32 %v1677, %v1864
        %v1890 = vsub.f32 %v1680, %v1869
        %v1891 = vsub.f32 %v1682, %v1874
        %v1892 = vmul.f32 %v1876, 1.442695
        %v1893 = vpow.pop %v1892
        %v1894 = vmul.f32 %v1877, 1.442695
        %v1895 = vpow.pop %v1894
        %v1896 = vmul.f32 %v1878, 1.442695
        %v1897 = vpow.pop %v1896
        %v1898 = vmul.f32 %v1879, 1.442695
        %v1899 = vpow.pop %v1898
        %v1900 = vmul.f32 %v1880, 1.442695
        %v1901 = vpow.pop %v1900
        %v1902 = vmul.f32 %v1881, 1.442695
        %v1903 = vpow.pop %v1902
        %v1904 = vmul.f32 %v1882, 1.442695
        %v1905 = vpow.pop %v1904
        %v1906 = vmul.f32 %v1883, 1.442695
        %v1907 = vpow.pop %v1906
        %v1908 = vmul.f32 %v1884, 1.442695
        %v1909 = vpow.pop %v1908
        %v1910 = vmul.f32 %v1885, 1.442695
        %v1911 = vpow.pop %v1910
        %v1912 = vmul.f32 %v1886, 1.442695
        %v1913 = vpow.pop %v1912
        %v1914 = vmul.f32 %v1887, 1.442695
        %v1915 = vpow.pop %v1914
        %v1916 = vmul.f32 %v1888, 1.442695
        %v1917 = vpow.pop %v1916
        %v1918 = vmul.f32 %v1889, 1.442695
        %v1919 = vpow.pop %v1918
        %v1920 = vmul.f32 %v1890, 1.442695
        %v1921 = vpow.pop %v1920
        %v1922 = vmul.f32 %v1891, 1.442695
        %v1923 = vpow.pop %v1922
        %v1924 = vld [vmem:[#allocation4] sm:$0xff]
        %v1925 = vld [vmem:[#allocation4 + $0x8] sm:$0xff]
        %v1926 = vld [vmem:[#allocation4 + $0x10] sm:$0xff]
        %v1927 = vld [vmem:[#allocation4 + $0x18] sm:$0xff]
        %v1928 = vld [vmem:[#allocation4 + $0x20] sm:$0xff]
        %v1929 = vld [vmem:[#allocation4 + $0x28] sm:$0xff]
        %v1930 = vld [vmem:[#allocation4 + $0x30] sm:$0xff]
        %v1931 = vld [vmem:[#allocation4 + $0x38] sm:$0xff]
        %v1932 = vld [vmem:[#allocation4 + $0x40] sm:$0xff]
        %v1933 = vld [vmem:[#allocation4 + $0x48] sm:$0xff]
        %v1934 = vld [vmem:[#allocation4 + $0x50] sm:$0xff]
        %v1935 = vld [vmem:[#allocation4 + $0x58] sm:$0xff]
        %v1936 = vld [vmem:[#allocation4 + $0x60] sm:$0xff]
        %v1937 = vld [vmem:[#allocation4 + $0x68] sm:$0xff]
        %v1938 = vld [vmem:[#allocation4 + $0x70] sm:$0xff]
        %v1939 = vld [vmem:[#allocation4 + $0x78] sm:$0xff]
        %v1940 = vmul.f32 %v1765, %v1924
        %v1941 = vmul.f32 %v1767, %v1925
        %v1942 = vmul.f32 %v1769, %v1926
        %v1943 = vmul.f32 %v1771, %v1927
        %v1944 = vmul.f32 %v1773, %v1928
        %v1945 = vmul.f32 %v1775, %v1929
        %v1946 = vmul.f32 %v1777, %v1930
        %v1947 = vmul.f32 %v1779, %v1931
        %v1948 = vmul.f32 %v1781, %v1932
        %v1949 = vmul.f32 %v1783, %v1933
        %v1950 = vmul.f32 %v1785, %v1934
        %v1951 = vmul.f32 %v1787, %v1935
        %v1952 = vmul.f32 %v1789, %v1936
        %v1953 = vmul.f32 %v1791, %v1937
        %v1954 = vmul.f32 %v1793, %v1938
        %v1955 = vmul.f32 %v1795, %v1939
        %1956 = vadd.xlane.f32.xlu0 %v1893
        %v1957 = vpop.xlane.xlu0 %1956
        %1958 = vadd.xlane.f32.xlu0 %v1895
        %v1959 = vpop.xlane.xlu0 %1958
        %1960 = vadd.xlane.f32.xlu0 %v1897
        %v1961 = vpop.xlane.xlu0 %1960
        %1962 = vadd.xlane.f32.xlu0 %v1899
        %v1963 = vpop.xlane.xlu0 %1962
        %1964 = vadd.xlane.f32.xlu0 %v1901
        %v1965 = vpop.xlane.xlu0 %1964
        %1966 = vadd.xlane.f32.xlu0 %v1903
        %v1967 = vpop.xlane.xlu0 %1966
        %1968 = vadd.xlane.f32.xlu0 %v1905
        %v1969 = vpop.xlane.xlu0 %1968
        %1970 = vadd.xlane.f32.xlu0 %v1907
        %v1971 = vpop.xlane.xlu0 %1970
        %1972 = vadd.xlane.f32.xlu0 %v1909
        %v1973 = vpop.xlane.xlu0 %1972
        %1974 = vadd.xlane.f32.xlu0 %v1911
        %v1975 = vpop.xlane.xlu0 %1974
        %1976 = vadd.xlane.f32.xlu0 %v1913
        %v1977 = vpop.xlane.xlu0 %1976
        %1978 = vadd.xlane.f32.xlu0 %v1915
        %v1979 = vpop.xlane.xlu0 %1978
        %1980 = vadd.xlane.f32.xlu0 %v1917
        %v1981 = vpop.xlane.xlu0 %1980
        %1982 = vadd.xlane.f32.xlu0 %v1919
        %v1983 = vpop.xlane.xlu0 %1982
        %1984 = vadd.xlane.f32.xlu0 %v1921
        %v1985 = vpop.xlane.xlu0 %1984
        %1986 = vadd.xlane.f32.xlu0 %v1923
        %v1987 = vpop.xlane.xlu0 %1986
        %v1988 = vadd.f32 %v1940, %v1957
        %v1989 = vadd.f32 %v1941, %v1959
        %v1990 = vadd.f32 %v1942, %v1961
        %v1991 = vadd.f32 %v1943, %v1963
        %v1992 = vadd.f32 %v1944, %v1965
        %v1993 = vadd.f32 %v1945, %v1967
        %v1994 = vadd.f32 %v1946, %v1969
        %v1995 = vadd.f32 %v1947, %v1971
        %v1996 = vadd.f32 %v1948, %v1973
        %v1997 = vadd.f32 %v1949, %v1975
        %v1998 = vadd.f32 %v1950, %v1977
        %v1999 = vadd.f32 %v1951, %v1979
        %v2000 = vadd.f32 %v1952, %v1981
        %v2001 = vadd.f32 %v1953, %v1983
        %v2002 = vadd.f32 %v1954, %v1985
        %v2003 = vadd.f32 %v1955, %v1987
        %vm2004 = vcmask 7168
        %2005 = vst.msk [vmem:[#allocation4] sm:$0xff] %vm2004, %v1988
        %2006 = vst.msk [vmem:[#allocation4 + $0x8] sm:$0xff] %vm2004, %v1989
        %2007 = vst.msk [vmem:[#allocation4 + $0x10] sm:$0xff] %vm2004, %v1990
        %2008 = vst.msk [vmem:[#allocation4 + $0x18] sm:$0xff] %vm2004, %v1991
        %2009 = vst.msk [vmem:[#allocation4 + $0x20] sm:$0xff] %vm2004, %v1992
        %2010 = vst.msk [vmem:[#allocation4 + $0x28] sm:$0xff] %vm2004, %v1993
        %2011 = vst.msk [vmem:[#allocation4 + $0x30] sm:$0xff] %vm2004, %v1994
        %2012 = vst.msk [vmem:[#allocation4 + $0x38] sm:$0xff] %vm2004, %v1995
        %2013 = vst.msk [vmem:[#allocation4 + $0x40] sm:$0xff] %vm2004, %v1996
        %2014 = vst.msk [vmem:[#allocation4 + $0x48] sm:$0xff] %vm2004, %v1997
        %2015 = vst.msk [vmem:[#allocation4 + $0x50] sm:$0xff] %vm2004, %v1998
        %2016 = vst.msk [vmem:[#allocation4 + $0x58] sm:$0xff] %vm2004, %v1999
        %2017 = vst.msk [vmem:[#allocation4 + $0x60] sm:$0xff] %vm2004, %v2000
        %2018 = vst.msk [vmem:[#allocation4 + $0x68] sm:$0xff] %vm2004, %v2001
        %2019 = vst.msk [vmem:[#allocation4 + $0x70] sm:$0xff] %vm2004, %v2002
        %2020 = vst.msk [vmem:[#allocation4 + $0x78] sm:$0xff] %vm2004, %v2003
        %v2021 = vld [vmem:[#allocation5] sm:$0xff]
        %v2022 = vld [vmem:[#allocation5 + $0x8] sm:$0xff]
        %v2023 = vld [vmem:[#allocation5 + $0x10] sm:$0xff]
        %v2024 = vld [vmem:[#allocation5 + $0x18] sm:$0xff]
        %v2025 = vld [vmem:[#allocation5 + $0x20] sm:$0xff]
        %v2026 = vld [vmem:[#allocation5 + $0x28] sm:$0xff]
        %v2027 = vld [vmem:[#allocation5 + $0x30] sm:$0xff]
        %v2028 = vld [vmem:[#allocation5 + $0x38] sm:$0xff]
        %v2029 = vld [vmem:[#allocation5 + $0x40] sm:$0xff]
        %v2030 = vld [vmem:[#allocation5 + $0x48] sm:$0xff]
        %v2031 = vld [vmem:[#allocation5 + $0x50] sm:$0xff]
        %v2032 = vld [vmem:[#allocation5 + $0x58] sm:$0xff]
        %v2033 = vld [vmem:[#allocation5 + $0x60] sm:$0xff]
        %v2034 = vld [vmem:[#allocation5 + $0x68] sm:$0xff]
        %v2035 = vld [vmem:[#allocation5 + $0x70] sm:$0xff]
        %v2036 = vld [vmem:[#allocation5 + $0x78] sm:$0xff]
        %2038 = vset.pattern.permute.xlu0 0
        %2039 = vperm.xlu0 %2038, %v1765
        %v2040 = vpop.permute.xlu0 %2039
        %2043 = vset.pattern.permute.xlu0 0
        %2044 = vperm.xlu0 %2043, %v1767
        %v2045 = vpop.permute.xlu0 %2044
        %2048 = vset.pattern.permute.xlu0 0
        %2049 = vperm.xlu0 %2048, %v1769
        %v2050 = vpop.permute.xlu0 %2049
        %2053 = vset.pattern.permute.xlu0 0
        %2054 = vperm.xlu0 %2053, %v1771
        %v2055 = vpop.permute.xlu0 %2054
        %2058 = vset.pattern.permute.xlu0 0
        %2059 = vperm.xlu0 %2058, %v1773
        %v2060 = vpop.permute.xlu0 %2059
        %2063 = vset.pattern.permute.xlu0 0
        %2064 = vperm.xlu0 %2063, %v1775
        %v2065 = vpop.permute.xlu0 %2064
        %2068 = vset.pattern.permute.xlu0 0
        %2069 = vperm.xlu0 %2068, %v1777
        %v2070 = vpop.permute.xlu0 %2069
        %2073 = vset.pattern.permute.xlu0 0
        %2074 = vperm.xlu0 %2073, %v1779
        %v2075 = vpop.permute.xlu0 %2074
        %2078 = vset.pattern.permute.xlu0 0
        %2079 = vperm.xlu0 %2078, %v1781
        %v2080 = vpop.permute.xlu0 %2079
        %2083 = vset.pattern.permute.xlu0 0
        %2084 = vperm.xlu0 %2083, %v1783
        %v2085 = vpop.permute.xlu0 %2084
        %2088 = vset.pattern.permute.xlu0 0
        %2089 = vperm.xlu0 %2088, %v1785
        %v2090 = vpop.permute.xlu0 %2089
        %2093 = vset.pattern.permute.xlu0 0
        %2094 = vperm.xlu0 %2093, %v1787
        %v2095 = vpop.permute.xlu0 %2094
        %2098 = vset.pattern.permute.xlu0 0
        %2099 = vperm.xlu0 %2098, %v1789
        %v2100 = vpop.permute.xlu0 %2099
        %2103 = vset.pattern.permute.xlu0 0
        %2104 = vperm.xlu0 %2103, %v1791
        %v2105 = vpop.permute.xlu0 %2104
        %2108 = vset.pattern.permute.xlu0 0
        %2109 = vperm.xlu0 %2108, %v1793
        %v2110 = vpop.permute.xlu0 %2109
        %2113 = vset.pattern.permute.xlu0 0
        %2114 = vperm.xlu0 %2113, %v1795
        %v2115 = vpop.permute.xlu0 %2114
        %v2117 = vmul.f32 %v2040, %v2021
        %v2118 = vmul.f32 %v2045, %v2022
        %v2119 = vmul.f32 %v2050, %v2023
        %v2120 = vmul.f32 %v2055, %v2024
        %v2121 = vmul.f32 %v2060, %v2025
        %v2122 = vmul.f32 %v2065, %v2026
        %v2123 = vmul.f32 %v2070, %v2027
        %v2124 = vmul.f32 %v2075, %v2028
        %v2125 = vmul.f32 %v2080, %v2029
        %v2126 = vmul.f32 %v2085, %v2030
        %v2127 = vmul.f32 %v2090, %v2031
        %v2128 = vmul.f32 %v2095, %v2032
        %v2129 = vmul.f32 %v2100, %v2033
        %v2130 = vmul.f32 %v2105, %v2034
        %v2131 = vmul.f32 %v2110, %v2035
        %v2132 = vmul.f32 %v2115, %v2036
        %v2133 = vpack.c.bf16 %v1895, %v1893
        %v2134 = vpack.c.bf16 %v1899, %v1897
        %v2135 = vpack.c.bf16 %v1903, %v1901
        %v2136 = vpack.c.bf16 %v1907, %v1905
        %v2137 = vpack.c.bf16 %v1911, %v1909
        %v2138 = vpack.c.bf16 %v1915, %v1913
        %v2139 = vpack.c.bf16 %v1919, %v1917
        %v2140 = vpack.c.bf16 %v1923, %v1921
        %v2157 = vunpack.c.l.b16 %v1459
        %v2158 = vunpack.c.l.b16 %v1461
        %v2159 = vunpack.c.l.b16 %v1463
        %v2160 = vunpack.c.l.b16 %v1465
        %v2161 = vunpack.c.l.b16 %v1467
        %v2162 = vunpack.c.l.b16 %v1469
        %v2163 = vunpack.c.l.b16 %v1471
        %v2164 = vunpack.c.l.b16 %v1473
        %v2165 = vunpack.c.l.b16 %v1475
        %v2166 = vunpack.c.l.b16 %v1477
        %v2167 = vunpack.c.l.b16 %v1479
        %v2168 = vunpack.c.l.b16 %v1481
        %v2169 = vunpack.c.l.b16 %v1483
        %v2170 = vunpack.c.l.b16 %v1485
        %v2171 = vunpack.c.l.b16 %v1487
        %v2172 = vunpack.c.l.b16 %v1489
        %v2173 = vpack.c.b16 %v2158, %v2157
        %v2174 = vpack.c.b16 %v2160, %v2159
        %v2175 = vpack.c.b16 %v2162, %v2161
        %v2176 = vpack.c.b16 %v2164, %v2163
        %v2177 = vpack.c.b16 %v2166, %v2165
        %v2178 = vpack.c.b16 %v2168, %v2167
        %v2179 = vpack.c.b16 %v2170, %v2169
        %v2180 = vpack.c.b16 %v2172, %v2171
        %2189 = vmatpush.bf16.msra.mxu0 %v2180
        %2190 = vmatpush.bf16.msra.mxu0 %v2179
        %2191 = vmatpush.bf16.msra.mxu0 %v2178
        %2192 = vmatpush.bf16.msra.mxu0 %v2177
        %2193 = vmatpush.bf16.msra.mxu0 %v2176
        %2194 = vmatpush.bf16.msra.mxu0 %v2175
        %2195 = vmatpush.bf16.msra.mxu0 %v2174
        %2196 = vmatpush.bf16.msra.mxu0 %v2173
        %2197 = vmatmul.bf16.gmra.mxu0 %v2133
        %v2198 = vpop.f32.mrf.mxu0
        %v2199 = vadd.f32 0.0, %v2198
        %v2200 = vpop.f32.mrf.mxu0
        %v2201 = vadd.f32 0.0, %v2200
        %2202 = vmatmul.bf16.gmra.mxu0 %v2134
        %v2203 = vpop.f32.mrf.mxu0
        %v2204 = vadd.f32 0.0, %v2203
        %v2205 = vpop.f32.mrf.mxu0
        %v2206 = vadd.f32 0.0, %v2205
        %2207 = vmatmul.bf16.gmra.mxu0 %v2135
        %v2208 = vpop.f32.mrf.mxu0
        %v2209 = vadd.f32 0.0, %v2208
        %v2210 = vpop.f32.mrf.mxu0
        %v2211 = vadd.f32 0.0, %v2210
        %2212 = vmatmul.bf16.gmra.mxu0 %v2136
        %v2213 = vpop.f32.mrf.mxu0
        %v2214 = vadd.f32 0.0, %v2213
        %v2215 = vpop.f32.mrf.mxu0
        %v2216 = vadd.f32 0.0, %v2215
        %2217 = vmatmul.bf16.gmra.mxu0 %v2137
        %v2218 = vpop.f32.mrf.mxu0
        %v2219 = vadd.f32 0.0, %v2218
        %v2220 = vpop.f32.mrf.mxu0
        %v2221 = vadd.f32 0.0, %v2220
        %2222 = vmatmul.bf16.gmra.mxu0 %v2138
        %v2223 = vpop.f32.mrf.mxu0
        %v2224 = vadd.f32 0.0, %v2223
        %v2225 = vpop.f32.mrf.mxu0
        %v2226 = vadd.f32 0.0, %v2225
        %2227 = vmatmul.bf16.gmra.mxu0 %v2139
        %v2228 = vpop.f32.mrf.mxu0
        %v2229 = vadd.f32 0.0, %v2228
        %v2230 = vpop.f32.mrf.mxu0
        %v2231 = vadd.f32 0.0, %v2230
        %2232 = vmatmul.bf16.gmra.mxu0 %v2140
        %v2233 = vpop.f32.mrf.mxu0
        %v2234 = vadd.f32 0.0, %v2233
        %v2235 = vpop.f32.mrf.mxu0
        %v2236 = vadd.f32 0.0, %v2235
        %2237 = vdwg.mxu0
        %v2238 = vadd.f32 %v2117, %v2199
        %v2239 = vadd.f32 %v2118, %v2201
        %v2240 = vadd.f32 %v2119, %v2204
        %v2241 = vadd.f32 %v2120, %v2206
        %v2242 = vadd.f32 %v2121, %v2209
        %v2243 = vadd.f32 %v2122, %v2211
        %v2244 = vadd.f32 %v2123, %v2214
        %v2245 = vadd.f32 %v2124, %v2216
        %v2246 = vadd.f32 %v2125, %v2219
        %v2247 = vadd.f32 %v2126, %v2221
        %v2248 = vadd.f32 %v2127, %v2224
        %v2249 = vadd.f32 %v2128, %v2226
        %v2250 = vadd.f32 %v2129, %v2229
        %v2251 = vadd.f32 %v2130, %v2231
        %v2252 = vadd.f32 %v2131, %v2234
        %v2253 = vadd.f32 %v2132, %v2236
        %2254 = vst.msk [vmem:[#allocation5] sm:$0xff] %vm1586, %v2238
        %2255 = vst.msk [vmem:[#allocation5 + $0x8] sm:$0xff] %vm1586, %v2239
        %2256 = vst.msk [vmem:[#allocation5 + $0x10] sm:$0xff] %vm1586, %v2240
        %2257 = vst.msk [vmem:[#allocation5 + $0x18] sm:$0xff] %vm1586, %v2241
        %2258 = vst.msk [vmem:[#allocation5 + $0x20] sm:$0xff] %vm1586, %v2242
        %2259 = vst.msk [vmem:[#allocation5 + $0x28] sm:$0xff] %vm1586, %v2243
        %2260 = vst.msk [vmem:[#allocation5 + $0x30] sm:$0xff] %vm1586, %v2244
        %2261 = vst.msk [vmem:[#allocation5 + $0x38] sm:$0xff] %vm1586, %v2245
        %2262 = vst.msk [vmem:[#allocation5 + $0x40] sm:$0xff] %vm1586, %v2246
        %2263 = vst.msk [vmem:[#allocation5 + $0x48] sm:$0xff] %vm1586, %v2247
        %2264 = vst.msk [vmem:[#allocation5 + $0x50] sm:$0xff] %vm1586, %v2248
        %2265 = vst.msk [vmem:[#allocation5 + $0x58] sm:$0xff] %vm1586, %v2249
        %2266 = vst.msk [vmem:[#allocation5 + $0x60] sm:$0xff] %vm1586, %v2250
        %2267 = vst.msk [vmem:[#allocation5 + $0x68] sm:$0xff] %vm1586, %v2251
        %2268 = vst.msk [vmem:[#allocation5 + $0x70] sm:$0xff] %vm1586, %v2252
        %2269 = vst.msk [vmem:[#allocation5 + $0x78] sm:$0xff] %vm1586, %v2253
        %2270 = vst.msk [vmem:[#allocation3] sm:$0xff] %vm2004, %v1732
        %2271 = vst.msk [vmem:[#allocation3 + $0x8] sm:$0xff] %vm2004, %v1733
        %2272 = vst.msk [vmem:[#allocation3 + $0x10] sm:$0xff] %vm2004, %v1734
        %2273 = vst.msk [vmem:[#allocation3 + $0x18] sm:$0xff] %vm2004, %v1735
        %2274 = vst.msk [vmem:[#allocation3 + $0x20] sm:$0xff] %vm2004, %v1736
        %2275 = vst.msk [vmem:[#allocation3 + $0x28] sm:$0xff] %vm2004, %v1737
        %2276 = vst.msk [vmem:[#allocation3 + $0x30] sm:$0xff] %vm2004, %v1738
        %2277 = vst.msk [vmem:[#allocation3 + $0x38] sm:$0xff] %vm2004, %v1739
        %2278 = vst.msk [vmem:[#allocation3 + $0x40] sm:$0xff] %vm2004, %v1740
        %2279 = vst.msk [vmem:[#allocation3 + $0x48] sm:$0xff] %vm2004, %v1741
        %2280 = vst.msk [vmem:[#allocation3 + $0x50] sm:$0xff] %vm2004, %v1742
        %2281 = vst.msk [vmem:[#allocation3 + $0x58] sm:$0xff] %vm2004, %v1743
        %2282 = vst.msk [vmem:[#allocation3 + $0x60] sm:$0xff] %vm2004, %v1744
        %2283 = vst.msk [vmem:[#allocation3 + $0x68] sm:$0xff] %vm2004, %v1745
        %2284 = vst.msk [vmem:[#allocation3 + $0x70] sm:$0xff] %vm2004, %v1746
        %2285 = vst.msk [vmem:[#allocation3 + $0x78] sm:$0xff] %vm2004, %v1747
        %v2286 = vunpack.c.h.b16 %v1490
        %v2287 = vunpack.c.h.b16 %v1491
        %v2288 = vunpack.c.h.b16 %v1492
        %v2289 = vunpack.c.h.b16 %v1493
        %v2290 = vunpack.c.h.b16 %v1494
        %v2291 = vunpack.c.h.b16 %v1495
        %v2292 = vunpack.c.h.b16 %v1496
        %v2293 = vunpack.c.h.b16 %v1497
        %v2294 = vunpack.c.h.b16 %v1498
        %v2295 = vunpack.c.h.b16 %v1499
        %v2296 = vunpack.c.h.b16 %v1500
        %v2297 = vunpack.c.h.b16 %v1501
        %v2298 = vunpack.c.h.b16 %v1502
        %v2299 = vunpack.c.h.b16 %v1503
        %v2300 = vunpack.c.h.b16 %v1504
        %v2301 = vunpack.c.h.b16 %v1505
        %v2302 = vpack.c.b16 %v2287, %v2286
        %v2303 = vpack.c.b16 %v2289, %v2288
        %v2304 = vpack.c.b16 %v2291, %v2290
        %v2305 = vpack.c.b16 %v2293, %v2292
        %v2306 = vpack.c.b16 %v2295, %v2294
        %v2307 = vpack.c.b16 %v2297, %v2296
        %v2308 = vpack.c.b16 %v2299, %v2298
        %v2309 = vpack.c.b16 %v2301, %v2300
        %v2310 = vunpack.c.h.b16 %v1458
        %v2311 = vunpack.c.h.b16 %v1460
        %v2312 = vunpack.c.h.b16 %v1462
        %v2313 = vunpack.c.h.b16 %v1464
        %v2314 = vunpack.c.h.b16 %v1466
        %v2315 = vunpack.c.h.b16 %v1468
        %v2316 = vunpack.c.h.b16 %v1470
        %v2317 = vunpack.c.h.b16 %v1472
        %v2318 = vunpack.c.h.b16 %v1474
        %v2319 = vunpack.c.h.b16 %v1476
        %v2320 = vunpack.c.h.b16 %v1478
        %v2321 = vunpack.c.h.b16 %v1480
        %v2322 = vunpack.c.h.b16 %v1482
        %v2323 = vunpack.c.h.b16 %v1484
        %v2324 = vunpack.c.h.b16 %v1486
        %v2325 = vunpack.c.h.b16 %v1488
        %v2326 = vpack.c.b16 %v2311, %v2310
        %v2327 = vpack.c.b16 %v2313, %v2312
        %v2328 = vpack.c.b16 %v2315, %v2314
        %v2329 = vpack.c.b16 %v2317, %v2316
        %v2330 = vpack.c.b16 %v2319, %v2318
        %v2331 = vpack.c.b16 %v2321, %v2320
        %v2332 = vpack.c.b16 %v2323, %v2322
        %v2333 = vpack.c.b16 %v2325, %v2324
        %v2335 = vsel %vm1586, %v2302, 0
        %v2338 = vsel %vm1586, %v2303, 0
        %v2341 = vsel %vm1586, %v2304, 0
        %v2344 = vsel %vm1586, %v2305, 0
        %v2347 = vsel %vm1586, %v2306, 0
        %v2350 = vsel %vm1586, %v2307, 0
        %v2353 = vsel %vm1586, %v2308, 0
        %v2356 = vsel %vm1586, %v2309, 0
        %v2359 = vsel %vm1586, %v2326, 0
        %v2362 = vsel %vm1586, %v2327, 0
        %v2365 = vsel %vm1586, %v2328, 0
        %v2368 = vsel %vm1586, %v2329, 0
        %v2371 = vsel %vm1586, %v2330, 0
        %v2374 = vsel %vm1586, %v2331, 0
        %v2377 = vsel %vm1586, %v2332, 0
        %v2380 = vsel %vm1586, %v2333, 0
        %2382 = vmatpush.bf16.xpose.msra.mxu0 %v2380
        %2383 = vmatpush.bf16.xpose.msra.mxu0 %v2377
        %2384 = vmatpush.bf16.xpose.msra.mxu0 %v2374
        %2385 = vmatpush.bf16.xpose.msra.mxu0 %v2371
        %2386 = vmatpush.bf16.xpose.msra.mxu0 %v2368
        %2387 = vmatpush.bf16.xpose.msra.mxu0 %v2365
        %2388 = vmatpush.bf16.xpose.msra.mxu0 %v2362
        %2389 = vmatpush.bf16.xpose.msra.mxu0 %v2359
        %2390 = vmatmul.bf16.gmra.mxu0 %v2335
        %v2391 = vpop.f32.mrf.mxu0
        %v2392 = vadd.f32 0.0, %v2391
        %v2393 = vpop.f32.mrf.mxu0
        %v2394 = vadd.f32 0.0, %v2393
        %2395 = vmatmul.bf16.gmra.mxu0 %v2338
        %v2396 = vpop.f32.mrf.mxu0
        %v2397 = vadd.f32 0.0, %v2396
        %v2398 = vpop.f32.mrf.mxu0
        %v2399 = vadd.f32 0.0, %v2398
        %2400 = vmatmul.bf16.gmra.mxu0 %v2341
        %v2401 = vpop.f32.mrf.mxu0
        %v2402 = vadd.f32 0.0, %v2401
        %v2403 = vpop.f32.mrf.mxu0
        %v2404 = vadd.f32 0.0, %v2403
        %2405 = vmatmul.bf16.gmra.mxu0 %v2344
        %v2406 = vpop.f32.mrf.mxu0
        %v2407 = vadd.f32 0.0, %v2406
        %v2408 = vpop.f32.mrf.mxu0
        %v2409 = vadd.f32 0.0, %v2408
        %2410 = vmatmul.bf16.gmra.mxu0 %v2347
        %v2411 = vpop.f32.mrf.mxu0
        %v2412 = vadd.f32 0.0, %v2411
        %v2413 = vpop.f32.mrf.mxu0
        %v2414 = vadd.f32 0.0, %v2413
        %2415 = vmatmul.bf16.gmra.mxu0 %v2350
        %v2416 = vpop.f32.mrf.mxu0
        %v2417 = vadd.f32 0.0, %v2416
        %v2418 = vpop.f32.mrf.mxu0
        %v2419 = vadd.f32 0.0, %v2418
        %2420 = vmatmul.bf16.gmra.mxu0 %v2353
        %v2421 = vpop.f32.mrf.mxu0
        %v2422 = vadd.f32 0.0, %v2421
        %v2423 = vpop.f32.mrf.mxu0
        %v2424 = vadd.f32 0.0, %v2423
        %2425 = vmatmul.bf16.gmra.mxu0 %v2356
        %v2426 = vpop.f32.mrf.mxu0
        %v2427 = vadd.f32 0.0, %v2426
        %v2428 = vpop.f32.mrf.mxu0
        %v2429 = vadd.f32 0.0, %v2428
        %2430 = vdwg.mxu0
        %v2431 = vld [vmem:[#allocation6] sm:$0xff]
        %v2432 = vld [vmem:[#allocation6 + $0x8] sm:$0xff]
        %v2433 = vld [vmem:[#allocation6 + $0x10] sm:$0xff]
        %v2434 = vld [vmem:[#allocation6 + $0x18] sm:$0xff]
        %v2435 = vld [vmem:[#allocation6 + $0x20] sm:$0xff]
        %v2436 = vld [vmem:[#allocation6 + $0x28] sm:$0xff]
        %v2437 = vld [vmem:[#allocation6 + $0x30] sm:$0xff]
        %v2438 = vld [vmem:[#allocation6 + $0x38] sm:$0xff]
        %v2439 = vld [vmem:[#allocation6 + $0x40] sm:$0xff]
        %v2440 = vld [vmem:[#allocation6 + $0x48] sm:$0xff]
        %v2441 = vld [vmem:[#allocation6 + $0x50] sm:$0xff]
        %v2442 = vld [vmem:[#allocation6 + $0x58] sm:$0xff]
        %v2443 = vld [vmem:[#allocation6 + $0x60] sm:$0xff]
        %v2444 = vld [vmem:[#allocation6 + $0x68] sm:$0xff]
        %v2445 = vld [vmem:[#allocation6 + $0x70] sm:$0xff]
        %v2446 = vld [vmem:[#allocation6 + $0x78] sm:$0xff]
        %2447 = vmax.xlane.f32.xlu0 %v2392
        %v2448 = vpop.xlane.xlu0 %2447
        %2449 = vmax.xlane.f32.xlu0 %v2394
        %v2450 = vpop.xlane.xlu0 %2449
        %2451 = vmax.xlane.f32.xlu0 %v2397
        %v2452 = vpop.xlane.xlu0 %2451
        %2453 = vmax.xlane.f32.xlu0 %v2399
        %v2454 = vpop.xlane.xlu0 %2453
        %2455 = vmax.xlane.f32.xlu0 %v2402
        %v2456 = vpop.xlane.xlu0 %2455
        %2457 = vmax.xlane.f32.xlu0 %v2404
        %v2458 = vpop.xlane.xlu0 %2457
        %2459 = vmax.xlane.f32.xlu0 %v2407
        %v2460 = vpop.xlane.xlu0 %2459
        %2461 = vmax.xlane.f32.xlu0 %v2409
        %v2462 = vpop.xlane.xlu0 %2461
        %2463 = vmax.xlane.f32.xlu0 %v2412
        %v2464 = vpop.xlane.xlu0 %2463
        %2465 = vmax.xlane.f32.xlu0 %v2414
        %v2466 = vpop.xlane.xlu0 %2465
        %2467 = vmax.xlane.f32.xlu0 %v2417
        %v2468 = vpop.xlane.xlu0 %2467
        %2469 = vmax.xlane.f32.xlu0 %v2419
        %v2470 = vpop.xlane.xlu0 %2469
        %2471 = vmax.xlane.f32.xlu0 %v2422
        %v2472 = vpop.xlane.xlu0 %2471
        %2473 = vmax.xlane.f32.xlu0 %v2424
        %v2474 = vpop.xlane.xlu0 %2473
        %2475 = vmax.xlane.f32.xlu0 %v2427
        %v2476 = vpop.xlane.xlu0 %2475
        %2477 = vmax.xlane.f32.xlu0 %v2429
        %v2478 = vpop.xlane.xlu0 %2477
        %v2479 = vmax.f32 %v2431, %v2448
        %v2480 = vmax.f32 %v2432, %v2450
        %v2481 = vmax.f32 %v2433, %v2452
        %v2482 = vmax.f32 %v2434, %v2454
        %v2483 = vmax.f32 %v2435, %v2456
        %v2484 = vmax.f32 %v2436, %v2458
        %v2485 = vmax.f32 %v2437, %v2460
        %v2486 = vmax.f32 %v2438, %v2462
        %v2487 = vmax.f32 %v2439, %v2464
        %v2488 = vmax.f32 %v2440, %v2466
        %v2489 = vmax.f32 %v2441, %v2468
        %v2490 = vmax.f32 %v2442, %v2470
        %v2491 = vmax.f32 %v2443, %v2472
        %v2492 = vmax.f32 %v2444, %v2474
        %v2493 = vmax.f32 %v2445, %v2476
        %v2494 = vmax.f32 %v2446, %v2478
        %v2495 = vsub.f32 %v2431, %v2479
        %v2496 = vsub.f32 %v2432, %v2480
        %v2497 = vsub.f32 %v2433, %v2481
        %v2498 = vsub.f32 %v2434, %v2482
        %v2499 = vsub.f32 %v2435, %v2483
        %v2500 = vsub.f32 %v2436, %v2484
        %v2501 = vsub.f32 %v2437, %v2485
        %v2502 = vsub.f32 %v2438, %v2486
        %v2503 = vsub.f32 %v2439, %v2487
        %v2504 = vsub.f32 %v2440, %v2488
        %v2505 = vsub.f32 %v2441, %v2489
        %v2506 = vsub.f32 %v2442, %v2490
        %v2507 = vsub.f32 %v2443, %v2491
        %v2508 = vsub.f32 %v2444, %v2492
        %v2509 = vsub.f32 %v2445, %v2493
        %v2510 = vsub.f32 %v2446, %v2494
        %v2511 = vmul.f32 %v2495, 1.442695
        %v2512 = vpow.pop %v2511
        %v2513 = vmul.f32 %v2496, 1.442695
        %v2514 = vpow.pop %v2513
        %v2515 = vmul.f32 %v2497, 1.442695
        %v2516 = vpow.pop %v2515
        %v2517 = vmul.f32 %v2498, 1.442695
        %v2518 = vpow.pop %v2517
        %v2519 = vmul.f32 %v2499, 1.442695
        %v2520 = vpow.pop %v2519
        %v2521 = vmul.f32 %v2500, 1.442695
        %v2522 = vpow.pop %v2521
        %v2523 = vmul.f32 %v2501, 1.442695
        %v2524 = vpow.pop %v2523
        %v2525 = vmul.f32 %v2502, 1.442695
        %v2526 = vpow.pop %v2525
        %v2527 = vmul.f32 %v2503, 1.442695
        %v2528 = vpow.pop %v2527
        %v2529 = vmul.f32 %v2504, 1.442695
        %v2530 = vpow.pop %v2529
        %v2531 = vmul.f32 %v2505, 1.442695
        %v2532 = vpow.pop %v2531
        %v2533 = vmul.f32 %v2506, 1.442695
        %v2534 = vpow.pop %v2533
        %v2535 = vmul.f32 %v2507, 1.442695
        %v2536 = vpow.pop %v2535
        %v2537 = vmul.f32 %v2508, 1.442695
        %v2538 = vpow.pop %v2537
        %v2539 = vmul.f32 %v2509, 1.442695
        %v2540 = vpow.pop %v2539
        %v2541 = vmul.f32 %v2510, 1.442695
        %v2542 = vpow.pop %v2541
        %2544 = vset.pattern.permute.xlu0 0
        %2545 = vperm.xlu0 %2544, %v2479
        %v2546 = vpop.permute.xlu0 %2545
        %2549 = vset.pattern.permute.xlu0 0
        %2550 = vperm.xlu0 %2549, %v2480
        %v2551 = vpop.permute.xlu0 %2550
        %2554 = vset.pattern.permute.xlu0 0
        %2555 = vperm.xlu0 %2554, %v2481
        %v2556 = vpop.permute.xlu0 %2555
        %2559 = vset.pattern.permute.xlu0 0
        %2560 = vperm.xlu0 %2559, %v2482
        %v2561 = vpop.permute.xlu0 %2560
        %2564 = vset.pattern.permute.xlu0 0
        %2565 = vperm.xlu0 %2564, %v2483
        %v2566 = vpop.permute.xlu0 %2565
        %2569 = vset.pattern.permute.xlu0 0
        %2570 = vperm.xlu0 %2569, %v2484
        %v2571 = vpop.permute.xlu0 %2570
        %2574 = vset.pattern.permute.xlu0 0
        %2575 = vperm.xlu0 %2574, %v2485
        %v2576 = vpop.permute.xlu0 %2575
        %2579 = vset.pattern.permute.xlu0 0
        %2580 = vperm.xlu0 %2579, %v2486
        %v2581 = vpop.permute.xlu0 %2580
        %2584 = vset.pattern.permute.xlu0 0
        %2585 = vperm.xlu0 %2584, %v2487
        %v2586 = vpop.permute.xlu0 %2585
        %2589 = vset.pattern.permute.xlu0 0
        %2590 = vperm.xlu0 %2589, %v2488
        %v2591 = vpop.permute.xlu0 %2590
        %2594 = vset.pattern.permute.xlu0 0
        %2595 = vperm.xlu0 %2594, %v2489
        %v2596 = vpop.permute.xlu0 %2595
        %2599 = vset.pattern.permute.xlu0 0
        %2600 = vperm.xlu0 %2599, %v2490
        %v2601 = vpop.permute.xlu0 %2600
        %2604 = vset.pattern.permute.xlu0 0
        %2605 = vperm.xlu0 %2604, %v2491
        %v2606 = vpop.permute.xlu0 %2605
        %2609 = vset.pattern.permute.xlu0 0
        %2610 = vperm.xlu0 %2609, %v2492
        %v2611 = vpop.permute.xlu0 %2610
        %2614 = vset.pattern.permute.xlu0 0
        %2615 = vperm.xlu0 %2614, %v2493
        %v2616 = vpop.permute.xlu0 %2615
        %2619 = vset.pattern.permute.xlu0 0
        %2620 = vperm.xlu0 %2619, %v2494
        %v2621 = vpop.permute.xlu0 %2620
        %v2623 = vsub.f32 %v2392, %v2546
        %v2624 = vsub.f32 %v2394, %v2551
        %v2625 = vsub.f32 %v2397, %v2556
        %v2626 = vsub.f32 %v2399, %v2561
        %v2627 = vsub.f32 %v2402, %v2566
        %v2628 = vsub.f32 %v2404, %v2571
        %v2629 = vsub.f32 %v2407, %v2576
        %v2630 = vsub.f32 %v2409, %v2581
        %v2631 = vsub.f32 %v2412, %v2586
        %v2632 = vsub.f32 %v2414, %v2591
        %v2633 = vsub.f32 %v2417, %v2596
        %v2634 = vsub.f32 %v2419, %v2601
        %v2635 = vsub.f32 %v2422, %v2606
        %v2636 = vsub.f32 %v2424, %v2611
        %v2637 = vsub.f32 %v2427, %v2616
        %v2638 = vsub.f32 %v2429, %v2621
        %v2639 = vmul.f32 %v2623, 1.442695
        %v2640 = vpow.pop %v2639
        %v2641 = vmul.f32 %v2624, 1.442695
        %v2642 = vpow.pop %v2641
        %v2643 = vmul.f32 %v2625, 1.442695
        %v2644 = vpow.pop %v2643
        %v2645 = vmul.f32 %v2626, 1.442695
        %v2646 = vpow.pop %v2645
        %v2647 = vmul.f32 %v2627, 1.442695
        %v2648 = vpow.pop %v2647
        %v2649 = vmul.f32 %v2628, 1.442695
        %v2650 = vpow.pop %v2649
        %v2651 = vmul.f32 %v2629, 1.442695
        %v2652 = vpow.pop %v2651
        %v2653 = vmul.f32 %v2630, 1.442695
        %v2654 = vpow.pop %v2653
        %v2655 = vmul.f32 %v2631, 1.442695
        %v2656 = vpow.pop %v2655
        %v2657 = vmul.f32 %v2632, 1.442695
        %v2658 = vpow.pop %v2657
        %v2659 = vmul.f32 %v2633, 1.442695
        %v2660 = vpow.pop %v2659
        %v2661 = vmul.f32 %v2634, 1.442695
        %v2662 = vpow.pop %v2661
        %v2663 = vmul.f32 %v2635, 1.442695
        %v2664 = vpow.pop %v2663
        %v2665 = vmul.f32 %v2636, 1.442695
        %v2666 = vpow.pop %v2665
        %v2667 = vmul.f32 %v2637, 1.442695
        %v2668 = vpow.pop %v2667
        %v2669 = vmul.f32 %v2638, 1.442695
        %v2670 = vpow.pop %v2669
        %v2671 = vld [vmem:[#allocation7] sm:$0xff]
        %v2672 = vld [vmem:[#allocation7 + $0x8] sm:$0xff]
        %v2673 = vld [vmem:[#allocation7 + $0x10] sm:$0xff]
        %v2674 = vld [vmem:[#allocation7 + $0x18] sm:$0xff]
        %v2675 = vld [vmem:[#allocation7 + $0x20] sm:$0xff]
        %v2676 = vld [vmem:[#allocation7 + $0x28] sm:$0xff]
        %v2677 = vld [vmem:[#allocation7 + $0x30] sm:$0xff]
        %v2678 = vld [vmem:[#allocation7 + $0x38] sm:$0xff]
        %v2679 = vld [vmem:[#allocation7 + $0x40] sm:$0xff]
        %v2680 = vld [vmem:[#allocation7 + $0x48] sm:$0xff]
        %v2681 = vld [vmem:[#allocation7 + $0x50] sm:$0xff]
        %v2682 = vld [vmem:[#allocation7 + $0x58] sm:$0xff]
        %v2683 = vld [vmem:[#allocation7 + $0x60] sm:$0xff]
        %v2684 = vld [vmem:[#allocation7 + $0x68] sm:$0xff]
        %v2685 = vld [vmem:[#allocation7 + $0x70] sm:$0xff]
        %v2686 = vld [vmem:[#allocation7 + $0x78] sm:$0xff]
        %v2687 = vmul.f32 %v2512, %v2671
        %v2688 = vmul.f32 %v2514, %v2672
        %v2689 = vmul.f32 %v2516, %v2673
        %v2690 = vmul.f32 %v2518, %v2674
        %v2691 = vmul.f32 %v2520, %v2675
        %v2692 = vmul.f32 %v2522, %v2676
        %v2693 = vmul.f32 %v2524, %v2677
        %v2694 = vmul.f32 %v2526, %v2678
        %v2695 = vmul.f32 %v2528, %v2679
        %v2696 = vmul.f32 %v2530, %v2680
        %v2697 = vmul.f32 %v2532, %v2681
        %v2698 = vmul.f32 %v2534, %v2682
        %v2699 = vmul.f32 %v2536, %v2683
        %v2700 = vmul.f32 %v2538, %v2684
        %v2701 = vmul.f32 %v2540, %v2685
        %v2702 = vmul.f32 %v2542, %v2686
        %2703 = vadd.xlane.f32.xlu0 %v2640
        %v2704 = vpop.xlane.xlu0 %2703
        %2705 = vadd.xlane.f32.xlu0 %v2642
        %v2706 = vpop.xlane.xlu0 %2705
        %2707 = vadd.xlane.f32.xlu0 %v2644
        %v2708 = vpop.xlane.xlu0 %2707
        %2709 = vadd.xlane.f32.xlu0 %v2646
        %v2710 = vpop.xlane.xlu0 %2709
        %2711 = vadd.xlane.f32.xlu0 %v2648
        %v2712 = vpop.xlane.xlu0 %2711
        %2713 = vadd.xlane.f32.xlu0 %v2650
        %v2714 = vpop.xlane.xlu0 %2713
        %2715 = vadd.xlane.f32.xlu0 %v2652
        %v2716 = vpop.xlane.xlu0 %2715
        %2717 = vadd.xlane.f32.xlu0 %v2654
        %v2718 = vpop.xlane.xlu0 %2717
        %2719 = vadd.xlane.f32.xlu0 %v2656
        %v2720 = vpop.xlane.xlu0 %2719
        %2721 = vadd.xlane.f32.xlu0 %v2658
        %v2722 = vpop.xlane.xlu0 %2721
        %2723 = vadd.xlane.f32.xlu0 %v2660
        %v2724 = vpop.xlane.xlu0 %2723
        %2725 = vadd.xlane.f32.xlu0 %v2662
        %v2726 = vpop.xlane.xlu0 %2725
        %2727 = vadd.xlane.f32.xlu0 %v2664
        %v2728 = vpop.xlane.xlu0 %2727
        %2729 = vadd.xlane.f32.xlu0 %v2666
        %v2730 = vpop.xlane.xlu0 %2729
        %2731 = vadd.xlane.f32.xlu0 %v2668
        %v2732 = vpop.xlane.xlu0 %2731
        %2733 = vadd.xlane.f32.xlu0 %v2670
        %v2734 = vpop.xlane.xlu0 %2733
        %v2735 = vadd.f32 %v2687, %v2704
        %v2736 = vadd.f32 %v2688, %v2706
        %v2737 = vadd.f32 %v2689, %v2708
        %v2738 = vadd.f32 %v2690, %v2710
        %v2739 = vadd.f32 %v2691, %v2712
        %v2740 = vadd.f32 %v2692, %v2714
        %v2741 = vadd.f32 %v2693, %v2716
        %v2742 = vadd.f32 %v2694, %v2718
        %v2743 = vadd.f32 %v2695, %v2720
        %v2744 = vadd.f32 %v2696, %v2722
        %v2745 = vadd.f32 %v2697, %v2724
        %v2746 = vadd.f32 %v2698, %v2726
        %v2747 = vadd.f32 %v2699, %v2728
        %v2748 = vadd.f32 %v2700, %v2730
        %v2749 = vadd.f32 %v2701, %v2732
        %v2750 = vadd.f32 %v2702, %v2734
        %2751 = vst.msk [vmem:[#allocation7] sm:$0xff] %vm2004, %v2735
        %2752 = vst.msk [vmem:[#allocation7 + $0x8] sm:$0xff] %vm2004, %v2736
        %2753 = vst.msk [vmem:[#allocation7 + $0x10] sm:$0xff] %vm2004, %v2737
        %2754 = vst.msk [vmem:[#allocation7 + $0x18] sm:$0xff] %vm2004, %v2738
        %2755 = vst.msk [vmem:[#allocation7 + $0x20] sm:$0xff] %vm2004, %v2739
        %2756 = vst.msk [vmem:[#allocation7 + $0x28] sm:$0xff] %vm2004, %v2740
        %2757 = vst.msk [vmem:[#allocation7 + $0x30] sm:$0xff] %vm2004, %v2741
        %2758 = vst.msk [vmem:[#allocation7 + $0x38] sm:$0xff] %vm2004, %v2742
        %2759 = vst.msk [vmem:[#allocation7 + $0x40] sm:$0xff] %vm2004, %v2743
        %2760 = vst.msk [vmem:[#allocation7 + $0x48] sm:$0xff] %vm2004, %v2744
        %2761 = vst.msk [vmem:[#allocation7 + $0x50] sm:$0xff] %vm2004, %v2745
        %2762 = vst.msk [vmem:[#allocation7 + $0x58] sm:$0xff] %vm2004, %v2746
        %2763 = vst.msk [vmem:[#allocation7 + $0x60] sm:$0xff] %vm2004, %v2747
        %2764 = vst.msk [vmem:[#allocation7 + $0x68] sm:$0xff] %vm2004, %v2748
        %2765 = vst.msk [vmem:[#allocation7 + $0x70] sm:$0xff] %vm2004, %v2749
        %2766 = vst.msk [vmem:[#allocation7 + $0x78] sm:$0xff] %vm2004, %v2750
        %v2767 = vld [vmem:[#allocation8] sm:$0xff]
        %v2768 = vld [vmem:[#allocation8 + $0x8] sm:$0xff]
        %v2769 = vld [vmem:[#allocation8 + $0x10] sm:$0xff]
        %v2770 = vld [vmem:[#allocation8 + $0x18] sm:$0xff]
        %v2771 = vld [vmem:[#allocation8 + $0x20] sm:$0xff]
        %v2772 = vld [vmem:[#allocation8 + $0x28] sm:$0xff]
        %v2773 = vld [vmem:[#allocation8 + $0x30] sm:$0xff]
        %v2774 = vld [vmem:[#allocation8 + $0x38] sm:$0xff]
        %v2775 = vld [vmem:[#allocation8 + $0x40] sm:$0xff]
        %v2776 = vld [vmem:[#allocation8 + $0x48] sm:$0xff]
        %v2777 = vld [vmem:[#allocation8 + $0x50] sm:$0xff]
        %v2778 = vld [vmem:[#allocation8 + $0x58] sm:$0xff]
        %v2779 = vld [vmem:[#allocation8 + $0x60] sm:$0xff]
        %v2780 = vld [vmem:[#allocation8 + $0x68] sm:$0xff]
        %v2781 = vld [vmem:[#allocation8 + $0x70] sm:$0xff]
        %v2782 = vld [vmem:[#allocation8 + $0x78] sm:$0xff]
        %2784 = vset.pattern.permute.xlu0 0
        %2785 = vperm.xlu0 %2784, %v2512
        %v2786 = vpop.permute.xlu0 %2785
        %2789 = vset.pattern.permute.xlu0 0
        %2790 = vperm.xlu0 %2789, %v2514
        %v2791 = vpop.permute.xlu0 %2790
        %2794 = vset.pattern.permute.xlu0 0
        %2795 = vperm.xlu0 %2794, %v2516
        %v2796 = vpop.permute.xlu0 %2795
        %2799 = vset.pattern.permute.xlu0 0
        %2800 = vperm.xlu0 %2799, %v2518
        %v2801 = vpop.permute.xlu0 %2800
        %2804 = vset.pattern.permute.xlu0 0
        %2805 = vperm.xlu0 %2804, %v2520
        %v2806 = vpop.permute.xlu0 %2805
        %2809 = vset.pattern.permute.xlu0 0
        %2810 = vperm.xlu0 %2809, %v2522
        %v2811 = vpop.permute.xlu0 %2810
        %2814 = vset.pattern.permute.xlu0 0
        %2815 = vperm.xlu0 %2814, %v2524
        %v2816 = vpop.permute.xlu0 %2815
        %2819 = vset.pattern.permute.xlu0 0
        %2820 = vperm.xlu0 %2819, %v2526
        %v2821 = vpop.permute.xlu0 %2820
        %2824 = vset.pattern.permute.xlu0 0
        %2825 = vperm.xlu0 %2824, %v2528
        %v2826 = vpop.permute.xlu0 %2825
        %2829 = vset.pattern.permute.xlu0 0
        %2830 = vperm.xlu0 %2829, %v2530
        %v2831 = vpop.permute.xlu0 %2830
        %2834 = vset.pattern.permute.xlu0 0
        %2835 = vperm.xlu0 %2834, %v2532
        %v2836 = vpop.permute.xlu0 %2835
        %2839 = vset.pattern.permute.xlu0 0
        %2840 = vperm.xlu0 %2839, %v2534
        %v2841 = vpop.permute.xlu0 %2840
        %2844 = vset.pattern.permute.xlu0 0
        %2845 = vperm.xlu0 %2844, %v2536
        %v2846 = vpop.permute.xlu0 %2845
        %2849 = vset.pattern.permute.xlu0 0
        %2850 = vperm.xlu0 %2849, %v2538
        %v2851 = vpop.permute.xlu0 %2850
        %2854 = vset.pattern.permute.xlu0 0
        %2855 = vperm.xlu0 %2854, %v2540
        %v2856 = vpop.permute.xlu0 %2855
        %2859 = vset.pattern.permute.xlu0 0
        %2860 = vperm.xlu0 %2859, %v2542
        %v2861 = vpop.permute.xlu0 %2860
        %v2863 = vmul.f32 %v2786, %v2767
        %v2864 = vmul.f32 %v2791, %v2768
        %v2865 = vmul.f32 %v2796, %v2769
        %v2866 = vmul.f32 %v2801, %v2770
        %v2867 = vmul.f32 %v2806, %v2771
        %v2868 = vmul.f32 %v2811, %v2772
        %v2869 = vmul.f32 %v2816, %v2773
        %v2870 = vmul.f32 %v2821, %v2774
        %v2871 = vmul.f32 %v2826, %v2775
        %v2872 = vmul.f32 %v2831, %v2776
        %v2873 = vmul.f32 %v2836, %v2777
        %v2874 = vmul.f32 %v2841, %v2778
        %v2875 = vmul.f32 %v2846, %v2779
        %v2876 = vmul.f32 %v2851, %v2780
        %v2877 = vmul.f32 %v2856, %v2781
        %v2878 = vmul.f32 %v2861, %v2782
        %v2879 = vpack.c.bf16 %v2642, %v2640
        %v2880 = vpack.c.bf16 %v2646, %v2644
        %v2881 = vpack.c.bf16 %v2650, %v2648
        %v2882 = vpack.c.bf16 %v2654, %v2652
        %v2883 = vpack.c.bf16 %v2658, %v2656
        %v2884 = vpack.c.bf16 %v2662, %v2660
        %v2885 = vpack.c.bf16 %v2666, %v2664
        %v2886 = vpack.c.bf16 %v2670, %v2668
        %2887 = vmatpush.bf16.msra.mxu0 %v2180
        %2888 = vmatpush.bf16.msra.mxu0 %v2179
        %2889 = vmatpush.bf16.msra.mxu0 %v2178
        %2890 = vmatpush.bf16.msra.mxu0 %v2177
        %2891 = vmatpush.bf16.msra.mxu0 %v2176
        %2892 = vmatpush.bf16.msra.mxu0 %v2175
        %2893 = vmatpush.bf16.msra.mxu0 %v2174
        %2894 = vmatpush.bf16.msra.mxu0 %v2173
        %2895 = vmatmul.bf16.gmra.mxu0 %v2879
        %v2896 = vpop.f32.mrf.mxu0
        %v2897 = vadd.f32 0.0, %v2896
        %v2898 = vpop.f32.mrf.mxu0
        %v2899 = vadd.f32 0.0, %v2898
        %2900 = vmatmul.bf16.gmra.mxu0 %v2880
        %v2901 = vpop.f32.mrf.mxu0
        %v2902 = vadd.f32 0.0, %v2901
        %v2903 = vpop.f32.mrf.mxu0
        %v2904 = vadd.f32 0.0, %v2903
        %2905 = vmatmul.bf16.gmra.mxu0 %v2881
        %v2906 = vpop.f32.mrf.mxu0
        %v2907 = vadd.f32 0.0, %v2906
        %v2908 = vpop.f32.mrf.mxu0
        %v2909 = vadd.f32 0.0, %v2908
        %2910 = vmatmul.bf16.gmra.mxu0 %v2882
        %v2911 = vpop.f32.mrf.mxu0
        %v2912 = vadd.f32 0.0, %v2911
        %v2913 = vpop.f32.mrf.mxu0
        %v2914 = vadd.f32 0.0, %v2913
        %2915 = vmatmul.bf16.gmra.mxu0 %v2883
        %v2916 = vpop.f32.mrf.mxu0
        %v2917 = vadd.f32 0.0, %v2916
        %v2918 = vpop.f32.mrf.mxu0
        %v2919 = vadd.f32 0.0, %v2918
        %2920 = vmatmul.bf16.gmra.mxu0 %v2884
        %v2921 = vpop.f32.mrf.mxu0
        %v2922 = vadd.f32 0.0, %v2921
        %v2923 = vpop.f32.mrf.mxu0
        %v2924 = vadd.f32 0.0, %v2923
        %2925 = vmatmul.bf16.gmra.mxu0 %v2885
        %v2926 = vpop.f32.mrf.mxu0
        %v2927 = vadd.f32 0.0, %v2926
        %v2928 = vpop.f32.mrf.mxu0
        %v2929 = vadd.f32 0.0, %v2928
        %2930 = vmatmul.bf16.gmra.mxu0 %v2886
        %v2931 = vpop.f32.mrf.mxu0
        %v2932 = vadd.f32 0.0, %v2931
        %v2933 = vpop.f32.mrf.mxu0
        %v2934 = vadd.f32 0.0, %v2933
        %2935 = vdwg.mxu0
        %v2936 = vadd.f32 %v2863, %v2897
        %v2937 = vadd.f32 %v2864, %v2899
        %v2938 = vadd.f32 %v2865, %v2902
        %v2939 = vadd.f32 %v2866, %v2904
        %v2940 = vadd.f32 %v2867, %v2907
        %v2941 = vadd.f32 %v2868, %v2909
        %v2942 = vadd.f32 %v2869, %v2912
        %v2943 = vadd.f32 %v2870, %v2914
        %v2944 = vadd.f32 %v2871, %v2917
        %v2945 = vadd.f32 %v2872, %v2919
        %v2946 = vadd.f32 %v2873, %v2922
        %v2947 = vadd.f32 %v2874, %v2924
        %v2948 = vadd.f32 %v2875, %v2927
        %v2949 = vadd.f32 %v2876, %v2929
        %v2950 = vadd.f32 %v2877, %v2932
        %v2951 = vadd.f32 %v2878, %v2934
        %2952 = vst.msk [vmem:[#allocation8] sm:$0xff] %vm1586, %v2936
        %2953 = vst.msk [vmem:[#allocation8 + $0x8] sm:$0xff] %vm1586, %v2937
        %2954 = vst.msk [vmem:[#allocation8 + $0x10] sm:$0xff] %vm1586, %v2938
        %2955 = vst.msk [vmem:[#allocation8 + $0x18] sm:$0xff] %vm1586, %v2939
        %2956 = vst.msk [vmem:[#allocation8 + $0x20] sm:$0xff] %vm1586, %v2940
        %2957 = vst.msk [vmem:[#allocation8 + $0x28] sm:$0xff] %vm1586, %v2941
        %2958 = vst.msk [vmem:[#allocation8 + $0x30] sm:$0xff] %vm1586, %v2942
        %2959 = vst.msk [vmem:[#allocation8 + $0x38] sm:$0xff] %vm1586, %v2943
        %2960 = vst.msk [vmem:[#allocation8 + $0x40] sm:$0xff] %vm1586, %v2944
        %2961 = vst.msk [vmem:[#allocation8 + $0x48] sm:$0xff] %vm1586, %v2945
        %2962 = vst.msk [vmem:[#allocation8 + $0x50] sm:$0xff] %vm1586, %v2946
        %2963 = vst.msk [vmem:[#allocation8 + $0x58] sm:$0xff] %vm1586, %v2947
        %2964 = vst.msk [vmem:[#allocation8 + $0x60] sm:$0xff] %vm1586, %v2948
        %2965 = vst.msk [vmem:[#allocation8 + $0x68] sm:$0xff] %vm1586, %v2949
        %2966 = vst.msk [vmem:[#allocation8 + $0x70] sm:$0xff] %vm1586, %v2950
        %2967 = vst.msk [vmem:[#allocation8 + $0x78] sm:$0xff] %vm1586, %v2951
        %2968 = vst.msk [vmem:[#allocation6] sm:$0xff] %vm2004, %v2479
        %2969 = vst.msk [vmem:[#allocation6 + $0x8] sm:$0xff] %vm2004, %v2480
        %2970 = vst.msk [vmem:[#allocation6 + $0x10] sm:$0xff] %vm2004, %v2481
        %2971 = vst.msk [vmem:[#allocation6 + $0x18] sm:$0xff] %vm2004, %v2482
        %2972 = vst.msk [vmem:[#allocation6 + $0x20] sm:$0xff] %vm2004, %v2483
        %2973 = vst.msk [vmem:[#allocation6 + $0x28] sm:$0xff] %vm2004, %v2484
        %2974 = vst.msk [vmem:[#allocation6 + $0x30] sm:$0xff] %vm2004, %v2485
        %2975 = vst.msk [vmem:[#allocation6 + $0x38] sm:$0xff] %vm2004, %v2486
        %2976 = vst.msk [vmem:[#allocation6 + $0x40] sm:$0xff] %vm2004, %v2487
        %2977 = vst.msk [vmem:[#allocation6 + $0x48] sm:$0xff] %vm2004, %v2488
        %2978 = vst.msk [vmem:[#allocation6 + $0x50] sm:$0xff] %vm2004, %v2489
        %2979 = vst.msk [vmem:[#allocation6 + $0x58] sm:$0xff] %vm2004, %v2490
        %2980 = vst.msk [vmem:[#allocation6 + $0x60] sm:$0xff] %vm2004, %v2491
        %2981 = vst.msk [vmem:[#allocation6 + $0x68] sm:$0xff] %vm2004, %v2492
        %2982 = vst.msk [vmem:[#allocation6 + $0x70] sm:$0xff] %vm2004, %v2493
        %2983 = vst.msk [vmem:[#allocation6 + $0x78] sm:$0xff] %vm2004, %v2494
        %2984 = vrot.lane.b32.xlu0 %v1538, 96
        %v2985 = vpop.permute.xlu0 %2984
        %2986 = vrot.lane.b32.xlu0 %v1539, 96
        %v2987 = vpop.permute.xlu0 %2986
        %2988 = vrot.lane.b32.xlu0 %v1540, 96
        %v2989 = vpop.permute.xlu0 %2988
        %2990 = vrot.lane.b32.xlu0 %v1541, 96
        %v2991 = vpop.permute.xlu0 %2990
        %2992 = vrot.lane.b32.xlu0 %v1542, 96
        %v2993 = vpop.permute.xlu0 %2992
        %2994 = vrot.lane.b32.xlu0 %v1543, 96
        %v2995 = vpop.permute.xlu0 %2994
        %2996 = vrot.lane.b32.xlu0 %v1544, 96
        %v2997 = vpop.permute.xlu0 %2996
        %2998 = vrot.lane.b32.xlu0 %v1545, 96
        %v2999 = vpop.permute.xlu0 %2998
        %3000 = vrot.lane.b32.xlu0 %v1578, 96
        %v3001 = vpop.permute.xlu0 %3000
        %3002 = vrot.lane.b32.xlu0 %v1579, 96
        %v3003 = vpop.permute.xlu0 %3002
        %3004 = vrot.lane.b32.xlu0 %v1580, 96
        %v3005 = vpop.permute.xlu0 %3004
        %3006 = vrot.lane.b32.xlu0 %v1581, 96
        %v3007 = vpop.permute.xlu0 %3006
        %3008 = vrot.lane.b32.xlu0 %v1582, 96
        %v3009 = vpop.permute.xlu0 %3008
        %3010 = vrot.lane.b32.xlu0 %v1583, 96
        %v3011 = vpop.permute.xlu0 %3010
        %3012 = vrot.lane.b32.xlu0 %v1584, 96
        %v3013 = vpop.permute.xlu0 %3012
        %3014 = vrot.lane.b32.xlu0 %v1585, 96
        %v3015 = vpop.permute.xlu0 %3014
        %v3017 = vsel %vm1586, %v2985, 0
        %v3020 = vsel %vm1586, %v2987, 0
        %v3023 = vsel %vm1586, %v2989, 0
        %v3026 = vsel %vm1586, %v2991, 0
        %v3029 = vsel %vm1586, %v2993, 0
        %v3032 = vsel %vm1586, %v2995, 0
        %v3035 = vsel %vm1586, %v2997, 0
        %v3038 = vsel %vm1586, %v2999, 0
        %v3041 = vsel %vm1586, %v3001, 0
        %v3044 = vsel %vm1586, %v3003, 0
        %v3047 = vsel %vm1586, %v3005, 0
        %v3050 = vsel %vm1586, %v3007, 0
        %v3053 = vsel %vm1586, %v3009, 0
        %v3056 = vsel %vm1586, %v3011, 0
        %v3059 = vsel %vm1586, %v3013, 0
        %v3062 = vsel %vm1586, %v3015, 0
        %3064 = vmatpush.bf16.xpose.msra.mxu0 %v3062
        %3065 = vmatpush.bf16.xpose.msra.mxu0 %v3059
        %3066 = vmatpush.bf16.xpose.msra.mxu0 %v3056
        %3067 = vmatpush.bf16.xpose.msra.mxu0 %v3053
        %3068 = vmatpush.bf16.xpose.msra.mxu0 %v3050
        %3069 = vmatpush.bf16.xpose.msra.mxu0 %v3047
        %3070 = vmatpush.bf16.xpose.msra.mxu0 %v3044
        %3071 = vmatpush.bf16.xpose.msra.mxu0 %v3041
        %3072 = vmatmul.bf16.gmra.mxu0 %v3017
        %v3073 = vpop.f32.mrf.mxu0
        %v3074 = vadd.f32 0.0, %v3073
        %v3075 = vpop.f32.mrf.mxu0
        %v3076 = vadd.f32 0.0, %v3075
        %3077 = vmatmul.bf16.gmra.mxu0 %v3020
        %v3078 = vpop.f32.mrf.mxu0
        %v3079 = vadd.f32 0.0, %v3078
        %v3080 = vpop.f32.mrf.mxu0
        %v3081 = vadd.f32 0.0, %v3080
        %3082 = vmatmul.bf16.gmra.mxu0 %v3023
        %v3083 = vpop.f32.mrf.mxu0
        %v3084 = vadd.f32 0.0, %v3083
        %v3085 = vpop.f32.mrf.mxu0
        %v3086 = vadd.f32 0.0, %v3085
        %3087 = vmatmul.bf16.gmra.mxu0 %v3026
        %v3088 = vpop.f32.mrf.mxu0
        %v3089 = vadd.f32 0.0, %v3088
        %v3090 = vpop.f32.mrf.mxu0
        %v3091 = vadd.f32 0.0, %v3090
        %3092 = vmatmul.bf16.gmra.mxu0 %v3029
        %v3093 = vpop.f32.mrf.mxu0
        %v3094 = vadd.f32 0.0, %v3093
        %v3095 = vpop.f32.mrf.mxu0
        %v3096 = vadd.f32 0.0, %v3095
        %3097 = vmatmul.bf16.gmra.mxu0 %v3032
        %v3098 = vpop.f32.mrf.mxu0
        %v3099 = vadd.f32 0.0, %v3098
        %v3100 = vpop.f32.mrf.mxu0
        %v3101 = vadd.f32 0.0, %v3100
        %3102 = vmatmul.bf16.gmra.mxu0 %v3035
        %v3103 = vpop.f32.mrf.mxu0
        %v3104 = vadd.f32 0.0, %v3103
        %v3105 = vpop.f32.mrf.mxu0
        %v3106 = vadd.f32 0.0, %v3105
        %3107 = vmatmul.bf16.gmra.mxu0 %v3038
        %v3108 = vpop.f32.mrf.mxu0
        %v3109 = vadd.f32 0.0, %v3108
        %v3110 = vpop.f32.mrf.mxu0
        %v3111 = vadd.f32 0.0, %v3110
        %3112 = vdwg.mxu0
        %s3113 = scalar_lea.vmem [#allocation3], 128
        %v3114 = vld [vmem:[%s3113] sm:$0xff]
        %v3115 = vld [vmem:[%s3113 + $0x8] sm:$0xff]
        %v3116 = vld [vmem:[%s3113 + $0x10] sm:$0xff]
        %v3117 = vld [vmem:[%s3113 + $0x18] sm:$0xff]
        %v3118 = vld [vmem:[%s3113 + $0x20] sm:$0xff]
        %v3119 = vld [vmem:[%s3113 + $0x28] sm:$0xff]
        %v3120 = vld [vmem:[%s3113 + $0x30] sm:$0xff]
        %v3121 = vld [vmem:[%s3113 + $0x38] sm:$0xff]
        %v3122 = vld [vmem:[%s3113 + $0x40] sm:$0xff]
        %v3123 = vld [vmem:[%s3113 + $0x48] sm:$0xff]
        %v3124 = vld [vmem:[%s3113 + $0x50] sm:$0xff]
        %v3125 = vld [vmem:[%s3113 + $0x58] sm:$0xff]
        %v3126 = vld [vmem:[%s3113 + $0x60] sm:$0xff]
        %v3127 = vld [vmem:[%s3113 + $0x68] sm:$0xff]
        %v3128 = vld [vmem:[%s3113 + $0x70] sm:$0xff]
        %v3129 = vld [vmem:[%s3113 + $0x78] sm:$0xff]
        %3130 = vmax.xlane.f32.xlu0 %v3074
        %v3131 = vpop.xlane.xlu0 %3130
        %3132 = vmax.xlane.f32.xlu0 %v3076
        %v3133 = vpop.xlane.xlu0 %3132
        %3134 = vmax.xlane.f32.xlu0 %v3079
        %v3135 = vpop.xlane.xlu0 %3134
        %3136 = vmax.xlane.f32.xlu0 %v3081
        %v3137 = vpop.xlane.xlu0 %3136
        %3138 = vmax.xlane.f32.xlu0 %v3084
        %v3139 = vpop.xlane.xlu0 %3138
        %3140 = vmax.xlane.f32.xlu0 %v3086
        %v3141 = vpop.xlane.xlu0 %3140
        %3142 = vmax.xlane.f32.xlu0 %v3089
        %v3143 = vpop.xlane.xlu0 %3142
        %3144 = vmax.xlane.f32.xlu0 %v3091
        %v3145 = vpop.xlane.xlu0 %3144
        %3146 = vmax.xlane.f32.xlu0 %v3094
        %v3147 = vpop.xlane.xlu0 %3146
        %3148 = vmax.xlane.f32.xlu0 %v3096
        %v3149 = vpop.xlane.xlu0 %3148
        %3150 = vmax.xlane.f32.xlu0 %v3099
        %v3151 = vpop.xlane.xlu0 %3150
        %3152 = vmax.xlane.f32.xlu0 %v3101
        %v3153 = vpop.xlane.xlu0 %3152
        %3154 = vmax.xlane.f32.xlu0 %v3104
        %v3155 = vpop.xlane.xlu0 %3154
        %3156 = vmax.xlane.f32.xlu0 %v3106
        %v3157 = vpop.xlane.xlu0 %3156
        %3158 = vmax.xlane.f32.xlu0 %v3109
        %v3159 = vpop.xlane.xlu0 %3158
        %3160 = vmax.xlane.f32.xlu0 %v3111
        %v3161 = vpop.xlane.xlu0 %3160
        %v3162 = vmax.f32 %v3114, %v3131
        %v3163 = vmax.f32 %v3115, %v3133
        %v3164 = vmax.f32 %v3116, %v3135
        %v3165 = vmax.f32 %v3117, %v3137
        %v3166 = vmax.f32 %v3118, %v3139
        %v3167 = vmax.f32 %v3119, %v3141
        %v3168 = vmax.f32 %v3120, %v3143
        %v3169 = vmax.f32 %v3121, %v3145
        %v3170 = vmax.f32 %v3122, %v3147
        %v3171 = vmax.f32 %v3123, %v3149
        %v3172 = vmax.f32 %v3124, %v3151
        %v3173 = vmax.f32 %v3125, %v3153
        %v3174 = vmax.f32 %v3126, %v3155
        %v3175 = vmax.f32 %v3127, %v3157
        %v3176 = vmax.f32 %v3128, %v3159
        %v3177 = vmax.f32 %v3129, %v3161
        %v3178 = vsub.f32 %v3114, %v3162
        %v3179 = vsub.f32 %v3115, %v3163
        %v3180 = vsub.f32 %v3116, %v3164
        %v3181 = vsub.f32 %v3117, %v3165
        %v3182 = vsub.f32 %v3118, %v3166
        %v3183 = vsub.f32 %v3119, %v3167
        %v3184 = vsub.f32 %v3120, %v3168
        %v3185 = vsub.f32 %v3121, %v3169
        %v3186 = vsub.f32 %v3122, %v3170
        %v3187 = vsub.f32 %v3123, %v3171
        %v3188 = vsub.f32 %v3124, %v3172
        %v3189 = vsub.f32 %v3125, %v3173
        %v3190 = vsub.f32 %v3126, %v3174
        %v3191 = vsub.f32 %v3127, %v3175
        %v3192 = vsub.f32 %v3128, %v3176
        %v3193 = vsub.f32 %v3129, %v3177
        %v3194 = vmul.f32 %v3178, 1.442695
        %v3195 = vpow.pop %v3194
        %v3196 = vmul.f32 %v3179, 1.442695
        %v3197 = vpow.pop %v3196
        %v3198 = vmul.f32 %v3180, 1.442695
        %v3199 = vpow.pop %v3198
        %v3200 = vmul.f32 %v3181, 1.442695
        %v3201 = vpow.pop %v3200
        %v3202 = vmul.f32 %v3182, 1.442695
        %v3203 = vpow.pop %v3202
        %v3204 = vmul.f32 %v3183, 1.442695
        %v3205 = vpow.pop %v3204
        %v3206 = vmul.f32 %v3184, 1.442695
        %v3207 = vpow.pop %v3206
        %v3208 = vmul.f32 %v3185, 1.442695
        %v3209 = vpow.pop %v3208
        %v3210 = vmul.f32 %v3186, 1.442695
        %v3211 = vpow.pop %v3210
        %v3212 = vmul.f32 %v3187, 1.442695
        %v3213 = vpow.pop %v3212
        %v3214 = vmul.f32 %v3188, 1.442695
        %v3215 = vpow.pop %v3214
        %v3216 = vmul.f32 %v3189, 1.442695
        %v3217 = vpow.pop %v3216
        %v3218 = vmul.f32 %v3190, 1.442695
        %v3219 = vpow.pop %v3218
        %v3220 = vmul.f32 %v3191, 1.442695
        %v3221 = vpow.pop %v3220
        %v3222 = vmul.f32 %v3192, 1.442695
        %v3223 = vpow.pop %v3222
        %v3224 = vmul.f32 %v3193, 1.442695
        %v3225 = vpow.pop %v3224
        %3227 = vset.pattern.permute.xlu0 0
        %3228 = vperm.xlu0 %3227, %v3162
        %v3229 = vpop.permute.xlu0 %3228
        %3232 = vset.pattern.permute.xlu0 0
        %3233 = vperm.xlu0 %3232, %v3163
        %v3234 = vpop.permute.xlu0 %3233
        %3237 = vset.pattern.permute.xlu0 0
        %3238 = vperm.xlu0 %3237, %v3164
        %v3239 = vpop.permute.xlu0 %3238
        %3242 = vset.pattern.permute.xlu0 0
        %3243 = vperm.xlu0 %3242, %v3165
        %v3244 = vpop.permute.xlu0 %3243
        %3247 = vset.pattern.permute.xlu0 0
        %3248 = vperm.xlu0 %3247, %v3166
        %v3249 = vpop.permute.xlu0 %3248
        %3252 = vset.pattern.permute.xlu0 0
        %3253 = vperm.xlu0 %3252, %v3167
        %v3254 = vpop.permute.xlu0 %3253
        %3257 = vset.pattern.permute.xlu0 0
        %3258 = vperm.xlu0 %3257, %v3168
        %v3259 = vpop.permute.xlu0 %3258
        %3262 = vset.pattern.permute.xlu0 0
        %3263 = vperm.xlu0 %3262, %v3169
        %v3264 = vpop.permute.xlu0 %3263
        %3267 = vset.pattern.permute.xlu0 0
        %3268 = vperm.xlu0 %3267, %v3170
        %v3269 = vpop.permute.xlu0 %3268
        %3272 = vset.pattern.permute.xlu0 0
        %3273 = vperm.xlu0 %3272, %v3171
        %v3274 = vpop.permute.xlu0 %3273
        %3277 = vset.pattern.permute.xlu0 0
        %3278 = vperm.xlu0 %3277, %v3172
        %v3279 = vpop.permute.xlu0 %3278
        %3282 = vset.pattern.permute.xlu0 0
        %3283 = vperm.xlu0 %3282, %v3173
        %v3284 = vpop.permute.xlu0 %3283
        %3287 = vset.pattern.permute.xlu0 0
        %3288 = vperm.xlu0 %3287, %v3174
        %v3289 = vpop.permute.xlu0 %3288
        %3292 = vset.pattern.permute.xlu0 0
        %3293 = vperm.xlu0 %3292, %v3175
        %v3294 = vpop.permute.xlu0 %3293
        %3297 = vset.pattern.permute.xlu0 0
        %3298 = vperm.xlu0 %3297, %v3176
        %v3299 = vpop.permute.xlu0 %3298
        %3302 = vset.pattern.permute.xlu0 0
        %3303 = vperm.xlu0 %3302, %v3177
        %v3304 = vpop.permute.xlu0 %3303
        %v3306 = vsub.f32 %v3074, %v3229
        %v3307 = vsub.f32 %v3076, %v3234
        %v3308 = vsub.f32 %v3079, %v3239
        %v3309 = vsub.f32 %v3081, %v3244
        %v3310 = vsub.f32 %v3084, %v3249
        %v3311 = vsub.f32 %v3086, %v3254
        %v3312 = vsub.f32 %v3089, %v3259
        %v3313 = vsub.f32 %v3091, %v3264
        %v3314 = vsub.f32 %v3094, %v3269
        %v3315 = vsub.f32 %v3096, %v3274
        %v3316 = vsub.f32 %v3099, %v3279
        %v3317 = vsub.f32 %v3101, %v3284
        %v3318 = vsub.f32 %v3104, %v3289
        %v3319 = vsub.f32 %v3106, %v3294
        %v3320 = vsub.f32 %v3109, %v3299
        %v3321 = vsub.f32 %v3111, %v3304
        %v3322 = vmul.f32 %v3306, 1.442695
        %v3323 = vpow.pop %v3322
        %v3324 = vmul.f32 %v3307, 1.442695
        %v3325 = vpow.pop %v3324
        %v3326 = vmul.f32 %v3308, 1.442695
        %v3327 = vpow.pop %v3326
        %v3328 = vmul.f32 %v3309, 1.442695
        %v3329 = vpow.pop %v3328
        %v3330 = vmul.f32 %v3310, 1.442695
        %v3331 = vpow.pop %v3330
        %v3332 = vmul.f32 %v3311, 1.442695
        %v3333 = vpow.pop %v3332
        %v3334 = vmul.f32 %v3312, 1.442695
        %v3335 = vpow.pop %v3334
        %v3336 = vmul.f32 %v3313, 1.442695
        %v3337 = vpow.pop %v3336
        %v3338 = vmul.f32 %v3314, 1.442695
        %v3339 = vpow.pop %v3338
        %v3340 = vmul.f32 %v3315, 1.442695
        %v3341 = vpow.pop %v3340
        %v3342 = vmul.f32 %v3316, 1.442695
        %v3343 = vpow.pop %v3342
        %v3344 = vmul.f32 %v3317, 1.442695
        %v3345 = vpow.pop %v3344
        %v3346 = vmul.f32 %v3318, 1.442695
        %v3347 = vpow.pop %v3346
        %v3348 = vmul.f32 %v3319, 1.442695
        %v3349 = vpow.pop %v3348
        %v3350 = vmul.f32 %v3320, 1.442695
        %v3351 = vpow.pop %v3350
        %v3352 = vmul.f32 %v3321, 1.442695
        %v3353 = vpow.pop %v3352
        %s3354 = scalar_lea.vmem [#allocation4], 128
        %v3355 = vld [vmem:[%s3354] sm:$0xff]
        %v3356 = vld [vmem:[%s3354 + $0x8] sm:$0xff]
        %v3357 = vld [vmem:[%s3354 + $0x10] sm:$0xff]
        %v3358 = vld [vmem:[%s3354 + $0x18] sm:$0xff]
        %v3359 = vld [vmem:[%s3354 + $0x20] sm:$0xff]
        %v3360 = vld [vmem:[%s3354 + $0x28] sm:$0xff]
        %v3361 = vld [vmem:[%s3354 + $0x30] sm:$0xff]
        %v3362 = vld [vmem:[%s3354 + $0x38] sm:$0xff]
        %v3363 = vld [vmem:[%s3354 + $0x40] sm:$0xff]
        %v3364 = vld [vmem:[%s3354 + $0x48] sm:$0xff]
        %v3365 = vld [vmem:[%s3354 + $0x50] sm:$0xff]
        %v3366 = vld [vmem:[%s3354 + $0x58] sm:$0xff]
        %v3367 = vld [vmem:[%s3354 + $0x60] sm:$0xff]
        %v3368 = vld [vmem:[%s3354 + $0x68] sm:$0xff]
        %v3369 = vld [vmem:[%s3354 + $0x70] sm:$0xff]
        %v3370 = vld [vmem:[%s3354 + $0x78] sm:$0xff]
        %v3371 = vmul.f32 %v3195, %v3355
        %v3372 = vmul.f32 %v3197, %v3356
        %v3373 = vmul.f32 %v3199, %v3357
        %v3374 = vmul.f32 %v3201, %v3358
        %v3375 = vmul.f32 %v3203, %v3359
        %v3376 = vmul.f32 %v3205, %v3360
        %v3377 = vmul.f32 %v3207, %v3361
        %v3378 = vmul.f32 %v3209, %v3362
        %v3379 = vmul.f32 %v3211, %v3363
        %v3380 = vmul.f32 %v3213, %v3364
        %v3381 = vmul.f32 %v3215, %v3365
        %v3382 = vmul.f32 %v3217, %v3366
        %v3383 = vmul.f32 %v3219, %v3367
        %v3384 = vmul.f32 %v3221, %v3368
        %v3385 = vmul.f32 %v3223, %v3369
        %v3386 = vmul.f32 %v3225, %v3370
        %3387 = vadd.xlane.f32.xlu0 %v3323
        %v3388 = vpop.xlane.xlu0 %3387
        %3389 = vadd.xlane.f32.xlu0 %v3325
        %v3390 = vpop.xlane.xlu0 %3389
        %3391 = vadd.xlane.f32.xlu0 %v3327
        %v3392 = vpop.xlane.xlu0 %3391
        %3393 = vadd.xlane.f32.xlu0 %v3329
        %v3394 = vpop.xlane.xlu0 %3393
        %3395 = vadd.xlane.f32.xlu0 %v3331
        %v3396 = vpop.xlane.xlu0 %3395
        %3397 = vadd.xlane.f32.xlu0 %v3333
        %v3398 = vpop.xlane.xlu0 %3397
        %3399 = vadd.xlane.f32.xlu0 %v3335
        %v3400 = vpop.xlane.xlu0 %3399
        %3401 = vadd.xlane.f32.xlu0 %v3337
        %v3402 = vpop.xlane.xlu0 %3401
        %3403 = vadd.xlane.f32.xlu0 %v3339
        %v3404 = vpop.xlane.xlu0 %3403
        %3405 = vadd.xlane.f32.xlu0 %v3341
        %v3406 = vpop.xlane.xlu0 %3405
        %3407 = vadd.xlane.f32.xlu0 %v3343
        %v3408 = vpop.xlane.xlu0 %3407
        %3409 = vadd.xlane.f32.xlu0 %v3345
        %v3410 = vpop.xlane.xlu0 %3409
        %3411 = vadd.xlane.f32.xlu0 %v3347
        %v3412 = vpop.xlane.xlu0 %3411
        %3413 = vadd.xlane.f32.xlu0 %v3349
        %v3414 = vpop.xlane.xlu0 %3413
        %3415 = vadd.xlane.f32.xlu0 %v3351
        %v3416 = vpop.xlane.xlu0 %3415
        %3417 = vadd.xlane.f32.xlu0 %v3353
        %v3418 = vpop.xlane.xlu0 %3417
        %v3419 = vadd.f32 %v3371, %v3388
        %v3420 = vadd.f32 %v3372, %v3390
        %v3421 = vadd.f32 %v3373, %v3392
        %v3422 = vadd.f32 %v3374, %v3394
        %v3423 = vadd.f32 %v3375, %v3396
        %v3424 = vadd.f32 %v3376, %v3398
        %v3425 = vadd.f32 %v3377, %v3400
        %v3426 = vadd.f32 %v3378, %v3402
        %v3427 = vadd.f32 %v3379, %v3404
        %v3428 = vadd.f32 %v3380, %v3406
        %v3429 = vadd.f32 %v3381, %v3408
        %v3430 = vadd.f32 %v3382, %v3410
        %v3431 = vadd.f32 %v3383, %v3412
        %v3432 = vadd.f32 %v3384, %v3414
        %v3433 = vadd.f32 %v3385, %v3416
        %v3434 = vadd.f32 %v3386, %v3418
        %3435 = vst.msk [vmem:[%s3354] sm:$0xff] %vm2004, %v3419
        %3436 = vst.msk [vmem:[%s3354 + $0x8] sm:$0xff] %vm2004, %v3420
        %3437 = vst.msk [vmem:[%s3354 + $0x10] sm:$0xff] %vm2004, %v3421
        %3438 = vst.msk [vmem:[%s3354 + $0x18] sm:$0xff] %vm2004, %v3422
        %3439 = vst.msk [vmem:[%s3354 + $0x20] sm:$0xff] %vm2004, %v3423
        %3440 = vst.msk [vmem:[%s3354 + $0x28] sm:$0xff] %vm2004, %v3424
        %3441 = vst.msk [vmem:[%s3354 + $0x30] sm:$0xff] %vm2004, %v3425
        %3442 = vst.msk [vmem:[%s3354 + $0x38] sm:$0xff] %vm2004, %v3426
        %3443 = vst.msk [vmem:[%s3354 + $0x40] sm:$0xff] %vm2004, %v3427
        %3444 = vst.msk [vmem:[%s3354 + $0x48] sm:$0xff] %vm2004, %v3428
        %3445 = vst.msk [vmem:[%s3354 + $0x50] sm:$0xff] %vm2004, %v3429
        %3446 = vst.msk [vmem:[%s3354 + $0x58] sm:$0xff] %vm2004, %v3430
        %3447 = vst.msk [vmem:[%s3354 + $0x60] sm:$0xff] %vm2004, %v3431
        %3448 = vst.msk [vmem:[%s3354 + $0x68] sm:$0xff] %vm2004, %v3432
        %3449 = vst.msk [vmem:[%s3354 + $0x70] sm:$0xff] %vm2004, %v3433
        %3450 = vst.msk [vmem:[%s3354 + $0x78] sm:$0xff] %vm2004, %v3434
        %s3451 = scalar_lea.vmem [#allocation5], 128
        %v3452 = vld [vmem:[%s3451] sm:$0xff]
        %v3453 = vld [vmem:[%s3451 + $0x8] sm:$0xff]
        %v3454 = vld [vmem:[%s3451 + $0x10] sm:$0xff]
        %v3455 = vld [vmem:[%s3451 + $0x18] sm:$0xff]
        %v3456 = vld [vmem:[%s3451 + $0x20] sm:$0xff]
        %v3457 = vld [vmem:[%s3451 + $0x28] sm:$0xff]
        %v3458 = vld [vmem:[%s3451 + $0x30] sm:$0xff]
        %v3459 = vld [vmem:[%s3451 + $0x38] sm:$0xff]
        %v3460 = vld [vmem:[%s3451 + $0x40] sm:$0xff]
        %v3461 = vld [vmem:[%s3451 + $0x48] sm:$0xff]
        %v3462 = vld [vmem:[%s3451 + $0x50] sm:$0xff]
        %v3463 = vld [vmem:[%s3451 + $0x58] sm:$0xff]
        %v3464 = vld [vmem:[%s3451 + $0x60] sm:$0xff]
        %v3465 = vld [vmem:[%s3451 + $0x68] sm:$0xff]
        %v3466 = vld [vmem:[%s3451 + $0x70] sm:$0xff]
        %v3467 = vld [vmem:[%s3451 + $0x78] sm:$0xff]
        %3469 = vset.pattern.permute.xlu0 0
        %3470 = vperm.xlu0 %3469, %v3195
        %v3471 = vpop.permute.xlu0 %3470
        %3474 = vset.pattern.permute.xlu0 0
        %3475 = vperm.xlu0 %3474, %v3197
        %v3476 = vpop.permute.xlu0 %3475
        %3479 = vset.pattern.permute.xlu0 0
        %3480 = vperm.xlu0 %3479, %v3199
        %v3481 = vpop.permute.xlu0 %3480
        %3484 = vset.pattern.permute.xlu0 0
        %3485 = vperm.xlu0 %3484, %v3201
        %v3486 = vpop.permute.xlu0 %3485
        %3489 = vset.pattern.permute.xlu0 0
        %3490 = vperm.xlu0 %3489, %v3203
        %v3491 = vpop.permute.xlu0 %3490
        %3494 = vset.pattern.permute.xlu0 0
        %3495 = vperm.xlu0 %3494, %v3205
        %v3496 = vpop.permute.xlu0 %3495
        %3499 = vset.pattern.permute.xlu0 0
        %3500 = vperm.xlu0 %3499, %v3207
        %v3501 = vpop.permute.xlu0 %3500
        %3504 = vset.pattern.permute.xlu0 0
        %3505 = vperm.xlu0 %3504, %v3209
        %v3506 = vpop.permute.xlu0 %3505
        %3509 = vset.pattern.permute.xlu0 0
        %3510 = vperm.xlu0 %3509, %v3211
        %v3511 = vpop.permute.xlu0 %3510
        %3514 = vset.pattern.permute.xlu0 0
        %3515 = vperm.xlu0 %3514, %v3213
        %v3516 = vpop.permute.xlu0 %3515
        %3519 = vset.pattern.permute.xlu0 0
        %3520 = vperm.xlu0 %3519, %v3215
        %v3521 = vpop.permute.xlu0 %3520
        %3524 = vset.pattern.permute.xlu0 0
        %3525 = vperm.xlu0 %3524, %v3217
        %v3526 = vpop.permute.xlu0 %3525
        %3529 = vset.pattern.permute.xlu0 0
        %3530 = vperm.xlu0 %3529, %v3219
        %v3531 = vpop.permute.xlu0 %3530
        %3534 = vset.pattern.permute.xlu0 0
        %3535 = vperm.xlu0 %3534, %v3221
        %v3536 = vpop.permute.xlu0 %3535
        %3539 = vset.pattern.permute.xlu0 0
        %3540 = vperm.xlu0 %3539, %v3223
        %v3541 = vpop.permute.xlu0 %3540
        %3544 = vset.pattern.permute.xlu0 0
        %3545 = vperm.xlu0 %3544, %v3225
        %v3546 = vpop.permute.xlu0 %3545
        %v3548 = vmul.f32 %v3471, %v3452
        %v3549 = vmul.f32 %v3476, %v3453
        %v3550 = vmul.f32 %v3481, %v3454
        %v3551 = vmul.f32 %v3486, %v3455
        %v3552 = vmul.f32 %v3491, %v3456
        %v3553 = vmul.f32 %v3496, %v3457
        %v3554 = vmul.f32 %v3501, %v3458
        %v3555 = vmul.f32 %v3506, %v3459
        %v3556 = vmul.f32 %v3511, %v3460
        %v3557 = vmul.f32 %v3516, %v3461
        %v3558 = vmul.f32 %v3521, %v3462
        %v3559 = vmul.f32 %v3526, %v3463
        %v3560 = vmul.f32 %v3531, %v3464
        %v3561 = vmul.f32 %v3536, %v3465
        %v3562 = vmul.f32 %v3541, %v3466
        %v3563 = vmul.f32 %v3546, %v3467
        %v3564 = vpack.c.bf16 %v3325, %v3323
        %v3565 = vpack.c.bf16 %v3329, %v3327
        %v3566 = vpack.c.bf16 %v3333, %v3331
        %v3567 = vpack.c.bf16 %v3337, %v3335
        %v3568 = vpack.c.bf16 %v3341, %v3339
        %v3569 = vpack.c.bf16 %v3345, %v3343
        %v3570 = vpack.c.bf16 %v3349, %v3347
        %v3571 = vpack.c.bf16 %v3353, %v3351
        %3572 = vrot.lane.b32.xlu0 %v2173, 96
        %v3573 = vpop.permute.xlu0 %3572
        %3574 = vrot.lane.b32.xlu0 %v2174, 96
        %v3575 = vpop.permute.xlu0 %3574
        %3576 = vrot.lane.b32.xlu0 %v2175, 96
        %v3577 = vpop.permute.xlu0 %3576
        %3578 = vrot.lane.b32.xlu0 %v2176, 96
        %v3579 = vpop.permute.xlu0 %3578
        %3580 = vrot.lane.b32.xlu0 %v2177, 96
        %v3581 = vpop.permute.xlu0 %3580
        %3582 = vrot.lane.b32.xlu0 %v2178, 96
        %v3583 = vpop.permute.xlu0 %3582
        %3584 = vrot.lane.b32.xlu0 %v2179, 96
        %v3585 = vpop.permute.xlu0 %3584
        %3586 = vrot.lane.b32.xlu0 %v2180, 96
        %v3587 = vpop.permute.xlu0 %3586
        %3596 = vmatpush.bf16.msra.mxu0 %v3587
        %3597 = vmatpush.bf16.msra.mxu0 %v3585
        %3598 = vmatpush.bf16.msra.mxu0 %v3583
        %3599 = vmatpush.bf16.msra.mxu0 %v3581
        %3600 = vmatpush.bf16.msra.mxu0 %v3579
        %3601 = vmatpush.bf16.msra.mxu0 %v3577
        %3602 = vmatpush.bf16.msra.mxu0 %v3575
        %3603 = vmatpush.bf16.msra.mxu0 %v3573
        %3604 = vmatmul.bf16.gmra.mxu0 %v3564
        %v3605 = vpop.f32.mrf.mxu0
        %v3606 = vadd.f32 0.0, %v3605
        %v3607 = vpop.f32.mrf.mxu0
        %v3608 = vadd.f32 0.0, %v3607
        %3609 = vmatmul.bf16.gmra.mxu0 %v3565
        %v3610 = vpop.f32.mrf.mxu0
        %v3611 = vadd.f32 0.0, %v3610
        %v3612 = vpop.f32.mrf.mxu0
        %v3613 = vadd.f32 0.0, %v3612
        %3614 = vmatmul.bf16.gmra.mxu0 %v3566
        %v3615 = vpop.f32.mrf.mxu0
        %v3616 = vadd.f32 0.0, %v3615
        %v3617 = vpop.f32.mrf.mxu0
        %v3618 = vadd.f32 0.0, %v3617
        %3619 = vmatmul.bf16.gmra.mxu0 %v3567
        %v3620 = vpop.f32.mrf.mxu0
        %v3621 = vadd.f32 0.0, %v3620
        %v3622 = vpop.f32.mrf.mxu0
        %v3623 = vadd.f32 0.0, %v3622
        %3624 = vmatmul.bf16.gmra.mxu0 %v3568
        %v3625 = vpop.f32.mrf.mxu0
        %v3626 = vadd.f32 0.0, %v3625
        %v3627 = vpop.f32.mrf.mxu0
        %v3628 = vadd.f32 0.0, %v3627
        %3629 = vmatmul.bf16.gmra.mxu0 %v3569
        %v3630 = vpop.f32.mrf.mxu0
        %v3631 = vadd.f32 0.0, %v3630
        %v3632 = vpop.f32.mrf.mxu0
        %v3633 = vadd.f32 0.0, %v3632
        %3634 = vmatmul.bf16.gmra.mxu0 %v3570
        %v3635 = vpop.f32.mrf.mxu0
        %v3636 = vadd.f32 0.0, %v3635
        %v3637 = vpop.f32.mrf.mxu0
        %v3638 = vadd.f32 0.0, %v3637
        %3639 = vmatmul.bf16.gmra.mxu0 %v3571
        %v3640 = vpop.f32.mrf.mxu0
        %v3641 = vadd.f32 0.0, %v3640
        %v3642 = vpop.f32.mrf.mxu0
        %v3643 = vadd.f32 0.0, %v3642
        %3644 = vdwg.mxu0
        %v3645 = vadd.f32 %v3548, %v3606
        %v3646 = vadd.f32 %v3549, %v3608
        %v3647 = vadd.f32 %v3550, %v3611
        %v3648 = vadd.f32 %v3551, %v3613
        %v3649 = vadd.f32 %v3552, %v3616
        %v3650 = vadd.f32 %v3553, %v3618
        %v3651 = vadd.f32 %v3554, %v3621
        %v3652 = vadd.f32 %v3555, %v3623
        %v3653 = vadd.f32 %v3556, %v3626
        %v3654 = vadd.f32 %v3557, %v3628
        %v3655 = vadd.f32 %v3558, %v3631
        %v3656 = vadd.f32 %v3559, %v3633
        %v3657 = vadd.f32 %v3560, %v3636
        %v3658 = vadd.f32 %v3561, %v3638
        %v3659 = vadd.f32 %v3562, %v3641
        %v3660 = vadd.f32 %v3563, %v3643
        %3661 = vst.msk [vmem:[%s3451] sm:$0xff] %vm1586, %v3645
        %3662 = vst.msk [vmem:[%s3451 + $0x8] sm:$0xff] %vm1586, %v3646
        %3663 = vst.msk [vmem:[%s3451 + $0x10] sm:$0xff] %vm1586, %v3647
        %3664 = vst.msk [vmem:[%s3451 + $0x18] sm:$0xff] %vm1586, %v3648
        %3665 = vst.msk [vmem:[%s3451 + $0x20] sm:$0xff] %vm1586, %v3649
        %3666 = vst.msk [vmem:[%s3451 + $0x28] sm:$0xff] %vm1586, %v3650
        %3667 = vst.msk [vmem:[%s3451 + $0x30] sm:$0xff] %vm1586, %v3651
        %3668 = vst.msk [vmem:[%s3451 + $0x38] sm:$0xff] %vm1586, %v3652
        %3669 = vst.msk [vmem:[%s3451 + $0x40] sm:$0xff] %vm1586, %v3653
        %3670 = vst.msk [vmem:[%s3451 + $0x48] sm:$0xff] %vm1586, %v3654
        %3671 = vst.msk [vmem:[%s3451 + $0x50] sm:$0xff] %vm1586, %v3655
        %3672 = vst.msk [vmem:[%s3451 + $0x58] sm:$0xff] %vm1586, %v3656
        %3673 = vst.msk [vmem:[%s3451 + $0x60] sm:$0xff] %vm1586, %v3657
        %3674 = vst.msk [vmem:[%s3451 + $0x68] sm:$0xff] %vm1586, %v3658
        %3675 = vst.msk [vmem:[%s3451 + $0x70] sm:$0xff] %vm1586, %v3659
        %3676 = vst.msk [vmem:[%s3451 + $0x78] sm:$0xff] %vm1586, %v3660
        %3677 = vst.msk [vmem:[%s3113] sm:$0xff] %vm2004, %v3162
        %3678 = vst.msk [vmem:[%s3113 + $0x8] sm:$0xff] %vm2004, %v3163
        %3679 = vst.msk [vmem:[%s3113 + $0x10] sm:$0xff] %vm2004, %v3164
        %3680 = vst.msk [vmem:[%s3113 + $0x18] sm:$0xff] %vm2004, %v3165
        %3681 = vst.msk [vmem:[%s3113 + $0x20] sm:$0xff] %vm2004, %v3166
        %3682 = vst.msk [vmem:[%s3113 + $0x28] sm:$0xff] %vm2004, %v3167
        %3683 = vst.msk [vmem:[%s3113 + $0x30] sm:$0xff] %vm2004, %v3168
        %3684 = vst.msk [vmem:[%s3113 + $0x38] sm:$0xff] %vm2004, %v3169
        %3685 = vst.msk [vmem:[%s3113 + $0x40] sm:$0xff] %vm2004, %v3170
        %3686 = vst.msk [vmem:[%s3113 + $0x48] sm:$0xff] %vm2004, %v3171
        %3687 = vst.msk [vmem:[%s3113 + $0x50] sm:$0xff] %vm2004, %v3172
        %3688 = vst.msk [vmem:[%s3113 + $0x58] sm:$0xff] %vm2004, %v3173
        %3689 = vst.msk [vmem:[%s3113 + $0x60] sm:$0xff] %vm2004, %v3174
        %3690 = vst.msk [vmem:[%s3113 + $0x68] sm:$0xff] %vm2004, %v3175
        %3691 = vst.msk [vmem:[%s3113 + $0x70] sm:$0xff] %vm2004, %v3176
        %3692 = vst.msk [vmem:[%s3113 + $0x78] sm:$0xff] %vm2004, %v3177
        %3693 = vrot.lane.b32.xlu0 %v2302, 96
        %v3694 = vpop.permute.xlu0 %3693
        %3695 = vrot.lane.b32.xlu0 %v2303, 96
        %v3696 = vpop.permute.xlu0 %3695
        %3697 = vrot.lane.b32.xlu0 %v2304, 96
        %v3698 = vpop.permute.xlu0 %3697
        %3699 = vrot.lane.b32.xlu0 %v2305, 96
        %v3700 = vpop.permute.xlu0 %3699
        %3701 = vrot.lane.b32.xlu0 %v2306, 96
        %v3702 = vpop.permute.xlu0 %3701
        %3703 = vrot.lane.b32.xlu0 %v2307, 96
        %v3704 = vpop.permute.xlu0 %3703
        %3705 = vrot.lane.b32.xlu0 %v2308, 96
        %v3706 = vpop.permute.xlu0 %3705
        %3707 = vrot.lane.b32.xlu0 %v2309, 96
        %v3708 = vpop.permute.xlu0 %3707
        %3709 = vrot.lane.b32.xlu0 %v2326, 96
        %v3710 = vpop.permute.xlu0 %3709
        %3711 = vrot.lane.b32.xlu0 %v2327, 96
        %v3712 = vpop.permute.xlu0 %3711
        %3713 = vrot.lane.b32.xlu0 %v2328, 96
        %v3714 = vpop.permute.xlu0 %3713
        %3715 = vrot.lane.b32.xlu0 %v2329, 96
        %v3716 = vpop.permute.xlu0 %3715
        %3717 = vrot.lane.b32.xlu0 %v2330, 96
        %v3718 = vpop.permute.xlu0 %3717
        %3719 = vrot.lane.b32.xlu0 %v2331, 96
        %v3720 = vpop.permute.xlu0 %3719
        %3721 = vrot.lane.b32.xlu0 %v2332, 96
        %v3722 = vpop.permute.xlu0 %3721
        %3723 = vrot.lane.b32.xlu0 %v2333, 96
        %v3724 = vpop.permute.xlu0 %3723
        %v3726 = vsel %vm1586, %v3694, 0
        %v3729 = vsel %vm1586, %v3696, 0
        %v3732 = vsel %vm1586, %v3698, 0
        %v3735 = vsel %vm1586, %v3700, 0
        %v3738 = vsel %vm1586, %v3702, 0
        %v3741 = vsel %vm1586, %v3704, 0
        %v3744 = vsel %vm1586, %v3706, 0
        %v3747 = vsel %vm1586, %v3708, 0
        %v3750 = vsel %vm1586, %v3710, 0
        %v3753 = vsel %vm1586, %v3712, 0
        %v3756 = vsel %vm1586, %v3714, 0
        %v3759 = vsel %vm1586, %v3716, 0
        %v3762 = vsel %vm1586, %v3718, 0
        %v3765 = vsel %vm1586, %v3720, 0
        %v3768 = vsel %vm1586, %v3722, 0
        %v3771 = vsel %vm1586, %v3724, 0
        %3773 = vmatpush.bf16.xpose.msra.mxu0 %v3771
        %3774 = vmatpush.bf16.xpose.msra.mxu0 %v3768
        %3775 = vmatpush.bf16.xpose.msra.mxu0 %v3765
        %3776 = vmatpush.bf16.xpose.msra.mxu0 %v3762
        %3777 = vmatpush.bf16.xpose.msra.mxu0 %v3759
        %3778 = vmatpush.bf16.xpose.msra.mxu0 %v3756
        %3779 = vmatpush.bf16.xpose.msra.mxu0 %v3753
        %3780 = vmatpush.bf16.xpose.msra.mxu0 %v3750
        %3781 = vmatmul.bf16.gmra.mxu0 %v3726
        %v3782 = vpop.f32.mrf.mxu0
        %v3783 = vadd.f32 0.0, %v3782
        %v3784 = vpop.f32.mrf.mxu0
        %v3785 = vadd.f32 0.0, %v3784
        %3786 = vmatmul.bf16.gmra.mxu0 %v3729
        %v3787 = vpop.f32.mrf.mxu0
        %v3788 = vadd.f32 0.0, %v3787
        %v3789 = vpop.f32.mrf.mxu0
        %v3790 = vadd.f32 0.0, %v3789
        %3791 = vmatmul.bf16.gmra.mxu0 %v3732
        %v3792 = vpop.f32.mrf.mxu0
        %v3793 = vadd.f32 0.0, %v3792
        %v3794 = vpop.f32.mrf.mxu0
        %v3795 = vadd.f32 0.0, %v3794
        %3796 = vmatmul.bf16.gmra.mxu0 %v3735
        %v3797 = vpop.f32.mrf.mxu0
        %v3798 = vadd.f32 0.0, %v3797
        %v3799 = vpop.f32.mrf.mxu0
        %v3800 = vadd.f32 0.0, %v3799
        %3801 = vmatmul.bf16.gmra.mxu0 %v3738
        %v3802 = vpop.f32.mrf.mxu0
        %v3803 = vadd.f32 0.0, %v3802
        %v3804 = vpop.f32.mrf.mxu0
        %v3805 = vadd.f32 0.0, %v3804
        %3806 = vmatmul.bf16.gmra.mxu0 %v3741
        %v3807 = vpop.f32.mrf.mxu0
        %v3808 = vadd.f32 0.0, %v3807
        %v3809 = vpop.f32.mrf.mxu0
        %v3810 = vadd.f32 0.0, %v3809
        %3811 = vmatmul.bf16.gmra.mxu0 %v3744
        %v3812 = vpop.f32.mrf.mxu0
        %v3813 = vadd.f32 0.0, %v3812
        %v3814 = vpop.f32.mrf.mxu0
        %v3815 = vadd.f32 0.0, %v3814
        %3816 = vmatmul.bf16.gmra.mxu0 %v3747
        %v3817 = vpop.f32.mrf.mxu0
        %v3818 = vadd.f32 0.0, %v3817
        %v3819 = vpop.f32.mrf.mxu0
        %v3820 = vadd.f32 0.0, %v3819
        %3821 = vdwg.mxu0
        %s3822 = scalar_lea.vmem [#allocation6], 128
        %v3823 = vld [vmem:[%s3822] sm:$0xff]
        %v3824 = vld [vmem:[%s3822 + $0x8] sm:$0xff]
        %v3825 = vld [vmem:[%s3822 + $0x10] sm:$0xff]
        %v3826 = vld [vmem:[%s3822 + $0x18] sm:$0xff]
        %v3827 = vld [vmem:[%s3822 + $0x20] sm:$0xff]
        %v3828 = vld [vmem:[%s3822 + $0x28] sm:$0xff]
        %v3829 = vld [vmem:[%s3822 + $0x30] sm:$0xff]
        %v3830 = vld [vmem:[%s3822 + $0x38] sm:$0xff]
        %v3831 = vld [vmem:[%s3822 + $0x40] sm:$0xff]
        %v3832 = vld [vmem:[%s3822 + $0x48] sm:$0xff]
        %v3833 = vld [vmem:[%s3822 + $0x50] sm:$0xff]
        %v3834 = vld [vmem:[%s3822 + $0x58] sm:$0xff]
        %v3835 = vld [vmem:[%s3822 + $0x60] sm:$0xff]
        %v3836 = vld [vmem:[%s3822 + $0x68] sm:$0xff]
        %v3837 = vld [vmem:[%s3822 + $0x70] sm:$0xff]
        %v3838 = vld [vmem:[%s3822 + $0x78] sm:$0xff]
        %3839 = vmax.xlane.f32.xlu0 %v3783
        %v3840 = vpop.xlane.xlu0 %3839
        %3841 = vmax.xlane.f32.xlu0 %v3785
        %v3842 = vpop.xlane.xlu0 %3841
        %3843 = vmax.xlane.f32.xlu0 %v3788
        %v3844 = vpop.xlane.xlu0 %3843
        %3845 = vmax.xlane.f32.xlu0 %v3790
        %v3846 = vpop.xlane.xlu0 %3845
        %3847 = vmax.xlane.f32.xlu0 %v3793
        %v3848 = vpop.xlane.xlu0 %3847
        %3849 = vmax.xlane.f32.xlu0 %v3795
        %v3850 = vpop.xlane.xlu0 %3849
        %3851 = vmax.xlane.f32.xlu0 %v3798
        %v3852 = vpop.xlane.xlu0 %3851
        %3853 = vmax.xlane.f32.xlu0 %v3800
        %v3854 = vpop.xlane.xlu0 %3853
        %3855 = vmax.xlane.f32.xlu0 %v3803
        %v3856 = vpop.xlane.xlu0 %3855
        %3857 = vmax.xlane.f32.xlu0 %v3805
        %v3858 = vpop.xlane.xlu0 %3857
        %3859 = vmax.xlane.f32.xlu0 %v3808
        %v3860 = vpop.xlane.xlu0 %3859
        %3861 = vmax.xlane.f32.xlu0 %v3810
        %v3862 = vpop.xlane.xlu0 %3861
        %3863 = vmax.xlane.f32.xlu0 %v3813
        %v3864 = vpop.xlane.xlu0 %3863
        %3865 = vmax.xlane.f32.xlu0 %v3815
        %v3866 = vpop.xlane.xlu0 %3865
        %3867 = vmax.xlane.f32.xlu0 %v3818
        %v3868 = vpop.xlane.xlu0 %3867
        %3869 = vmax.xlane.f32.xlu0 %v3820
        %v3870 = vpop.xlane.xlu0 %3869
        %v3871 = vmax.f32 %v3823, %v3840
        %v3872 = vmax.f32 %v3824, %v3842
        %v3873 = vmax.f32 %v3825, %v3844
        %v3874 = vmax.f32 %v3826, %v3846
        %v3875 = vmax.f32 %v3827, %v3848
        %v3876 = vmax.f32 %v3828, %v3850
        %v3877 = vmax.f32 %v3829, %v3852
        %v3878 = vmax.f32 %v3830, %v3854
        %v3879 = vmax.f32 %v3831, %v3856
        %v3880 = vmax.f32 %v3832, %v3858
        %v3881 = vmax.f32 %v3833, %v3860
        %v3882 = vmax.f32 %v3834, %v3862
        %v3883 = vmax.f32 %v3835, %v3864
        %v3884 = vmax.f32 %v3836, %v3866
        %v3885 = vmax.f32 %v3837, %v3868
        %v3886 = vmax.f32 %v3838, %v3870
        %v3887 = vsub.f32 %v3823, %v3871
        %v3888 = vsub.f32 %v3824, %v3872
        %v3889 = vsub.f32 %v3825, %v3873
        %v3890 = vsub.f32 %v3826, %v3874
        %v3891 = vsub.f32 %v3827, %v3875
        %v3892 = vsub.f32 %v3828, %v3876
        %v3893 = vsub.f32 %v3829, %v3877
        %v3894 = vsub.f32 %v3830, %v3878
        %v3895 = vsub.f32 %v3831, %v3879
        %v3896 = vsub.f32 %v3832, %v3880
        %v3897 = vsub.f32 %v3833, %v3881
        %v3898 = vsub.f32 %v3834, %v3882
        %v3899 = vsub.f32 %v3835, %v3883
        %v3900 = vsub.f32 %v3836, %v3884
        %v3901 = vsub.f32 %v3837, %v3885
        %v3902 = vsub.f32 %v3838, %v3886
        %v3903 = vmul.f32 %v3887, 1.442695
        %v3904 = vpow.pop %v3903
        %v3905 = vmul.f32 %v3888, 1.442695
        %v3906 = vpow.pop %v3905
        %v3907 = vmul.f32 %v3889, 1.442695
        %v3908 = vpow.pop %v3907
        %v3909 = vmul.f32 %v3890, 1.442695
        %v3910 = vpow.pop %v3909
        %v3911 = vmul.f32 %v3891, 1.442695
        %v3912 = vpow.pop %v3911
        %v3913 = vmul.f32 %v3892, 1.442695
        %v3914 = vpow.pop %v3913
        %v3915 = vmul.f32 %v3893, 1.442695
        %v3916 = vpow.pop %v3915
        %v3917 = vmul.f32 %v3894, 1.442695
        %v3918 = vpow.pop %v3917
        %v3919 = vmul.f32 %v3895, 1.442695
        %v3920 = vpow.pop %v3919
        %v3921 = vmul.f32 %v3896, 1.442695
        %v3922 = vpow.pop %v3921
        %v3923 = vmul.f32 %v3897, 1.442695
        %v3924 = vpow.pop %v3923
        %v3925 = vmul.f32 %v3898, 1.442695
        %v3926 = vpow.pop %v3925
        %v3927 = vmul.f32 %v3899, 1.442695
        %v3928 = vpow.pop %v3927
        %v3929 = vmul.f32 %v3900, 1.442695
        %v3930 = vpow.pop %v3929
        %v3931 = vmul.f32 %v3901, 1.442695
        %v3932 = vpow.pop %v3931
        %v3933 = vmul.f32 %v3902, 1.442695
        %v3934 = vpow.pop %v3933
        %3936 = vset.pattern.permute.xlu0 0
        %3937 = vperm.xlu0 %3936, %v3871
        %v3938 = vpop.permute.xlu0 %3937
        %3941 = vset.pattern.permute.xlu0 0
        %3942 = vperm.xlu0 %3941, %v3872
        %v3943 = vpop.permute.xlu0 %3942
        %3946 = vset.pattern.permute.xlu0 0
        %3947 = vperm.xlu0 %3946, %v3873
        %v3948 = vpop.permute.xlu0 %3947
        %3951 = vset.pattern.permute.xlu0 0
        %3952 = vperm.xlu0 %3951, %v3874
        %v3953 = vpop.permute.xlu0 %3952
        %3956 = vset.pattern.permute.xlu0 0
        %3957 = vperm.xlu0 %3956, %v3875
        %v3958 = vpop.permute.xlu0 %3957
        %3961 = vset.pattern.permute.xlu0 0
        %3962 = vperm.xlu0 %3961, %v3876
        %v3963 = vpop.permute.xlu0 %3962
        %3966 = vset.pattern.permute.xlu0 0
        %3967 = vperm.xlu0 %3966, %v3877
        %v3968 = vpop.permute.xlu0 %3967
        %3971 = vset.pattern.permute.xlu0 0
        %3972 = vperm.xlu0 %3971, %v3878
        %v3973 = vpop.permute.xlu0 %3972
        %3976 = vset.pattern.permute.xlu0 0
        %3977 = vperm.xlu0 %3976, %v3879
        %v3978 = vpop.permute.xlu0 %3977
        %3981 = vset.pattern.permute.xlu0 0
        %3982 = vperm.xlu0 %3981, %v3880
        %v3983 = vpop.permute.xlu0 %3982
        %3986 = vset.pattern.permute.xlu0 0
        %3987 = vperm.xlu0 %3986, %v3881
        %v3988 = vpop.permute.xlu0 %3987
        %3991 = vset.pattern.permute.xlu0 0
        %3992 = vperm.xlu0 %3991, %v3882
        %v3993 = vpop.permute.xlu0 %3992
        %3996 = vset.pattern.permute.xlu0 0
        %3997 = vperm.xlu0 %3996, %v3883
        %v3998 = vpop.permute.xlu0 %3997
        %4001 = vset.pattern.permute.xlu0 0
        %4002 = vperm.xlu0 %4001, %v3884
        %v4003 = vpop.permute.xlu0 %4002
        %4006 = vset.pattern.permute.xlu0 0
        %4007 = vperm.xlu0 %4006, %v3885
        %v4008 = vpop.permute.xlu0 %4007
        %4011 = vset.pattern.permute.xlu0 0
        %4012 = vperm.xlu0 %4011, %v3886
        %v4013 = vpop.permute.xlu0 %4012
        %v4015 = vsub.f32 %v3783, %v3938
        %v4016 = vsub.f32 %v3785, %v3943
        %v4017 = vsub.f32 %v3788, %v3948
        %v4018 = vsub.f32 %v3790, %v3953
        %v4019 = vsub.f32 %v3793, %v3958
        %v4020 = vsub.f32 %v3795, %v3963
        %v4021 = vsub.f32 %v3798, %v3968
        %v4022 = vsub.f32 %v3800, %v3973
        %v4023 = vsub.f32 %v3803, %v3978
        %v4024 = vsub.f32 %v3805, %v3983
        %v4025 = vsub.f32 %v3808, %v3988
        %v4026 = vsub.f32 %v3810, %v3993
        %v4027 = vsub.f32 %v3813, %v3998
        %v4028 = vsub.f32 %v3815, %v4003
        %v4029 = vsub.f32 %v3818, %v4008
        %v4030 = vsub.f32 %v3820, %v4013
        %v4031 = vmul.f32 %v4015, 1.442695
        %v4032 = vpow.pop %v4031
        %v4033 = vmul.f32 %v4016, 1.442695
        %v4034 = vpow.pop %v4033
        %v4035 = vmul.f32 %v4017, 1.442695
        %v4036 = vpow.pop %v4035
        %v4037 = vmul.f32 %v4018, 1.442695
        %v4038 = vpow.pop %v4037
        %v4039 = vmul.f32 %v4019, 1.442695
        %v4040 = vpow.pop %v4039
        %v4041 = vmul.f32 %v4020, 1.442695
        %v4042 = vpow.pop %v4041
        %v4043 = vmul.f32 %v4021, 1.442695
        %v4044 = vpow.pop %v4043
        %v4045 = vmul.f32 %v4022, 1.442695
        %v4046 = vpow.pop %v4045
        %v4047 = vmul.f32 %v4023, 1.442695
        %v4048 = vpow.pop %v4047
        %v4049 = vmul.f32 %v4024, 1.442695
        %v4050 = vpow.pop %v4049
        %v4051 = vmul.f32 %v4025, 1.442695
        %v4052 = vpow.pop %v4051
        %v4053 = vmul.f32 %v4026, 1.442695
        %v4054 = vpow.pop %v4053
        %v4055 = vmul.f32 %v4027, 1.442695
        %v4056 = vpow.pop %v4055
        %v4057 = vmul.f32 %v4028, 1.442695
        %v4058 = vpow.pop %v4057
        %v4059 = vmul.f32 %v4029, 1.442695
        %v4060 = vpow.pop %v4059
        %v4061 = vmul.f32 %v4030, 1.442695
        %v4062 = vpow.pop %v4061
        %s4063 = scalar_lea.vmem [#allocation7], 128
        %v4064 = vld [vmem:[%s4063] sm:$0xff]
        %v4065 = vld [vmem:[%s4063 + $0x8] sm:$0xff]
        %v4066 = vld [vmem:[%s4063 + $0x10] sm:$0xff]
        %v4067 = vld [vmem:[%s4063 + $0x18] sm:$0xff]
        %v4068 = vld [vmem:[%s4063 + $0x20] sm:$0xff]
        %v4069 = vld [vmem:[%s4063 + $0x28] sm:$0xff]
        %v4070 = vld [vmem:[%s4063 + $0x30] sm:$0xff]
        %v4071 = vld [vmem:[%s4063 + $0x38] sm:$0xff]
        %v4072 = vld [vmem:[%s4063 + $0x40] sm:$0xff]
        %v4073 = vld [vmem:[%s4063 + $0x48] sm:$0xff]
        %v4074 = vld [vmem:[%s4063 + $0x50] sm:$0xff]
        %v4075 = vld [vmem:[%s4063 + $0x58] sm:$0xff]
        %v4076 = vld [vmem:[%s4063 + $0x60] sm:$0xff]
        %v4077 = vld [vmem:[%s4063 + $0x68] sm:$0xff]
        %v4078 = vld [vmem:[%s4063 + $0x70] sm:$0xff]
        %v4079 = vld [vmem:[%s4063 + $0x78] sm:$0xff]
        %v4080 = vmul.f32 %v3904, %v4064
        %v4081 = vmul.f32 %v3906, %v4065
        %v4082 = vmul.f32 %v3908, %v4066
        %v4083 = vmul.f32 %v3910, %v4067
        %v4084 = vmul.f32 %v3912, %v4068
        %v4085 = vmul.f32 %v3914, %v4069
        %v4086 = vmul.f32 %v3916, %v4070
        %v4087 = vmul.f32 %v3918, %v4071
        %v4088 = vmul.f32 %v3920, %v4072
        %v4089 = vmul.f32 %v3922, %v4073
        %v4090 = vmul.f32 %v3924, %v4074
        %v4091 = vmul.f32 %v3926, %v4075
        %v4092 = vmul.f32 %v3928, %v4076
        %v4093 = vmul.f32 %v3930, %v4077
        %v4094 = vmul.f32 %v3932, %v4078
        %v4095 = vmul.f32 %v3934, %v4079
        %4096 = vadd.xlane.f32.xlu0 %v4032
        %v4097 = vpop.xlane.xlu0 %4096
        %4098 = vadd.xlane.f32.xlu0 %v4034
        %v4099 = vpop.xlane.xlu0 %4098
        %4100 = vadd.xlane.f32.xlu0 %v4036
        %v4101 = vpop.xlane.xlu0 %4100
        %4102 = vadd.xlane.f32.xlu0 %v4038
        %v4103 = vpop.xlane.xlu0 %4102
        %4104 = vadd.xlane.f32.xlu0 %v4040
        %v4105 = vpop.xlane.xlu0 %4104
        %4106 = vadd.xlane.f32.xlu0 %v4042
        %v4107 = vpop.xlane.xlu0 %4106
        %4108 = vadd.xlane.f32.xlu0 %v4044
        %v4109 = vpop.xlane.xlu0 %4108
        %4110 = vadd.xlane.f32.xlu0 %v4046
        %v4111 = vpop.xlane.xlu0 %4110
        %4112 = vadd.xlane.f32.xlu0 %v4048
        %v4113 = vpop.xlane.xlu0 %4112
        %4114 = vadd.xlane.f32.xlu0 %v4050
        %v4115 = vpop.xlane.xlu0 %4114
        %4116 = vadd.xlane.f32.xlu0 %v4052
        %v4117 = vpop.xlane.xlu0 %4116
        %4118 = vadd.xlane.f32.xlu0 %v4054
        %v4119 = vpop.xlane.xlu0 %4118
        %4120 = vadd.xlane.f32.xlu0 %v4056
        %v4121 = vpop.xlane.xlu0 %4120
        %4122 = vadd.xlane.f32.xlu0 %v4058
        %v4123 = vpop.xlane.xlu0 %4122
        %4124 = vadd.xlane.f32.xlu0 %v4060
        %v4125 = vpop.xlane.xlu0 %4124
        %4126 = vadd.xlane.f32.xlu0 %v4062
        %v4127 = vpop.xlane.xlu0 %4126
        %v4128 = vadd.f32 %v4080, %v4097
        %v4129 = vadd.f32 %v4081, %v4099
        %v4130 = vadd.f32 %v4082, %v4101
        %v4131 = vadd.f32 %v4083, %v4103
        %v4132 = vadd.f32 %v4084, %v4105
        %v4133 = vadd.f32 %v4085, %v4107
        %v4134 = vadd.f32 %v4086, %v4109
        %v4135 = vadd.f32 %v4087, %v4111
        %v4136 = vadd.f32 %v4088, %v4113
        %v4137 = vadd.f32 %v4089, %v4115
        %v4138 = vadd.f32 %v4090, %v4117
        %v4139 = vadd.f32 %v4091, %v4119
        %v4140 = vadd.f32 %v4092, %v4121
        %v4141 = vadd.f32 %v4093, %v4123
        %v4142 = vadd.f32 %v4094, %v4125
        %v4143 = vadd.f32 %v4095, %v4127
        %4144 = vst.msk [vmem:[%s4063] sm:$0xff] %vm2004, %v4128
        %4145 = vst.msk [vmem:[%s4063 + $0x8] sm:$0xff] %vm2004, %v4129
        %4146 = vst.msk [vmem:[%s4063 + $0x10] sm:$0xff] %vm2004, %v4130
        %4147 = vst.msk [vmem:[%s4063 + $0x18] sm:$0xff] %vm2004, %v4131
        %4148 = vst.msk [vmem:[%s4063 + $0x20] sm:$0xff] %vm2004, %v4132
        %4149 = vst.msk [vmem:[%s4063 + $0x28] sm:$0xff] %vm2004, %v4133
        %4150 = vst.msk [vmem:[%s4063 + $0x30] sm:$0xff] %vm2004, %v4134
        %4151 = vst.msk [vmem:[%s4063 + $0x38] sm:$0xff] %vm2004, %v4135
        %4152 = vst.msk [vmem:[%s4063 + $0x40] sm:$0xff] %vm2004, %v4136
        %4153 = vst.msk [vmem:[%s4063 + $0x48] sm:$0xff] %vm2004, %v4137
        %4154 = vst.msk [vmem:[%s4063 + $0x50] sm:$0xff] %vm2004, %v4138
        %4155 = vst.msk [vmem:[%s4063 + $0x58] sm:$0xff] %vm2004, %v4139
        %4156 = vst.msk [vmem:[%s4063 + $0x60] sm:$0xff] %vm2004, %v4140
        %4157 = vst.msk [vmem:[%s4063 + $0x68] sm:$0xff] %vm2004, %v4141
        %4158 = vst.msk [vmem:[%s4063 + $0x70] sm:$0xff] %vm2004, %v4142
        %4159 = vst.msk [vmem:[%s4063 + $0x78] sm:$0xff] %vm2004, %v4143
        %s4160 = scalar_lea.vmem [#allocation8], 128
        %v4161 = vld [vmem:[%s4160] sm:$0xff]
        %v4162 = vld [vmem:[%s4160 + $0x8] sm:$0xff]
        %v4163 = vld [vmem:[%s4160 + $0x10] sm:$0xff]
        %v4164 = vld [vmem:[%s4160 + $0x18] sm:$0xff]
        %v4165 = vld [vmem:[%s4160 + $0x20] sm:$0xff]
        %v4166 = vld [vmem:[%s4160 + $0x28] sm:$0xff]
        %v4167 = vld [vmem:[%s4160 + $0x30] sm:$0xff]
        %v4168 = vld [vmem:[%s4160 + $0x38] sm:$0xff]
        %v4169 = vld [vmem:[%s4160 + $0x40] sm:$0xff]
        %v4170 = vld [vmem:[%s4160 + $0x48] sm:$0xff]
        %v4171 = vld [vmem:[%s4160 + $0x50] sm:$0xff]
        %v4172 = vld [vmem:[%s4160 + $0x58] sm:$0xff]
        %v4173 = vld [vmem:[%s4160 + $0x60] sm:$0xff]
        %v4174 = vld [vmem:[%s4160 + $0x68] sm:$0xff]
        %v4175 = vld [vmem:[%s4160 + $0x70] sm:$0xff]
        %v4176 = vld [vmem:[%s4160 + $0x78] sm:$0xff]
        %4178 = vset.pattern.permute.xlu0 0
        %4179 = vperm.xlu0 %4178, %v3904
        %v4180 = vpop.permute.xlu0 %4179
        %4183 = vset.pattern.permute.xlu0 0
        %4184 = vperm.xlu0 %4183, %v3906
        %v4185 = vpop.permute.xlu0 %4184
        %4188 = vset.pattern.permute.xlu0 0
        %4189 = vperm.xlu0 %4188, %v3908
        %v4190 = vpop.permute.xlu0 %4189
        %4193 = vset.pattern.permute.xlu0 0
        %4194 = vperm.xlu0 %4193, %v3910
        %v4195 = vpop.permute.xlu0 %4194
        %4198 = vset.pattern.permute.xlu0 0
        %4199 = vperm.xlu0 %4198, %v3912
        %v4200 = vpop.permute.xlu0 %4199
        %4203 = vset.pattern.permute.xlu0 0
        %4204 = vperm.xlu0 %4203, %v3914
        %v4205 = vpop.permute.xlu0 %4204
        %4208 = vset.pattern.permute.xlu0 0
        %4209 = vperm.xlu0 %4208, %v3916
        %v4210 = vpop.permute.xlu0 %4209
        %4213 = vset.pattern.permute.xlu0 0
        %4214 = vperm.xlu0 %4213, %v3918
        %v4215 = vpop.permute.xlu0 %4214
        %4218 = vset.pattern.permute.xlu0 0
        %4219 = vperm.xlu0 %4218, %v3920
        %v4220 = vpop.permute.xlu0 %4219
        %4223 = vset.pattern.permute.xlu0 0
        %4224 = vperm.xlu0 %4223, %v3922
        %v4225 = vpop.permute.xlu0 %4224
        %4228 = vset.pattern.permute.xlu0 0
        %4229 = vperm.xlu0 %4228, %v3924
        %v4230 = vpop.permute.xlu0 %4229
        %4233 = vset.pattern.permute.xlu0 0
        %4234 = vperm.xlu0 %4233, %v3926
        %v4235 = vpop.permute.xlu0 %4234
        %4238 = vset.pattern.permute.xlu0 0
        %4239 = vperm.xlu0 %4238, %v3928
        %v4240 = vpop.permute.xlu0 %4239
        %4243 = vset.pattern.permute.xlu0 0
        %4244 = vperm.xlu0 %4243, %v3930
        %v4245 = vpop.permute.xlu0 %4244
        %4248 = vset.pattern.permute.xlu0 0
        %4249 = vperm.xlu0 %4248, %v3932
        %v4250 = vpop.permute.xlu0 %4249
        %4253 = vset.pattern.permute.xlu0 0
        %4254 = vperm.xlu0 %4253, %v3934
        %v4255 = vpop.permute.xlu0 %4254
        %v4257 = vmul.f32 %v4180, %v4161
        %v4258 = vmul.f32 %v4185, %v4162
        %v4259 = vmul.f32 %v4190, %v4163
        %v4260 = vmul.f32 %v4195, %v4164
        %v4261 = vmul.f32 %v4200, %v4165
        %v4262 = vmul.f32 %v4205, %v4166
        %v4263 = vmul.f32 %v4210, %v4167
        %v4264 = vmul.f32 %v4215, %v4168
        %v4265 = vmul.f32 %v4220, %v4169
        %v4266 = vmul.f32 %v4225, %v4170
        %v4267 = vmul.f32 %v4230, %v4171
        %v4268 = vmul.f32 %v4235, %v4172
        %v4269 = vmul.f32 %v4240, %v4173
        %v4270 = vmul.f32 %v4245, %v4174
        %v4271 = vmul.f32 %v4250, %v4175
        %v4272 = vmul.f32 %v4255, %v4176
        %v4273 = vpack.c.bf16 %v4034, %v4032
        %v4274 = vpack.c.bf16 %v4038, %v4036
        %v4275 = vpack.c.bf16 %v4042, %v4040
        %v4276 = vpack.c.bf16 %v4046, %v4044
        %v4277 = vpack.c.bf16 %v4050, %v4048
        %v4278 = vpack.c.bf16 %v4054, %v4052
        %v4279 = vpack.c.bf16 %v4058, %v4056
        %v4280 = vpack.c.bf16 %v4062, %v4060
        %4281 = vmatpush.bf16.msra.mxu0 %v3587
        %4282 = vmatpush.bf16.msra.mxu0 %v3585
        %4283 = vmatpush.bf16.msra.mxu0 %v3583
        %4284 = vmatpush.bf16.msra.mxu0 %v3581
        %4285 = vmatpush.bf16.msra.mxu0 %v3579
        %4286 = vmatpush.bf16.msra.mxu0 %v3577
        %4287 = vmatpush.bf16.msra.mxu0 %v3575
        %4288 = vmatpush.bf16.msra.mxu0 %v3573
        %4289 = vmatmul.bf16.gmra.mxu0 %v4273
        %v4290 = vpop.f32.mrf.mxu0
        %v4291 = vadd.f32 0.0, %v4290
        %v4292 = vpop.f32.mrf.mxu0
        %v4293 = vadd.f32 0.0, %v4292
        %4294 = vmatmul.bf16.gmra.mxu0 %v4274
        %v4295 = vpop.f32.mrf.mxu0
        %v4296 = vadd.f32 0.0, %v4295
        %v4297 = vpop.f32.mrf.mxu0
        %v4298 = vadd.f32 0.0, %v4297
        %4299 = vmatmul.bf16.gmra.mxu0 %v4275
        %v4300 = vpop.f32.mrf.mxu0
        %v4301 = vadd.f32 0.0, %v4300
        %v4302 = vpop.f32.mrf.mxu0
        %v4303 = vadd.f32 0.0, %v4302
        %4304 = vmatmul.bf16.gmra.mxu0 %v4276
        %v4305 = vpop.f32.mrf.mxu0
        %v4306 = vadd.f32 0.0, %v4305
        %v4307 = vpop.f32.mrf.mxu0
        %v4308 = vadd.f32 0.0, %v4307
        %4309 = vmatmul.bf16.gmra.mxu0 %v4277
        %v4310 = vpop.f32.mrf.mxu0
        %v4311 = vadd.f32 0.0, %v4310
        %v4312 = vpop.f32.mrf.mxu0
        %v4313 = vadd.f32 0.0, %v4312
        %4314 = vmatmul.bf16.gmra.mxu0 %v4278
        %v4315 = vpop.f32.mrf.mxu0
        %v4316 = vadd.f32 0.0, %v4315
        %v4317 = vpop.f32.mrf.mxu0
        %v4318 = vadd.f32 0.0, %v4317
        %4319 = vmatmul.bf16.gmra.mxu0 %v4279
        %v4320 = vpop.f32.mrf.mxu0
        %v4321 = vadd.f32 0.0, %v4320
        %v4322 = vpop.f32.mrf.mxu0
        %v4323 = vadd.f32 0.0, %v4322
        %4324 = vmatmul.bf16.gmra.mxu0 %v4280
        %v4325 = vpop.f32.mrf.mxu0
        %v4326 = vadd.f32 0.0, %v4325
        %v4327 = vpop.f32.mrf.mxu0
        %v4328 = vadd.f32 0.0, %v4327
        %4329 = vdwg.mxu0
        %v4330 = vadd.f32 %v4257, %v4291
        %v4331 = vadd.f32 %v4258, %v4293
        %v4332 = vadd.f32 %v4259, %v4296
        %v4333 = vadd.f32 %v4260, %v4298
        %v4334 = vadd.f32 %v4261, %v4301
        %v4335 = vadd.f32 %v4262, %v4303
        %v4336 = vadd.f32 %v4263, %v4306
        %v4337 = vadd.f32 %v4264, %v4308
        %v4338 = vadd.f32 %v4265, %v4311
        %v4339 = vadd.f32 %v4266, %v4313
        %v4340 = vadd.f32 %v4267, %v4316
        %v4341 = vadd.f32 %v4268, %v4318
        %v4342 = vadd.f32 %v4269, %v4321
        %v4343 = vadd.f32 %v4270, %v4323
        %v4344 = vadd.f32 %v4271, %v4326
        %v4345 = vadd.f32 %v4272, %v4328
        %4346 = vst.msk [vmem:[%s4160] sm:$0xff] %vm1586, %v4330
        %4347 = vst.msk [vmem:[%s4160 + $0x8] sm:$0xff] %vm1586, %v4331
        %4348 = vst.msk [vmem:[%s4160 + $0x10] sm:$0xff] %vm1586, %v4332
        %4349 = vst.msk [vmem:[%s4160 + $0x18] sm:$0xff] %vm1586, %v4333
        %4350 = vst.msk [vmem:[%s4160 + $0x20] sm:$0xff] %vm1586, %v4334
        %4351 = vst.msk [vmem:[%s4160 + $0x28] sm:$0xff] %vm1586, %v4335
        %4352 = vst.msk [vmem:[%s4160 + $0x30] sm:$0xff] %vm1586, %v4336
        %4353 = vst.msk [vmem:[%s4160 + $0x38] sm:$0xff] %vm1586, %v4337
        %4354 = vst.msk [vmem:[%s4160 + $0x40] sm:$0xff] %vm1586, %v4338
        %4355 = vst.msk [vmem:[%s4160 + $0x48] sm:$0xff] %vm1586, %v4339
        %4356 = vst.msk [vmem:[%s4160 + $0x50] sm:$0xff] %vm1586, %v4340
        %4357 = vst.msk [vmem:[%s4160 + $0x58] sm:$0xff] %vm1586, %v4341
        %4358 = vst.msk [vmem:[%s4160 + $0x60] sm:$0xff] %vm1586, %v4342
        %4359 = vst.msk [vmem:[%s4160 + $0x68] sm:$0xff] %vm1586, %v4343
        %4360 = vst.msk [vmem:[%s4160 + $0x70] sm:$0xff] %vm1586, %v4344
        %4361 = vst.msk [vmem:[%s4160 + $0x78] sm:$0xff] %vm1586, %v4345
        %4362 = vst.msk [vmem:[%s3822] sm:$0xff] %vm2004, %v3871
        %4363 = vst.msk [vmem:[%s3822 + $0x8] sm:$0xff] %vm2004, %v3872
        %4364 = vst.msk [vmem:[%s3822 + $0x10] sm:$0xff] %vm2004, %v3873
        %4365 = vst.msk [vmem:[%s3822 + $0x18] sm:$0xff] %vm2004, %v3874
        %4366 = vst.msk [vmem:[%s3822 + $0x20] sm:$0xff] %vm2004, %v3875
        %4367 = vst.msk [vmem:[%s3822 + $0x28] sm:$0xff] %vm2004, %v3876
        %4368 = vst.msk [vmem:[%s3822 + $0x30] sm:$0xff] %vm2004, %v3877
        %4369 = vst.msk [vmem:[%s3822 + $0x38] sm:$0xff] %vm2004, %v3878
        %4370 = vst.msk [vmem:[%s3822 + $0x40] sm:$0xff] %vm2004, %v3879
        %4371 = vst.msk [vmem:[%s3822 + $0x48] sm:$0xff] %vm2004, %v3880
        %4372 = vst.msk [vmem:[%s3822 + $0x50] sm:$0xff] %vm2004, %v3881
        %4373 = vst.msk [vmem:[%s3822 + $0x58] sm:$0xff] %vm2004, %v3882
        %4374 = vst.msk [vmem:[%s3822 + $0x60] sm:$0xff] %vm2004, %v3883
        %4375 = vst.msk [vmem:[%s3822 + $0x68] sm:$0xff] %vm2004, %v3884
        %4376 = vst.msk [vmem:[%s3822 + $0x70] sm:$0xff] %vm2004, %v3885
        %4377 = vst.msk [vmem:[%s3822 + $0x78] sm:$0xff] %vm2004, %v3886
        %4378 = vrot.lane.b32.xlu0 %v1538, 64
        %v4379 = vpop.permute.xlu0 %4378
        %4380 = vrot.lane.b32.xlu0 %v1539, 64
        %v4381 = vpop.permute.xlu0 %4380
        %4382 = vrot.lane.b32.xlu0 %v1540, 64
        %v4383 = vpop.permute.xlu0 %4382
        %4384 = vrot.lane.b32.xlu0 %v1541, 64
        %v4385 = vpop.permute.xlu0 %4384
        %4386 = vrot.lane.b32.xlu0 %v1542, 64
        %v4387 = vpop.permute.xlu0 %4386
        %4388 = vrot.lane.b32.xlu0 %v1543, 64
        %v4389 = vpop.permute.xlu0 %4388
        %4390 = vrot.lane.b32.xlu0 %v1544, 64
        %v4391 = vpop.permute.xlu0 %4390
        %4392 = vrot.lane.b32.xlu0 %v1545, 64
        %v4393 = vpop.permute.xlu0 %4392
        %4394 = vrot.lane.b32.xlu0 %v1578, 64
        %v4395 = vpop.permute.xlu0 %4394
        %4396 = vrot.lane.b32.xlu0 %v1579, 64
        %v4397 = vpop.permute.xlu0 %4396
        %4398 = vrot.lane.b32.xlu0 %v1580, 64
        %v4399 = vpop.permute.xlu0 %4398
        %4400 = vrot.lane.b32.xlu0 %v1581, 64
        %v4401 = vpop.permute.xlu0 %4400
        %4402 = vrot.lane.b32.xlu0 %v1582, 64
        %v4403 = vpop.permute.xlu0 %4402
        %4404 = vrot.lane.b32.xlu0 %v1583, 64
        %v4405 = vpop.permute.xlu0 %4404
        %4406 = vrot.lane.b32.xlu0 %v1584, 64
        %v4407 = vpop.permute.xlu0 %4406
        %4408 = vrot.lane.b32.xlu0 %v1585, 64
        %v4409 = vpop.permute.xlu0 %4408
        %v4411 = vsel %vm1586, %v4379, 0
        %v4414 = vsel %vm1586, %v4381, 0
        %v4417 = vsel %vm1586, %v4383, 0
        %v4420 = vsel %vm1586, %v4385, 0
        %v4423 = vsel %vm1586, %v4387, 0
        %v4426 = vsel %vm1586, %v4389, 0
        %v4429 = vsel %vm1586, %v4391, 0
        %v4432 = vsel %vm1586, %v4393, 0
        %v4435 = vsel %vm1586, %v4395, 0
        %v4438 = vsel %vm1586, %v4397, 0
        %v4441 = vsel %vm1586, %v4399, 0
        %v4444 = vsel %vm1586, %v4401, 0
        %v4447 = vsel %vm1586, %v4403, 0
        %v4450 = vsel %vm1586, %v4405, 0
        %v4453 = vsel %vm1586, %v4407, 0
        %v4456 = vsel %vm1586, %v4409, 0
        %4458 = vmatpush.bf16.xpose.msra.mxu0 %v4456
        %4459 = vmatpush.bf16.xpose.msra.mxu0 %v4453
        %4460 = vmatpush.bf16.xpose.msra.mxu0 %v4450
        %4461 = vmatpush.bf16.xpose.msra.mxu0 %v4447
        %4462 = vmatpush.bf16.xpose.msra.mxu0 %v4444
        %4463 = vmatpush.bf16.xpose.msra.mxu0 %v4441
        %4464 = vmatpush.bf16.xpose.msra.mxu0 %v4438
        %4465 = vmatpush.bf16.xpose.msra.mxu0 %v4435
        %4466 = vmatmul.bf16.gmra.mxu0 %v4411
        %v4467 = vpop.f32.mrf.mxu0
        %v4468 = vadd.f32 0.0, %v4467
        %v4469 = vpop.f32.mrf.mxu0
        %v4470 = vadd.f32 0.0, %v4469
        %4471 = vmatmul.bf16.gmra.mxu0 %v4414
        %v4472 = vpop.f32.mrf.mxu0
        %v4473 = vadd.f32 0.0, %v4472
        %v4474 = vpop.f32.mrf.mxu0
        %v4475 = vadd.f32 0.0, %v4474
        %4476 = vmatmul.bf16.gmra.mxu0 %v4417
        %v4477 = vpop.f32.mrf.mxu0
        %v4478 = vadd.f32 0.0, %v4477
        %v4479 = vpop.f32.mrf.mxu0
        %v4480 = vadd.f32 0.0, %v4479
        %4481 = vmatmul.bf16.gmra.mxu0 %v4420
        %v4482 = vpop.f32.mrf.mxu0
        %v4483 = vadd.f32 0.0, %v4482
        %v4484 = vpop.f32.mrf.mxu0
        %v4485 = vadd.f32 0.0, %v4484
        %4486 = vmatmul.bf16.gmra.mxu0 %v4423
        %v4487 = vpop.f32.mrf.mxu0
        %v4488 = vadd.f32 0.0, %v4487
        %v4489 = vpop.f32.mrf.mxu0
        %v4490 = vadd.f32 0.0, %v4489
        %4491 = vmatmul.bf16.gmra.mxu0 %v4426
        %v4492 = vpop.f32.mrf.mxu0
        %v4493 = vadd.f32 0.0, %v4492
        %v4494 = vpop.f32.mrf.mxu0
        %v4495 = vadd.f32 0.0, %v4494
        %4496 = vmatmul.bf16.gmra.mxu0 %v4429
        %v4497 = vpop.f32.mrf.mxu0
        %v4498 = vadd.f32 0.0, %v4497
        %v4499 = vpop.f32.mrf.mxu0
        %v4500 = vadd.f32 0.0, %v4499
        %4501 = vmatmul.bf16.gmra.mxu0 %v4432
        %v4502 = vpop.f32.mrf.mxu0
        %v4503 = vadd.f32 0.0, %v4502
        %v4504 = vpop.f32.mrf.mxu0
        %v4505 = vadd.f32 0.0, %v4504
        %4506 = vdwg.mxu0
        %s4507 = scalar_lea.vmem [#allocation3], 256
        %v4508 = vld [vmem:[%s4507] sm:$0xff]
        %v4509 = vld [vmem:[%s4507 + $0x8] sm:$0xff]
        %v4510 = vld [vmem:[%s4507 + $0x10] sm:$0xff]
        %v4511 = vld [vmem:[%s4507 + $0x18] sm:$0xff]
        %v4512 = vld [vmem:[%s4507 + $0x20] sm:$0xff]
        %v4513 = vld [vmem:[%s4507 + $0x28] sm:$0xff]
        %v4514 = vld [vmem:[%s4507 + $0x30] sm:$0xff]
        %v4515 = vld [vmem:[%s4507 + $0x38] sm:$0xff]
        %v4516 = vld [vmem:[%s4507 + $0x40] sm:$0xff]
        %v4517 = vld [vmem:[%s4507 + $0x48] sm:$0xff]
        %v4518 = vld [vmem:[%s4507 + $0x50] sm:$0xff]
        %v4519 = vld [vmem:[%s4507 + $0x58] sm:$0xff]
        %v4520 = vld [vmem:[%s4507 + $0x60] sm:$0xff]
        %v4521 = vld [vmem:[%s4507 + $0x68] sm:$0xff]
        %v4522 = vld [vmem:[%s4507 + $0x70] sm:$0xff]
        %v4523 = vld [vmem:[%s4507 + $0x78] sm:$0xff]
        %4524 = vmax.xlane.f32.xlu0 %v4468
        %v4525 = vpop.xlane.xlu0 %4524
        %4526 = vmax.xlane.f32.xlu0 %v4470
        %v4527 = vpop.xlane.xlu0 %4526
        %4528 = vmax.xlane.f32.xlu0 %v4473
        %v4529 = vpop.xlane.xlu0 %4528
        %4530 = vmax.xlane.f32.xlu0 %v4475
        %v4531 = vpop.xlane.xlu0 %4530
        %4532 = vmax.xlane.f32.xlu0 %v4478
        %v4533 = vpop.xlane.xlu0 %4532
        %4534 = vmax.xlane.f32.xlu0 %v4480
        %v4535 = vpop.xlane.xlu0 %4534
        %4536 = vmax.xlane.f32.xlu0 %v4483
        %v4537 = vpop.xlane.xlu0 %4536
        %4538 = vmax.xlane.f32.xlu0 %v4485
        %v4539 = vpop.xlane.xlu0 %4538
        %4540 = vmax.xlane.f32.xlu0 %v4488
        %v4541 = vpop.xlane.xlu0 %4540
        %4542 = vmax.xlane.f32.xlu0 %v4490
        %v4543 = vpop.xlane.xlu0 %4542
        %4544 = vmax.xlane.f32.xlu0 %v4493
        %v4545 = vpop.xlane.xlu0 %4544
        %4546 = vmax.xlane.f32.xlu0 %v4495
        %v4547 = vpop.xlane.xlu0 %4546
        %4548 = vmax.xlane.f32.xlu0 %v4498
        %v4549 = vpop.xlane.xlu0 %4548
        %4550 = vmax.xlane.f32.xlu0 %v4500
        %v4551 = vpop.xlane.xlu0 %4550
        %4552 = vmax.xlane.f32.xlu0 %v4503
        %v4553 = vpop.xlane.xlu0 %4552
        %4554 = vmax.xlane.f32.xlu0 %v4505
        %v4555 = vpop.xlane.xlu0 %4554
        %v4556 = vmax.f32 %v4508, %v4525
        %v4557 = vmax.f32 %v4509, %v4527
        %v4558 = vmax.f32 %v4510, %v4529
        %v4559 = vmax.f32 %v4511, %v4531
        %v4560 = vmax.f32 %v4512, %v4533
        %v4561 = vmax.f32 %v4513, %v4535
        %v4562 = vmax.f32 %v4514, %v4537
        %v4563 = vmax.f32 %v4515, %v4539
        %v4564 = vmax.f32 %v4516, %v4541
        %v4565 = vmax.f32 %v4517, %v4543
        %v4566 = vmax.f32 %v4518, %v4545
        %v4567 = vmax.f32 %v4519, %v4547
        %v4568 = vmax.f32 %v4520, %v4549
        %v4569 = vmax.f32 %v4521, %v4551
        %v4570 = vmax.f32 %v4522, %v4553
        %v4571 = vmax.f32 %v4523, %v4555
        %v4572 = vsub.f32 %v4508, %v4556
        %v4573 = vsub.f32 %v4509, %v4557
        %v4574 = vsub.f32 %v4510, %v4558
        %v4575 = vsub.f32 %v4511, %v4559
        %v4576 = vsub.f32 %v4512, %v4560
        %v4577 = vsub.f32 %v4513, %v4561
        %v4578 = vsub.f32 %v4514, %v4562
        %v4579 = vsub.f32 %v4515, %v4563
        %v4580 = vsub.f32 %v4516, %v4564
        %v4581 = vsub.f32 %v4517, %v4565
        %v4582 = vsub.f32 %v4518, %v4566
        %v4583 = vsub.f32 %v4519, %v4567
        %v4584 = vsub.f32 %v4520, %v4568
        %v4585 = vsub.f32 %v4521, %v4569
        %v4586 = vsub.f32 %v4522, %v4570
        %v4587 = vsub.f32 %v4523, %v4571
        %v4588 = vmul.f32 %v4572, 1.442695
        %v4589 = vpow.pop %v4588
        %v4590 = vmul.f32 %v4573, 1.442695
        %v4591 = vpow.pop %v4590
        %v4592 = vmul.f32 %v4574, 1.442695
        %v4593 = vpow.pop %v4592
        %v4594 = vmul.f32 %v4575, 1.442695
        %v4595 = vpow.pop %v4594
        %v4596 = vmul.f32 %v4576, 1.442695
        %v4597 = vpow.pop %v4596
        %v4598 = vmul.f32 %v4577, 1.442695
        %v4599 = vpow.pop %v4598
        %v4600 = vmul.f32 %v4578, 1.442695
        %v4601 = vpow.pop %v4600
        %v4602 = vmul.f32 %v4579, 1.442695
        %v4603 = vpow.pop %v4602
        %v4604 = vmul.f32 %v4580, 1.442695
        %v4605 = vpow.pop %v4604
        %v4606 = vmul.f32 %v4581, 1.442695
        %v4607 = vpow.pop %v4606
        %v4608 = vmul.f32 %v4582, 1.442695
        %v4609 = vpow.pop %v4608
        %v4610 = vmul.f32 %v4583, 1.442695
        %v4611 = vpow.pop %v4610
        %v4612 = vmul.f32 %v4584, 1.442695
        %v4613 = vpow.pop %v4612
        %v4614 = vmul.f32 %v4585, 1.442695
        %v4615 = vpow.pop %v4614
        %v4616 = vmul.f32 %v4586, 1.442695
        %v4617 = vpow.pop %v4616
        %v4618 = vmul.f32 %v4587, 1.442695
        %v4619 = vpow.pop %v4618
        %4621 = vset.pattern.permute.xlu0 0
        %4622 = vperm.xlu0 %4621, %v4556
        %v4623 = vpop.permute.xlu0 %4622
        %4626 = vset.pattern.permute.xlu0 0
        %4627 = vperm.xlu0 %4626, %v4557
        %v4628 = vpop.permute.xlu0 %4627
        %4631 = vset.pattern.permute.xlu0 0
        %4632 = vperm.xlu0 %4631, %v4558
        %v4633 = vpop.permute.xlu0 %4632
        %4636 = vset.pattern.permute.xlu0 0
        %4637 = vperm.xlu0 %4636, %v4559
        %v4638 = vpop.permute.xlu0 %4637
        %4641 = vset.pattern.permute.xlu0 0
        %4642 = vperm.xlu0 %4641, %v4560
        %v4643 = vpop.permute.xlu0 %4642
        %4646 = vset.pattern.permute.xlu0 0
        %4647 = vperm.xlu0 %4646, %v4561
        %v4648 = vpop.permute.xlu0 %4647
        %4651 = vset.pattern.permute.xlu0 0
        %4652 = vperm.xlu0 %4651, %v4562
        %v4653 = vpop.permute.xlu0 %4652
        %4656 = vset.pattern.permute.xlu0 0
        %4657 = vperm.xlu0 %4656, %v4563
        %v4658 = vpop.permute.xlu0 %4657
        %4661 = vset.pattern.permute.xlu0 0
        %4662 = vperm.xlu0 %4661, %v4564
        %v4663 = vpop.permute.xlu0 %4662
        %4666 = vset.pattern.permute.xlu0 0
        %4667 = vperm.xlu0 %4666, %v4565
        %v4668 = vpop.permute.xlu0 %4667
        %4671 = vset.pattern.permute.xlu0 0
        %4672 = vperm.xlu0 %4671, %v4566
        %v4673 = vpop.permute.xlu0 %4672
        %4676 = vset.pattern.permute.xlu0 0
        %4677 = vperm.xlu0 %4676, %v4567
        %v4678 = vpop.permute.xlu0 %4677
        %4681 = vset.pattern.permute.xlu0 0
        %4682 = vperm.xlu0 %4681, %v4568
        %v4683 = vpop.permute.xlu0 %4682
        %4686 = vset.pattern.permute.xlu0 0
        %4687 = vperm.xlu0 %4686, %v4569
        %v4688 = vpop.permute.xlu0 %4687
        %4691 = vset.pattern.permute.xlu0 0
        %4692 = vperm.xlu0 %4691, %v4570
        %v4693 = vpop.permute.xlu0 %4692
        %4696 = vset.pattern.permute.xlu0 0
        %4697 = vperm.xlu0 %4696, %v4571
        %v4698 = vpop.permute.xlu0 %4697
        %v4700 = vsub.f32 %v4468, %v4623
        %v4701 = vsub.f32 %v4470, %v4628
        %v4702 = vsub.f32 %v4473, %v4633
        %v4703 = vsub.f32 %v4475, %v4638
        %v4704 = vsub.f32 %v4478, %v4643
        %v4705 = vsub.f32 %v4480, %v4648
        %v4706 = vsub.f32 %v4483, %v4653
        %v4707 = vsub.f32 %v4485, %v4658
        %v4708 = vsub.f32 %v4488, %v4663
        %v4709 = vsub.f32 %v4490, %v4668
        %v4710 = vsub.f32 %v4493, %v4673
        %v4711 = vsub.f32 %v4495, %v4678
        %v4712 = vsub.f32 %v4498, %v4683
        %v4713 = vsub.f32 %v4500, %v4688
        %v4714 = vsub.f32 %v4503, %v4693
        %v4715 = vsub.f32 %v4505, %v4698
        %v4716 = vmul.f32 %v4700, 1.442695
        %v4717 = vpow.pop %v4716
        %v4718 = vmul.f32 %v4701, 1.442695
        %v4719 = vpow.pop %v4718
        %v4720 = vmul.f32 %v4702, 1.442695
        %v4721 = vpow.pop %v4720
        %v4722 = vmul.f32 %v4703, 1.442695
        %v4723 = vpow.pop %v4722
        %v4724 = vmul.f32 %v4704, 1.442695
        %v4725 = vpow.pop %v4724
        %v4726 = vmul.f32 %v4705, 1.442695
        %v4727 = vpow.pop %v4726
        %v4728 = vmul.f32 %v4706, 1.442695
        %v4729 = vpow.pop %v4728
        %v4730 = vmul.f32 %v4707, 1.442695
        %v4731 = vpow.pop %v4730
        %v4732 = vmul.f32 %v4708, 1.442695
        %v4733 = vpow.pop %v4732
        %v4734 = vmul.f32 %v4709, 1.442695
        %v4735 = vpow.pop %v4734
        %v4736 = vmul.f32 %v4710, 1.442695
        %v4737 = vpow.pop %v4736
        %v4738 = vmul.f32 %v4711, 1.442695
        %v4739 = vpow.pop %v4738
        %v4740 = vmul.f32 %v4712, 1.442695
        %v4741 = vpow.pop %v4740
        %v4742 = vmul.f32 %v4713, 1.442695
        %v4743 = vpow.pop %v4742
        %v4744 = vmul.f32 %v4714, 1.442695
        %v4745 = vpow.pop %v4744
        %v4746 = vmul.f32 %v4715, 1.442695
        %v4747 = vpow.pop %v4746
        %s4748 = scalar_lea.vmem [#allocation4], 256
        %v4749 = vld [vmem:[%s4748] sm:$0xff]
        %v4750 = vld [vmem:[%s4748 + $0x8] sm:$0xff]
        %v4751 = vld [vmem:[%s4748 + $0x10] sm:$0xff]
        %v4752 = vld [vmem:[%s4748 + $0x18] sm:$0xff]
        %v4753 = vld [vmem:[%s4748 + $0x20] sm:$0xff]
        %v4754 = vld [vmem:[%s4748 + $0x28] sm:$0xff]
        %v4755 = vld [vmem:[%s4748 + $0x30] sm:$0xff]
        %v4756 = vld [vmem:[%s4748 + $0x38] sm:$0xff]
        %v4757 = vld [vmem:[%s4748 + $0x40] sm:$0xff]
        %v4758 = vld [vmem:[%s4748 + $0x48] sm:$0xff]
        %v4759 = vld [vmem:[%s4748 + $0x50] sm:$0xff]
        %v4760 = vld [vmem:[%s4748 + $0x58] sm:$0xff]
        %v4761 = vld [vmem:[%s4748 + $0x60] sm:$0xff]
        %v4762 = vld [vmem:[%s4748 + $0x68] sm:$0xff]
        %v4763 = vld [vmem:[%s4748 + $0x70] sm:$0xff]
        %v4764 = vld [vmem:[%s4748 + $0x78] sm:$0xff]
        %v4765 = vmul.f32 %v4589, %v4749
        %v4766 = vmul.f32 %v4591, %v4750
        %v4767 = vmul.f32 %v4593, %v4751
        %v4768 = vmul.f32 %v4595, %v4752
        %v4769 = vmul.f32 %v4597, %v4753
        %v4770 = vmul.f32 %v4599, %v4754
        %v4771 = vmul.f32 %v4601, %v4755
        %v4772 = vmul.f32 %v4603, %v4756
        %v4773 = vmul.f32 %v4605, %v4757
        %v4774 = vmul.f32 %v4607, %v4758
        %v4775 = vmul.f32 %v4609, %v4759
        %v4776 = vmul.f32 %v4611, %v4760
        %v4777 = vmul.f32 %v4613, %v4761
        %v4778 = vmul.f32 %v4615, %v4762
        %v4779 = vmul.f32 %v4617, %v4763
        %v4780 = vmul.f32 %v4619, %v4764
        %4781 = vadd.xlane.f32.xlu0 %v4717
        %v4782 = vpop.xlane.xlu0 %4781
        %4783 = vadd.xlane.f32.xlu0 %v4719
        %v4784 = vpop.xlane.xlu0 %4783
        %4785 = vadd.xlane.f32.xlu0 %v4721
        %v4786 = vpop.xlane.xlu0 %4785
        %4787 = vadd.xlane.f32.xlu0 %v4723
        %v4788 = vpop.xlane.xlu0 %4787
        %4789 = vadd.xlane.f32.xlu0 %v4725
        %v4790 = vpop.xlane.xlu0 %4789
        %4791 = vadd.xlane.f32.xlu0 %v4727
        %v4792 = vpop.xlane.xlu0 %4791
        %4793 = vadd.xlane.f32.xlu0 %v4729
        %v4794 = vpop.xlane.xlu0 %4793
        %4795 = vadd.xlane.f32.xlu0 %v4731
        %v4796 = vpop.xlane.xlu0 %4795
        %4797 = vadd.xlane.f32.xlu0 %v4733
        %v4798 = vpop.xlane.xlu0 %4797
        %4799 = vadd.xlane.f32.xlu0 %v4735
        %v4800 = vpop.xlane.xlu0 %4799
        %4801 = vadd.xlane.f32.xlu0 %v4737
        %v4802 = vpop.xlane.xlu0 %4801
        %4803 = vadd.xlane.f32.xlu0 %v4739
        %v4804 = vpop.xlane.xlu0 %4803
        %4805 = vadd.xlane.f32.xlu0 %v4741
        %v4806 = vpop.xlane.xlu0 %4805
        %4807 = vadd.xlane.f32.xlu0 %v4743
        %v4808 = vpop.xlane.xlu0 %4807
        %4809 = vadd.xlane.f32.xlu0 %v4745
        %v4810 = vpop.xlane.xlu0 %4809
        %4811 = vadd.xlane.f32.xlu0 %v4747
        %v4812 = vpop.xlane.xlu0 %4811
        %v4813 = vadd.f32 %v4765, %v4782
        %v4814 = vadd.f32 %v4766, %v4784
        %v4815 = vadd.f32 %v4767, %v4786
        %v4816 = vadd.f32 %v4768, %v4788
        %v4817 = vadd.f32 %v4769, %v4790
        %v4818 = vadd.f32 %v4770, %v4792
        %v4819 = vadd.f32 %v4771, %v4794
        %v4820 = vadd.f32 %v4772, %v4796
        %v4821 = vadd.f32 %v4773, %v4798
        %v4822 = vadd.f32 %v4774, %v4800
        %v4823 = vadd.f32 %v4775, %v4802
        %v4824 = vadd.f32 %v4776, %v4804
        %v4825 = vadd.f32 %v4777, %v4806
        %v4826 = vadd.f32 %v4778, %v4808
        %v4827 = vadd.f32 %v4779, %v4810
        %v4828 = vadd.f32 %v4780, %v4812
        %4829 = vst.msk [vmem:[%s4748] sm:$0xff] %vm2004, %v4813
        %4830 = vst.msk [vmem:[%s4748 + $0x8] sm:$0xff] %vm2004, %v4814
        %4831 = vst.msk [vmem:[%s4748 + $0x10] sm:$0xff] %vm2004, %v4815
        %4832 = vst.msk [vmem:[%s4748 + $0x18] sm:$0xff] %vm2004, %v4816
        %4833 = vst.msk [vmem:[%s4748 + $0x20] sm:$0xff] %vm2004, %v4817
        %4834 = vst.msk [vmem:[%s4748 + $0x28] sm:$0xff] %vm2004, %v4818
        %4835 = vst.msk [vmem:[%s4748 + $0x30] sm:$0xff] %vm2004, %v4819
        %4836 = vst.msk [vmem:[%s4748 + $0x38] sm:$0xff] %vm2004, %v4820
        %4837 = vst.msk [vmem:[%s4748 + $0x40] sm:$0xff] %vm2004, %v4821
        %4838 = vst.msk [vmem:[%s4748 + $0x48] sm:$0xff] %vm2004, %v4822
        %4839 = vst.msk [vmem:[%s4748 + $0x50] sm:$0xff] %vm2004, %v4823
        %4840 = vst.msk [vmem:[%s4748 + $0x58] sm:$0xff] %vm2004, %v4824
        %4841 = vst.msk [vmem:[%s4748 + $0x60] sm:$0xff] %vm2004, %v4825
        %4842 = vst.msk [vmem:[%s4748 + $0x68] sm:$0xff] %vm2004, %v4826
        %4843 = vst.msk [vmem:[%s4748 + $0x70] sm:$0xff] %vm2004, %v4827
        %4844 = vst.msk [vmem:[%s4748 + $0x78] sm:$0xff] %vm2004, %v4828
        %s4845 = scalar_lea.vmem [#allocation5], 256
        %v4846 = vld [vmem:[%s4845] sm:$0xff]
        %v4847 = vld [vmem:[%s4845 + $0x8] sm:$0xff]
        %v4848 = vld [vmem:[%s4845 + $0x10] sm:$0xff]
        %v4849 = vld [vmem:[%s4845 + $0x18] sm:$0xff]
        %v4850 = vld [vmem:[%s4845 + $0x20] sm:$0xff]
        %v4851 = vld [vmem:[%s4845 + $0x28] sm:$0xff]
        %v4852 = vld [vmem:[%s4845 + $0x30] sm:$0xff]
        %v4853 = vld [vmem:[%s4845 + $0x38] sm:$0xff]
        %v4854 = vld [vmem:[%s4845 + $0x40] sm:$0xff]
        %v4855 = vld [vmem:[%s4845 + $0x48] sm:$0xff]
        %v4856 = vld [vmem:[%s4845 + $0x50] sm:$0xff]
        %v4857 = vld [vmem:[%s4845 + $0x58] sm:$0xff]
        %v4858 = vld [vmem:[%s4845 + $0x60] sm:$0xff]
        %v4859 = vld [vmem:[%s4845 + $0x68] sm:$0xff]
        %v4860 = vld [vmem:[%s4845 + $0x70] sm:$0xff]
        %v4861 = vld [vmem:[%s4845 + $0x78] sm:$0xff]
        %4863 = vset.pattern.permute.xlu0 0
        %4864 = vperm.xlu0 %4863, %v4589
        %v4865 = vpop.permute.xlu0 %4864
        %4868 = vset.pattern.permute.xlu0 0
        %4869 = vperm.xlu0 %4868, %v4591
        %v4870 = vpop.permute.xlu0 %4869
        %4873 = vset.pattern.permute.xlu0 0
        %4874 = vperm.xlu0 %4873, %v4593
        %v4875 = vpop.permute.xlu0 %4874
        %4878 = vset.pattern.permute.xlu0 0
        %4879 = vperm.xlu0 %4878, %v4595
        %v4880 = vpop.permute.xlu0 %4879
        %4883 = vset.pattern.permute.xlu0 0
        %4884 = vperm.xlu0 %4883, %v4597
        %v4885 = vpop.permute.xlu0 %4884
        %4888 = vset.pattern.permute.xlu0 0
        %4889 = vperm.xlu0 %4888, %v4599
        %v4890 = vpop.permute.xlu0 %4889
        %4893 = vset.pattern.permute.xlu0 0
        %4894 = vperm.xlu0 %4893, %v4601
        %v4895 = vpop.permute.xlu0 %4894
        %4898 = vset.pattern.permute.xlu0 0
        %4899 = vperm.xlu0 %4898, %v4603
        %v4900 = vpop.permute.xlu0 %4899
        %4903 = vset.pattern.permute.xlu0 0
        %4904 = vperm.xlu0 %4903, %v4605
        %v4905 = vpop.permute.xlu0 %4904
        %4908 = vset.pattern.permute.xlu0 0
        %4909 = vperm.xlu0 %4908, %v4607
        %v4910 = vpop.permute.xlu0 %4909
        %4913 = vset.pattern.permute.xlu0 0
        %4914 = vperm.xlu0 %4913, %v4609
        %v4915 = vpop.permute.xlu0 %4914
        %4918 = vset.pattern.permute.xlu0 0
        %4919 = vperm.xlu0 %4918, %v4611
        %v4920 = vpop.permute.xlu0 %4919
        %4923 = vset.pattern.permute.xlu0 0
        %4924 = vperm.xlu0 %4923, %v4613
        %v4925 = vpop.permute.xlu0 %4924
        %4928 = vset.pattern.permute.xlu0 0
        %4929 = vperm.xlu0 %4928, %v4615
        %v4930 = vpop.permute.xlu0 %4929
        %4933 = vset.pattern.permute.xlu0 0
        %4934 = vperm.xlu0 %4933, %v4617
        %v4935 = vpop.permute.xlu0 %4934
        %4938 = vset.pattern.permute.xlu0 0
        %4939 = vperm.xlu0 %4938, %v4619
        %v4940 = vpop.permute.xlu0 %4939
        %v4942 = vmul.f32 %v4865, %v4846
        %v4943 = vmul.f32 %v4870, %v4847
        %v4944 = vmul.f32 %v4875, %v4848
        %v4945 = vmul.f32 %v4880, %v4849
        %v4946 = vmul.f32 %v4885, %v4850
        %v4947 = vmul.f32 %v4890, %v4851
        %v4948 = vmul.f32 %v4895, %v4852
        %v4949 = vmul.f32 %v4900, %v4853
        %v4950 = vmul.f32 %v4905, %v4854
        %v4951 = vmul.f32 %v4910, %v4855
        %v4952 = vmul.f32 %v4915, %v4856
        %v4953 = vmul.f32 %v4920, %v4857
        %v4954 = vmul.f32 %v4925, %v4858
        %v4955 = vmul.f32 %v4930, %v4859
        %v4956 = vmul.f32 %v4935, %v4860
        %v4957 = vmul.f32 %v4940, %v4861
        %v4958 = vpack.c.bf16 %v4719, %v4717
        %v4959 = vpack.c.bf16 %v4723, %v4721
        %v4960 = vpack.c.bf16 %v4727, %v4725
        %v4961 = vpack.c.bf16 %v4731, %v4729
        %v4962 = vpack.c.bf16 %v4735, %v4733
        %v4963 = vpack.c.bf16 %v4739, %v4737
        %v4964 = vpack.c.bf16 %v4743, %v4741
        %v4965 = vpack.c.bf16 %v4747, %v4745
        %4966 = vrot.lane.b32.xlu0 %v2173, 64
        %v4967 = vpop.permute.xlu0 %4966
        %4968 = vrot.lane.b32.xlu0 %v2174, 64
        %v4969 = vpop.permute.xlu0 %4968
        %4970 = vrot.lane.b32.xlu0 %v2175, 64
        %v4971 = vpop.permute.xlu0 %4970
        %4972 = vrot.lane.b32.xlu0 %v2176, 64
        %v4973 = vpop.permute.xlu0 %4972
        %4974 = vrot.lane.b32.xlu0 %v2177, 64
        %v4975 = vpop.permute.xlu0 %4974
        %4976 = vrot.lane.b32.xlu0 %v2178, 64
        %v4977 = vpop.permute.xlu0 %4976
        %4978 = vrot.lane.b32.xlu0 %v2179, 64
        %v4979 = vpop.permute.xlu0 %4978
        %4980 = vrot.lane.b32.xlu0 %v2180, 64
        %v4981 = vpop.permute.xlu0 %4980
        %4990 = vmatpush.bf16.msra.mxu0 %v4981
        %4991 = vmatpush.bf16.msra.mxu0 %v4979
        %4992 = vmatpush.bf16.msra.mxu0 %v4977
        %4993 = vmatpush.bf16.msra.mxu0 %v4975
        %4994 = vmatpush.bf16.msra.mxu0 %v4973
        %4995 = vmatpush.bf16.msra.mxu0 %v4971
        %4996 = vmatpush.bf16.msra.mxu0 %v4969
        %4997 = vmatpush.bf16.msra.mxu0 %v4967
        %4998 = vmatmul.bf16.gmra.mxu0 %v4958
        %v4999 = vpop.f32.mrf.mxu0
        %v5000 = vadd.f32 0.0, %v4999
        %v5001 = vpop.f32.mrf.mxu0
        %v5002 = vadd.f32 0.0, %v5001
        %5003 = vmatmul.bf16.gmra.mxu0 %v4959
        %v5004 = vpop.f32.mrf.mxu0
        %v5005 = vadd.f32 0.0, %v5004
        %v5006 = vpop.f32.mrf.mxu0
        %v5007 = vadd.f32 0.0, %v5006
        %5008 = vmatmul.bf16.gmra.mxu0 %v4960
        %v5009 = vpop.f32.mrf.mxu0
        %v5010 = vadd.f32 0.0, %v5009
        %v5011 = vpop.f32.mrf.mxu0
        %v5012 = vadd.f32 0.0, %v5011
        %5013 = vmatmul.bf16.gmra.mxu0 %v4961
        %v5014 = vpop.f32.mrf.mxu0
        %v5015 = vadd.f32 0.0, %v5014
        %v5016 = vpop.f32.mrf.mxu0
        %v5017 = vadd.f32 0.0, %v5016
        %5018 = vmatmul.bf16.gmra.mxu0 %v4962
        %v5019 = vpop.f32.mrf.mxu0
        %v5020 = vadd.f32 0.0, %v5019
        %v5021 = vpop.f32.mrf.mxu0
        %v5022 = vadd.f32 0.0, %v5021
        %5023 = vmatmul.bf16.gmra.mxu0 %v4963
        %v5024 = vpop.f32.mrf.mxu0
        %v5025 = vadd.f32 0.0, %v5024
        %v5026 = vpop.f32.mrf.mxu0
        %v5027 = vadd.f32 0.0, %v5026
        %5028 = vmatmul.bf16.gmra.mxu0 %v4964
        %v5029 = vpop.f32.mrf.mxu0
        %v5030 = vadd.f32 0.0, %v5029
        %v5031 = vpop.f32.mrf.mxu0
        %v5032 = vadd.f32 0.0, %v5031
        %5033 = vmatmul.bf16.gmra.mxu0 %v4965
        %v5034 = vpop.f32.mrf.mxu0
        %v5035 = vadd.f32 0.0, %v5034
        %v5036 = vpop.f32.mrf.mxu0
        %v5037 = vadd.f32 0.0, %v5036
        %5038 = vdwg.mxu0
        %v5039 = vadd.f32 %v4942, %v5000
        %v5040 = vadd.f32 %v4943, %v5002
        %v5041 = vadd.f32 %v4944, %v5005
        %v5042 = vadd.f32 %v4945, %v5007
        %v5043 = vadd.f32 %v4946, %v5010
        %v5044 = vadd.f32 %v4947, %v5012
        %v5045 = vadd.f32 %v4948, %v5015
        %v5046 = vadd.f32 %v4949, %v5017
        %v5047 = vadd.f32 %v4950, %v5020
        %v5048 = vadd.f32 %v4951, %v5022
        %v5049 = vadd.f32 %v4952, %v5025
        %v5050 = vadd.f32 %v4953, %v5027
        %v5051 = vadd.f32 %v4954, %v5030
        %v5052 = vadd.f32 %v4955, %v5032
        %v5053 = vadd.f32 %v4956, %v5035
        %v5054 = vadd.f32 %v4957, %v5037
        %5055 = vst.msk [vmem:[%s4845] sm:$0xff] %vm1586, %v5039
        %5056 = vst.msk [vmem:[%s4845 + $0x8] sm:$0xff] %vm1586, %v5040
        %5057 = vst.msk [vmem:[%s4845 + $0x10] sm:$0xff] %vm1586, %v5041
        %5058 = vst.msk [vmem:[%s4845 + $0x18] sm:$0xff] %vm1586, %v5042
        %5059 = vst.msk [vmem:[%s4845 + $0x20] sm:$0xff] %vm1586, %v5043
        %5060 = vst.msk [vmem:[%s4845 + $0x28] sm:$0xff] %vm1586, %v5044
        %5061 = vst.msk [vmem:[%s4845 + $0x30] sm:$0xff] %vm1586, %v5045
        %5062 = vst.msk [vmem:[%s4845 + $0x38] sm:$0xff] %vm1586, %v5046
        %5063 = vst.msk [vmem:[%s4845 + $0x40] sm:$0xff] %vm1586, %v5047
        %5064 = vst.msk [vmem:[%s4845 + $0x48] sm:$0xff] %vm1586, %v5048
        %5065 = vst.msk [vmem:[%s4845 + $0x50] sm:$0xff] %vm1586, %v5049
        %5066 = vst.msk [vmem:[%s4845 + $0x58] sm:$0xff] %vm1586, %v5050
        %5067 = vst.msk [vmem:[%s4845 + $0x60] sm:$0xff] %vm1586, %v5051
        %5068 = vst.msk [vmem:[%s4845 + $0x68] sm:$0xff] %vm1586, %v5052
        %5069 = vst.msk [vmem:[%s4845 + $0x70] sm:$0xff] %vm1586, %v5053
        %5070 = vst.msk [vmem:[%s4845 + $0x78] sm:$0xff] %vm1586, %v5054
        %5071 = vst.msk [vmem:[%s4507] sm:$0xff] %vm2004, %v4556
        %5072 = vst.msk [vmem:[%s4507 + $0x8] sm:$0xff] %vm2004, %v4557
        %5073 = vst.msk [vmem:[%s4507 + $0x10] sm:$0xff] %vm2004, %v4558
        %5074 = vst.msk [vmem:[%s4507 + $0x18] sm:$0xff] %vm2004, %v4559
        %5075 = vst.msk [vmem:[%s4507 + $0x20] sm:$0xff] %vm2004, %v4560
        %5076 = vst.msk [vmem:[%s4507 + $0x28] sm:$0xff] %vm2004, %v4561
        %5077 = vst.msk [vmem:[%s4507 + $0x30] sm:$0xff] %vm2004, %v4562
        %5078 = vst.msk [vmem:[%s4507 + $0x38] sm:$0xff] %vm2004, %v4563
        %5079 = vst.msk [vmem:[%s4507 + $0x40] sm:$0xff] %vm2004, %v4564
        %5080 = vst.msk [vmem:[%s4507 + $0x48] sm:$0xff] %vm2004, %v4565
        %5081 = vst.msk [vmem:[%s4507 + $0x50] sm:$0xff] %vm2004, %v4566
        %5082 = vst.msk [vmem:[%s4507 + $0x58] sm:$0xff] %vm2004, %v4567
        %5083 = vst.msk [vmem:[%s4507 + $0x60] sm:$0xff] %vm2004, %v4568
        %5084 = vst.msk [vmem:[%s4507 + $0x68] sm:$0xff] %vm2004, %v4569
        %5085 = vst.msk [vmem:[%s4507 + $0x70] sm:$0xff] %vm2004, %v4570
        %5086 = vst.msk [vmem:[%s4507 + $0x78] sm:$0xff] %vm2004, %v4571
        %5087 = vrot.lane.b32.xlu0 %v2302, 64
        %v5088 = vpop.permute.xlu0 %5087
        %5089 = vrot.lane.b32.xlu0 %v2303, 64
        %v5090 = vpop.permute.xlu0 %5089
        %5091 = vrot.lane.b32.xlu0 %v2304, 64
        %v5092 = vpop.permute.xlu0 %5091
        %5093 = vrot.lane.b32.xlu0 %v2305, 64
        %v5094 = vpop.permute.xlu0 %5093
        %5095 = vrot.lane.b32.xlu0 %v2306, 64
        %v5096 = vpop.permute.xlu0 %5095
        %5097 = vrot.lane.b32.xlu0 %v2307, 64
        %v5098 = vpop.permute.xlu0 %5097
        %5099 = vrot.lane.b32.xlu0 %v2308, 64
        %v5100 = vpop.permute.xlu0 %5099
        %5101 = vrot.lane.b32.xlu0 %v2309, 64
        %v5102 = vpop.permute.xlu0 %5101
        %5103 = vrot.lane.b32.xlu0 %v2326, 64
        %v5104 = vpop.permute.xlu0 %5103
        %5105 = vrot.lane.b32.xlu0 %v2327, 64
        %v5106 = vpop.permute.xlu0 %5105
        %5107 = vrot.lane.b32.xlu0 %v2328, 64
        %v5108 = vpop.permute.xlu0 %5107
        %5109 = vrot.lane.b32.xlu0 %v2329, 64
        %v5110 = vpop.permute.xlu0 %5109
        %5111 = vrot.lane.b32.xlu0 %v2330, 64
        %v5112 = vpop.permute.xlu0 %5111
        %5113 = vrot.lane.b32.xlu0 %v2331, 64
        %v5114 = vpop.permute.xlu0 %5113
        %5115 = vrot.lane.b32.xlu0 %v2332, 64
        %v5116 = vpop.permute.xlu0 %5115
        %5117 = vrot.lane.b32.xlu0 %v2333, 64
        %v5118 = vpop.permute.xlu0 %5117
        %v5120 = vsel %vm1586, %v5088, 0
        %v5123 = vsel %vm1586, %v5090, 0
        %v5126 = vsel %vm1586, %v5092, 0
        %v5129 = vsel %vm1586, %v5094, 0
        %v5132 = vsel %vm1586, %v5096, 0
        %v5135 = vsel %vm1586, %v5098, 0
        %v5138 = vsel %vm1586, %v5100, 0
        %v5141 = vsel %vm1586, %v5102, 0
        %v5144 = vsel %vm1586, %v5104, 0
        %v5147 = vsel %vm1586, %v5106, 0
        %v5150 = vsel %vm1586, %v5108, 0
        %v5153 = vsel %vm1586, %v5110, 0
        %v5156 = vsel %vm1586, %v5112, 0
        %v5159 = vsel %vm1586, %v5114, 0
        %v5162 = vsel %vm1586, %v5116, 0
        %v5165 = vsel %vm1586, %v5118, 0
        %5167 = vmatpush.bf16.xpose.msra.mxu0 %v5165
        %5168 = vmatpush.bf16.xpose.msra.mxu0 %v5162
        %5169 = vmatpush.bf16.xpose.msra.mxu0 %v5159
        %5170 = vmatpush.bf16.xpose.msra.mxu0 %v5156
        %5171 = vmatpush.bf16.xpose.msra.mxu0 %v5153
        %5172 = vmatpush.bf16.xpose.msra.mxu0 %v5150
        %5173 = vmatpush.bf16.xpose.msra.mxu0 %v5147
        %5174 = vmatpush.bf16.xpose.msra.mxu0 %v5144
        %5175 = vmatmul.bf16.gmra.mxu0 %v5120
        %v5176 = vpop.f32.mrf.mxu0
        %v5177 = vadd.f32 0.0, %v5176
        %v5178 = vpop.f32.mrf.mxu0
        %v5179 = vadd.f32 0.0, %v5178
        %5180 = vmatmul.bf16.gmra.mxu0 %v5123
        %v5181 = vpop.f32.mrf.mxu0
        %v5182 = vadd.f32 0.0, %v5181
        %v5183 = vpop.f32.mrf.mxu0
        %v5184 = vadd.f32 0.0, %v5183
        %5185 = vmatmul.bf16.gmra.mxu0 %v5126
        %v5186 = vpop.f32.mrf.mxu0
        %v5187 = vadd.f32 0.0, %v5186
        %v5188 = vpop.f32.mrf.mxu0
        %v5189 = vadd.f32 0.0, %v5188
        %5190 = vmatmul.bf16.gmra.mxu0 %v5129
        %v5191 = vpop.f32.mrf.mxu0
        %v5192 = vadd.f32 0.0, %v5191
        %v5193 = vpop.f32.mrf.mxu0
        %v5194 = vadd.f32 0.0, %v5193
        %5195 = vmatmul.bf16.gmra.mxu0 %v5132
        %v5196 = vpop.f32.mrf.mxu0
        %v5197 = vadd.f32 0.0, %v5196
        %v5198 = vpop.f32.mrf.mxu0
        %v5199 = vadd.f32 0.0, %v5198
        %5200 = vmatmul.bf16.gmra.mxu0 %v5135
        %v5201 = vpop.f32.mrf.mxu0
        %v5202 = vadd.f32 0.0, %v5201
        %v5203 = vpop.f32.mrf.mxu0
        %v5204 = vadd.f32 0.0, %v5203
        %5205 = vmatmul.bf16.gmra.mxu0 %v5138
        %v5206 = vpop.f32.mrf.mxu0
        %v5207 = vadd.f32 0.0, %v5206
        %v5208 = vpop.f32.mrf.mxu0
        %v5209 = vadd.f32 0.0, %v5208
        %5210 = vmatmul.bf16.gmra.mxu0 %v5141
        %v5211 = vpop.f32.mrf.mxu0
        %v5212 = vadd.f32 0.0, %v5211
        %v5213 = vpop.f32.mrf.mxu0
        %v5214 = vadd.f32 0.0, %v5213
        %5215 = vdwg.mxu0
        %s5216 = scalar_lea.vmem [#allocation6], 256
        %v5217 = vld [vmem:[%s5216] sm:$0xff]
        %v5218 = vld [vmem:[%s5216 + $0x8] sm:$0xff]
        %v5219 = vld [vmem:[%s5216 + $0x10] sm:$0xff]
        %v5220 = vld [vmem:[%s5216 + $0x18] sm:$0xff]
        %v5221 = vld [vmem:[%s5216 + $0x20] sm:$0xff]
        %v5222 = vld [vmem:[%s5216 + $0x28] sm:$0xff]
        %v5223 = vld [vmem:[%s5216 + $0x30] sm:$0xff]
        %v5224 = vld [vmem:[%s5216 + $0x38] sm:$0xff]
        %v5225 = vld [vmem:[%s5216 + $0x40] sm:$0xff]
        %v5226 = vld [vmem:[%s5216 + $0x48] sm:$0xff]
        %v5227 = vld [vmem:[%s5216 + $0x50] sm:$0xff]
        %v5228 = vld [vmem:[%s5216 + $0x58] sm:$0xff]
        %v5229 = vld [vmem:[%s5216 + $0x60] sm:$0xff]
        %v5230 = vld [vmem:[%s5216 + $0x68] sm:$0xff]
        %v5231 = vld [vmem:[%s5216 + $0x70] sm:$0xff]
        %v5232 = vld [vmem:[%s5216 + $0x78] sm:$0xff]
        %5233 = vmax.xlane.f32.xlu0 %v5177
        %v5234 = vpop.xlane.xlu0 %5233
        %5235 = vmax.xlane.f32.xlu0 %v5179
        %v5236 = vpop.xlane.xlu0 %5235
        %5237 = vmax.xlane.f32.xlu0 %v5182
        %v5238 = vpop.xlane.xlu0 %5237
        %5239 = vmax.xlane.f32.xlu0 %v5184
        %v5240 = vpop.xlane.xlu0 %5239
        %5241 = vmax.xlane.f32.xlu0 %v5187
        %v5242 = vpop.xlane.xlu0 %5241
        %5243 = vmax.xlane.f32.xlu0 %v5189
        %v5244 = vpop.xlane.xlu0 %5243
        %5245 = vmax.xlane.f32.xlu0 %v5192
        %v5246 = vpop.xlane.xlu0 %5245
        %5247 = vmax.xlane.f32.xlu0 %v5194
        %v5248 = vpop.xlane.xlu0 %5247
        %5249 = vmax.xlane.f32.xlu0 %v5197
        %v5250 = vpop.xlane.xlu0 %5249
        %5251 = vmax.xlane.f32.xlu0 %v5199
        %v5252 = vpop.xlane.xlu0 %5251
        %5253 = vmax.xlane.f32.xlu0 %v5202
        %v5254 = vpop.xlane.xlu0 %5253
        %5255 = vmax.xlane.f32.xlu0 %v5204
        %v5256 = vpop.xlane.xlu0 %5255
        %5257 = vmax.xlane.f32.xlu0 %v5207
        %v5258 = vpop.xlane.xlu0 %5257
        %5259 = vmax.xlane.f32.xlu0 %v5209
        %v5260 = vpop.xlane.xlu0 %5259
        %5261 = vmax.xlane.f32.xlu0 %v5212
        %v5262 = vpop.xlane.xlu0 %5261
        %5263 = vmax.xlane.f32.xlu0 %v5214
        %v5264 = vpop.xlane.xlu0 %5263
        %v5265 = vmax.f32 %v5217, %v5234
        %v5266 = vmax.f32 %v5218, %v5236
        %v5267 = vmax.f32 %v5219, %v5238
        %v5268 = vmax.f32 %v5220, %v5240
        %v5269 = vmax.f32 %v5221, %v5242
        %v5270 = vmax.f32 %v5222, %v5244
        %v5271 = vmax.f32 %v5223, %v5246
        %v5272 = vmax.f32 %v5224, %v5248
        %v5273 = vmax.f32 %v5225, %v5250
        %v5274 = vmax.f32 %v5226, %v5252
        %v5275 = vmax.f32 %v5227, %v5254
        %v5276 = vmax.f32 %v5228, %v5256
        %v5277 = vmax.f32 %v5229, %v5258
        %v5278 = vmax.f32 %v5230, %v5260
        %v5279 = vmax.f32 %v5231, %v5262
        %v5280 = vmax.f32 %v5232, %v5264
        %v5281 = vsub.f32 %v5217, %v5265
        %v5282 = vsub.f32 %v5218, %v5266
        %v5283 = vsub.f32 %v5219, %v5267
        %v5284 = vsub.f32 %v5220, %v5268
        %v5285 = vsub.f32 %v5221, %v5269
        %v5286 = vsub.f32 %v5222, %v5270
        %v5287 = vsub.f32 %v5223, %v5271
        %v5288 = vsub.f32 %v5224, %v5272
        %v5289 = vsub.f32 %v5225, %v5273
        %v5290 = vsub.f32 %v5226, %v5274
        %v5291 = vsub.f32 %v5227, %v5275
        %v5292 = vsub.f32 %v5228, %v5276
        %v5293 = vsub.f32 %v5229, %v5277
        %v5294 = vsub.f32 %v5230, %v5278
        %v5295 = vsub.f32 %v5231, %v5279
        %v5296 = vsub.f32 %v5232, %v5280
        %v5297 = vmul.f32 %v5281, 1.442695
        %v5298 = vpow.pop %v5297
        %v5299 = vmul.f32 %v5282, 1.442695
        %v5300 = vpow.pop %v5299
        %v5301 = vmul.f32 %v5283, 1.442695
        %v5302 = vpow.pop %v5301
        %v5303 = vmul.f32 %v5284, 1.442695
        %v5304 = vpow.pop %v5303
        %v5305 = vmul.f32 %v5285, 1.442695
        %v5306 = vpow.pop %v5305
        %v5307 = vmul.f32 %v5286, 1.442695
        %v5308 = vpow.pop %v5307
        %v5309 = vmul.f32 %v5287, 1.442695
        %v5310 = vpow.pop %v5309
        %v5311 = vmul.f32 %v5288, 1.442695
        %v5312 = vpow.pop %v5311
        %v5313 = vmul.f32 %v5289, 1.442695
        %v5314 = vpow.pop %v5313
        %v5315 = vmul.f32 %v5290, 1.442695
        %v5316 = vpow.pop %v5315
        %v5317 = vmul.f32 %v5291, 1.442695
        %v5318 = vpow.pop %v5317
        %v5319 = vmul.f32 %v5292, 1.442695
        %v5320 = vpow.pop %v5319
        %v5321 = vmul.f32 %v5293, 1.442695
        %v5322 = vpow.pop %v5321
        %v5323 = vmul.f32 %v5294, 1.442695
        %v5324 = vpow.pop %v5323
        %v5325 = vmul.f32 %v5295, 1.442695
        %v5326 = vpow.pop %v5325
        %v5327 = vmul.f32 %v5296, 1.442695
        %v5328 = vpow.pop %v5327
        %5330 = vset.pattern.permute.xlu0 0
        %5331 = vperm.xlu0 %5330, %v5265
        %v5332 = vpop.permute.xlu0 %5331
        %5335 = vset.pattern.permute.xlu0 0
        %5336 = vperm.xlu0 %5335, %v5266
        %v5337 = vpop.permute.xlu0 %5336
        %5340 = vset.pattern.permute.xlu0 0
        %5341 = vperm.xlu0 %5340, %v5267
        %v5342 = vpop.permute.xlu0 %5341
        %5345 = vset.pattern.permute.xlu0 0
        %5346 = vperm.xlu0 %5345, %v5268
        %v5347 = vpop.permute.xlu0 %5346
        %5350 = vset.pattern.permute.xlu0 0
        %5351 = vperm.xlu0 %5350, %v5269
        %v5352 = vpop.permute.xlu0 %5351
        %5355 = vset.pattern.permute.xlu0 0
        %5356 = vperm.xlu0 %5355, %v5270
        %v5357 = vpop.permute.xlu0 %5356
        %5360 = vset.pattern.permute.xlu0 0
        %5361 = vperm.xlu0 %5360, %v5271
        %v5362 = vpop.permute.xlu0 %5361
        %5365 = vset.pattern.permute.xlu0 0
        %5366 = vperm.xlu0 %5365, %v5272
        %v5367 = vpop.permute.xlu0 %5366
        %5370 = vset.pattern.permute.xlu0 0
        %5371 = vperm.xlu0 %5370, %v5273
        %v5372 = vpop.permute.xlu0 %5371
        %5375 = vset.pattern.permute.xlu0 0
        %5376 = vperm.xlu0 %5375, %v5274
        %v5377 = vpop.permute.xlu0 %5376
        %5380 = vset.pattern.permute.xlu0 0
        %5381 = vperm.xlu0 %5380, %v5275
        %v5382 = vpop.permute.xlu0 %5381
        %5385 = vset.pattern.permute.xlu0 0
        %5386 = vperm.xlu0 %5385, %v5276
        %v5387 = vpop.permute.xlu0 %5386
        %5390 = vset.pattern.permute.xlu0 0
        %5391 = vperm.xlu0 %5390, %v5277
        %v5392 = vpop.permute.xlu0 %5391
        %5395 = vset.pattern.permute.xlu0 0
        %5396 = vperm.xlu0 %5395, %v5278
        %v5397 = vpop.permute.xlu0 %5396
        %5400 = vset.pattern.permute.xlu0 0
        %5401 = vperm.xlu0 %5400, %v5279
        %v5402 = vpop.permute.xlu0 %5401
        %5405 = vset.pattern.permute.xlu0 0
        %5406 = vperm.xlu0 %5405, %v5280
        %v5407 = vpop.permute.xlu0 %5406
        %v5409 = vsub.f32 %v5177, %v5332
        %v5410 = vsub.f32 %v5179, %v5337
        %v5411 = vsub.f32 %v5182, %v5342
        %v5412 = vsub.f32 %v5184, %v5347
        %v5413 = vsub.f32 %v5187, %v5352
        %v5414 = vsub.f32 %v5189, %v5357
        %v5415 = vsub.f32 %v5192, %v5362
        %v5416 = vsub.f32 %v5194, %v5367
        %v5417 = vsub.f32 %v5197, %v5372
        %v5418 = vsub.f32 %v5199, %v5377
        %v5419 = vsub.f32 %v5202, %v5382
        %v5420 = vsub.f32 %v5204, %v5387
        %v5421 = vsub.f32 %v5207, %v5392
        %v5422 = vsub.f32 %v5209, %v5397
        %v5423 = vsub.f32 %v5212, %v5402
        %v5424 = vsub.f32 %v5214, %v5407
        %v5425 = vmul.f32 %v5409, 1.442695
        %v5426 = vpow.pop %v5425
        %v5427 = vmul.f32 %v5410, 1.442695
        %v5428 = vpow.pop %v5427
        %v5429 = vmul.f32 %v5411, 1.442695
        %v5430 = vpow.pop %v5429
        %v5431 = vmul.f32 %v5412, 1.442695
        %v5432 = vpow.pop %v5431
        %v5433 = vmul.f32 %v5413, 1.442695
        %v5434 = vpow.pop %v5433
        %v5435 = vmul.f32 %v5414, 1.442695
        %v5436 = vpow.pop %v5435
        %v5437 = vmul.f32 %v5415, 1.442695
        %v5438 = vpow.pop %v5437
        %v5439 = vmul.f32 %v5416, 1.442695
        %v5440 = vpow.pop %v5439
        %v5441 = vmul.f32 %v5417, 1.442695
        %v5442 = vpow.pop %v5441
        %v5443 = vmul.f32 %v5418, 1.442695
        %v5444 = vpow.pop %v5443
        %v5445 = vmul.f32 %v5419, 1.442695
        %v5446 = vpow.pop %v5445
        %v5447 = vmul.f32 %v5420, 1.442695
        %v5448 = vpow.pop %v5447
        %v5449 = vmul.f32 %v5421, 1.442695
        %v5450 = vpow.pop %v5449
        %v5451 = vmul.f32 %v5422, 1.442695
        %v5452 = vpow.pop %v5451
        %v5453 = vmul.f32 %v5423, 1.442695
        %v5454 = vpow.pop %v5453
        %v5455 = vmul.f32 %v5424, 1.442695
        %v5456 = vpow.pop %v5455
        %s5457 = scalar_lea.vmem [#allocation7], 256
        %v5458 = vld [vmem:[%s5457] sm:$0xff]
        %v5459 = vld [vmem:[%s5457 + $0x8] sm:$0xff]
        %v5460 = vld [vmem:[%s5457 + $0x10] sm:$0xff]
        %v5461 = vld [vmem:[%s5457 + $0x18] sm:$0xff]
        %v5462 = vld [vmem:[%s5457 + $0x20] sm:$0xff]
        %v5463 = vld [vmem:[%s5457 + $0x28] sm:$0xff]
        %v5464 = vld [vmem:[%s5457 + $0x30] sm:$0xff]
        %v5465 = vld [vmem:[%s5457 + $0x38] sm:$0xff]
        %v5466 = vld [vmem:[%s5457 + $0x40] sm:$0xff]
        %v5467 = vld [vmem:[%s5457 + $0x48] sm:$0xff]
        %v5468 = vld [vmem:[%s5457 + $0x50] sm:$0xff]
        %v5469 = vld [vmem:[%s5457 + $0x58] sm:$0xff]
        %v5470 = vld [vmem:[%s5457 + $0x60] sm:$0xff]
        %v5471 = vld [vmem:[%s5457 + $0x68] sm:$0xff]
        %v5472 = vld [vmem:[%s5457 + $0x70] sm:$0xff]
        %v5473 = vld [vmem:[%s5457 + $0x78] sm:$0xff]
        %v5474 = vmul.f32 %v5298, %v5458
        %v5475 = vmul.f32 %v5300, %v5459
        %v5476 = vmul.f32 %v5302, %v5460
        %v5477 = vmul.f32 %v5304, %v5461
        %v5478 = vmul.f32 %v5306, %v5462
        %v5479 = vmul.f32 %v5308, %v5463
        %v5480 = vmul.f32 %v5310, %v5464
        %v5481 = vmul.f32 %v5312, %v5465
        %v5482 = vmul.f32 %v5314, %v5466
        %v5483 = vmul.f32 %v5316, %v5467
        %v5484 = vmul.f32 %v5318, %v5468
        %v5485 = vmul.f32 %v5320, %v5469
        %v5486 = vmul.f32 %v5322, %v5470
        %v5487 = vmul.f32 %v5324, %v5471
        %v5488 = vmul.f32 %v5326, %v5472
        %v5489 = vmul.f32 %v5328, %v5473
        %5490 = vadd.xlane.f32.xlu0 %v5426
        %v5491 = vpop.xlane.xlu0 %5490
        %5492 = vadd.xlane.f32.xlu0 %v5428
        %v5493 = vpop.xlane.xlu0 %5492
        %5494 = vadd.xlane.f32.xlu0 %v5430
        %v5495 = vpop.xlane.xlu0 %5494
        %5496 = vadd.xlane.f32.xlu0 %v5432
        %v5497 = vpop.xlane.xlu0 %5496
        %5498 = vadd.xlane.f32.xlu0 %v5434
        %v5499 = vpop.xlane.xlu0 %5498
        %5500 = vadd.xlane.f32.xlu0 %v5436
        %v5501 = vpop.xlane.xlu0 %5500
        %5502 = vadd.xlane.f32.xlu0 %v5438
        %v5503 = vpop.xlane.xlu0 %5502
        %5504 = vadd.xlane.f32.xlu0 %v5440
        %v5505 = vpop.xlane.xlu0 %5504
        %5506 = vadd.xlane.f32.xlu0 %v5442
        %v5507 = vpop.xlane.xlu0 %5506
        %5508 = vadd.xlane.f32.xlu0 %v5444
        %v5509 = vpop.xlane.xlu0 %5508
        %5510 = vadd.xlane.f32.xlu0 %v5446
        %v5511 = vpop.xlane.xlu0 %5510
        %5512 = vadd.xlane.f32.xlu0 %v5448
        %v5513 = vpop.xlane.xlu0 %5512
        %5514 = vadd.xlane.f32.xlu0 %v5450
        %v5515 = vpop.xlane.xlu0 %5514
        %5516 = vadd.xlane.f32.xlu0 %v5452
        %v5517 = vpop.xlane.xlu0 %5516
        %5518 = vadd.xlane.f32.xlu0 %v5454
        %v5519 = vpop.xlane.xlu0 %5518
        %5520 = vadd.xlane.f32.xlu0 %v5456
        %v5521 = vpop.xlane.xlu0 %5520
        %v5522 = vadd.f32 %v5474, %v5491
        %v5523 = vadd.f32 %v5475, %v5493
        %v5524 = vadd.f32 %v5476, %v5495
        %v5525 = vadd.f32 %v5477, %v5497
        %v5526 = vadd.f32 %v5478, %v5499
        %v5527 = vadd.f32 %v5479, %v5501
        %v5528 = vadd.f32 %v5480, %v5503
        %v5529 = vadd.f32 %v5481, %v5505
        %v5530 = vadd.f32 %v5482, %v5507
        %v5531 = vadd.f32 %v5483, %v5509
        %v5532 = vadd.f32 %v5484, %v5511
        %v5533 = vadd.f32 %v5485, %v5513
        %v5534 = vadd.f32 %v5486, %v5515
        %v5535 = vadd.f32 %v5487, %v5517
        %v5536 = vadd.f32 %v5488, %v5519
        %v5537 = vadd.f32 %v5489, %v5521
        %5538 = vst.msk [vmem:[%s5457] sm:$0xff] %vm2004, %v5522
        %5539 = vst.msk [vmem:[%s5457 + $0x8] sm:$0xff] %vm2004, %v5523
        %5540 = vst.msk [vmem:[%s5457 + $0x10] sm:$0xff] %vm2004, %v5524
        %5541 = vst.msk [vmem:[%s5457 + $0x18] sm:$0xff] %vm2004, %v5525
        %5542 = vst.msk [vmem:[%s5457 + $0x20] sm:$0xff] %vm2004, %v5526
        %5543 = vst.msk [vmem:[%s5457 + $0x28] sm:$0xff] %vm2004, %v5527
        %5544 = vst.msk [vmem:[%s5457 + $0x30] sm:$0xff] %vm2004, %v5528
        %5545 = vst.msk [vmem:[%s5457 + $0x38] sm:$0xff] %vm2004, %v5529
        %5546 = vst.msk [vmem:[%s5457 + $0x40] sm:$0xff] %vm2004, %v5530
        %5547 = vst.msk [vmem:[%s5457 + $0x48] sm:$0xff] %vm2004, %v5531
        %5548 = vst.msk [vmem:[%s5457 + $0x50] sm:$0xff] %vm2004, %v5532
        %5549 = vst.msk [vmem:[%s5457 + $0x58] sm:$0xff] %vm2004, %v5533
        %5550 = vst.msk [vmem:[%s5457 + $0x60] sm:$0xff] %vm2004, %v5534
        %5551 = vst.msk [vmem:[%s5457 + $0x68] sm:$0xff] %vm2004, %v5535
        %5552 = vst.msk [vmem:[%s5457 + $0x70] sm:$0xff] %vm2004, %v5536
        %5553 = vst.msk [vmem:[%s5457 + $0x78] sm:$0xff] %vm2004, %v5537
        %s5554 = scalar_lea.vmem [#allocation8], 256
        %v5555 = vld [vmem:[%s5554] sm:$0xff]
        %v5556 = vld [vmem:[%s5554 + $0x8] sm:$0xff]
        %v5557 = vld [vmem:[%s5554 + $0x10] sm:$0xff]
        %v5558 = vld [vmem:[%s5554 + $0x18] sm:$0xff]
        %v5559 = vld [vmem:[%s5554 + $0x20] sm:$0xff]
        %v5560 = vld [vmem:[%s5554 + $0x28] sm:$0xff]
        %v5561 = vld [vmem:[%s5554 + $0x30] sm:$0xff]
        %v5562 = vld [vmem:[%s5554 + $0x38] sm:$0xff]
        %v5563 = vld [vmem:[%s5554 + $0x40] sm:$0xff]
        %v5564 = vld [vmem:[%s5554 + $0x48] sm:$0xff]
        %v5565 = vld [vmem:[%s5554 + $0x50] sm:$0xff]
        %v5566 = vld [vmem:[%s5554 + $0x58] sm:$0xff]
        %v5567 = vld [vmem:[%s5554 + $0x60] sm:$0xff]
        %v5568 = vld [vmem:[%s5554 + $0x68] sm:$0xff]
        %v5569 = vld [vmem:[%s5554 + $0x70] sm:$0xff]
        %v5570 = vld [vmem:[%s5554 + $0x78] sm:$0xff]
        %5572 = vset.pattern.permute.xlu0 0
        %5573 = vperm.xlu0 %5572, %v5298
        %v5574 = vpop.permute.xlu0 %5573
        %5577 = vset.pattern.permute.xlu0 0
        %5578 = vperm.xlu0 %5577, %v5300
        %v5579 = vpop.permute.xlu0 %5578
        %5582 = vset.pattern.permute.xlu0 0
        %5583 = vperm.xlu0 %5582, %v5302
        %v5584 = vpop.permute.xlu0 %5583
        %5587 = vset.pattern.permute.xlu0 0
        %5588 = vperm.xlu0 %5587, %v5304
        %v5589 = vpop.permute.xlu0 %5588
        %5592 = vset.pattern.permute.xlu0 0
        %5593 = vperm.xlu0 %5592, %v5306
        %v5594 = vpop.permute.xlu0 %5593
        %5597 = vset.pattern.permute.xlu0 0
        %5598 = vperm.xlu0 %5597, %v5308
        %v5599 = vpop.permute.xlu0 %5598
        %5602 = vset.pattern.permute.xlu0 0
        %5603 = vperm.xlu0 %5602, %v5310
        %v5604 = vpop.permute.xlu0 %5603
        %5607 = vset.pattern.permute.xlu0 0
        %5608 = vperm.xlu0 %5607, %v5312
        %v5609 = vpop.permute.xlu0 %5608
        %5612 = vset.pattern.permute.xlu0 0
        %5613 = vperm.xlu0 %5612, %v5314
        %v5614 = vpop.permute.xlu0 %5613
        %5617 = vset.pattern.permute.xlu0 0
        %5618 = vperm.xlu0 %5617, %v5316
        %v5619 = vpop.permute.xlu0 %5618
        %5622 = vset.pattern.permute.xlu0 0
        %5623 = vperm.xlu0 %5622, %v5318
        %v5624 = vpop.permute.xlu0 %5623
        %5627 = vset.pattern.permute.xlu0 0
        %5628 = vperm.xlu0 %5627, %v5320
        %v5629 = vpop.permute.xlu0 %5628
        %5632 = vset.pattern.permute.xlu0 0
        %5633 = vperm.xlu0 %5632, %v5322
        %v5634 = vpop.permute.xlu0 %5633
        %5637 = vset.pattern.permute.xlu0 0
        %5638 = vperm.xlu0 %5637, %v5324
        %v5639 = vpop.permute.xlu0 %5638
        %5642 = vset.pattern.permute.xlu0 0
        %5643 = vperm.xlu0 %5642, %v5326
        %v5644 = vpop.permute.xlu0 %5643
        %5647 = vset.pattern.permute.xlu0 0
        %5648 = vperm.xlu0 %5647, %v5328
        %v5649 = vpop.permute.xlu0 %5648
        %v5651 = vmul.f32 %v5574, %v5555
        %v5652 = vmul.f32 %v5579, %v5556
        %v5653 = vmul.f32 %v5584, %v5557
        %v5654 = vmul.f32 %v5589, %v5558
        %v5655 = vmul.f32 %v5594, %v5559
        %v5656 = vmul.f32 %v5599, %v5560
        %v5657 = vmul.f32 %v5604, %v5561
        %v5658 = vmul.f32 %v5609, %v5562
        %v5659 = vmul.f32 %v5614, %v5563
        %v5660 = vmul.f32 %v5619, %v5564
        %v5661 = vmul.f32 %v5624, %v5565
        %v5662 = vmul.f32 %v5629, %v5566
        %v5663 = vmul.f32 %v5634, %v5567
        %v5664 = vmul.f32 %v5639, %v5568
        %v5665 = vmul.f32 %v5644, %v5569
        %v5666 = vmul.f32 %v5649, %v5570
        %v5667 = vpack.c.bf16 %v5428, %v5426
        %v5668 = vpack.c.bf16 %v5432, %v5430
        %v5669 = vpack.c.bf16 %v5436, %v5434
        %v5670 = vpack.c.bf16 %v5440, %v5438
        %v5671 = vpack.c.bf16 %v5444, %v5442
        %v5672 = vpack.c.bf16 %v5448, %v5446
        %v5673 = vpack.c.bf16 %v5452, %v5450
        %v5674 = vpack.c.bf16 %v5456, %v5454
        %5675 = vmatpush.bf16.msra.mxu0 %v4981
        %5676 = vmatpush.bf16.msra.mxu0 %v4979
        %5677 = vmatpush.bf16.msra.mxu0 %v4977
        %5678 = vmatpush.bf16.msra.mxu0 %v4975
        %5679 = vmatpush.bf16.msra.mxu0 %v4973
        %5680 = vmatpush.bf16.msra.mxu0 %v4971
        %5681 = vmatpush.bf16.msra.mxu0 %v4969
        %5682 = vmatpush.bf16.msra.mxu0 %v4967
        %5683 = vmatmul.bf16.gmra.mxu0 %v5667
        %v5684 = vpop.f32.mrf.mxu0
        %v5685 = vadd.f32 0.0, %v5684
        %v5686 = vpop.f32.mrf.mxu0
        %v5687 = vadd.f32 0.0, %v5686
        %5688 = vmatmul.bf16.gmra.mxu0 %v5668
        %v5689 = vpop.f32.mrf.mxu0
        %v5690 = vadd.f32 0.0, %v5689
        %v5691 = vpop.f32.mrf.mxu0
        %v5692 = vadd.f32 0.0, %v5691
        %5693 = vmatmul.bf16.gmra.mxu0 %v5669
        %v5694 = vpop.f32.mrf.mxu0
        %v5695 = vadd.f32 0.0, %v5694
        %v5696 = vpop.f32.mrf.mxu0
        %v5697 = vadd.f32 0.0, %v5696
        %5698 = vmatmul.bf16.gmra.mxu0 %v5670
        %v5699 = vpop.f32.mrf.mxu0
        %v5700 = vadd.f32 0.0, %v5699
        %v5701 = vpop.f32.mrf.mxu0
        %v5702 = vadd.f32 0.0, %v5701
        %5703 = vmatmul.bf16.gmra.mxu0 %v5671
        %v5704 = vpop.f32.mrf.mxu0
        %v5705 = vadd.f32 0.0, %v5704
        %v5706 = vpop.f32.mrf.mxu0
        %v5707 = vadd.f32 0.0, %v5706
        %5708 = vmatmul.bf16.gmra.mxu0 %v5672
        %v5709 = vpop.f32.mrf.mxu0
        %v5710 = vadd.f32 0.0, %v5709
        %v5711 = vpop.f32.mrf.mxu0
        %v5712 = vadd.f32 0.0, %v5711
        %5713 = vmatmul.bf16.gmra.mxu0 %v5673
        %v5714 = vpop.f32.mrf.mxu0
        %v5715 = vadd.f32 0.0, %v5714
        %v5716 = vpop.f32.mrf.mxu0
        %v5717 = vadd.f32 0.0, %v5716
        %5718 = vmatmul.bf16.gmra.mxu0 %v5674
        %v5719 = vpop.f32.mrf.mxu0
        %v5720 = vadd.f32 0.0, %v5719
        %v5721 = vpop.f32.mrf.mxu0
        %v5722 = vadd.f32 0.0, %v5721
        %5723 = vdwg.mxu0
        %v5724 = vadd.f32 %v5651, %v5685
        %v5725 = vadd.f32 %v5652, %v5687
        %v5726 = vadd.f32 %v5653, %v5690
        %v5727 = vadd.f32 %v5654, %v5692
        %v5728 = vadd.f32 %v5655, %v5695
        %v5729 = vadd.f32 %v5656, %v5697
        %v5730 = vadd.f32 %v5657, %v5700
        %v5731 = vadd.f32 %v5658, %v5702
        %v5732 = vadd.f32 %v5659, %v5705
        %v5733 = vadd.f32 %v5660, %v5707
        %v5734 = vadd.f32 %v5661, %v5710
        %v5735 = vadd.f32 %v5662, %v5712
        %v5736 = vadd.f32 %v5663, %v5715
        %v5737 = vadd.f32 %v5664, %v5717
        %v5738 = vadd.f32 %v5665, %v5720
        %v5739 = vadd.f32 %v5666, %v5722
        %5740 = vst.msk [vmem:[%s5554] sm:$0xff] %vm1586, %v5724
        %5741 = vst.msk [vmem:[%s5554 + $0x8] sm:$0xff] %vm1586, %v5725
        %5742 = vst.msk [vmem:[%s5554 + $0x10] sm:$0xff] %vm1586, %v5726
        %5743 = vst.msk [vmem:[%s5554 + $0x18] sm:$0xff] %vm1586, %v5727
        %5744 = vst.msk [vmem:[%s5554 + $0x20] sm:$0xff] %vm1586, %v5728
        %5745 = vst.msk [vmem:[%s5554 + $0x28] sm:$0xff] %vm1586, %v5729
        %5746 = vst.msk [vmem:[%s5554 + $0x30] sm:$0xff] %vm1586, %v5730
        %5747 = vst.msk [vmem:[%s5554 + $0x38] sm:$0xff] %vm1586, %v5731
        %5748 = vst.msk [vmem:[%s5554 + $0x40] sm:$0xff] %vm1586, %v5732
        %5749 = vst.msk [vmem:[%s5554 + $0x48] sm:$0xff] %vm1586, %v5733
        %5750 = vst.msk [vmem:[%s5554 + $0x50] sm:$0xff] %vm1586, %v5734
        %5751 = vst.msk [vmem:[%s5554 + $0x58] sm:$0xff] %vm1586, %v5735
        %5752 = vst.msk [vmem:[%s5554 + $0x60] sm:$0xff] %vm1586, %v5736
        %5753 = vst.msk [vmem:[%s5554 + $0x68] sm:$0xff] %vm1586, %v5737
        %5754 = vst.msk [vmem:[%s5554 + $0x70] sm:$0xff] %vm1586, %v5738
        %5755 = vst.msk [vmem:[%s5554 + $0x78] sm:$0xff] %vm1586, %v5739
        %5756 = vst.msk [vmem:[%s5216] sm:$0xff] %vm2004, %v5265
        %5757 = vst.msk [vmem:[%s5216 + $0x8] sm:$0xff] %vm2004, %v5266
        %5758 = vst.msk [vmem:[%s5216 + $0x10] sm:$0xff] %vm2004, %v5267
        %5759 = vst.msk [vmem:[%s5216 + $0x18] sm:$0xff] %vm2004, %v5268
        %5760 = vst.msk [vmem:[%s5216 + $0x20] sm:$0xff] %vm2004, %v5269
        %5761 = vst.msk [vmem:[%s5216 + $0x28] sm:$0xff] %vm2004, %v5270
        %5762 = vst.msk [vmem:[%s5216 + $0x30] sm:$0xff] %vm2004, %v5271
        %5763 = vst.msk [vmem:[%s5216 + $0x38] sm:$0xff] %vm2004, %v5272
        %5764 = vst.msk [vmem:[%s5216 + $0x40] sm:$0xff] %vm2004, %v5273
        %5765 = vst.msk [vmem:[%s5216 + $0x48] sm:$0xff] %vm2004, %v5274
        %5766 = vst.msk [vmem:[%s5216 + $0x50] sm:$0xff] %vm2004, %v5275
        %5767 = vst.msk [vmem:[%s5216 + $0x58] sm:$0xff] %vm2004, %v5276
        %5768 = vst.msk [vmem:[%s5216 + $0x60] sm:$0xff] %vm2004, %v5277
        %5769 = vst.msk [vmem:[%s5216 + $0x68] sm:$0xff] %vm2004, %v5278
        %5770 = vst.msk [vmem:[%s5216 + $0x70] sm:$0xff] %vm2004, %v5279
        %5771 = vst.msk [vmem:[%s5216 + $0x78] sm:$0xff] %vm2004, %v5280
        %5772 = vrot.lane.b32.xlu0 %v1538, 32
        %v5773 = vpop.permute.xlu0 %5772
        %5774 = vrot.lane.b32.xlu0 %v1539, 32
        %v5775 = vpop.permute.xlu0 %5774
        %5776 = vrot.lane.b32.xlu0 %v1540, 32
        %v5777 = vpop.permute.xlu0 %5776
        %5778 = vrot.lane.b32.xlu0 %v1541, 32
        %v5779 = vpop.permute.xlu0 %5778
        %5780 = vrot.lane.b32.xlu0 %v1542, 32
        %v5781 = vpop.permute.xlu0 %5780
        %5782 = vrot.lane.b32.xlu0 %v1543, 32
        %v5783 = vpop.permute.xlu0 %5782
        %5784 = vrot.lane.b32.xlu0 %v1544, 32
        %v5785 = vpop.permute.xlu0 %5784
        %5786 = vrot.lane.b32.xlu0 %v1545, 32
        %v5787 = vpop.permute.xlu0 %5786
        %5788 = vrot.lane.b32.xlu0 %v1578, 32
        %v5789 = vpop.permute.xlu0 %5788
        %5790 = vrot.lane.b32.xlu0 %v1579, 32
        %v5791 = vpop.permute.xlu0 %5790
        %5792 = vrot.lane.b32.xlu0 %v1580, 32
        %v5793 = vpop.permute.xlu0 %5792
        %5794 = vrot.lane.b32.xlu0 %v1581, 32
        %v5795 = vpop.permute.xlu0 %5794
        %5796 = vrot.lane.b32.xlu0 %v1582, 32
        %v5797 = vpop.permute.xlu0 %5796
        %5798 = vrot.lane.b32.xlu0 %v1583, 32
        %v5799 = vpop.permute.xlu0 %5798
        %5800 = vrot.lane.b32.xlu0 %v1584, 32
        %v5801 = vpop.permute.xlu0 %5800
        %5802 = vrot.lane.b32.xlu0 %v1585, 32
        %v5803 = vpop.permute.xlu0 %5802
        %v5805 = vsel %vm1586, %v5773, 0
        %v5808 = vsel %vm1586, %v5775, 0
        %v5811 = vsel %vm1586, %v5777, 0
        %v5814 = vsel %vm1586, %v5779, 0
        %v5817 = vsel %vm1586, %v5781, 0
        %v5820 = vsel %vm1586, %v5783, 0
        %v5823 = vsel %vm1586, %v5785, 0
        %v5826 = vsel %vm1586, %v5787, 0
        %v5829 = vsel %vm1586, %v5789, 0
        %v5832 = vsel %vm1586, %v5791, 0
        %v5835 = vsel %vm1586, %v5793, 0
        %v5838 = vsel %vm1586, %v5795, 0
        %v5841 = vsel %vm1586, %v5797, 0
        %v5844 = vsel %vm1586, %v5799, 0
        %v5847 = vsel %vm1586, %v5801, 0
        %v5850 = vsel %vm1586, %v5803, 0
        %5852 = vmatpush.bf16.xpose.msra.mxu0 %v5850
        %5853 = vmatpush.bf16.xpose.msra.mxu0 %v5847
        %5854 = vmatpush.bf16.xpose.msra.mxu0 %v5844
        %5855 = vmatpush.bf16.xpose.msra.mxu0 %v5841
        %5856 = vmatpush.bf16.xpose.msra.mxu0 %v5838
        %5857 = vmatpush.bf16.xpose.msra.mxu0 %v5835
        %5858 = vmatpush.bf16.xpose.msra.mxu0 %v5832
        %5859 = vmatpush.bf16.xpose.msra.mxu0 %v5829
        %5860 = vmatmul.bf16.gmra.mxu0 %v5805
        %v5861 = vpop.f32.mrf.mxu0
        %v5862 = vadd.f32 0.0, %v5861
        %v5863 = vpop.f32.mrf.mxu0
        %v5864 = vadd.f32 0.0, %v5863
        %5865 = vmatmul.bf16.gmra.mxu0 %v5808
        %v5866 = vpop.f32.mrf.mxu0
        %v5867 = vadd.f32 0.0, %v5866
        %v5868 = vpop.f32.mrf.mxu0
        %v5869 = vadd.f32 0.0, %v5868
        %5870 = vmatmul.bf16.gmra.mxu0 %v5811
        %v5871 = vpop.f32.mrf.mxu0
        %v5872 = vadd.f32 0.0, %v5871
        %v5873 = vpop.f32.mrf.mxu0
        %v5874 = vadd.f32 0.0, %v5873
        %5875 = vmatmul.bf16.gmra.mxu0 %v5814
        %v5876 = vpop.f32.mrf.mxu0
        %v5877 = vadd.f32 0.0, %v5876
        %v5878 = vpop.f32.mrf.mxu0
        %v5879 = vadd.f32 0.0, %v5878
        %5880 = vmatmul.bf16.gmra.mxu0 %v5817
        %v5881 = vpop.f32.mrf.mxu0
        %v5882 = vadd.f32 0.0, %v5881
        %v5883 = vpop.f32.mrf.mxu0
        %v5884 = vadd.f32 0.0, %v5883
        %5885 = vmatmul.bf16.gmra.mxu0 %v5820
        %v5886 = vpop.f32.mrf.mxu0
        %v5887 = vadd.f32 0.0, %v5886
        %v5888 = vpop.f32.mrf.mxu0
        %v5889 = vadd.f32 0.0, %v5888
        %5890 = vmatmul.bf16.gmra.mxu0 %v5823
        %v5891 = vpop.f32.mrf.mxu0
        %v5892 = vadd.f32 0.0, %v5891
        %v5893 = vpop.f32.mrf.mxu0
        %v5894 = vadd.f32 0.0, %v5893
        %5895 = vmatmul.bf16.gmra.mxu0 %v5826
        %v5896 = vpop.f32.mrf.mxu0
        %v5897 = vadd.f32 0.0, %v5896
        %v5898 = vpop.f32.mrf.mxu0
        %v5899 = vadd.f32 0.0, %v5898
        %5900 = vdwg.mxu0
        %s5901 = scalar_lea.vmem [#allocation3], 384
        %v5902 = vld [vmem:[%s5901] sm:$0xff]
        %v5903 = vld [vmem:[%s5901 + $0x8] sm:$0xff]
        %v5904 = vld [vmem:[%s5901 + $0x10] sm:$0xff]
        %v5905 = vld [vmem:[%s5901 + $0x18] sm:$0xff]
        %v5906 = vld [vmem:[%s5901 + $0x20] sm:$0xff]
        %v5907 = vld [vmem:[%s5901 + $0x28] sm:$0xff]
        %v5908 = vld [vmem:[%s5901 + $0x30] sm:$0xff]
        %v5909 = vld [vmem:[%s5901 + $0x38] sm:$0xff]
        %v5910 = vld [vmem:[%s5901 + $0x40] sm:$0xff]
        %v5911 = vld [vmem:[%s5901 + $0x48] sm:$0xff]
        %v5912 = vld [vmem:[%s5901 + $0x50] sm:$0xff]
        %v5913 = vld [vmem:[%s5901 + $0x58] sm:$0xff]
        %v5914 = vld [vmem:[%s5901 + $0x60] sm:$0xff]
        %v5915 = vld [vmem:[%s5901 + $0x68] sm:$0xff]
        %v5916 = vld [vmem:[%s5901 + $0x70] sm:$0xff]
        %v5917 = vld [vmem:[%s5901 + $0x78] sm:$0xff]
        %5918 = vmax.xlane.f32.xlu0 %v5862
        %v5919 = vpop.xlane.xlu0 %5918
        %5920 = vmax.xlane.f32.xlu0 %v5864
        %v5921 = vpop.xlane.xlu0 %5920
        %5922 = vmax.xlane.f32.xlu0 %v5867
        %v5923 = vpop.xlane.xlu0 %5922
        %5924 = vmax.xlane.f32.xlu0 %v5869
        %v5925 = vpop.xlane.xlu0 %5924
        %5926 = vmax.xlane.f32.xlu0 %v5872
        %v5927 = vpop.xlane.xlu0 %5926
        %5928 = vmax.xlane.f32.xlu0 %v5874
        %v5929 = vpop.xlane.xlu0 %5928
        %5930 = vmax.xlane.f32.xlu0 %v5877
        %v5931 = vpop.xlane.xlu0 %5930
        %5932 = vmax.xlane.f32.xlu0 %v5879
        %v5933 = vpop.xlane.xlu0 %5932
        %5934 = vmax.xlane.f32.xlu0 %v5882
        %v5935 = vpop.xlane.xlu0 %5934
        %5936 = vmax.xlane.f32.xlu0 %v5884
        %v5937 = vpop.xlane.xlu0 %5936
        %5938 = vmax.xlane.f32.xlu0 %v5887
        %v5939 = vpop.xlane.xlu0 %5938
        %5940 = vmax.xlane.f32.xlu0 %v5889
        %v5941 = vpop.xlane.xlu0 %5940
        %5942 = vmax.xlane.f32.xlu0 %v5892
        %v5943 = vpop.xlane.xlu0 %5942
        %5944 = vmax.xlane.f32.xlu0 %v5894
        %v5945 = vpop.xlane.xlu0 %5944
        %5946 = vmax.xlane.f32.xlu0 %v5897
        %v5947 = vpop.xlane.xlu0 %5946
        %5948 = vmax.xlane.f32.xlu0 %v5899
        %v5949 = vpop.xlane.xlu0 %5948
        %v5950 = vmax.f32 %v5902, %v5919
        %v5951 = vmax.f32 %v5903, %v5921
        %v5952 = vmax.f32 %v5904, %v5923
        %v5953 = vmax.f32 %v5905, %v5925
        %v5954 = vmax.f32 %v5906, %v5927
        %v5955 = vmax.f32 %v5907, %v5929
        %v5956 = vmax.f32 %v5908, %v5931
        %v5957 = vmax.f32 %v5909, %v5933
        %v5958 = vmax.f32 %v5910, %v5935
        %v5959 = vmax.f32 %v5911, %v5937
        %v5960 = vmax.f32 %v5912, %v5939
        %v5961 = vmax.f32 %v5913, %v5941
        %v5962 = vmax.f32 %v5914, %v5943
        %v5963 = vmax.f32 %v5915, %v5945
        %v5964 = vmax.f32 %v5916, %v5947
        %v5965 = vmax.f32 %v5917, %v5949
        %v5966 = vsub.f32 %v5902, %v5950
        %v5967 = vsub.f32 %v5903, %v5951
        %v5968 = vsub.f32 %v5904, %v5952
        %v5969 = vsub.f32 %v5905, %v5953
        %v5970 = vsub.f32 %v5906, %v5954
        %v5971 = vsub.f32 %v5907, %v5955
        %v5972 = vsub.f32 %v5908, %v5956
        %v5973 = vsub.f32 %v5909, %v5957
        %v5974 = vsub.f32 %v5910, %v5958
        %v5975 = vsub.f32 %v5911, %v5959
        %v5976 = vsub.f32 %v5912, %v5960
        %v5977 = vsub.f32 %v5913, %v5961
        %v5978 = vsub.f32 %v5914, %v5962
        %v5979 = vsub.f32 %v5915, %v5963
        %v5980 = vsub.f32 %v5916, %v5964
        %v5981 = vsub.f32 %v5917, %v5965
        %v5982 = vmul.f32 %v5966, 1.442695
        %v5983 = vpow.pop %v5982
        %v5984 = vmul.f32 %v5967, 1.442695
        %v5985 = vpow.pop %v5984
        %v5986 = vmul.f32 %v5968, 1.442695
        %v5987 = vpow.pop %v5986
        %v5988 = vmul.f32 %v5969, 1.442695
        %v5989 = vpow.pop %v5988
        %v5990 = vmul.f32 %v5970, 1.442695
        %v5991 = vpow.pop %v5990
        %v5992 = vmul.f32 %v5971, 1.442695
        %v5993 = vpow.pop %v5992
        %v5994 = vmul.f32 %v5972, 1.442695
        %v5995 = vpow.pop %v5994
        %v5996 = vmul.f32 %v5973, 1.442695
        %v5997 = vpow.pop %v5996
        %v5998 = vmul.f32 %v5974, 1.442695
        %v5999 = vpow.pop %v5998
        %v6000 = vmul.f32 %v5975, 1.442695
        %v6001 = vpow.pop %v6000
        %v6002 = vmul.f32 %v5976, 1.442695
        %v6003 = vpow.pop %v6002
        %v6004 = vmul.f32 %v5977, 1.442695
        %v6005 = vpow.pop %v6004
        %v6006 = vmul.f32 %v5978, 1.442695
        %v6007 = vpow.pop %v6006
        %v6008 = vmul.f32 %v5979, 1.442695
        %v6009 = vpow.pop %v6008
        %v6010 = vmul.f32 %v5980, 1.442695
        %v6011 = vpow.pop %v6010
        %v6012 = vmul.f32 %v5981, 1.442695
        %v6013 = vpow.pop %v6012
        %6015 = vset.pattern.permute.xlu0 0
        %6016 = vperm.xlu0 %6015, %v5950
        %v6017 = vpop.permute.xlu0 %6016
        %6020 = vset.pattern.permute.xlu0 0
        %6021 = vperm.xlu0 %6020, %v5951
        %v6022 = vpop.permute.xlu0 %6021
        %6025 = vset.pattern.permute.xlu0 0
        %6026 = vperm.xlu0 %6025, %v5952
        %v6027 = vpop.permute.xlu0 %6026
        %6030 = vset.pattern.permute.xlu0 0
        %6031 = vperm.xlu0 %6030, %v5953
        %v6032 = vpop.permute.xlu0 %6031
        %6035 = vset.pattern.permute.xlu0 0
        %6036 = vperm.xlu0 %6035, %v5954
        %v6037 = vpop.permute.xlu0 %6036
        %6040 = vset.pattern.permute.xlu0 0
        %6041 = vperm.xlu0 %6040, %v5955
        %v6042 = vpop.permute.xlu0 %6041
        %6045 = vset.pattern.permute.xlu0 0
        %6046 = vperm.xlu0 %6045, %v5956
        %v6047 = vpop.permute.xlu0 %6046
        %6050 = vset.pattern.permute.xlu0 0
        %6051 = vperm.xlu0 %6050, %v5957
        %v6052 = vpop.permute.xlu0 %6051
        %6055 = vset.pattern.permute.xlu0 0
        %6056 = vperm.xlu0 %6055, %v5958
        %v6057 = vpop.permute.xlu0 %6056
        %6060 = vset.pattern.permute.xlu0 0
        %6061 = vperm.xlu0 %6060, %v5959
        %v6062 = vpop.permute.xlu0 %6061
        %6065 = vset.pattern.permute.xlu0 0
        %6066 = vperm.xlu0 %6065, %v5960
        %v6067 = vpop.permute.xlu0 %6066
        %6070 = vset.pattern.permute.xlu0 0
        %6071 = vperm.xlu0 %6070, %v5961
        %v6072 = vpop.permute.xlu0 %6071
        %6075 = vset.pattern.permute.xlu0 0
        %6076 = vperm.xlu0 %6075, %v5962
        %v6077 = vpop.permute.xlu0 %6076
        %6080 = vset.pattern.permute.xlu0 0
        %6081 = vperm.xlu0 %6080, %v5963
        %v6082 = vpop.permute.xlu0 %6081
        %6085 = vset.pattern.permute.xlu0 0
        %6086 = vperm.xlu0 %6085, %v5964
        %v6087 = vpop.permute.xlu0 %6086
        %6090 = vset.pattern.permute.xlu0 0
        %6091 = vperm.xlu0 %6090, %v5965
        %v6092 = vpop.permute.xlu0 %6091
        %v6094 = vsub.f32 %v5862, %v6017
        %v6095 = vsub.f32 %v5864, %v6022
        %v6096 = vsub.f32 %v5867, %v6027
        %v6097 = vsub.f32 %v5869, %v6032
        %v6098 = vsub.f32 %v5872, %v6037
        %v6099 = vsub.f32 %v5874, %v6042
        %v6100 = vsub.f32 %v5877, %v6047
        %v6101 = vsub.f32 %v5879, %v6052
        %v6102 = vsub.f32 %v5882, %v6057
        %v6103 = vsub.f32 %v5884, %v6062
        %v6104 = vsub.f32 %v5887, %v6067
        %v6105 = vsub.f32 %v5889, %v6072
        %v6106 = vsub.f32 %v5892, %v6077
        %v6107 = vsub.f32 %v5894, %v6082
        %v6108 = vsub.f32 %v5897, %v6087
        %v6109 = vsub.f32 %v5899, %v6092
        %v6110 = vmul.f32 %v6094, 1.442695
        %v6111 = vpow.pop %v6110
        %v6112 = vmul.f32 %v6095, 1.442695
        %v6113 = vpow.pop %v6112
        %v6114 = vmul.f32 %v6096, 1.442695
        %v6115 = vpow.pop %v6114
        %v6116 = vmul.f32 %v6097, 1.442695
        %v6117 = vpow.pop %v6116
        %v6118 = vmul.f32 %v6098, 1.442695
        %v6119 = vpow.pop %v6118
        %v6120 = vmul.f32 %v6099, 1.442695
        %v6121 = vpow.pop %v6120
        %v6122 = vmul.f32 %v6100, 1.442695
        %v6123 = vpow.pop %v6122
        %v6124 = vmul.f32 %v6101, 1.442695
        %v6125 = vpow.pop %v6124
        %v6126 = vmul.f32 %v6102, 1.442695
        %v6127 = vpow.pop %v6126
        %v6128 = vmul.f32 %v6103, 1.442695
        %v6129 = vpow.pop %v6128
        %v6130 = vmul.f32 %v6104, 1.442695
        %v6131 = vpow.pop %v6130
        %v6132 = vmul.f32 %v6105, 1.442695
        %v6133 = vpow.pop %v6132
        %v6134 = vmul.f32 %v6106, 1.442695
        %v6135 = vpow.pop %v6134
        %v6136 = vmul.f32 %v6107, 1.442695
        %v6137 = vpow.pop %v6136
        %v6138 = vmul.f32 %v6108, 1.442695
        %v6139 = vpow.pop %v6138
        %v6140 = vmul.f32 %v6109, 1.442695
        %v6141 = vpow.pop %v6140
        %s6142 = scalar_lea.vmem [#allocation4], 384
        %v6143 = vld [vmem:[%s6142] sm:$0xff]
        %v6144 = vld [vmem:[%s6142 + $0x8] sm:$0xff]
        %v6145 = vld [vmem:[%s6142 + $0x10] sm:$0xff]
        %v6146 = vld [vmem:[%s6142 + $0x18] sm:$0xff]
        %v6147 = vld [vmem:[%s6142 + $0x20] sm:$0xff]
        %v6148 = vld [vmem:[%s6142 + $0x28] sm:$0xff]
        %v6149 = vld [vmem:[%s6142 + $0x30] sm:$0xff]
        %v6150 = vld [vmem:[%s6142 + $0x38] sm:$0xff]
        %v6151 = vld [vmem:[%s6142 + $0x40] sm:$0xff]
        %v6152 = vld [vmem:[%s6142 + $0x48] sm:$0xff]
        %v6153 = vld [vmem:[%s6142 + $0x50] sm:$0xff]
        %v6154 = vld [vmem:[%s6142 + $0x58] sm:$0xff]
        %v6155 = vld [vmem:[%s6142 + $0x60] sm:$0xff]
        %v6156 = vld [vmem:[%s6142 + $0x68] sm:$0xff]
        %v6157 = vld [vmem:[%s6142 + $0x70] sm:$0xff]
        %v6158 = vld [vmem:[%s6142 + $0x78] sm:$0xff]
        %v6159 = vmul.f32 %v5983, %v6143
        %v6160 = vmul.f32 %v5985, %v6144
        %v6161 = vmul.f32 %v5987, %v6145
        %v6162 = vmul.f32 %v5989, %v6146
        %v6163 = vmul.f32 %v5991, %v6147
        %v6164 = vmul.f32 %v5993, %v6148
        %v6165 = vmul.f32 %v5995, %v6149
        %v6166 = vmul.f32 %v5997, %v6150
        %v6167 = vmul.f32 %v5999, %v6151
        %v6168 = vmul.f32 %v6001, %v6152
        %v6169 = vmul.f32 %v6003, %v6153
        %v6170 = vmul.f32 %v6005, %v6154
        %v6171 = vmul.f32 %v6007, %v6155
        %v6172 = vmul.f32 %v6009, %v6156
        %v6173 = vmul.f32 %v6011, %v6157
        %v6174 = vmul.f32 %v6013, %v6158
        %6175 = vadd.xlane.f32.xlu0 %v6111
        %v6176 = vpop.xlane.xlu0 %6175
        %6177 = vadd.xlane.f32.xlu0 %v6113
        %v6178 = vpop.xlane.xlu0 %6177
        %6179 = vadd.xlane.f32.xlu0 %v6115
        %v6180 = vpop.xlane.xlu0 %6179
        %6181 = vadd.xlane.f32.xlu0 %v6117
        %v6182 = vpop.xlane.xlu0 %6181
        %6183 = vadd.xlane.f32.xlu0 %v6119
        %v6184 = vpop.xlane.xlu0 %6183
        %6185 = vadd.xlane.f32.xlu0 %v6121
        %v6186 = vpop.xlane.xlu0 %6185
        %6187 = vadd.xlane.f32.xlu0 %v6123
        %v6188 = vpop.xlane.xlu0 %6187
        %6189 = vadd.xlane.f32.xlu0 %v6125
        %v6190 = vpop.xlane.xlu0 %6189
        %6191 = vadd.xlane.f32.xlu0 %v6127
        %v6192 = vpop.xlane.xlu0 %6191
        %6193 = vadd.xlane.f32.xlu0 %v6129
        %v6194 = vpop.xlane.xlu0 %6193
        %6195 = vadd.xlane.f32.xlu0 %v6131
        %v6196 = vpop.xlane.xlu0 %6195
        %6197 = vadd.xlane.f32.xlu0 %v6133
        %v6198 = vpop.xlane.xlu0 %6197
        %6199 = vadd.xlane.f32.xlu0 %v6135
        %v6200 = vpop.xlane.xlu0 %6199
        %6201 = vadd.xlane.f32.xlu0 %v6137
        %v6202 = vpop.xlane.xlu0 %6201
        %6203 = vadd.xlane.f32.xlu0 %v6139
        %v6204 = vpop.xlane.xlu0 %6203
        %6205 = vadd.xlane.f32.xlu0 %v6141
        %v6206 = vpop.xlane.xlu0 %6205
        %v6207 = vadd.f32 %v6159, %v6176
        %v6208 = vadd.f32 %v6160, %v6178
        %v6209 = vadd.f32 %v6161, %v6180
        %v6210 = vadd.f32 %v6162, %v6182
        %v6211 = vadd.f32 %v6163, %v6184
        %v6212 = vadd.f32 %v6164, %v6186
        %v6213 = vadd.f32 %v6165, %v6188
        %v6214 = vadd.f32 %v6166, %v6190
        %v6215 = vadd.f32 %v6167, %v6192
        %v6216 = vadd.f32 %v6168, %v6194
        %v6217 = vadd.f32 %v6169, %v6196
        %v6218 = vadd.f32 %v6170, %v6198
        %v6219 = vadd.f32 %v6171, %v6200
        %v6220 = vadd.f32 %v6172, %v6202
        %v6221 = vadd.f32 %v6173, %v6204
        %v6222 = vadd.f32 %v6174, %v6206
        %6223 = vst.msk [vmem:[%s6142] sm:$0xff] %vm2004, %v6207
        %6224 = vst.msk [vmem:[%s6142 + $0x8] sm:$0xff] %vm2004, %v6208
        %6225 = vst.msk [vmem:[%s6142 + $0x10] sm:$0xff] %vm2004, %v6209
        %6226 = vst.msk [vmem:[%s6142 + $0x18] sm:$0xff] %vm2004, %v6210
        %6227 = vst.msk [vmem:[%s6142 + $0x20] sm:$0xff] %vm2004, %v6211
        %6228 = vst.msk [vmem:[%s6142 + $0x28] sm:$0xff] %vm2004, %v6212
        %6229 = vst.msk [vmem:[%s6142 + $0x30] sm:$0xff] %vm2004, %v6213
        %6230 = vst.msk [vmem:[%s6142 + $0x38] sm:$0xff] %vm2004, %v6214
        %6231 = vst.msk [vmem:[%s6142 + $0x40] sm:$0xff] %vm2004, %v6215
        %6232 = vst.msk [vmem:[%s6142 + $0x48] sm:$0xff] %vm2004, %v6216
        %6233 = vst.msk [vmem:[%s6142 + $0x50] sm:$0xff] %vm2004, %v6217
        %6234 = vst.msk [vmem:[%s6142 + $0x58] sm:$0xff] %vm2004, %v6218
        %6235 = vst.msk [vmem:[%s6142 + $0x60] sm:$0xff] %vm2004, %v6219
        %6236 = vst.msk [vmem:[%s6142 + $0x68] sm:$0xff] %vm2004, %v6220
        %6237 = vst.msk [vmem:[%s6142 + $0x70] sm:$0xff] %vm2004, %v6221
        %6238 = vst.msk [vmem:[%s6142 + $0x78] sm:$0xff] %vm2004, %v6222
        %s6239 = scalar_lea.vmem [#allocation5], 384
        %v6240 = vld [vmem:[%s6239] sm:$0xff]
        %v6241 = vld [vmem:[%s6239 + $0x8] sm:$0xff]
        %v6242 = vld [vmem:[%s6239 + $0x10] sm:$0xff]
        %v6243 = vld [vmem:[%s6239 + $0x18] sm:$0xff]
        %v6244 = vld [vmem:[%s6239 + $0x20] sm:$0xff]
        %v6245 = vld [vmem:[%s6239 + $0x28] sm:$0xff]
        %v6246 = vld [vmem:[%s6239 + $0x30] sm:$0xff]
        %v6247 = vld [vmem:[%s6239 + $0x38] sm:$0xff]
        %v6248 = vld [vmem:[%s6239 + $0x40] sm:$0xff]
        %v6249 = vld [vmem:[%s6239 + $0x48] sm:$0xff]
        %v6250 = vld [vmem:[%s6239 + $0x50] sm:$0xff]
        %v6251 = vld [vmem:[%s6239 + $0x58] sm:$0xff]
        %v6252 = vld [vmem:[%s6239 + $0x60] sm:$0xff]
        %v6253 = vld [vmem:[%s6239 + $0x68] sm:$0xff]
        %v6254 = vld [vmem:[%s6239 + $0x70] sm:$0xff]
        %v6255 = vld [vmem:[%s6239 + $0x78] sm:$0xff]
        %6257 = vset.pattern.permute.xlu0 0
        %6258 = vperm.xlu0 %6257, %v5983
        %v6259 = vpop.permute.xlu0 %6258
        %6262 = vset.pattern.permute.xlu0 0
        %6263 = vperm.xlu0 %6262, %v5985
        %v6264 = vpop.permute.xlu0 %6263
        %6267 = vset.pattern.permute.xlu0 0
        %6268 = vperm.xlu0 %6267, %v5987
        %v6269 = vpop.permute.xlu0 %6268
        %6272 = vset.pattern.permute.xlu0 0
        %6273 = vperm.xlu0 %6272, %v5989
        %v6274 = vpop.permute.xlu0 %6273
        %6277 = vset.pattern.permute.xlu0 0
        %6278 = vperm.xlu0 %6277, %v5991
        %v6279 = vpop.permute.xlu0 %6278
        %6282 = vset.pattern.permute.xlu0 0
        %6283 = vperm.xlu0 %6282, %v5993
        %v6284 = vpop.permute.xlu0 %6283
        %6287 = vset.pattern.permute.xlu0 0
        %6288 = vperm.xlu0 %6287, %v5995
        %v6289 = vpop.permute.xlu0 %6288
        %6292 = vset.pattern.permute.xlu0 0
        %6293 = vperm.xlu0 %6292, %v5997
        %v6294 = vpop.permute.xlu0 %6293
        %6297 = vset.pattern.permute.xlu0 0
        %6298 = vperm.xlu0 %6297, %v5999
        %v6299 = vpop.permute.xlu0 %6298
        %6302 = vset.pattern.permute.xlu0 0
        %6303 = vperm.xlu0 %6302, %v6001
        %v6304 = vpop.permute.xlu0 %6303
        %6307 = vset.pattern.permute.xlu0 0
        %6308 = vperm.xlu0 %6307, %v6003
        %v6309 = vpop.permute.xlu0 %6308
        %6312 = vset.pattern.permute.xlu0 0
        %6313 = vperm.xlu0 %6312, %v6005
        %v6314 = vpop.permute.xlu0 %6313
        %6317 = vset.pattern.permute.xlu0 0
        %6318 = vperm.xlu0 %6317, %v6007
        %v6319 = vpop.permute.xlu0 %6318
        %6322 = vset.pattern.permute.xlu0 0
        %6323 = vperm.xlu0 %6322, %v6009
        %v6324 = vpop.permute.xlu0 %6323
        %6327 = vset.pattern.permute.xlu0 0
        %6328 = vperm.xlu0 %6327, %v6011
        %v6329 = vpop.permute.xlu0 %6328
        %6332 = vset.pattern.permute.xlu0 0
        %6333 = vperm.xlu0 %6332, %v6013
        %v6334 = vpop.permute.xlu0 %6333
        %v6336 = vmul.f32 %v6259, %v6240
        %v6337 = vmul.f32 %v6264, %v6241
        %v6338 = vmul.f32 %v6269, %v6242
        %v6339 = vmul.f32 %v6274, %v6243
        %v6340 = vmul.f32 %v6279, %v6244
        %v6341 = vmul.f32 %v6284, %v6245
        %v6342 = vmul.f32 %v6289, %v6246
        %v6343 = vmul.f32 %v6294, %v6247
        %v6344 = vmul.f32 %v6299, %v6248
        %v6345 = vmul.f32 %v6304, %v6249
        %v6346 = vmul.f32 %v6309, %v6250
        %v6347 = vmul.f32 %v6314, %v6251
        %v6348 = vmul.f32 %v6319, %v6252
        %v6349 = vmul.f32 %v6324, %v6253
        %v6350 = vmul.f32 %v6329, %v6254
        %v6351 = vmul.f32 %v6334, %v6255
        %v6352 = vpack.c.bf16 %v6113, %v6111
        %v6353 = vpack.c.bf16 %v6117, %v6115
        %v6354 = vpack.c.bf16 %v6121, %v6119
        %v6355 = vpack.c.bf16 %v6125, %v6123
        %v6356 = vpack.c.bf16 %v6129, %v6127
        %v6357 = vpack.c.bf16 %v6133, %v6131
        %v6358 = vpack.c.bf16 %v6137, %v6135
        %v6359 = vpack.c.bf16 %v6141, %v6139
        %6360 = vrot.lane.b32.xlu0 %v2173, 32
        %v6361 = vpop.permute.xlu0 %6360
        %6362 = vrot.lane.b32.xlu0 %v2174, 32
        %v6363 = vpop.permute.xlu0 %6362
        %6364 = vrot.lane.b32.xlu0 %v2175, 32
        %v6365 = vpop.permute.xlu0 %6364
        %6366 = vrot.lane.b32.xlu0 %v2176, 32
        %v6367 = vpop.permute.xlu0 %6366
        %6368 = vrot.lane.b32.xlu0 %v2177, 32
        %v6369 = vpop.permute.xlu0 %6368
        %6370 = vrot.lane.b32.xlu0 %v2178, 32
        %v6371 = vpop.permute.xlu0 %6370
        %6372 = vrot.lane.b32.xlu0 %v2179, 32
        %v6373 = vpop.permute.xlu0 %6372
        %6374 = vrot.lane.b32.xlu0 %v2180, 32
        %v6375 = vpop.permute.xlu0 %6374
        %6384 = vmatpush.bf16.msra.mxu0 %v6375
        %6385 = vmatpush.bf16.msra.mxu0 %v6373
        %6386 = vmatpush.bf16.msra.mxu0 %v6371
        %6387 = vmatpush.bf16.msra.mxu0 %v6369
        %6388 = vmatpush.bf16.msra.mxu0 %v6367
        %6389 = vmatpush.bf16.msra.mxu0 %v6365
        %6390 = vmatpush.bf16.msra.mxu0 %v6363
        %6391 = vmatpush.bf16.msra.mxu0 %v6361
        %6392 = vmatmul.bf16.gmra.mxu0 %v6352
        %v6393 = vpop.f32.mrf.mxu0
        %v6394 = vadd.f32 0.0, %v6393
        %v6395 = vpop.f32.mrf.mxu0
        %v6396 = vadd.f32 0.0, %v6395
        %6397 = vmatmul.bf16.gmra.mxu0 %v6353
        %v6398 = vpop.f32.mrf.mxu0
        %v6399 = vadd.f32 0.0, %v6398
        %v6400 = vpop.f32.mrf.mxu0
        %v6401 = vadd.f32 0.0, %v6400
        %6402 = vmatmul.bf16.gmra.mxu0 %v6354
        %v6403 = vpop.f32.mrf.mxu0
        %v6404 = vadd.f32 0.0, %v6403
        %v6405 = vpop.f32.mrf.mxu0
        %v6406 = vadd.f32 0.0, %v6405
        %6407 = vmatmul.bf16.gmra.mxu0 %v6355
        %v6408 = vpop.f32.mrf.mxu0
        %v6409 = vadd.f32 0.0, %v6408
        %v6410 = vpop.f32.mrf.mxu0
        %v6411 = vadd.f32 0.0, %v6410
        %6412 = vmatmul.bf16.gmra.mxu0 %v6356
        %v6413 = vpop.f32.mrf.mxu0
        %v6414 = vadd.f32 0.0, %v6413
        %v6415 = vpop.f32.mrf.mxu0
        %v6416 = vadd.f32 0.0, %v6415
        %6417 = vmatmul.bf16.gmra.mxu0 %v6357
        %v6418 = vpop.f32.mrf.mxu0
        %v6419 = vadd.f32 0.0, %v6418
        %v6420 = vpop.f32.mrf.mxu0
        %v6421 = vadd.f32 0.0, %v6420
        %6422 = vmatmul.bf16.gmra.mxu0 %v6358
        %v6423 = vpop.f32.mrf.mxu0
        %v6424 = vadd.f32 0.0, %v6423
        %v6425 = vpop.f32.mrf.mxu0
        %v6426 = vadd.f32 0.0, %v6425
        %6427 = vmatmul.bf16.gmra.mxu0 %v6359
        %v6428 = vpop.f32.mrf.mxu0
        %v6429 = vadd.f32 0.0, %v6428
        %v6430 = vpop.f32.mrf.mxu0
        %v6431 = vadd.f32 0.0, %v6430
        %6432 = vdwg.mxu0
        %v6433 = vadd.f32 %v6336, %v6394
        %v6434 = vadd.f32 %v6337, %v6396
        %v6435 = vadd.f32 %v6338, %v6399
        %v6436 = vadd.f32 %v6339, %v6401
        %v6437 = vadd.f32 %v6340, %v6404
        %v6438 = vadd.f32 %v6341, %v6406
        %v6439 = vadd.f32 %v6342, %v6409
        %v6440 = vadd.f32 %v6343, %v6411
        %v6441 = vadd.f32 %v6344, %v6414
        %v6442 = vadd.f32 %v6345, %v6416
        %v6443 = vadd.f32 %v6346, %v6419
        %v6444 = vadd.f32 %v6347, %v6421
        %v6445 = vadd.f32 %v6348, %v6424
        %v6446 = vadd.f32 %v6349, %v6426
        %v6447 = vadd.f32 %v6350, %v6429
        %v6448 = vadd.f32 %v6351, %v6431
        %6449 = vst.msk [vmem:[%s6239] sm:$0xff] %vm1586, %v6433
        %6450 = vst.msk [vmem:[%s6239 + $0x8] sm:$0xff] %vm1586, %v6434
        %6451 = vst.msk [vmem:[%s6239 + $0x10] sm:$0xff] %vm1586, %v6435
        %6452 = vst.msk [vmem:[%s6239 + $0x18] sm:$0xff] %vm1586, %v6436
        %6453 = vst.msk [vmem:[%s6239 + $0x20] sm:$0xff] %vm1586, %v6437
        %6454 = vst.msk [vmem:[%s6239 + $0x28] sm:$0xff] %vm1586, %v6438
        %6455 = vst.msk [vmem:[%s6239 + $0x30] sm:$0xff] %vm1586, %v6439
        %6456 = vst.msk [vmem:[%s6239 + $0x38] sm:$0xff] %vm1586, %v6440
        %6457 = vst.msk [vmem:[%s6239 + $0x40] sm:$0xff] %vm1586, %v6441
        %6458 = vst.msk [vmem:[%s6239 + $0x48] sm:$0xff] %vm1586, %v6442
        %6459 = vst.msk [vmem:[%s6239 + $0x50] sm:$0xff] %vm1586, %v6443
        %6460 = vst.msk [vmem:[%s6239 + $0x58] sm:$0xff] %vm1586, %v6444
        %6461 = vst.msk [vmem:[%s6239 + $0x60] sm:$0xff] %vm1586, %v6445
        %6462 = vst.msk [vmem:[%s6239 + $0x68] sm:$0xff] %vm1586, %v6446
        %6463 = vst.msk [vmem:[%s6239 + $0x70] sm:$0xff] %vm1586, %v6447
        %6464 = vst.msk [vmem:[%s6239 + $0x78] sm:$0xff] %vm1586, %v6448
        %6465 = vst.msk [vmem:[%s5901] sm:$0xff] %vm2004, %v5950
        %6466 = vst.msk [vmem:[%s5901 + $0x8] sm:$0xff] %vm2004, %v5951
        %6467 = vst.msk [vmem:[%s5901 + $0x10] sm:$0xff] %vm2004, %v5952
        %6468 = vst.msk [vmem:[%s5901 + $0x18] sm:$0xff] %vm2004, %v5953
        %6469 = vst.msk [vmem:[%s5901 + $0x20] sm:$0xff] %vm2004, %v5954
        %6470 = vst.msk [vmem:[%s5901 + $0x28] sm:$0xff] %vm2004, %v5955
        %6471 = vst.msk [vmem:[%s5901 + $0x30] sm:$0xff] %vm2004, %v5956
        %6472 = vst.msk [vmem:[%s5901 + $0x38] sm:$0xff] %vm2004, %v5957
        %6473 = vst.msk [vmem:[%s5901 + $0x40] sm:$0xff] %vm2004, %v5958
        %6474 = vst.msk [vmem:[%s5901 + $0x48] sm:$0xff] %vm2004, %v5959
        %6475 = vst.msk [vmem:[%s5901 + $0x50] sm:$0xff] %vm2004, %v5960
        %6476 = vst.msk [vmem:[%s5901 + $0x58] sm:$0xff] %vm2004, %v5961
        %6477 = vst.msk [vmem:[%s5901 + $0x60] sm:$0xff] %vm2004, %v5962
        %6478 = vst.msk [vmem:[%s5901 + $0x68] sm:$0xff] %vm2004, %v5963
        %6479 = vst.msk [vmem:[%s5901 + $0x70] sm:$0xff] %vm2004, %v5964
        %6480 = vst.msk [vmem:[%s5901 + $0x78] sm:$0xff] %vm2004, %v5965
        %6481 = vrot.lane.b32.xlu0 %v2302, 32
        %v6482 = vpop.permute.xlu0 %6481
        %6483 = vrot.lane.b32.xlu0 %v2303, 32
        %v6484 = vpop.permute.xlu0 %6483
        %6485 = vrot.lane.b32.xlu0 %v2304, 32
        %v6486 = vpop.permute.xlu0 %6485
        %6487 = vrot.lane.b32.xlu0 %v2305, 32
        %v6488 = vpop.permute.xlu0 %6487
        %6489 = vrot.lane.b32.xlu0 %v2306, 32
        %v6490 = vpop.permute.xlu0 %6489
        %6491 = vrot.lane.b32.xlu0 %v2307, 32
        %v6492 = vpop.permute.xlu0 %6491
        %6493 = vrot.lane.b32.xlu0 %v2308, 32
        %v6494 = vpop.permute.xlu0 %6493
        %6495 = vrot.lane.b32.xlu0 %v2309, 32
        %v6496 = vpop.permute.xlu0 %6495
        %6497 = vrot.lane.b32.xlu0 %v2326, 32
        %v6498 = vpop.permute.xlu0 %6497
        %6499 = vrot.lane.b32.xlu0 %v2327, 32
        %v6500 = vpop.permute.xlu0 %6499
        %6501 = vrot.lane.b32.xlu0 %v2328, 32
        %v6502 = vpop.permute.xlu0 %6501
        %6503 = vrot.lane.b32.xlu0 %v2329, 32
        %v6504 = vpop.permute.xlu0 %6503
        %6505 = vrot.lane.b32.xlu0 %v2330, 32
        %v6506 = vpop.permute.xlu0 %6505
        %6507 = vrot.lane.b32.xlu0 %v2331, 32
        %v6508 = vpop.permute.xlu0 %6507
        %6509 = vrot.lane.b32.xlu0 %v2332, 32
        %v6510 = vpop.permute.xlu0 %6509
        %6511 = vrot.lane.b32.xlu0 %v2333, 32
        %v6512 = vpop.permute.xlu0 %6511
        %v6514 = vsel %vm1586, %v6482, 0
        %v6517 = vsel %vm1586, %v6484, 0
        %v6520 = vsel %vm1586, %v6486, 0
        %v6523 = vsel %vm1586, %v6488, 0
        %v6526 = vsel %vm1586, %v6490, 0
        %v6529 = vsel %vm1586, %v6492, 0
        %v6532 = vsel %vm1586, %v6494, 0
        %v6535 = vsel %vm1586, %v6496, 0
        %v6538 = vsel %vm1586, %v6498, 0
        %v6541 = vsel %vm1586, %v6500, 0
        %v6544 = vsel %vm1586, %v6502, 0
        %v6547 = vsel %vm1586, %v6504, 0
        %v6550 = vsel %vm1586, %v6506, 0
        %v6553 = vsel %vm1586, %v6508, 0
        %v6556 = vsel %vm1586, %v6510, 0
        %v6559 = vsel %vm1586, %v6512, 0
        %6561 = vmatpush.bf16.xpose.msra.mxu0 %v6559
        %6562 = vmatpush.bf16.xpose.msra.mxu0 %v6556
        %6563 = vmatpush.bf16.xpose.msra.mxu0 %v6553
        %6564 = vmatpush.bf16.xpose.msra.mxu0 %v6550
        %6565 = vmatpush.bf16.xpose.msra.mxu0 %v6547
        %6566 = vmatpush.bf16.xpose.msra.mxu0 %v6544
        %6567 = vmatpush.bf16.xpose.msra.mxu0 %v6541
        %6568 = vmatpush.bf16.xpose.msra.mxu0 %v6538
        %6569 = vmatmul.bf16.gmra.mxu0 %v6514
        %v6570 = vpop.f32.mrf.mxu0
        %v6571 = vadd.f32 0.0, %v6570
        %v6572 = vpop.f32.mrf.mxu0
        %v6573 = vadd.f32 0.0, %v6572
        %6574 = vmatmul.bf16.gmra.mxu0 %v6517
        %v6575 = vpop.f32.mrf.mxu0
        %v6576 = vadd.f32 0.0, %v6575
        %v6577 = vpop.f32.mrf.mxu0
        %v6578 = vadd.f32 0.0, %v6577
        %6579 = vmatmul.bf16.gmra.mxu0 %v6520
        %v6580 = vpop.f32.mrf.mxu0
        %v6581 = vadd.f32 0.0, %v6580
        %v6582 = vpop.f32.mrf.mxu0
        %v6583 = vadd.f32 0.0, %v6582
        %6584 = vmatmul.bf16.gmra.mxu0 %v6523
        %v6585 = vpop.f32.mrf.mxu0
        %v6586 = vadd.f32 0.0, %v6585
        %v6587 = vpop.f32.mrf.mxu0
        %v6588 = vadd.f32 0.0, %v6587
        %6589 = vmatmul.bf16.gmra.mxu0 %v6526
        %v6590 = vpop.f32.mrf.mxu0
        %v6591 = vadd.f32 0.0, %v6590
        %v6592 = vpop.f32.mrf.mxu0
        %v6593 = vadd.f32 0.0, %v6592
        %6594 = vmatmul.bf16.gmra.mxu0 %v6529
        %v6595 = vpop.f32.mrf.mxu0
        %v6596 = vadd.f32 0.0, %v6595
        %v6597 = vpop.f32.mrf.mxu0
        %v6598 = vadd.f32 0.0, %v6597
        %6599 = vmatmul.bf16.gmra.mxu0 %v6532
        %v6600 = vpop.f32.mrf.mxu0
        %v6601 = vadd.f32 0.0, %v6600
        %v6602 = vpop.f32.mrf.mxu0
        %v6603 = vadd.f32 0.0, %v6602
        %6604 = vmatmul.bf16.gmra.mxu0 %v6535
        %v6605 = vpop.f32.mrf.mxu0
        %v6606 = vadd.f32 0.0, %v6605
        %v6607 = vpop.f32.mrf.mxu0
        %v6608 = vadd.f32 0.0, %v6607
        %6609 = vdwg.mxu0
        %s6610 = scalar_lea.vmem [#allocation6], 384
        %v6611 = vld [vmem:[%s6610] sm:$0xff]
        %v6612 = vld [vmem:[%s6610 + $0x8] sm:$0xff]
        %v6613 = vld [vmem:[%s6610 + $0x10] sm:$0xff]
        %v6614 = vld [vmem:[%s6610 + $0x18] sm:$0xff]
        %v6615 = vld [vmem:[%s6610 + $0x20] sm:$0xff]
        %v6616 = vld [vmem:[%s6610 + $0x28] sm:$0xff]
        %v6617 = vld [vmem:[%s6610 + $0x30] sm:$0xff]
        %v6618 = vld [vmem:[%s6610 + $0x38] sm:$0xff]
        %v6619 = vld [vmem:[%s6610 + $0x40] sm:$0xff]
        %v6620 = vld [vmem:[%s6610 + $0x48] sm:$0xff]
        %v6621 = vld [vmem:[%s6610 + $0x50] sm:$0xff]
        %v6622 = vld [vmem:[%s6610 + $0x58] sm:$0xff]
        %v6623 = vld [vmem:[%s6610 + $0x60] sm:$0xff]
        %v6624 = vld [vmem:[%s6610 + $0x68] sm:$0xff]
        %v6625 = vld [vmem:[%s6610 + $0x70] sm:$0xff]
        %v6626 = vld [vmem:[%s6610 + $0x78] sm:$0xff]
        %6627 = vmax.xlane.f32.xlu0 %v6571
        %v6628 = vpop.xlane.xlu0 %6627
        %6629 = vmax.xlane.f32.xlu0 %v6573
        %v6630 = vpop.xlane.xlu0 %6629
        %6631 = vmax.xlane.f32.xlu0 %v6576
        %v6632 = vpop.xlane.xlu0 %6631
        %6633 = vmax.xlane.f32.xlu0 %v6578
        %v6634 = vpop.xlane.xlu0 %6633
        %6635 = vmax.xlane.f32.xlu0 %v6581
        %v6636 = vpop.xlane.xlu0 %6635
        %6637 = vmax.xlane.f32.xlu0 %v6583
        %v6638 = vpop.xlane.xlu0 %6637
        %6639 = vmax.xlane.f32.xlu0 %v6586
        %v6640 = vpop.xlane.xlu0 %6639
        %6641 = vmax.xlane.f32.xlu0 %v6588
        %v6642 = vpop.xlane.xlu0 %6641
        %6643 = vmax.xlane.f32.xlu0 %v6591
        %v6644 = vpop.xlane.xlu0 %6643
        %6645 = vmax.xlane.f32.xlu0 %v6593
        %v6646 = vpop.xlane.xlu0 %6645
        %6647 = vmax.xlane.f32.xlu0 %v6596
        %v6648 = vpop.xlane.xlu0 %6647
        %6649 = vmax.xlane.f32.xlu0 %v6598
        %v6650 = vpop.xlane.xlu0 %6649
        %6651 = vmax.xlane.f32.xlu0 %v6601
        %v6652 = vpop.xlane.xlu0 %6651
        %6653 = vmax.xlane.f32.xlu0 %v6603
        %v6654 = vpop.xlane.xlu0 %6653
        %6655 = vmax.xlane.f32.xlu0 %v6606
        %v6656 = vpop.xlane.xlu0 %6655
        %6657 = vmax.xlane.f32.xlu0 %v6608
        %v6658 = vpop.xlane.xlu0 %6657
        %v6659 = vmax.f32 %v6611, %v6628
        %v6660 = vmax.f32 %v6612, %v6630
        %v6661 = vmax.f32 %v6613, %v6632
        %v6662 = vmax.f32 %v6614, %v6634
        %v6663 = vmax.f32 %v6615, %v6636
        %v6664 = vmax.f32 %v6616, %v6638
        %v6665 = vmax.f32 %v6617, %v6640
        %v6666 = vmax.f32 %v6618, %v6642
        %v6667 = vmax.f32 %v6619, %v6644
        %v6668 = vmax.f32 %v6620, %v6646
        %v6669 = vmax.f32 %v6621, %v6648
        %v6670 = vmax.f32 %v6622, %v6650
        %v6671 = vmax.f32 %v6623, %v6652
        %v6672 = vmax.f32 %v6624, %v6654
        %v6673 = vmax.f32 %v6625, %v6656
        %v6674 = vmax.f32 %v6626, %v6658
        %v6675 = vsub.f32 %v6611, %v6659
        %v6676 = vsub.f32 %v6612, %v6660
        %v6677 = vsub.f32 %v6613, %v6661
        %v6678 = vsub.f32 %v6614, %v6662
        %v6679 = vsub.f32 %v6615, %v6663
        %v6680 = vsub.f32 %v6616, %v6664
        %v6681 = vsub.f32 %v6617, %v6665
        %v6682 = vsub.f32 %v6618, %v6666
        %v6683 = vsub.f32 %v6619, %v6667
        %v6684 = vsub.f32 %v6620, %v6668
        %v6685 = vsub.f32 %v6621, %v6669
        %v6686 = vsub.f32 %v6622, %v6670
        %v6687 = vsub.f32 %v6623, %v6671
        %v6688 = vsub.f32 %v6624, %v6672
        %v6689 = vsub.f32 %v6625, %v6673
        %v6690 = vsub.f32 %v6626, %v6674
        %v6691 = vmul.f32 %v6675, 1.442695
        %v6692 = vpow.pop %v6691
        %v6693 = vmul.f32 %v6676, 1.442695
        %v6694 = vpow.pop %v6693
        %v6695 = vmul.f32 %v6677, 1.442695
        %v6696 = vpow.pop %v6695
        %v6697 = vmul.f32 %v6678, 1.442695
        %v6698 = vpow.pop %v6697
        %v6699 = vmul.f32 %v6679, 1.442695
        %v6700 = vpow.pop %v6699
        %v6701 = vmul.f32 %v6680, 1.442695
        %v6702 = vpow.pop %v6701
        %v6703 = vmul.f32 %v6681, 1.442695
        %v6704 = vpow.pop %v6703
        %v6705 = vmul.f32 %v6682, 1.442695
        %v6706 = vpow.pop %v6705
        %v6707 = vmul.f32 %v6683, 1.442695
        %v6708 = vpow.pop %v6707
        %v6709 = vmul.f32 %v6684, 1.442695
        %v6710 = vpow.pop %v6709
        %v6711 = vmul.f32 %v6685, 1.442695
        %v6712 = vpow.pop %v6711
        %v6713 = vmul.f32 %v6686, 1.442695
        %v6714 = vpow.pop %v6713
        %v6715 = vmul.f32 %v6687, 1.442695
        %v6716 = vpow.pop %v6715
        %v6717 = vmul.f32 %v6688, 1.442695
        %v6718 = vpow.pop %v6717
        %v6719 = vmul.f32 %v6689, 1.442695
        %v6720 = vpow.pop %v6719
        %v6721 = vmul.f32 %v6690, 1.442695
        %v6722 = vpow.pop %v6721
        %6724 = vset.pattern.permute.xlu0 0
        %6725 = vperm.xlu0 %6724, %v6659
        %v6726 = vpop.permute.xlu0 %6725
        %6729 = vset.pattern.permute.xlu0 0
        %6730 = vperm.xlu0 %6729, %v6660
        %v6731 = vpop.permute.xlu0 %6730
        %6734 = vset.pattern.permute.xlu0 0
        %6735 = vperm.xlu0 %6734, %v6661
        %v6736 = vpop.permute.xlu0 %6735
        %6739 = vset.pattern.permute.xlu0 0
        %6740 = vperm.xlu0 %6739, %v6662
        %v6741 = vpop.permute.xlu0 %6740
        %6744 = vset.pattern.permute.xlu0 0
        %6745 = vperm.xlu0 %6744, %v6663
        %v6746 = vpop.permute.xlu0 %6745
        %6749 = vset.pattern.permute.xlu0 0
        %6750 = vperm.xlu0 %6749, %v6664
        %v6751 = vpop.permute.xlu0 %6750
        %6754 = vset.pattern.permute.xlu0 0
        %6755 = vperm.xlu0 %6754, %v6665
        %v6756 = vpop.permute.xlu0 %6755
        %6759 = vset.pattern.permute.xlu0 0
        %6760 = vperm.xlu0 %6759, %v6666
        %v6761 = vpop.permute.xlu0 %6760
        %6764 = vset.pattern.permute.xlu0 0
        %6765 = vperm.xlu0 %6764, %v6667
        %v6766 = vpop.permute.xlu0 %6765
        %6769 = vset.pattern.permute.xlu0 0
        %6770 = vperm.xlu0 %6769, %v6668
        %v6771 = vpop.permute.xlu0 %6770
        %6774 = vset.pattern.permute.xlu0 0
        %6775 = vperm.xlu0 %6774, %v6669
        %v6776 = vpop.permute.xlu0 %6775
        %6779 = vset.pattern.permute.xlu0 0
        %6780 = vperm.xlu0 %6779, %v6670
        %v6781 = vpop.permute.xlu0 %6780
        %6784 = vset.pattern.permute.xlu0 0
        %6785 = vperm.xlu0 %6784, %v6671
        %v6786 = vpop.permute.xlu0 %6785
        %6789 = vset.pattern.permute.xlu0 0
        %6790 = vperm.xlu0 %6789, %v6672
        %v6791 = vpop.permute.xlu0 %6790
        %6794 = vset.pattern.permute.xlu0 0
        %6795 = vperm.xlu0 %6794, %v6673
        %v6796 = vpop.permute.xlu0 %6795
        %6799 = vset.pattern.permute.xlu0 0
        %6800 = vperm.xlu0 %6799, %v6674
        %v6801 = vpop.permute.xlu0 %6800
        %v6803 = vsub.f32 %v6571, %v6726
        %v6804 = vsub.f32 %v6573, %v6731
        %v6805 = vsub.f32 %v6576, %v6736
        %v6806 = vsub.f32 %v6578, %v6741
        %v6807 = vsub.f32 %v6581, %v6746
        %v6808 = vsub.f32 %v6583, %v6751
        %v6809 = vsub.f32 %v6586, %v6756
        %v6810 = vsub.f32 %v6588, %v6761
        %v6811 = vsub.f32 %v6591, %v6766
        %v6812 = vsub.f32 %v6593, %v6771
        %v6813 = vsub.f32 %v6596, %v6776
        %v6814 = vsub.f32 %v6598, %v6781
        %v6815 = vsub.f32 %v6601, %v6786
        %v6816 = vsub.f32 %v6603, %v6791
        %v6817 = vsub.f32 %v6606, %v6796
        %v6818 = vsub.f32 %v6608, %v6801
        %v6819 = vmul.f32 %v6803, 1.442695
        %v6820 = vpow.pop %v6819
        %v6821 = vmul.f32 %v6804, 1.442695
        %v6822 = vpow.pop %v6821
        %v6823 = vmul.f32 %v6805, 1.442695
        %v6824 = vpow.pop %v6823
        %v6825 = vmul.f32 %v6806, 1.442695
        %v6826 = vpow.pop %v6825
        %v6827 = vmul.f32 %v6807, 1.442695
        %v6828 = vpow.pop %v6827
        %v6829 = vmul.f32 %v6808, 1.442695
        %v6830 = vpow.pop %v6829
        %v6831 = vmul.f32 %v6809, 1.442695
        %v6832 = vpow.pop %v6831
        %v6833 = vmul.f32 %v6810, 1.442695
        %v6834 = vpow.pop %v6833
        %v6835 = vmul.f32 %v6811, 1.442695
        %v6836 = vpow.pop %v6835
        %v6837 = vmul.f32 %v6812, 1.442695
        %v6838 = vpow.pop %v6837
        %v6839 = vmul.f32 %v6813, 1.442695
        %v6840 = vpow.pop %v6839
        %v6841 = vmul.f32 %v6814, 1.442695
        %v6842 = vpow.pop %v6841
        %v6843 = vmul.f32 %v6815, 1.442695
        %v6844 = vpow.pop %v6843
        %v6845 = vmul.f32 %v6816, 1.442695
        %v6846 = vpow.pop %v6845
        %v6847 = vmul.f32 %v6817, 1.442695
        %v6848 = vpow.pop %v6847
        %v6849 = vmul.f32 %v6818, 1.442695
        %v6850 = vpow.pop %v6849
        %s6851 = scalar_lea.vmem [#allocation7], 384
        %v6852 = vld [vmem:[%s6851] sm:$0xff]
        %v6853 = vld [vmem:[%s6851 + $0x8] sm:$0xff]
        %v6854 = vld [vmem:[%s6851 + $0x10] sm:$0xff]
        %v6855 = vld [vmem:[%s6851 + $0x18] sm:$0xff]
        %v6856 = vld [vmem:[%s6851 + $0x20] sm:$0xff]
        %v6857 = vld [vmem:[%s6851 + $0x28] sm:$0xff]
        %v6858 = vld [vmem:[%s6851 + $0x30] sm:$0xff]
        %v6859 = vld [vmem:[%s6851 + $0x38] sm:$0xff]
        %v6860 = vld [vmem:[%s6851 + $0x40] sm:$0xff]
        %v6861 = vld [vmem:[%s6851 + $0x48] sm:$0xff]
        %v6862 = vld [vmem:[%s6851 + $0x50] sm:$0xff]
        %v6863 = vld [vmem:[%s6851 + $0x58] sm:$0xff]
        %v6864 = vld [vmem:[%s6851 + $0x60] sm:$0xff]
        %v6865 = vld [vmem:[%s6851 + $0x68] sm:$0xff]
        %v6866 = vld [vmem:[%s6851 + $0x70] sm:$0xff]
        %v6867 = vld [vmem:[%s6851 + $0x78] sm:$0xff]
        %v6868 = vmul.f32 %v6692, %v6852
        %v6869 = vmul.f32 %v6694, %v6853
        %v6870 = vmul.f32 %v6696, %v6854
        %v6871 = vmul.f32 %v6698, %v6855
        %v6872 = vmul.f32 %v6700, %v6856
        %v6873 = vmul.f32 %v6702, %v6857
        %v6874 = vmul.f32 %v6704, %v6858
        %v6875 = vmul.f32 %v6706, %v6859
        %v6876 = vmul.f32 %v6708, %v6860
        %v6877 = vmul.f32 %v6710, %v6861
        %v6878 = vmul.f32 %v6712, %v6862
        %v6879 = vmul.f32 %v6714, %v6863
        %v6880 = vmul.f32 %v6716, %v6864
        %v6881 = vmul.f32 %v6718, %v6865
        %v6882 = vmul.f32 %v6720, %v6866
        %v6883 = vmul.f32 %v6722, %v6867
        %6884 = vadd.xlane.f32.xlu0 %v6820
        %v6885 = vpop.xlane.xlu0 %6884
        %6886 = vadd.xlane.f32.xlu0 %v6822
        %v6887 = vpop.xlane.xlu0 %6886
        %6888 = vadd.xlane.f32.xlu0 %v6824
        %v6889 = vpop.xlane.xlu0 %6888
        %6890 = vadd.xlane.f32.xlu0 %v6826
        %v6891 = vpop.xlane.xlu0 %6890
        %6892 = vadd.xlane.f32.xlu0 %v6828
        %v6893 = vpop.xlane.xlu0 %6892
        %6894 = vadd.xlane.f32.xlu0 %v6830
        %v6895 = vpop.xlane.xlu0 %6894
        %6896 = vadd.xlane.f32.xlu0 %v6832
        %v6897 = vpop.xlane.xlu0 %6896
        %6898 = vadd.xlane.f32.xlu0 %v6834
        %v6899 = vpop.xlane.xlu0 %6898
        %6900 = vadd.xlane.f32.xlu0 %v6836
        %v6901 = vpop.xlane.xlu0 %6900
        %6902 = vadd.xlane.f32.xlu0 %v6838
        %v6903 = vpop.xlane.xlu0 %6902
        %6904 = vadd.xlane.f32.xlu0 %v6840
        %v6905 = vpop.xlane.xlu0 %6904
        %6906 = vadd.xlane.f32.xlu0 %v6842
        %v6907 = vpop.xlane.xlu0 %6906
        %6908 = vadd.xlane.f32.xlu0 %v6844
        %v6909 = vpop.xlane.xlu0 %6908
        %6910 = vadd.xlane.f32.xlu0 %v6846
        %v6911 = vpop.xlane.xlu0 %6910
        %6912 = vadd.xlane.f32.xlu0 %v6848
        %v6913 = vpop.xlane.xlu0 %6912
        %6914 = vadd.xlane.f32.xlu0 %v6850
        %v6915 = vpop.xlane.xlu0 %6914
        %v6916 = vadd.f32 %v6868, %v6885
        %v6917 = vadd.f32 %v6869, %v6887
        %v6918 = vadd.f32 %v6870, %v6889
        %v6919 = vadd.f32 %v6871, %v6891
        %v6920 = vadd.f32 %v6872, %v6893
        %v6921 = vadd.f32 %v6873, %v6895
        %v6922 = vadd.f32 %v6874, %v6897
        %v6923 = vadd.f32 %v6875, %v6899
        %v6924 = vadd.f32 %v6876, %v6901
        %v6925 = vadd.f32 %v6877, %v6903
        %v6926 = vadd.f32 %v6878, %v6905
        %v6927 = vadd.f32 %v6879, %v6907
        %v6928 = vadd.f32 %v6880, %v6909
        %v6929 = vadd.f32 %v6881, %v6911
        %v6930 = vadd.f32 %v6882, %v6913
        %v6931 = vadd.f32 %v6883, %v6915
        %6932 = vst.msk [vmem:[%s6851] sm:$0xff] %vm2004, %v6916
        %6933 = vst.msk [vmem:[%s6851 + $0x8] sm:$0xff] %vm2004, %v6917
        %6934 = vst.msk [vmem:[%s6851 + $0x10] sm:$0xff] %vm2004, %v6918
        %6935 = vst.msk [vmem:[%s6851 + $0x18] sm:$0xff] %vm2004, %v6919
        %6936 = vst.msk [vmem:[%s6851 + $0x20] sm:$0xff] %vm2004, %v6920
        %6937 = vst.msk [vmem:[%s6851 + $0x28] sm:$0xff] %vm2004, %v6921
        %6938 = vst.msk [vmem:[%s6851 + $0x30] sm:$0xff] %vm2004, %v6922
        %6939 = vst.msk [vmem:[%s6851 + $0x38] sm:$0xff] %vm2004, %v6923
        %6940 = vst.msk [vmem:[%s6851 + $0x40] sm:$0xff] %vm2004, %v6924
        %6941 = vst.msk [vmem:[%s6851 + $0x48] sm:$0xff] %vm2004, %v6925
        %6942 = vst.msk [vmem:[%s6851 + $0x50] sm:$0xff] %vm2004, %v6926
        %6943 = vst.msk [vmem:[%s6851 + $0x58] sm:$0xff] %vm2004, %v6927
        %6944 = vst.msk [vmem:[%s6851 + $0x60] sm:$0xff] %vm2004, %v6928
        %6945 = vst.msk [vmem:[%s6851 + $0x68] sm:$0xff] %vm2004, %v6929
        %6946 = vst.msk [vmem:[%s6851 + $0x70] sm:$0xff] %vm2004, %v6930
        %6947 = vst.msk [vmem:[%s6851 + $0x78] sm:$0xff] %vm2004, %v6931
        %s6948 = scalar_lea.vmem [#allocation8], 384
        %v6949 = vld [vmem:[%s6948] sm:$0xff]
        %v6950 = vld [vmem:[%s6948 + $0x8] sm:$0xff]
        %v6951 = vld [vmem:[%s6948 + $0x10] sm:$0xff]
        %v6952 = vld [vmem:[%s6948 + $0x18] sm:$0xff]
        %v6953 = vld [vmem:[%s6948 + $0x20] sm:$0xff]
        %v6954 = vld [vmem:[%s6948 + $0x28] sm:$0xff]
        %v6955 = vld [vmem:[%s6948 + $0x30] sm:$0xff]
        %v6956 = vld [vmem:[%s6948 + $0x38] sm:$0xff]
        %v6957 = vld [vmem:[%s6948 + $0x40] sm:$0xff]
        %v6958 = vld [vmem:[%s6948 + $0x48] sm:$0xff]
        %v6959 = vld [vmem:[%s6948 + $0x50] sm:$0xff]
        %v6960 = vld [vmem:[%s6948 + $0x58] sm:$0xff]
        %v6961 = vld [vmem:[%s6948 + $0x60] sm:$0xff]
        %v6962 = vld [vmem:[%s6948 + $0x68] sm:$0xff]
        %v6963 = vld [vmem:[%s6948 + $0x70] sm:$0xff]
        %v6964 = vld [vmem:[%s6948 + $0x78] sm:$0xff]
        %6966 = vset.pattern.permute.xlu0 0
        %6967 = vperm.xlu0 %6966, %v6692
        %v6968 = vpop.permute.xlu0 %6967
        %6971 = vset.pattern.permute.xlu0 0
        %6972 = vperm.xlu0 %6971, %v6694
        %v6973 = vpop.permute.xlu0 %6972
        %6976 = vset.pattern.permute.xlu0 0
        %6977 = vperm.xlu0 %6976, %v6696
        %v6978 = vpop.permute.xlu0 %6977
        %6981 = vset.pattern.permute.xlu0 0
        %6982 = vperm.xlu0 %6981, %v6698
        %v6983 = vpop.permute.xlu0 %6982
        %6986 = vset.pattern.permute.xlu0 0
        %6987 = vperm.xlu0 %6986, %v6700
        %v6988 = vpop.permute.xlu0 %6987
        %6991 = vset.pattern.permute.xlu0 0
        %6992 = vperm.xlu0 %6991, %v6702
        %v6993 = vpop.permute.xlu0 %6992
        %6996 = vset.pattern.permute.xlu0 0
        %6997 = vperm.xlu0 %6996, %v6704
        %v6998 = vpop.permute.xlu0 %6997
        %7001 = vset.pattern.permute.xlu0 0
        %7002 = vperm.xlu0 %7001, %v6706
        %v7003 = vpop.permute.xlu0 %7002
        %7006 = vset.pattern.permute.xlu0 0
        %7007 = vperm.xlu0 %7006, %v6708
        %v7008 = vpop.permute.xlu0 %7007
        %7011 = vset.pattern.permute.xlu0 0
        %7012 = vperm.xlu0 %7011, %v6710
        %v7013 = vpop.permute.xlu0 %7012
        %7016 = vset.pattern.permute.xlu0 0
        %7017 = vperm.xlu0 %7016, %v6712
        %v7018 = vpop.permute.xlu0 %7017
        %7021 = vset.pattern.permute.xlu0 0
        %7022 = vperm.xlu0 %7021, %v6714
        %v7023 = vpop.permute.xlu0 %7022
        %7026 = vset.pattern.permute.xlu0 0
        %7027 = vperm.xlu0 %7026, %v6716
        %v7028 = vpop.permute.xlu0 %7027
        %7031 = vset.pattern.permute.xlu0 0
        %7032 = vperm.xlu0 %7031, %v6718
        %v7033 = vpop.permute.xlu0 %7032
        %7036 = vset.pattern.permute.xlu0 0
        %7037 = vperm.xlu0 %7036, %v6720
        %v7038 = vpop.permute.xlu0 %7037
        %7041 = vset.pattern.permute.xlu0 0
        %7042 = vperm.xlu0 %7041, %v6722
        %v7043 = vpop.permute.xlu0 %7042
        %v7045 = vmul.f32 %v6968, %v6949
        %v7046 = vmul.f32 %v6973, %v6950
        %v7047 = vmul.f32 %v6978, %v6951
        %v7048 = vmul.f32 %v6983, %v6952
        %v7049 = vmul.f32 %v6988, %v6953
        %v7050 = vmul.f32 %v6993, %v6954
        %v7051 = vmul.f32 %v6998, %v6955
        %v7052 = vmul.f32 %v7003, %v6956
        %v7053 = vmul.f32 %v7008, %v6957
        %v7054 = vmul.f32 %v7013, %v6958
        %v7055 = vmul.f32 %v7018, %v6959
        %v7056 = vmul.f32 %v7023, %v6960
        %v7057 = vmul.f32 %v7028, %v6961
        %v7058 = vmul.f32 %v7033, %v6962
        %v7059 = vmul.f32 %v7038, %v6963
        %v7060 = vmul.f32 %v7043, %v6964
        %v7061 = vpack.c.bf16 %v6822, %v6820
        %v7062 = vpack.c.bf16 %v6826, %v6824
        %v7063 = vpack.c.bf16 %v6830, %v6828
        %v7064 = vpack.c.bf16 %v6834, %v6832
        %v7065 = vpack.c.bf16 %v6838, %v6836
        %v7066 = vpack.c.bf16 %v6842, %v6840
        %v7067 = vpack.c.bf16 %v6846, %v6844
        %v7068 = vpack.c.bf16 %v6850, %v6848
        %7069 = vmatpush.bf16.msra.mxu0 %v6375
        %7070 = vmatpush.bf16.msra.mxu0 %v6373
        %7071 = vmatpush.bf16.msra.mxu0 %v6371
        %7072 = vmatpush.bf16.msra.mxu0 %v6369
        %7073 = vmatpush.bf16.msra.mxu0 %v6367
        %7074 = vmatpush.bf16.msra.mxu0 %v6365
        %7075 = vmatpush.bf16.msra.mxu0 %v6363
        %7076 = vmatpush.bf16.msra.mxu0 %v6361
        %7077 = vmatmul.bf16.gmra.mxu0 %v7061
        %v7078 = vpop.f32.mrf.mxu0
        %v7079 = vadd.f32 0.0, %v7078
        %v7080 = vpop.f32.mrf.mxu0
        %v7081 = vadd.f32 0.0, %v7080
        %7082 = vmatmul.bf16.gmra.mxu0 %v7062
        %v7083 = vpop.f32.mrf.mxu0
        %v7084 = vadd.f32 0.0, %v7083
        %v7085 = vpop.f32.mrf.mxu0
        %v7086 = vadd.f32 0.0, %v7085
        %7087 = vmatmul.bf16.gmra.mxu0 %v7063
        %v7088 = vpop.f32.mrf.mxu0
        %v7089 = vadd.f32 0.0, %v7088
        %v7090 = vpop.f32.mrf.mxu0
        %v7091 = vadd.f32 0.0, %v7090
        %7092 = vmatmul.bf16.gmra.mxu0 %v7064
        %v7093 = vpop.f32.mrf.mxu0
        %v7094 = vadd.f32 0.0, %v7093
        %v7095 = vpop.f32.mrf.mxu0
        %v7096 = vadd.f32 0.0, %v7095
        %7097 = vmatmul.bf16.gmra.mxu0 %v7065
        %v7098 = vpop.f32.mrf.mxu0
        %v7099 = vadd.f32 0.0, %v7098
        %v7100 = vpop.f32.mrf.mxu0
        %v7101 = vadd.f32 0.0, %v7100
        %7102 = vmatmul.bf16.gmra.mxu0 %v7066
        %v7103 = vpop.f32.mrf.mxu0
        %v7104 = vadd.f32 0.0, %v7103
        %v7105 = vpop.f32.mrf.mxu0
        %v7106 = vadd.f32 0.0, %v7105
        %7107 = vmatmul.bf16.gmra.mxu0 %v7067
        %v7108 = vpop.f32.mrf.mxu0
        %v7109 = vadd.f32 0.0, %v7108
        %v7110 = vpop.f32.mrf.mxu0
        %v7111 = vadd.f32 0.0, %v7110
        %7112 = vmatmul.bf16.gmra.mxu0 %v7068
        %v7113 = vpop.f32.mrf.mxu0
        %v7114 = vadd.f32 0.0, %v7113
        %v7115 = vpop.f32.mrf.mxu0
        %v7116 = vadd.f32 0.0, %v7115
        %7117 = vdwg.mxu0
        %v7118 = vadd.f32 %v7045, %v7079
        %v7119 = vadd.f32 %v7046, %v7081
        %v7120 = vadd.f32 %v7047, %v7084
        %v7121 = vadd.f32 %v7048, %v7086
        %v7122 = vadd.f32 %v7049, %v7089
        %v7123 = vadd.f32 %v7050, %v7091
        %v7124 = vadd.f32 %v7051, %v7094
        %v7125 = vadd.f32 %v7052, %v7096
        %v7126 = vadd.f32 %v7053, %v7099
        %v7127 = vadd.f32 %v7054, %v7101
        %v7128 = vadd.f32 %v7055, %v7104
        %v7129 = vadd.f32 %v7056, %v7106
        %v7130 = vadd.f32 %v7057, %v7109
        %v7131 = vadd.f32 %v7058, %v7111
        %v7132 = vadd.f32 %v7059, %v7114
        %v7133 = vadd.f32 %v7060, %v7116
        %7134 = vst.msk [vmem:[%s6948] sm:$0xff] %vm1586, %v7118
        %7135 = vst.msk [vmem:[%s6948 + $0x8] sm:$0xff] %vm1586, %v7119
        %7136 = vst.msk [vmem:[%s6948 + $0x10] sm:$0xff] %vm1586, %v7120
        %7137 = vst.msk [vmem:[%s6948 + $0x18] sm:$0xff] %vm1586, %v7121
        %7138 = vst.msk [vmem:[%s6948 + $0x20] sm:$0xff] %vm1586, %v7122
        %7139 = vst.msk [vmem:[%s6948 + $0x28] sm:$0xff] %vm1586, %v7123
        %7140 = vst.msk [vmem:[%s6948 + $0x30] sm:$0xff] %vm1586, %v7124
        %7141 = vst.msk [vmem:[%s6948 + $0x38] sm:$0xff] %vm1586, %v7125
        %7142 = vst.msk [vmem:[%s6948 + $0x40] sm:$0xff] %vm1586, %v7126
        %7143 = vst.msk [vmem:[%s6948 + $0x48] sm:$0xff] %vm1586, %v7127
        %7144 = vst.msk [vmem:[%s6948 + $0x50] sm:$0xff] %vm1586, %v7128
        %7145 = vst.msk [vmem:[%s6948 + $0x58] sm:$0xff] %vm1586, %v7129
        %7146 = vst.msk [vmem:[%s6948 + $0x60] sm:$0xff] %vm1586, %v7130
        %7147 = vst.msk [vmem:[%s6948 + $0x68] sm:$0xff] %vm1586, %v7131
        %7148 = vst.msk [vmem:[%s6948 + $0x70] sm:$0xff] %vm1586, %v7132
        %7149 = vst.msk [vmem:[%s6948 + $0x78] sm:$0xff] %vm1586, %v7133
        %7150 = vst.msk [vmem:[%s6610] sm:$0xff] %vm2004, %v6659
        %7151 = vst.msk [vmem:[%s6610 + $0x8] sm:$0xff] %vm2004, %v6660
        %7152 = vst.msk [vmem:[%s6610 + $0x10] sm:$0xff] %vm2004, %v6661
        %7153 = vst.msk [vmem:[%s6610 + $0x18] sm:$0xff] %vm2004, %v6662
        %7154 = vst.msk [vmem:[%s6610 + $0x20] sm:$0xff] %vm2004, %v6663
        %7155 = vst.msk [vmem:[%s6610 + $0x28] sm:$0xff] %vm2004, %v6664
        %7156 = vst.msk [vmem:[%s6610 + $0x30] sm:$0xff] %vm2004, %v6665
        %7157 = vst.msk [vmem:[%s6610 + $0x38] sm:$0xff] %vm2004, %v6666
        %7158 = vst.msk [vmem:[%s6610 + $0x40] sm:$0xff] %vm2004, %v6667
        %7159 = vst.msk [vmem:[%s6610 + $0x48] sm:$0xff] %vm2004, %v6668
        %7160 = vst.msk [vmem:[%s6610 + $0x50] sm:$0xff] %vm2004, %v6669
        %7161 = vst.msk [vmem:[%s6610 + $0x58] sm:$0xff] %vm2004, %v6670
        %7162 = vst.msk [vmem:[%s6610 + $0x60] sm:$0xff] %vm2004, %v6671
        %7163 = vst.msk [vmem:[%s6610 + $0x68] sm:$0xff] %vm2004, %v6672
        %7164 = vst.msk [vmem:[%s6610 + $0x70] sm:$0xff] %vm2004, %v6673
        %7165 = vst.msk [vmem:[%s6610 + $0x78] sm:$0xff] %vm2004, %v6674
        // Predicated region
        $region69: #{tpu_custom_call.1} parent=47 // pred_check
          %p7166 = pneg %p407
        $region70: #{tpu_custom_call.1} parent=47 // pred_check_branch
          %7168 = sbr.rel (%p7166) target = $region72
        $region71: #{tpu_custom_call.1} parent=47 // pred_region
          %s7169 = sld [smem:[#allocation9]]
          %v7170 = vld [vmem:[#allocation5] sm:$0xff]
          %v7171 = vld [vmem:[#allocation5 + $0x8] sm:$0xff]
          %v7172 = vld [vmem:[#allocation5 + $0x10] sm:$0xff]
          %v7173 = vld [vmem:[#allocation5 + $0x18] sm:$0xff]
          %v7174 = vld [vmem:[#allocation5 + $0x20] sm:$0xff]
          %v7175 = vld [vmem:[#allocation5 + $0x28] sm:$0xff]
          %v7176 = vld [vmem:[#allocation5 + $0x30] sm:$0xff]
          %v7177 = vld [vmem:[#allocation5 + $0x38] sm:$0xff]
          %v7178 = vld [vmem:[#allocation5 + $0x40] sm:$0xff]
          %v7179 = vld [vmem:[#allocation5 + $0x48] sm:$0xff]
          %v7180 = vld [vmem:[#allocation5 + $0x50] sm:$0xff]
          %v7181 = vld [vmem:[#allocation5 + $0x58] sm:$0xff]
          %v7182 = vld [vmem:[#allocation5 + $0x60] sm:$0xff]
          %v7183 = vld [vmem:[#allocation5 + $0x68] sm:$0xff]
          %v7184 = vld [vmem:[#allocation5 + $0x70] sm:$0xff]
          %v7185 = vld [vmem:[#allocation5 + $0x78] sm:$0xff]
          %v7186 = vld [vmem:[#allocation4] sm:$0xff]
          %v7187 = vld [vmem:[#allocation4 + $0x8] sm:$0xff]
          %v7188 = vld [vmem:[#allocation4 + $0x10] sm:$0xff]
          %v7189 = vld [vmem:[#allocation4 + $0x18] sm:$0xff]
          %v7190 = vld [vmem:[#allocation4 + $0x20] sm:$0xff]
          %v7191 = vld [vmem:[#allocation4 + $0x28] sm:$0xff]
          %v7192 = vld [vmem:[#allocation4 + $0x30] sm:$0xff]
          %v7193 = vld [vmem:[#allocation4 + $0x38] sm:$0xff]
          %v7194 = vld [vmem:[#allocation4 + $0x40] sm:$0xff]
          %v7195 = vld [vmem:[#allocation4 + $0x48] sm:$0xff]
          %v7196 = vld [vmem:[#allocation4 + $0x50] sm:$0xff]
          %v7197 = vld [vmem:[#allocation4 + $0x58] sm:$0xff]
          %v7198 = vld [vmem:[#allocation4 + $0x60] sm:$0xff]
          %v7199 = vld [vmem:[#allocation4 + $0x68] sm:$0xff]
          %v7200 = vld [vmem:[#allocation4 + $0x70] sm:$0xff]
          %v7201 = vld [vmem:[#allocation4 + $0x78] sm:$0xff]
          %v7202 = vrcp.pop %v7186
          %v7203 = vrcp.pop %v7187
          %v7204 = vrcp.pop %v7188
          %v7205 = vrcp.pop %v7189
          %v7206 = vrcp.pop %v7190
          %v7207 = vrcp.pop %v7191
          %v7208 = vrcp.pop %v7192
          %v7209 = vrcp.pop %v7193
          %v7210 = vrcp.pop %v7194
          %v7211 = vrcp.pop %v7195
          %v7212 = vrcp.pop %v7196
          %v7213 = vrcp.pop %v7197
          %v7214 = vrcp.pop %v7198
          %v7215 = vrcp.pop %v7199
          %v7216 = vrcp.pop %v7200
          %v7217 = vrcp.pop %v7201
          %7219 = vset.pattern.permute.xlu0 0
          %7220 = vperm.xlu0 %7219, %v7202
          %v7221 = vpop.permute.xlu0 %7220
          %7224 = vset.pattern.permute.xlu0 0
          %7225 = vperm.xlu0 %7224, %v7203
          %v7226 = vpop.permute.xlu0 %7225
          %7229 = vset.pattern.permute.xlu0 0
          %7230 = vperm.xlu0 %7229, %v7204
          %v7231 = vpop.permute.xlu0 %7230
          %7234 = vset.pattern.permute.xlu0 0
          %7235 = vperm.xlu0 %7234, %v7205
          %v7236 = vpop.permute.xlu0 %7235
          %7239 = vset.pattern.permute.xlu0 0
          %7240 = vperm.xlu0 %7239, %v7206
          %v7241 = vpop.permute.xlu0 %7240
          %7244 = vset.pattern.permute.xlu0 0
          %7245 = vperm.xlu0 %7244, %v7207
          %v7246 = vpop.permute.xlu0 %7245
          %7249 = vset.pattern.permute.xlu0 0
          %7250 = vperm.xlu0 %7249, %v7208
          %v7251 = vpop.permute.xlu0 %7250
          %7254 = vset.pattern.permute.xlu0 0
          %7255 = vperm.xlu0 %7254, %v7209
          %v7256 = vpop.permute.xlu0 %7255
          %7259 = vset.pattern.permute.xlu0 0
          %7260 = vperm.xlu0 %7259, %v7210
          %v7261 = vpop.permute.xlu0 %7260
          %7264 = vset.pattern.permute.xlu0 0
          %7265 = vperm.xlu0 %7264, %v7211
          %v7266 = vpop.permute.xlu0 %7265
          %7269 = vset.pattern.permute.xlu0 0
          %7270 = vperm.xlu0 %7269, %v7212
          %v7271 = vpop.permute.xlu0 %7270
          %7274 = vset.pattern.permute.xlu0 0
          %7275 = vperm.xlu0 %7274, %v7213
          %v7276 = vpop.permute.xlu0 %7275
          %7279 = vset.pattern.permute.xlu0 0
          %7280 = vperm.xlu0 %7279, %v7214
          %v7281 = vpop.permute.xlu0 %7280
          %7284 = vset.pattern.permute.xlu0 0
          %7285 = vperm.xlu0 %7284, %v7215
          %v7286 = vpop.permute.xlu0 %7285
          %7289 = vset.pattern.permute.xlu0 0
          %7290 = vperm.xlu0 %7289, %v7216
          %v7291 = vpop.permute.xlu0 %7290
          %7294 = vset.pattern.permute.xlu0 0
          %7295 = vperm.xlu0 %7294, %v7217
          %v7296 = vpop.permute.xlu0 %7295
          %v7298 = vmul.f32 %v7170, %v7221
          %v7299 = vmul.f32 %v7171, %v7226
          %v7300 = vmul.f32 %v7172, %v7231
          %v7301 = vmul.f32 %v7173, %v7236
          %v7302 = vmul.f32 %v7174, %v7241
          %v7303 = vmul.f32 %v7175, %v7246
          %v7304 = vmul.f32 %v7176, %v7251
          %v7305 = vmul.f32 %v7177, %v7256
          %v7306 = vmul.f32 %v7178, %v7261
          %v7307 = vmul.f32 %v7179, %v7266
          %v7308 = vmul.f32 %v7180, %v7271
          %v7309 = vmul.f32 %v7181, %v7276
          %v7310 = vmul.f32 %v7182, %v7281
          %v7311 = vmul.f32 %v7183, %v7286
          %v7312 = vmul.f32 %v7184, %v7291
          %v7313 = vmul.f32 %v7185, %v7296
          %v7314 = vld [vmem:[#allocation8] sm:$0xff]
          %v7315 = vld [vmem:[#allocation8 + $0x8] sm:$0xff]
          %v7316 = vld [vmem:[#allocation8 + $0x10] sm:$0xff]
          %v7317 = vld [vmem:[#allocation8 + $0x18] sm:$0xff]
          %v7318 = vld [vmem:[#allocation8 + $0x20] sm:$0xff]
          %v7319 = vld [vmem:[#allocation8 + $0x28] sm:$0xff]
          %v7320 = vld [vmem:[#allocation8 + $0x30] sm:$0xff]
          %v7321 = vld [vmem:[#allocation8 + $0x38] sm:$0xff]
          %v7322 = vld [vmem:[#allocation8 + $0x40] sm:$0xff]
          %v7323 = vld [vmem:[#allocation8 + $0x48] sm:$0xff]
          %v7324 = vld [vmem:[#allocation8 + $0x50] sm:$0xff]
          %v7325 = vld [vmem:[#allocation8 + $0x58] sm:$0xff]
          %v7326 = vld [vmem:[#allocation8 + $0x60] sm:$0xff]
          %v7327 = vld [vmem:[#allocation8 + $0x68] sm:$0xff]
          %v7328 = vld [vmem:[#allocation8 + $0x70] sm:$0xff]
          %v7329 = vld [vmem:[#allocation8 + $0x78] sm:$0xff]
          %v7330 = vld [vmem:[#allocation7] sm:$0xff]
          %v7331 = vld [vmem:[#allocation7 + $0x8] sm:$0xff]
          %v7332 = vld [vmem:[#allocation7 + $0x10] sm:$0xff]
          %v7333 = vld [vmem:[#allocation7 + $0x18] sm:$0xff]
          %v7334 = vld [vmem:[#allocation7 + $0x20] sm:$0xff]
          %v7335 = vld [vmem:[#allocation7 + $0x28] sm:$0xff]
          %v7336 = vld [vmem:[#allocation7 + $0x30] sm:$0xff]
          %v7337 = vld [vmem:[#allocation7 + $0x38] sm:$0xff]
          %v7338 = vld [vmem:[#allocation7 + $0x40] sm:$0xff]
          %v7339 = vld [vmem:[#allocation7 + $0x48] sm:$0xff]
          %v7340 = vld [vmem:[#allocation7 + $0x50] sm:$0xff]
          %v7341 = vld [vmem:[#allocation7 + $0x58] sm:$0xff]
          %v7342 = vld [vmem:[#allocation7 + $0x60] sm:$0xff]
          %v7343 = vld [vmem:[#allocation7 + $0x68] sm:$0xff]
          %v7344 = vld [vmem:[#allocation7 + $0x70] sm:$0xff]
          %v7345 = vld [vmem:[#allocation7 + $0x78] sm:$0xff]
          %v7346 = vrcp.pop %v7330
          %v7347 = vrcp.pop %v7331
          %v7348 = vrcp.pop %v7332
          %v7349 = vrcp.pop %v7333
          %v7350 = vrcp.pop %v7334
          %v7351 = vrcp.pop %v7335
          %v7352 = vrcp.pop %v7336
          %v7353 = vrcp.pop %v7337
          %v7354 = vrcp.pop %v7338
          %v7355 = vrcp.pop %v7339
          %v7356 = vrcp.pop %v7340
          %v7357 = vrcp.pop %v7341
          %v7358 = vrcp.pop %v7342
          %v7359 = vrcp.pop %v7343
          %v7360 = vrcp.pop %v7344
          %v7361 = vrcp.pop %v7345
          %7363 = vset.pattern.permute.xlu0 0
          %7364 = vperm.xlu0 %7363, %v7346
          %v7365 = vpop.permute.xlu0 %7364
          %7368 = vset.pattern.permute.xlu0 0
          %7369 = vperm.xlu0 %7368, %v7347
          %v7370 = vpop.permute.xlu0 %7369
          %7373 = vset.pattern.permute.xlu0 0
          %7374 = vperm.xlu0 %7373, %v7348
          %v7375 = vpop.permute.xlu0 %7374
          %7378 = vset.pattern.permute.xlu0 0
          %7379 = vperm.xlu0 %7378, %v7349
          %v7380 = vpop.permute.xlu0 %7379
          %7383 = vset.pattern.permute.xlu0 0
          %7384 = vperm.xlu0 %7383, %v7350
          %v7385 = vpop.permute.xlu0 %7384
          %7388 = vset.pattern.permute.xlu0 0
          %7389 = vperm.xlu0 %7388, %v7351
          %v7390 = vpop.permute.xlu0 %7389
          %7393 = vset.pattern.permute.xlu0 0
          %7394 = vperm.xlu0 %7393, %v7352
          %v7395 = vpop.permute.xlu0 %7394
          %7398 = vset.pattern.permute.xlu0 0
          %7399 = vperm.xlu0 %7398, %v7353
          %v7400 = vpop.permute.xlu0 %7399
          %7403 = vset.pattern.permute.xlu0 0
          %7404 = vperm.xlu0 %7403, %v7354
          %v7405 = vpop.permute.xlu0 %7404
          %7408 = vset.pattern.permute.xlu0 0
          %7409 = vperm.xlu0 %7408, %v7355
          %v7410 = vpop.permute.xlu0 %7409
          %7413 = vset.pattern.permute.xlu0 0
          %7414 = vperm.xlu0 %7413, %v7356
          %v7415 = vpop.permute.xlu0 %7414
          %7418 = vset.pattern.permute.xlu0 0
          %7419 = vperm.xlu0 %7418, %v7357
          %v7420 = vpop.permute.xlu0 %7419
          %7423 = vset.pattern.permute.xlu0 0
          %7424 = vperm.xlu0 %7423, %v7358
          %v7425 = vpop.permute.xlu0 %7424
          %7428 = vset.pattern.permute.xlu0 0
          %7429 = vperm.xlu0 %7428, %v7359
          %v7430 = vpop.permute.xlu0 %7429
          %7433 = vset.pattern.permute.xlu0 0
          %7434 = vperm.xlu0 %7433, %v7360
          %v7435 = vpop.permute.xlu0 %7434
          %7438 = vset.pattern.permute.xlu0 0
          %7439 = vperm.xlu0 %7438, %v7361
          %v7440 = vpop.permute.xlu0 %7439
          %v7442 = vmul.f32 %v7314, %v7365
          %v7443 = vmul.f32 %v7315, %v7370
          %v7444 = vmul.f32 %v7316, %v7375
          %v7445 = vmul.f32 %v7317, %v7380
          %v7446 = vmul.f32 %v7318, %v7385
          %v7447 = vmul.f32 %v7319, %v7390
          %v7448 = vmul.f32 %v7320, %v7395
          %v7449 = vmul.f32 %v7321, %v7400
          %v7450 = vmul.f32 %v7322, %v7405
          %v7451 = vmul.f32 %v7323, %v7410
          %v7452 = vmul.f32 %v7324, %v7415
          %v7453 = vmul.f32 %v7325, %v7420
          %v7454 = vmul.f32 %v7326, %v7425
          %v7455 = vmul.f32 %v7327, %v7430
          %v7456 = vmul.f32 %v7328, %v7435
          %v7457 = vmul.f32 %v7329, %v7440
          %v7458 = vstv %s7169
          %v7459 = vmul.f32 %v7458, %v7442
          %v7460 = vmul.f32 %v7458, %v7443
          %v7461 = vmul.f32 %v7458, %v7444
          %v7462 = vmul.f32 %v7458, %v7445
          %v7463 = vmul.f32 %v7458, %v7446
          %v7464 = vmul.f32 %v7458, %v7447
          %v7465 = vmul.f32 %v7458, %v7448
          %v7466 = vmul.f32 %v7458, %v7449
          %v7467 = vmul.f32 %v7458, %v7450
          %v7468 = vmul.f32 %v7458, %v7451
          %v7469 = vmul.f32 %v7458, %v7452
          %v7470 = vmul.f32 %v7458, %v7453
          %v7471 = vmul.f32 %v7458, %v7454
          %v7472 = vmul.f32 %v7458, %v7455
          %v7473 = vmul.f32 %v7458, %v7456
          %v7474 = vmul.f32 %v7458, %v7457
          %v7475 = vsub.f32 %v7298, %v7459
          %v7476 = vsub.f32 %v7299, %v7460
          %v7477 = vsub.f32 %v7300, %v7461
          %v7478 = vsub.f32 %v7301, %v7462
          %v7479 = vsub.f32 %v7302, %v7463
          %v7480 = vsub.f32 %v7303, %v7464
          %v7481 = vsub.f32 %v7304, %v7465
          %v7482 = vsub.f32 %v7305, %v7466
          %v7483 = vsub.f32 %v7306, %v7467
          %v7484 = vsub.f32 %v7307, %v7468
          %v7485 = vsub.f32 %v7308, %v7469
          %v7486 = vsub.f32 %v7309, %v7470
          %v7487 = vsub.f32 %v7310, %v7471
          %v7488 = vsub.f32 %v7311, %v7472
          %v7489 = vsub.f32 %v7312, %v7473
          %v7490 = vsub.f32 %v7313, %v7474
          %7491 = vst.msk [vmem:[%s403] sm:$0xff] %vm1586, %v7475
          %7492 = vst.msk [vmem:[%s403 + $0x8] sm:$0xff] %vm1586, %v7476
          %7493 = vst.msk [vmem:[%s403 + $0x10] sm:$0xff] %vm1586, %v7477
          %7494 = vst.msk [vmem:[%s403 + $0x18] sm:$0xff] %vm1586, %v7478
          %7495 = vst.msk [vmem:[%s403 + $0x20] sm:$0xff] %vm1586, %v7479
          %7496 = vst.msk [vmem:[%s403 + $0x28] sm:$0xff] %vm1586, %v7480
          %7497 = vst.msk [vmem:[%s403 + $0x30] sm:$0xff] %vm1586, %v7481
          %7498 = vst.msk [vmem:[%s403 + $0x38] sm:$0xff] %vm1586, %v7482
          %7499 = vst.msk [vmem:[%s403 + $0x40] sm:$0xff] %vm1586, %v7483
          %7500 = vst.msk [vmem:[%s403 + $0x48] sm:$0xff] %vm1586, %v7484
          %7501 = vst.msk [vmem:[%s403 + $0x50] sm:$0xff] %vm1586, %v7485
          %7502 = vst.msk [vmem:[%s403 + $0x58] sm:$0xff] %vm1586, %v7486
          %7503 = vst.msk [vmem:[%s403 + $0x60] sm:$0xff] %vm1586, %v7487
          %7504 = vst.msk [vmem:[%s403 + $0x68] sm:$0xff] %vm1586, %v7488
          %7505 = vst.msk [vmem:[%s403 + $0x70] sm:$0xff] %vm1586, %v7489
          %7506 = vst.msk [vmem:[%s403 + $0x78] sm:$0xff] %vm1586, %v7490
          %v7507 = vld [vmem:[%s3451] sm:$0xff]
          %v7508 = vld [vmem:[%s3451 + $0x8] sm:$0xff]
          %v7509 = vld [vmem:[%s3451 + $0x10] sm:$0xff]
          %v7510 = vld [vmem:[%s3451 + $0x18] sm:$0xff]
          %v7511 = vld [vmem:[%s3451 + $0x20] sm:$0xff]
          %v7512 = vld [vmem:[%s3451 + $0x28] sm:$0xff]
          %v7513 = vld [vmem:[%s3451 + $0x30] sm:$0xff]
          %v7514 = vld [vmem:[%s3451 + $0x38] sm:$0xff]
          %v7515 = vld [vmem:[%s3451 + $0x40] sm:$0xff]
          %v7516 = vld [vmem:[%s3451 + $0x48] sm:$0xff]
          %v7517 = vld [vmem:[%s3451 + $0x50] sm:$0xff]
          %v7518 = vld [vmem:[%s3451 + $0x58] sm:$0xff]
          %v7519 = vld [vmem:[%s3451 + $0x60] sm:$0xff]
          %v7520 = vld [vmem:[%s3451 + $0x68] sm:$0xff]
          %v7521 = vld [vmem:[%s3451 + $0x70] sm:$0xff]
          %v7522 = vld [vmem:[%s3451 + $0x78] sm:$0xff]
          %v7523 = vld [vmem:[%s3354] sm:$0xff]
          %v7524 = vld [vmem:[%s3354 + $0x8] sm:$0xff]
          %v7525 = vld [vmem:[%s3354 + $0x10] sm:$0xff]
          %v7526 = vld [vmem:[%s3354 + $0x18] sm:$0xff]
          %v7527 = vld [vmem:[%s3354 + $0x20] sm:$0xff]
          %v7528 = vld [vmem:[%s3354 + $0x28] sm:$0xff]
          %v7529 = vld [vmem:[%s3354 + $0x30] sm:$0xff]
          %v7530 = vld [vmem:[%s3354 + $0x38] sm:$0xff]
          %v7531 = vld [vmem:[%s3354 + $0x40] sm:$0xff]
          %v7532 = vld [vmem:[%s3354 + $0x48] sm:$0xff]
          %v7533 = vld [vmem:[%s3354 + $0x50] sm:$0xff]
          %v7534 = vld [vmem:[%s3354 + $0x58] sm:$0xff]
          %v7535 = vld [vmem:[%s3354 + $0x60] sm:$0xff]
          %v7536 = vld [vmem:[%s3354 + $0x68] sm:$0xff]
          %v7537 = vld [vmem:[%s3354 + $0x70] sm:$0xff]
          %v7538 = vld [vmem:[%s3354 + $0x78] sm:$0xff]
          %v7539 = vrcp.pop %v7523
          %v7540 = vrcp.pop %v7524
          %v7541 = vrcp.pop %v7525
          %v7542 = vrcp.pop %v7526
          %v7543 = vrcp.pop %v7527
          %v7544 = vrcp.pop %v7528
          %v7545 = vrcp.pop %v7529
          %v7546 = vrcp.pop %v7530
          %v7547 = vrcp.pop %v7531
          %v7548 = vrcp.pop %v7532
          %v7549 = vrcp.pop %v7533
          %v7550 = vrcp.pop %v7534
          %v7551 = vrcp.pop %v7535
          %v7552 = vrcp.pop %v7536
          %v7553 = vrcp.pop %v7537
          %v7554 = vrcp.pop %v7538
          %7556 = vset.pattern.permute.xlu0 0
          %7557 = vperm.xlu0 %7556, %v7539
          %v7558 = vpop.permute.xlu0 %7557
          %7561 = vset.pattern.permute.xlu0 0
          %7562 = vperm.xlu0 %7561, %v7540
          %v7563 = vpop.permute.xlu0 %7562
          %7566 = vset.pattern.permute.xlu0 0
          %7567 = vperm.xlu0 %7566, %v7541
          %v7568 = vpop.permute.xlu0 %7567
          %7571 = vset.pattern.permute.xlu0 0
          %7572 = vperm.xlu0 %7571, %v7542
          %v7573 = vpop.permute.xlu0 %7572
          %7576 = vset.pattern.permute.xlu0 0
          %7577 = vperm.xlu0 %7576, %v7543
          %v7578 = vpop.permute.xlu0 %7577
          %7581 = vset.pattern.permute.xlu0 0
          %7582 = vperm.xlu0 %7581, %v7544
          %v7583 = vpop.permute.xlu0 %7582
          %7586 = vset.pattern.permute.xlu0 0
          %7587 = vperm.xlu0 %7586, %v7545
          %v7588 = vpop.permute.xlu0 %7587
          %7591 = vset.pattern.permute.xlu0 0
          %7592 = vperm.xlu0 %7591, %v7546
          %v7593 = vpop.permute.xlu0 %7592
          %7596 = vset.pattern.permute.xlu0 0
          %7597 = vperm.xlu0 %7596, %v7547
          %v7598 = vpop.permute.xlu0 %7597
          %7601 = vset.pattern.permute.xlu0 0
          %7602 = vperm.xlu0 %7601, %v7548
          %v7603 = vpop.permute.xlu0 %7602
          %7606 = vset.pattern.permute.xlu0 0
          %7607 = vperm.xlu0 %7606, %v7549
          %v7608 = vpop.permute.xlu0 %7607
          %7611 = vset.pattern.permute.xlu0 0
          %7612 = vperm.xlu0 %7611, %v7550
          %v7613 = vpop.permute.xlu0 %7612
          %7616 = vset.pattern.permute.xlu0 0
          %7617 = vperm.xlu0 %7616, %v7551
          %v7618 = vpop.permute.xlu0 %7617
          %7621 = vset.pattern.permute.xlu0 0
          %7622 = vperm.xlu0 %7621, %v7552
          %v7623 = vpop.permute.xlu0 %7622
          %7626 = vset.pattern.permute.xlu0 0
          %7627 = vperm.xlu0 %7626, %v7553
          %v7628 = vpop.permute.xlu0 %7627
          %7631 = vset.pattern.permute.xlu0 0
          %7632 = vperm.xlu0 %7631, %v7554
          %v7633 = vpop.permute.xlu0 %7632
          %v7635 = vmul.f32 %v7507, %v7558
          %v7636 = vmul.f32 %v7508, %v7563
          %v7637 = vmul.f32 %v7509, %v7568
          %v7638 = vmul.f32 %v7510, %v7573
          %v7639 = vmul.f32 %v7511, %v7578
          %v7640 = vmul.f32 %v7512, %v7583
          %v7641 = vmul.f32 %v7513, %v7588
          %v7642 = vmul.f32 %v7514, %v7593
          %v7643 = vmul.f32 %v7515, %v7598
          %v7644 = vmul.f32 %v7516, %v7603
          %v7645 = vmul.f32 %v7517, %v7608
          %v7646 = vmul.f32 %v7518, %v7613
          %v7647 = vmul.f32 %v7519, %v7618
          %v7648 = vmul.f32 %v7520, %v7623
          %v7649 = vmul.f32 %v7521, %v7628
          %v7650 = vmul.f32 %v7522, %v7633
          %v7651 = vld [vmem:[%s4160] sm:$0xff]
          %v7652 = vld [vmem:[%s4160 + $0x8] sm:$0xff]
          %v7653 = vld [vmem:[%s4160 + $0x10] sm:$0xff]
          %v7654 = vld [vmem:[%s4160 + $0x18] sm:$0xff]
          %v7655 = vld [vmem:[%s4160 + $0x20] sm:$0xff]
          %v7656 = vld [vmem:[%s4160 + $0x28] sm:$0xff]
          %v7657 = vld [vmem:[%s4160 + $0x30] sm:$0xff]
          %v7658 = vld [vmem:[%s4160 + $0x38] sm:$0xff]
          %v7659 = vld [vmem:[%s4160 + $0x40] sm:$0xff]
          %v7660 = vld [vmem:[%s4160 + $0x48] sm:$0xff]
          %v7661 = vld [vmem:[%s4160 + $0x50] sm:$0xff]
          %v7662 = vld [vmem:[%s4160 + $0x58] sm:$0xff]
          %v7663 = vld [vmem:[%s4160 + $0x60] sm:$0xff]
          %v7664 = vld [vmem:[%s4160 + $0x68] sm:$0xff]
          %v7665 = vld [vmem:[%s4160 + $0x70] sm:$0xff]
          %v7666 = vld [vmem:[%s4160 + $0x78] sm:$0xff]
          %v7667 = vld [vmem:[%s4063] sm:$0xff]
          %v7668 = vld [vmem:[%s4063 + $0x8] sm:$0xff]
          %v7669 = vld [vmem:[%s4063 + $0x10] sm:$0xff]
          %v7670 = vld [vmem:[%s4063 + $0x18] sm:$0xff]
          %v7671 = vld [vmem:[%s4063 + $0x20] sm:$0xff]
          %v7672 = vld [vmem:[%s4063 + $0x28] sm:$0xff]
          %v7673 = vld [vmem:[%s4063 + $0x30] sm:$0xff]
          %v7674 = vld [vmem:[%s4063 + $0x38] sm:$0xff]
          %v7675 = vld [vmem:[%s4063 + $0x40] sm:$0xff]
          %v7676 = vld [vmem:[%s4063 + $0x48] sm:$0xff]
          %v7677 = vld [vmem:[%s4063 + $0x50] sm:$0xff]
          %v7678 = vld [vmem:[%s4063 + $0x58] sm:$0xff]
          %v7679 = vld [vmem:[%s4063 + $0x60] sm:$0xff]
          %v7680 = vld [vmem:[%s4063 + $0x68] sm:$0xff]
          %v7681 = vld [vmem:[%s4063 + $0x70] sm:$0xff]
          %v7682 = vld [vmem:[%s4063 + $0x78] sm:$0xff]
          %v7683 = vrcp.pop %v7667
          %v7684 = vrcp.pop %v7668
          %v7685 = vrcp.pop %v7669
          %v7686 = vrcp.pop %v7670
          %v7687 = vrcp.pop %v7671
          %v7688 = vrcp.pop %v7672
          %v7689 = vrcp.pop %v7673
          %v7690 = vrcp.pop %v7674
          %v7691 = vrcp.pop %v7675
          %v7692 = vrcp.pop %v7676
          %v7693 = vrcp.pop %v7677
          %v7694 = vrcp.pop %v7678
          %v7695 = vrcp.pop %v7679
          %v7696 = vrcp.pop %v7680
          %v7697 = vrcp.pop %v7681
          %v7698 = vrcp.pop %v7682
          %7700 = vset.pattern.permute.xlu0 0
          %7701 = vperm.xlu0 %7700, %v7683
          %v7702 = vpop.permute.xlu0 %7701
          %7705 = vset.pattern.permute.xlu0 0
          %7706 = vperm.xlu0 %7705, %v7684
          %v7707 = vpop.permute.xlu0 %7706
          %7710 = vset.pattern.permute.xlu0 0
          %7711 = vperm.xlu0 %7710, %v7685
          %v7712 = vpop.permute.xlu0 %7711
          %7715 = vset.pattern.permute.xlu0 0
          %7716 = vperm.xlu0 %7715, %v7686
          %v7717 = vpop.permute.xlu0 %7716
          %7720 = vset.pattern.permute.xlu0 0
          %7721 = vperm.xlu0 %7720, %v7687
          %v7722 = vpop.permute.xlu0 %7721
          %7725 = vset.pattern.permute.xlu0 0
          %7726 = vperm.xlu0 %7725, %v7688
          %v7727 = vpop.permute.xlu0 %7726
          %7730 = vset.pattern.permute.xlu0 0
          %7731 = vperm.xlu0 %7730, %v7689
          %v7732 = vpop.permute.xlu0 %7731
          %7735 = vset.pattern.permute.xlu0 0
          %7736 = vperm.xlu0 %7735, %v7690
          %v7737 = vpop.permute.xlu0 %7736
          %7740 = vset.pattern.permute.xlu0 0
          %7741 = vperm.xlu0 %7740, %v7691
          %v7742 = vpop.permute.xlu0 %7741
          %7745 = vset.pattern.permute.xlu0 0
          %7746 = vperm.xlu0 %7745, %v7692
          %v7747 = vpop.permute.xlu0 %7746
          %7750 = vset.pattern.permute.xlu0 0
          %7751 = vperm.xlu0 %7750, %v7693
          %v7752 = vpop.permute.xlu0 %7751
          %7755 = vset.pattern.permute.xlu0 0
          %7756 = vperm.xlu0 %7755, %v7694
          %v7757 = vpop.permute.xlu0 %7756
          %7760 = vset.pattern.permute.xlu0 0
          %7761 = vperm.xlu0 %7760, %v7695
          %v7762 = vpop.permute.xlu0 %7761
          %7765 = vset.pattern.permute.xlu0 0
          %7766 = vperm.xlu0 %7765, %v7696
          %v7767 = vpop.permute.xlu0 %7766
          %7770 = vset.pattern.permute.xlu0 0
          %7771 = vperm.xlu0 %7770, %v7697
          %v7772 = vpop.permute.xlu0 %7771
          %7775 = vset.pattern.permute.xlu0 0
          %7776 = vperm.xlu0 %7775, %v7698
          %v7777 = vpop.permute.xlu0 %7776
          %v7779 = vmul.f32 %v7651, %v7702
          %v7780 = vmul.f32 %v7652, %v7707
          %v7781 = vmul.f32 %v7653, %v7712
          %v7782 = vmul.f32 %v7654, %v7717
          %v7783 = vmul.f32 %v7655, %v7722
          %v7784 = vmul.f32 %v7656, %v7727
          %v7785 = vmul.f32 %v7657, %v7732
          %v7786 = vmul.f32 %v7658, %v7737
          %v7787 = vmul.f32 %v7659, %v7742
          %v7788 = vmul.f32 %v7660, %v7747
          %v7789 = vmul.f32 %v7661, %v7752
          %v7790 = vmul.f32 %v7662, %v7757
          %v7791 = vmul.f32 %v7663, %v7762
          %v7792 = vmul.f32 %v7664, %v7767
          %v7793 = vmul.f32 %v7665, %v7772
          %v7794 = vmul.f32 %v7666, %v7777
          %v7795 = vmul.f32 %v7458, %v7779
          %v7796 = vmul.f32 %v7458, %v7780
          %v7797 = vmul.f32 %v7458, %v7781
          %v7798 = vmul.f32 %v7458, %v7782
          %v7799 = vmul.f32 %v7458, %v7783
          %v7800 = vmul.f32 %v7458, %v7784
          %v7801 = vmul.f32 %v7458, %v7785
          %v7802 = vmul.f32 %v7458, %v7786
          %v7803 = vmul.f32 %v7458, %v7787
          %v7804 = vmul.f32 %v7458, %v7788
          %v7805 = vmul.f32 %v7458, %v7789
          %v7806 = vmul.f32 %v7458, %v7790
          %v7807 = vmul.f32 %v7458, %v7791
          %v7808 = vmul.f32 %v7458, %v7792
          %v7809 = vmul.f32 %v7458, %v7793
          %v7810 = vmul.f32 %v7458, %v7794
          %v7811 = vsub.f32 %v7635, %v7795
          %v7812 = vsub.f32 %v7636, %v7796
          %v7813 = vsub.f32 %v7637, %v7797
          %v7814 = vsub.f32 %v7638, %v7798
          %v7815 = vsub.f32 %v7639, %v7799
          %v7816 = vsub.f32 %v7640, %v7800
          %v7817 = vsub.f32 %v7641, %v7801
          %v7818 = vsub.f32 %v7642, %v7802
          %v7819 = vsub.f32 %v7643, %v7803
          %v7820 = vsub.f32 %v7644, %v7804
          %v7821 = vsub.f32 %v7645, %v7805
          %v7822 = vsub.f32 %v7646, %v7806
          %v7823 = vsub.f32 %v7647, %v7807
          %v7824 = vsub.f32 %v7648, %v7808
          %v7825 = vsub.f32 %v7649, %v7809
          %v7826 = vsub.f32 %v7650, %v7810
          %7843 = vrot.lane.b32.xlu0 %v7811, 32
          %v7844 = vpop.permute.xlu0 %7843
          %7845 = vrot.lane.b32.xlu0 %v7812, 32
          %v7846 = vpop.permute.xlu0 %7845
          %7847 = vrot.lane.b32.xlu0 %v7813, 32
          %v7848 = vpop.permute.xlu0 %7847
          %7849 = vrot.lane.b32.xlu0 %v7814, 32
          %v7850 = vpop.permute.xlu0 %7849
          %7851 = vrot.lane.b32.xlu0 %v7815, 32
          %v7852 = vpop.permute.xlu0 %7851
          %7853 = vrot.lane.b32.xlu0 %v7816, 32
          %v7854 = vpop.permute.xlu0 %7853
          %7855 = vrot.lane.b32.xlu0 %v7817, 32
          %v7856 = vpop.permute.xlu0 %7855
          %7857 = vrot.lane.b32.xlu0 %v7818, 32
          %v7858 = vpop.permute.xlu0 %7857
          %7859 = vrot.lane.b32.xlu0 %v7819, 32
          %v7860 = vpop.permute.xlu0 %7859
          %7861 = vrot.lane.b32.xlu0 %v7820, 32
          %v7862 = vpop.permute.xlu0 %7861
          %7863 = vrot.lane.b32.xlu0 %v7821, 32
          %v7864 = vpop.permute.xlu0 %7863
          %7865 = vrot.lane.b32.xlu0 %v7822, 32
          %v7866 = vpop.permute.xlu0 %7865
          %7867 = vrot.lane.b32.xlu0 %v7823, 32
          %v7868 = vpop.permute.xlu0 %7867
          %7869 = vrot.lane.b32.xlu0 %v7824, 32
          %v7870 = vpop.permute.xlu0 %7869
          %7871 = vrot.lane.b32.xlu0 %v7825, 32
          %v7872 = vpop.permute.xlu0 %7871
          %7873 = vrot.lane.b32.xlu0 %v7826, 32
          %v7874 = vpop.permute.xlu0 %7873
          %vm7891 = vcmask 523520
          %7892 = vst.msk [vmem:[%s403] sm:$0xff] %vm7891, %v7844
          %7893 = vst.msk [vmem:[%s403 + $0x8] sm:$0xff] %vm7891, %v7846
          %7894 = vst.msk [vmem:[%s403 + $0x10] sm:$0xff] %vm7891, %v7848
          %7895 = vst.msk [vmem:[%s403 + $0x18] sm:$0xff] %vm7891, %v7850
          %7896 = vst.msk [vmem:[%s403 + $0x20] sm:$0xff] %vm7891, %v7852
          %7897 = vst.msk [vmem:[%s403 + $0x28] sm:$0xff] %vm7891, %v7854
          %7898 = vst.msk [vmem:[%s403 + $0x30] sm:$0xff] %vm7891, %v7856
          %7899 = vst.msk [vmem:[%s403 + $0x38] sm:$0xff] %vm7891, %v7858
          %7900 = vst.msk [vmem:[%s403 + $0x40] sm:$0xff] %vm7891, %v7860
          %7901 = vst.msk [vmem:[%s403 + $0x48] sm:$0xff] %vm7891, %v7862
          %7902 = vst.msk [vmem:[%s403 + $0x50] sm:$0xff] %vm7891, %v7864
          %7903 = vst.msk [vmem:[%s403 + $0x58] sm:$0xff] %vm7891, %v7866
          %7904 = vst.msk [vmem:[%s403 + $0x60] sm:$0xff] %vm7891, %v7868
          %7905 = vst.msk [vmem:[%s403 + $0x68] sm:$0xff] %vm7891, %v7870
          %7906 = vst.msk [vmem:[%s403 + $0x70] sm:$0xff] %vm7891, %v7872
          %7907 = vst.msk [vmem:[%s403 + $0x78] sm:$0xff] %vm7891, %v7874
          %v7908 = vld [vmem:[%s4845] sm:$0xff]
          %v7909 = vld [vmem:[%s4845 + $0x8] sm:$0xff]
          %v7910 = vld [vmem:[%s4845 + $0x10] sm:$0xff]
          %v7911 = vld [vmem:[%s4845 + $0x18] sm:$0xff]
          %v7912 = vld [vmem:[%s4845 + $0x20] sm:$0xff]
          %v7913 = vld [vmem:[%s4845 + $0x28] sm:$0xff]
          %v7914 = vld [vmem:[%s4845 + $0x30] sm:$0xff]
          %v7915 = vld [vmem:[%s4845 + $0x38] sm:$0xff]
          %v7916 = vld [vmem:[%s4845 + $0x40] sm:$0xff]
          %v7917 = vld [vmem:[%s4845 + $0x48] sm:$0xff]
          %v7918 = vld [vmem:[%s4845 + $0x50] sm:$0xff]
          %v7919 = vld [vmem:[%s4845 + $0x58] sm:$0xff]
          %v7920 = vld [vmem:[%s4845 + $0x60] sm:$0xff]
          %v7921 = vld [vmem:[%s4845 + $0x68] sm:$0xff]
          %v7922 = vld [vmem:[%s4845 + $0x70] sm:$0xff]
          %v7923 = vld [vmem:[%s4845 + $0x78] sm:$0xff]
          %v7924 = vld [vmem:[%s4748] sm:$0xff]
          %v7925 = vld [vmem:[%s4748 + $0x8] sm:$0xff]
          %v7926 = vld [vmem:[%s4748 + $0x10] sm:$0xff]
          %v7927 = vld [vmem:[%s4748 + $0x18] sm:$0xff]
          %v7928 = vld [vmem:[%s4748 + $0x20] sm:$0xff]
          %v7929 = vld [vmem:[%s4748 + $0x28] sm:$0xff]
          %v7930 = vld [vmem:[%s4748 + $0x30] sm:$0xff]
          %v7931 = vld [vmem:[%s4748 + $0x38] sm:$0xff]
          %v7932 = vld [vmem:[%s4748 + $0x40] sm:$0xff]
          %v7933 = vld [vmem:[%s4748 + $0x48] sm:$0xff]
          %v7934 = vld [vmem:[%s4748 + $0x50] sm:$0xff]
          %v7935 = vld [vmem:[%s4748 + $0x58] sm:$0xff]
          %v7936 = vld [vmem:[%s4748 + $0x60] sm:$0xff]
          %v7937 = vld [vmem:[%s4748 + $0x68] sm:$0xff]
          %v7938 = vld [vmem:[%s4748 + $0x70] sm:$0xff]
          %v7939 = vld [vmem:[%s4748 + $0x78] sm:$0xff]
          %v7940 = vrcp.pop %v7924
          %v7941 = vrcp.pop %v7925
          %v7942 = vrcp.pop %v7926
          %v7943 = vrcp.pop %v7927
          %v7944 = vrcp.pop %v7928
          %v7945 = vrcp.pop %v7929
          %v7946 = vrcp.pop %v7930
          %v7947 = vrcp.pop %v7931
          %v7948 = vrcp.pop %v7932
          %v7949 = vrcp.pop %v7933
          %v7950 = vrcp.pop %v7934
          %v7951 = vrcp.pop %v7935
          %v7952 = vrcp.pop %v7936
          %v7953 = vrcp.pop %v7937
          %v7954 = vrcp.pop %v7938
          %v7955 = vrcp.pop %v7939
          %7957 = vset.pattern.permute.xlu0 0
          %7958 = vperm.xlu0 %7957, %v7940
          %v7959 = vpop.permute.xlu0 %7958
          %7962 = vset.pattern.permute.xlu0 0
          %7963 = vperm.xlu0 %7962, %v7941
          %v7964 = vpop.permute.xlu0 %7963
          %7967 = vset.pattern.permute.xlu0 0
          %7968 = vperm.xlu0 %7967, %v7942
          %v7969 = vpop.permute.xlu0 %7968
          %7972 = vset.pattern.permute.xlu0 0
          %7973 = vperm.xlu0 %7972, %v7943
          %v7974 = vpop.permute.xlu0 %7973
          %7977 = vset.pattern.permute.xlu0 0
          %7978 = vperm.xlu0 %7977, %v7944
          %v7979 = vpop.permute.xlu0 %7978
          %7982 = vset.pattern.permute.xlu0 0
          %7983 = vperm.xlu0 %7982, %v7945
          %v7984 = vpop.permute.xlu0 %7983
          %7987 = vset.pattern.permute.xlu0 0
          %7988 = vperm.xlu0 %7987, %v7946
          %v7989 = vpop.permute.xlu0 %7988
          %7992 = vset.pattern.permute.xlu0 0
          %7993 = vperm.xlu0 %7992, %v7947
          %v7994 = vpop.permute.xlu0 %7993
          %7997 = vset.pattern.permute.xlu0 0
          %7998 = vperm.xlu0 %7997, %v7948
          %v7999 = vpop.permute.xlu0 %7998
          %8002 = vset.pattern.permute.xlu0 0
          %8003 = vperm.xlu0 %8002, %v7949
          %v8004 = vpop.permute.xlu0 %8003
          %8007 = vset.pattern.permute.xlu0 0
          %8008 = vperm.xlu0 %8007, %v7950
          %v8009 = vpop.permute.xlu0 %8008
          %8012 = vset.pattern.permute.xlu0 0
          %8013 = vperm.xlu0 %8012, %v7951
          %v8014 = vpop.permute.xlu0 %8013
          %8017 = vset.pattern.permute.xlu0 0
          %8018 = vperm.xlu0 %8017, %v7952
          %v8019 = vpop.permute.xlu0 %8018
          %8022 = vset.pattern.permute.xlu0 0
          %8023 = vperm.xlu0 %8022, %v7953
          %v8024 = vpop.permute.xlu0 %8023
          %8027 = vset.pattern.permute.xlu0 0
          %8028 = vperm.xlu0 %8027, %v7954
          %v8029 = vpop.permute.xlu0 %8028
          %8032 = vset.pattern.permute.xlu0 0
          %8033 = vperm.xlu0 %8032, %v7955
          %v8034 = vpop.permute.xlu0 %8033
          %v8036 = vmul.f32 %v7908, %v7959
          %v8037 = vmul.f32 %v7909, %v7964
          %v8038 = vmul.f32 %v7910, %v7969
          %v8039 = vmul.f32 %v7911, %v7974
          %v8040 = vmul.f32 %v7912, %v7979
          %v8041 = vmul.f32 %v7913, %v7984
          %v8042 = vmul.f32 %v7914, %v7989
          %v8043 = vmul.f32 %v7915, %v7994
          %v8044 = vmul.f32 %v7916, %v7999
          %v8045 = vmul.f32 %v7917, %v8004
          %v8046 = vmul.f32 %v7918, %v8009
          %v8047 = vmul.f32 %v7919, %v8014
          %v8048 = vmul.f32 %v7920, %v8019
          %v8049 = vmul.f32 %v7921, %v8024
          %v8050 = vmul.f32 %v7922, %v8029
          %v8051 = vmul.f32 %v7923, %v8034
          %v8052 = vld [vmem:[%s5554] sm:$0xff]
          %v8053 = vld [vmem:[%s5554 + $0x8] sm:$0xff]
          %v8054 = vld [vmem:[%s5554 + $0x10] sm:$0xff]
          %v8055 = vld [vmem:[%s5554 + $0x18] sm:$0xff]
          %v8056 = vld [vmem:[%s5554 + $0x20] sm:$0xff]
          %v8057 = vld [vmem:[%s5554 + $0x28] sm:$0xff]
          %v8058 = vld [vmem:[%s5554 + $0x30] sm:$0xff]
          %v8059 = vld [vmem:[%s5554 + $0x38] sm:$0xff]
          %v8060 = vld [vmem:[%s5554 + $0x40] sm:$0xff]
          %v8061 = vld [vmem:[%s5554 + $0x48] sm:$0xff]
          %v8062 = vld [vmem:[%s5554 + $0x50] sm:$0xff]
          %v8063 = vld [vmem:[%s5554 + $0x58] sm:$0xff]
          %v8064 = vld [vmem:[%s5554 + $0x60] sm:$0xff]
          %v8065 = vld [vmem:[%s5554 + $0x68] sm:$0xff]
          %v8066 = vld [vmem:[%s5554 + $0x70] sm:$0xff]
          %v8067 = vld [vmem:[%s5554 + $0x78] sm:$0xff]
          %v8068 = vld [vmem:[%s5457] sm:$0xff]
          %v8069 = vld [vmem:[%s5457 + $0x8] sm:$0xff]
          %v8070 = vld [vmem:[%s5457 + $0x10] sm:$0xff]
          %v8071 = vld [vmem:[%s5457 + $0x18] sm:$0xff]
          %v8072 = vld [vmem:[%s5457 + $0x20] sm:$0xff]
          %v8073 = vld [vmem:[%s5457 + $0x28] sm:$0xff]
          %v8074 = vld [vmem:[%s5457 + $0x30] sm:$0xff]
          %v8075 = vld [vmem:[%s5457 + $0x38] sm:$0xff]
          %v8076 = vld [vmem:[%s5457 + $0x40] sm:$0xff]
          %v8077 = vld [vmem:[%s5457 + $0x48] sm:$0xff]
          %v8078 = vld [vmem:[%s5457 + $0x50] sm:$0xff]
          %v8079 = vld [vmem:[%s5457 + $0x58] sm:$0xff]
          %v8080 = vld [vmem:[%s5457 + $0x60] sm:$0xff]
          %v8081 = vld [vmem:[%s5457 + $0x68] sm:$0xff]
          %v8082 = vld [vmem:[%s5457 + $0x70] sm:$0xff]
          %v8083 = vld [vmem:[%s5457 + $0x78] sm:$0xff]
          %v8084 = vrcp.pop %v8068
          %v8085 = vrcp.pop %v8069
          %v8086 = vrcp.pop %v8070
          %v8087 = vrcp.pop %v8071
          %v8088 = vrcp.pop %v8072
          %v8089 = vrcp.pop %v8073
          %v8090 = vrcp.pop %v8074
          %v8091 = vrcp.pop %v8075
          %v8092 = vrcp.pop %v8076
          %v8093 = vrcp.pop %v8077
          %v8094 = vrcp.pop %v8078
          %v8095 = vrcp.pop %v8079
          %v8096 = vrcp.pop %v8080
          %v8097 = vrcp.pop %v8081
          %v8098 = vrcp.pop %v8082
          %v8099 = vrcp.pop %v8083
          %8101 = vset.pattern.permute.xlu0 0
          %8102 = vperm.xlu0 %8101, %v8084
          %v8103 = vpop.permute.xlu0 %8102
          %8106 = vset.pattern.permute.xlu0 0
          %8107 = vperm.xlu0 %8106, %v8085
          %v8108 = vpop.permute.xlu0 %8107
          %8111 = vset.pattern.permute.xlu0 0
          %8112 = vperm.xlu0 %8111, %v8086
          %v8113 = vpop.permute.xlu0 %8112
          %8116 = vset.pattern.permute.xlu0 0
          %8117 = vperm.xlu0 %8116, %v8087
          %v8118 = vpop.permute.xlu0 %8117
          %8121 = vset.pattern.permute.xlu0 0
          %8122 = vperm.xlu0 %8121, %v8088
          %v8123 = vpop.permute.xlu0 %8122
          %8126 = vset.pattern.permute.xlu0 0
          %8127 = vperm.xlu0 %8126, %v8089
          %v8128 = vpop.permute.xlu0 %8127
          %8131 = vset.pattern.permute.xlu0 0
          %8132 = vperm.xlu0 %8131, %v8090
          %v8133 = vpop.permute.xlu0 %8132
          %8136 = vset.pattern.permute.xlu0 0
          %8137 = vperm.xlu0 %8136, %v8091
          %v8138 = vpop.permute.xlu0 %8137
          %8141 = vset.pattern.permute.xlu0 0
          %8142 = vperm.xlu0 %8141, %v8092
          %v8143 = vpop.permute.xlu0 %8142
          %8146 = vset.pattern.permute.xlu0 0
          %8147 = vperm.xlu0 %8146, %v8093
          %v8148 = vpop.permute.xlu0 %8147
          %8151 = vset.pattern.permute.xlu0 0
          %8152 = vperm.xlu0 %8151, %v8094
          %v8153 = vpop.permute.xlu0 %8152
          %8156 = vset.pattern.permute.xlu0 0
          %8157 = vperm.xlu0 %8156, %v8095
          %v8158 = vpop.permute.xlu0 %8157
          %8161 = vset.pattern.permute.xlu0 0
          %8162 = vperm.xlu0 %8161, %v8096
          %v8163 = vpop.permute.xlu0 %8162
          %8166 = vset.pattern.permute.xlu0 0
          %8167 = vperm.xlu0 %8166, %v8097
          %v8168 = vpop.permute.xlu0 %8167
          %8171 = vset.pattern.permute.xlu0 0
          %8172 = vperm.xlu0 %8171, %v8098
          %v8173 = vpop.permute.xlu0 %8172
          %8176 = vset.pattern.permute.xlu0 0
          %8177 = vperm.xlu0 %8176, %v8099
          %v8178 = vpop.permute.xlu0 %8177
          %v8180 = vmul.f32 %v8052, %v8103
          %v8181 = vmul.f32 %v8053, %v8108
          %v8182 = vmul.f32 %v8054, %v8113
          %v8183 = vmul.f32 %v8055, %v8118
          %v8184 = vmul.f32 %v8056, %v8123
          %v8185 = vmul.f32 %v8057, %v8128
          %v8186 = vmul.f32 %v8058, %v8133
          %v8187 = vmul.f32 %v8059, %v8138
          %v8188 = vmul.f32 %v8060, %v8143
          %v8189 = vmul.f32 %v8061, %v8148
          %v8190 = vmul.f32 %v8062, %v8153
          %v8191 = vmul.f32 %v8063, %v8158
          %v8192 = vmul.f32 %v8064, %v8163
          %v8193 = vmul.f32 %v8065, %v8168
          %v8194 = vmul.f32 %v8066, %v8173
          %v8195 = vmul.f32 %v8067, %v8178
          %v8196 = vmul.f32 %v7458, %v8180
          %v8197 = vmul.f32 %v7458, %v8181
          %v8198 = vmul.f32 %v7458, %v8182
          %v8199 = vmul.f32 %v7458, %v8183
          %v8200 = vmul.f32 %v7458, %v8184
          %v8201 = vmul.f32 %v7458, %v8185
          %v8202 = vmul.f32 %v7458, %v8186
          %v8203 = vmul.f32 %v7458, %v8187
          %v8204 = vmul.f32 %v7458, %v8188
          %v8205 = vmul.f32 %v7458, %v8189
          %v8206 = vmul.f32 %v7458, %v8190
          %v8207 = vmul.f32 %v7458, %v8191
          %v8208 = vmul.f32 %v7458, %v8192
          %v8209 = vmul.f32 %v7458, %v8193
          %v8210 = vmul.f32 %v7458, %v8194
          %v8211 = vmul.f32 %v7458, %v8195
          %v8212 = vsub.f32 %v8036, %v8196
          %v8213 = vsub.f32 %v8037, %v8197
          %v8214 = vsub.f32 %v8038, %v8198
          %v8215 = vsub.f32 %v8039, %v8199
          %v8216 = vsub.f32 %v8040, %v8200
          %v8217 = vsub.f32 %v8041, %v8201
          %v8218 = vsub.f32 %v8042, %v8202
          %v8219 = vsub.f32 %v8043, %v8203
          %v8220 = vsub.f32 %v8044, %v8204
          %v8221 = vsub.f32 %v8045, %v8205
          %v8222 = vsub.f32 %v8046, %v8206
          %v8223 = vsub.f32 %v8047, %v8207
          %v8224 = vsub.f32 %v8048, %v8208
          %v8225 = vsub.f32 %v8049, %v8209
          %v8226 = vsub.f32 %v8050, %v8210
          %v8227 = vsub.f32 %v8051, %v8211
          %8244 = vrot.lane.b32.xlu0 %v8212, 64
          %v8245 = vpop.permute.xlu0 %8244
          %8246 = vrot.lane.b32.xlu0 %v8213, 64
          %v8247 = vpop.permute.xlu0 %8246
          %8248 = vrot.lane.b32.xlu0 %v8214, 64
          %v8249 = vpop.permute.xlu0 %8248
          %8250 = vrot.lane.b32.xlu0 %v8215, 64
          %v8251 = vpop.permute.xlu0 %8250
          %8252 = vrot.lane.b32.xlu0 %v8216, 64
          %v8253 = vpop.permute.xlu0 %8252
          %8254 = vrot.lane.b32.xlu0 %v8217, 64
          %v8255 = vpop.permute.xlu0 %8254
          %8256 = vrot.lane.b32.xlu0 %v8218, 64
          %v8257 = vpop.permute.xlu0 %8256
          %8258 = vrot.lane.b32.xlu0 %v8219, 64
          %v8259 = vpop.permute.xlu0 %8258
          %8260 = vrot.lane.b32.xlu0 %v8220, 64
          %v8261 = vpop.permute.xlu0 %8260
          %8262 = vrot.lane.b32.xlu0 %v8221, 64
          %v8263 = vpop.permute.xlu0 %8262
          %8264 = vrot.lane.b32.xlu0 %v8222, 64
          %v8265 = vpop.permute.xlu0 %8264
          %8266 = vrot.lane.b32.xlu0 %v8223, 64
          %v8267 = vpop.permute.xlu0 %8266
          %8268 = vrot.lane.b32.xlu0 %v8224, 64
          %v8269 = vpop.permute.xlu0 %8268
          %8270 = vrot.lane.b32.xlu0 %v8225, 64
          %v8271 = vpop.permute.xlu0 %8270
          %8272 = vrot.lane.b32.xlu0 %v8226, 64
          %v8273 = vpop.permute.xlu0 %8272
          %8274 = vrot.lane.b32.xlu0 %v8227, 64
          %v8275 = vpop.permute.xlu0 %8274
          %vm8292 = vcmask 785920
          %8293 = vst.msk [vmem:[%s403] sm:$0xff] %vm8292, %v8245
          %8294 = vst.msk [vmem:[%s403 + $0x8] sm:$0xff] %vm8292, %v8247
          %8295 = vst.msk [vmem:[%s403 + $0x10] sm:$0xff] %vm8292, %v8249
          %8296 = vst.msk [vmem:[%s403 + $0x18] sm:$0xff] %vm8292, %v8251
          %8297 = vst.msk [vmem:[%s403 + $0x20] sm:$0xff] %vm8292, %v8253
          %8298 = vst.msk [vmem:[%s403 + $0x28] sm:$0xff] %vm8292, %v8255
          %8299 = vst.msk [vmem:[%s403 + $0x30] sm:$0xff] %vm8292, %v8257
          %8300 = vst.msk [vmem:[%s403 + $0x38] sm:$0xff] %vm8292, %v8259
          %8301 = vst.msk [vmem:[%s403 + $0x40] sm:$0xff] %vm8292, %v8261
          %8302 = vst.msk [vmem:[%s403 + $0x48] sm:$0xff] %vm8292, %v8263
          %8303 = vst.msk [vmem:[%s403 + $0x50] sm:$0xff] %vm8292, %v8265
          %8304 = vst.msk [vmem:[%s403 + $0x58] sm:$0xff] %vm8292, %v8267
          %8305 = vst.msk [vmem:[%s403 + $0x60] sm:$0xff] %vm8292, %v8269
          %8306 = vst.msk [vmem:[%s403 + $0x68] sm:$0xff] %vm8292, %v8271
          %8307 = vst.msk [vmem:[%s403 + $0x70] sm:$0xff] %vm8292, %v8273
          %8308 = vst.msk [vmem:[%s403 + $0x78] sm:$0xff] %vm8292, %v8275
          %v8309 = vld [vmem:[%s6239] sm:$0xff]
          %v8310 = vld [vmem:[%s6239 + $0x8] sm:$0xff]
          %v8311 = vld [vmem:[%s6239 + $0x10] sm:$0xff]
          %v8312 = vld [vmem:[%s6239 + $0x18] sm:$0xff]
          %v8313 = vld [vmem:[%s6239 + $0x20] sm:$0xff]
          %v8314 = vld [vmem:[%s6239 + $0x28] sm:$0xff]
          %v8315 = vld [vmem:[%s6239 + $0x30] sm:$0xff]
          %v8316 = vld [vmem:[%s6239 + $0x38] sm:$0xff]
          %v8317 = vld [vmem:[%s6239 + $0x40] sm:$0xff]
          %v8318 = vld [vmem:[%s6239 + $0x48] sm:$0xff]
          %v8319 = vld [vmem:[%s6239 + $0x50] sm:$0xff]
          %v8320 = vld [vmem:[%s6239 + $0x58] sm:$0xff]
          %v8321 = vld [vmem:[%s6239 + $0x60] sm:$0xff]
          %v8322 = vld [vmem:[%s6239 + $0x68] sm:$0xff]
          %v8323 = vld [vmem:[%s6239 + $0x70] sm:$0xff]
          %v8324 = vld [vmem:[%s6239 + $0x78] sm:$0xff]
          %v8325 = vld [vmem:[%s6142] sm:$0xff]
          %v8326 = vld [vmem:[%s6142 + $0x8] sm:$0xff]
          %v8327 = vld [vmem:[%s6142 + $0x10] sm:$0xff]
          %v8328 = vld [vmem:[%s6142 + $0x18] sm:$0xff]
          %v8329 = vld [vmem:[%s6142 + $0x20] sm:$0xff]
          %v8330 = vld [vmem:[%s6142 + $0x28] sm:$0xff]
          %v8331 = vld [vmem:[%s6142 + $0x30] sm:$0xff]
          %v8332 = vld [vmem:[%s6142 + $0x38] sm:$0xff]
          %v8333 = vld [vmem:[%s6142 + $0x40] sm:$0xff]
          %v8334 = vld [vmem:[%s6142 + $0x48] sm:$0xff]
          %v8335 = vld [vmem:[%s6142 + $0x50] sm:$0xff]
          %v8336 = vld [vmem:[%s6142 + $0x58] sm:$0xff]
          %v8337 = vld [vmem:[%s6142 + $0x60] sm:$0xff]
          %v8338 = vld [vmem:[%s6142 + $0x68] sm:$0xff]
          %v8339 = vld [vmem:[%s6142 + $0x70] sm:$0xff]
          %v8340 = vld [vmem:[%s6142 + $0x78] sm:$0xff]
          %v8341 = vrcp.pop %v8325
          %v8342 = vrcp.pop %v8326
          %v8343 = vrcp.pop %v8327
          %v8344 = vrcp.pop %v8328
          %v8345 = vrcp.pop %v8329
          %v8346 = vrcp.pop %v8330
          %v8347 = vrcp.pop %v8331
          %v8348 = vrcp.pop %v8332
          %v8349 = vrcp.pop %v8333
          %v8350 = vrcp.pop %v8334
          %v8351 = vrcp.pop %v8335
          %v8352 = vrcp.pop %v8336
          %v8353 = vrcp.pop %v8337
          %v8354 = vrcp.pop %v8338
          %v8355 = vrcp.pop %v8339
          %v8356 = vrcp.pop %v8340
          %8358 = vset.pattern.permute.xlu0 0
          %8359 = vperm.xlu0 %8358, %v8341
          %v8360 = vpop.permute.xlu0 %8359
          %8363 = vset.pattern.permute.xlu0 0
          %8364 = vperm.xlu0 %8363, %v8342
          %v8365 = vpop.permute.xlu0 %8364
          %8368 = vset.pattern.permute.xlu0 0
          %8369 = vperm.xlu0 %8368, %v8343
          %v8370 = vpop.permute.xlu0 %8369
          %8373 = vset.pattern.permute.xlu0 0
          %8374 = vperm.xlu0 %8373, %v8344
          %v8375 = vpop.permute.xlu0 %8374
          %8378 = vset.pattern.permute.xlu0 0
          %8379 = vperm.xlu0 %8378, %v8345
          %v8380 = vpop.permute.xlu0 %8379
          %8383 = vset.pattern.permute.xlu0 0
          %8384 = vperm.xlu0 %8383, %v8346
          %v8385 = vpop.permute.xlu0 %8384
          %8388 = vset.pattern.permute.xlu0 0
          %8389 = vperm.xlu0 %8388, %v8347
          %v8390 = vpop.permute.xlu0 %8389
          %8393 = vset.pattern.permute.xlu0 0
          %8394 = vperm.xlu0 %8393, %v8348
          %v8395 = vpop.permute.xlu0 %8394
          %8398 = vset.pattern.permute.xlu0 0
          %8399 = vperm.xlu0 %8398, %v8349
          %v8400 = vpop.permute.xlu0 %8399
          %8403 = vset.pattern.permute.xlu0 0
          %8404 = vperm.xlu0 %8403, %v8350
          %v8405 = vpop.permute.xlu0 %8404
          %8408 = vset.pattern.permute.xlu0 0
          %8409 = vperm.xlu0 %8408, %v8351
          %v8410 = vpop.permute.xlu0 %8409
          %8413 = vset.pattern.permute.xlu0 0
          %8414 = vperm.xlu0 %8413, %v8352
          %v8415 = vpop.permute.xlu0 %8414
          %8418 = vset.pattern.permute.xlu0 0
          %8419 = vperm.xlu0 %8418, %v8353
          %v8420 = vpop.permute.xlu0 %8419
          %8423 = vset.pattern.permute.xlu0 0
          %8424 = vperm.xlu0 %8423, %v8354
          %v8425 = vpop.permute.xlu0 %8424
          %8428 = vset.pattern.permute.xlu0 0
          %8429 = vperm.xlu0 %8428, %v8355
          %v8430 = vpop.permute.xlu0 %8429
          %8433 = vset.pattern.permute.xlu0 0
          %8434 = vperm.xlu0 %8433, %v8356
          %v8435 = vpop.permute.xlu0 %8434
          %v8437 = vmul.f32 %v8309, %v8360
          %v8438 = vmul.f32 %v8310, %v8365
          %v8439 = vmul.f32 %v8311, %v8370
          %v8440 = vmul.f32 %v8312, %v8375
          %v8441 = vmul.f32 %v8313, %v8380
          %v8442 = vmul.f32 %v8314, %v8385
          %v8443 = vmul.f32 %v8315, %v8390
          %v8444 = vmul.f32 %v8316, %v8395
          %v8445 = vmul.f32 %v8317, %v8400
          %v8446 = vmul.f32 %v8318, %v8405
          %v8447 = vmul.f32 %v8319, %v8410
          %v8448 = vmul.f32 %v8320, %v8415
          %v8449 = vmul.f32 %v8321, %v8420
          %v8450 = vmul.f32 %v8322, %v8425
          %v8451 = vmul.f32 %v8323, %v8430
          %v8452 = vmul.f32 %v8324, %v8435
          %v8453 = vld [vmem:[%s6948] sm:$0xff]
          %v8454 = vld [vmem:[%s6948 + $0x8] sm:$0xff]
          %v8455 = vld [vmem:[%s6948 + $0x10] sm:$0xff]
          %v8456 = vld [vmem:[%s6948 + $0x18] sm:$0xff]
          %v8457 = vld [vmem:[%s6948 + $0x20] sm:$0xff]
          %v8458 = vld [vmem:[%s6948 + $0x28] sm:$0xff]
          %v8459 = vld [vmem:[%s6948 + $0x30] sm:$0xff]
          %v8460 = vld [vmem:[%s6948 + $0x38] sm:$0xff]
          %v8461 = vld [vmem:[%s6948 + $0x40] sm:$0xff]
          %v8462 = vld [vmem:[%s6948 + $0x48] sm:$0xff]
          %v8463 = vld [vmem:[%s6948 + $0x50] sm:$0xff]
          %v8464 = vld [vmem:[%s6948 + $0x58] sm:$0xff]
          %v8465 = vld [vmem:[%s6948 + $0x60] sm:$0xff]
          %v8466 = vld [vmem:[%s6948 + $0x68] sm:$0xff]
          %v8467 = vld [vmem:[%s6948 + $0x70] sm:$0xff]
          %v8468 = vld [vmem:[%s6948 + $0x78] sm:$0xff]
          %v8469 = vld [vmem:[%s6851] sm:$0xff]
          %v8470 = vld [vmem:[%s6851 + $0x8] sm:$0xff]
          %v8471 = vld [vmem:[%s6851 + $0x10] sm:$0xff]
          %v8472 = vld [vmem:[%s6851 + $0x18] sm:$0xff]
          %v8473 = vld [vmem:[%s6851 + $0x20] sm:$0xff]
          %v8474 = vld [vmem:[%s6851 + $0x28] sm:$0xff]
          %v8475 = vld [vmem:[%s6851 + $0x30] sm:$0xff]
          %v8476 = vld [vmem:[%s6851 + $0x38] sm:$0xff]
          %v8477 = vld [vmem:[%s6851 + $0x40] sm:$0xff]
          %v8478 = vld [vmem:[%s6851 + $0x48] sm:$0xff]
          %v8479 = vld [vmem:[%s6851 + $0x50] sm:$0xff]
          %v8480 = vld [vmem:[%s6851 + $0x58] sm:$0xff]
          %v8481 = vld [vmem:[%s6851 + $0x60] sm:$0xff]
          %v8482 = vld [vmem:[%s6851 + $0x68] sm:$0xff]
          %v8483 = vld [vmem:[%s6851 + $0x70] sm:$0xff]
          %v8484 = vld [vmem:[%s6851 + $0x78] sm:$0xff]
          %v8485 = vrcp.pop %v8469
          %v8486 = vrcp.pop %v8470
          %v8487 = vrcp.pop %v8471
          %v8488 = vrcp.pop %v8472
          %v8489 = vrcp.pop %v8473
          %v8490 = vrcp.pop %v8474
          %v8491 = vrcp.pop %v8475
          %v8492 = vrcp.pop %v8476
          %v8493 = vrcp.pop %v8477
          %v8494 = vrcp.pop %v8478
          %v8495 = vrcp.pop %v8479
          %v8496 = vrcp.pop %v8480
          %v8497 = vrcp.pop %v8481
          %v8498 = vrcp.pop %v8482
          %v8499 = vrcp.pop %v8483
          %v8500 = vrcp.pop %v8484
          %8502 = vset.pattern.permute.xlu0 0
          %8503 = vperm.xlu0 %8502, %v8485
          %v8504 = vpop.permute.xlu0 %8503
          %8507 = vset.pattern.permute.xlu0 0
          %8508 = vperm.xlu0 %8507, %v8486
          %v8509 = vpop.permute.xlu0 %8508
          %8512 = vset.pattern.permute.xlu0 0
          %8513 = vperm.xlu0 %8512, %v8487
          %v8514 = vpop.permute.xlu0 %8513
          %8517 = vset.pattern.permute.xlu0 0
          %8518 = vperm.xlu0 %8517, %v8488
          %v8519 = vpop.permute.xlu0 %8518
          %8522 = vset.pattern.permute.xlu0 0
          %8523 = vperm.xlu0 %8522, %v8489
          %v8524 = vpop.permute.xlu0 %8523
          %8527 = vset.pattern.permute.xlu0 0
          %8528 = vperm.xlu0 %8527, %v8490
          %v8529 = vpop.permute.xlu0 %8528
          %8532 = vset.pattern.permute.xlu0 0
          %8533 = vperm.xlu0 %8532, %v8491
          %v8534 = vpop.permute.xlu0 %8533
          %8537 = vset.pattern.permute.xlu0 0
          %8538 = vperm.xlu0 %8537, %v8492
          %v8539 = vpop.permute.xlu0 %8538
          %8542 = vset.pattern.permute.xlu0 0
          %8543 = vperm.xlu0 %8542, %v8493
          %v8544 = vpop.permute.xlu0 %8543
          %8547 = vset.pattern.permute.xlu0 0
          %8548 = vperm.xlu0 %8547, %v8494
          %v8549 = vpop.permute.xlu0 %8548
          %8552 = vset.pattern.permute.xlu0 0
          %8553 = vperm.xlu0 %8552, %v8495
          %v8554 = vpop.permute.xlu0 %8553
          %8557 = vset.pattern.permute.xlu0 0
          %8558 = vperm.xlu0 %8557, %v8496
          %v8559 = vpop.permute.xlu0 %8558
          %8562 = vset.pattern.permute.xlu0 0
          %8563 = vperm.xlu0 %8562, %v8497
          %v8564 = vpop.permute.xlu0 %8563
          %8567 = vset.pattern.permute.xlu0 0
          %8568 = vperm.xlu0 %8567, %v8498
          %v8569 = vpop.permute.xlu0 %8568
          %8572 = vset.pattern.permute.xlu0 0
          %8573 = vperm.xlu0 %8572, %v8499
          %v8574 = vpop.permute.xlu0 %8573
          %8577 = vset.pattern.permute.xlu0 0
          %8578 = vperm.xlu0 %8577, %v8500
          %v8579 = vpop.permute.xlu0 %8578
          %v8581 = vmul.f32 %v8453, %v8504
          %v8582 = vmul.f32 %v8454, %v8509
          %v8583 = vmul.f32 %v8455, %v8514
          %v8584 = vmul.f32 %v8456, %v8519
          %v8585 = vmul.f32 %v8457, %v8524
          %v8586 = vmul.f32 %v8458, %v8529
          %v8587 = vmul.f32 %v8459, %v8534
          %v8588 = vmul.f32 %v8460, %v8539
          %v8589 = vmul.f32 %v8461, %v8544
          %v8590 = vmul.f32 %v8462, %v8549
          %v8591 = vmul.f32 %v8463, %v8554
          %v8592 = vmul.f32 %v8464, %v8559
          %v8593 = vmul.f32 %v8465, %v8564
          %v8594 = vmul.f32 %v8466, %v8569
          %v8595 = vmul.f32 %v8467, %v8574
          %v8596 = vmul.f32 %v8468, %v8579
          %v8597 = vmul.f32 %v7458, %v8581
          %v8598 = vmul.f32 %v7458, %v8582
          %v8599 = vmul.f32 %v7458, %v8583
          %v8600 = vmul.f32 %v7458, %v8584
          %v8601 = vmul.f32 %v7458, %v8585
          %v8602 = vmul.f32 %v7458, %v8586
          %v8603 = vmul.f32 %v7458, %v8587
          %v8604 = vmul.f32 %v7458, %v8588
          %v8605 = vmul.f32 %v7458, %v8589
          %v8606 = vmul.f32 %v7458, %v8590
          %v8607 = vmul.f32 %v7458, %v8591
          %v8608 = vmul.f32 %v7458, %v8592
          %v8609 = vmul.f32 %v7458, %v8593
          %v8610 = vmul.f32 %v7458, %v8594
          %v8611 = vmul.f32 %v7458, %v8595
          %v8612 = vmul.f32 %v7458, %v8596
          %v8613 = vsub.f32 %v8437, %v8597
          %v8614 = vsub.f32 %v8438, %v8598
          %v8615 = vsub.f32 %v8439, %v8599
          %v8616 = vsub.f32 %v8440, %v8600
          %v8617 = vsub.f32 %v8441, %v8601
          %v8618 = vsub.f32 %v8442, %v8602
          %v8619 = vsub.f32 %v8443, %v8603
          %v8620 = vsub.f32 %v8444, %v8604
          %v8621 = vsub.f32 %v8445, %v8605
          %v8622 = vsub.f32 %v8446, %v8606
          %v8623 = vsub.f32 %v8447, %v8607
          %v8624 = vsub.f32 %v8448, %v8608
          %v8625 = vsub.f32 %v8449, %v8609
          %v8626 = vsub.f32 %v8450, %v8610
          %v8627 = vsub.f32 %v8451, %v8611
          %v8628 = vsub.f32 %v8452, %v8612
          %8645 = vrot.lane.b32.xlu0 %v8613, 96
          %v8646 = vpop.permute.xlu0 %8645
          %8647 = vrot.lane.b32.xlu0 %v8614, 96
          %v8648 = vpop.permute.xlu0 %8647
          %8649 = vrot.lane.b32.xlu0 %v8615, 96
          %v8650 = vpop.permute.xlu0 %8649
          %8651 = vrot.lane.b32.xlu0 %v8616, 96
          %v8652 = vpop.permute.xlu0 %8651
          %8653 = vrot.lane.b32.xlu0 %v8617, 96
          %v8654 = vpop.permute.xlu0 %8653
          %8655 = vrot.lane.b32.xlu0 %v8618, 96
          %v8656 = vpop.permute.xlu0 %8655
          %8657 = vrot.lane.b32.xlu0 %v8619, 96
          %v8658 = vpop.permute.xlu0 %8657
          %8659 = vrot.lane.b32.xlu0 %v8620, 96
          %v8660 = vpop.permute.xlu0 %8659
          %8661 = vrot.lane.b32.xlu0 %v8621, 96
          %v8662 = vpop.permute.xlu0 %8661
          %8663 = vrot.lane.b32.xlu0 %v8622, 96
          %v8664 = vpop.permute.xlu0 %8663
          %8665 = vrot.lane.b32.xlu0 %v8623, 96
          %v8666 = vpop.permute.xlu0 %8665
          %8667 = vrot.lane.b32.xlu0 %v8624, 96
          %v8668 = vpop.permute.xlu0 %8667
          %8669 = vrot.lane.b32.xlu0 %v8625, 96
          %v8670 = vpop.permute.xlu0 %8669
          %8671 = vrot.lane.b32.xlu0 %v8626, 96
          %v8672 = vpop.permute.xlu0 %8671
          %8673 = vrot.lane.b32.xlu0 %v8627, 96
          %v8674 = vpop.permute.xlu0 %8673
          %8675 = vrot.lane.b32.xlu0 %v8628, 96
          %v8676 = vpop.permute.xlu0 %8675
          %vm8693 = vcmask 1048320
          %8694 = vst.msk [vmem:[%s403] sm:$0xff] %vm8693, %v8646
          %8695 = vst.msk [vmem:[%s403 + $0x8] sm:$0xff] %vm8693, %v8648
          %8696 = vst.msk [vmem:[%s403 + $0x10] sm:$0xff] %vm8693, %v8650
          %8697 = vst.msk [vmem:[%s403 + $0x18] sm:$0xff] %vm8693, %v8652
          %8698 = vst.msk [vmem:[%s403 + $0x20] sm:$0xff] %vm8693, %v8654
          %8699 = vst.msk [vmem:[%s403 + $0x28] sm:$0xff] %vm8693, %v8656
          %8700 = vst.msk [vmem:[%s403 + $0x30] sm:$0xff] %vm8693, %v8658
          %8701 = vst.msk [vmem:[%s403 + $0x38] sm:$0xff] %vm8693, %v8660
          %8702 = vst.msk [vmem:[%s403 + $0x40] sm:$0xff] %vm8693, %v8662
          %8703 = vst.msk [vmem:[%s403 + $0x48] sm:$0xff] %vm8693, %v8664
          %8704 = vst.msk [vmem:[%s403 + $0x50] sm:$0xff] %vm8693, %v8666
          %8705 = vst.msk [vmem:[%s403 + $0x58] sm:$0xff] %vm8693, %v8668
          %8706 = vst.msk [vmem:[%s403 + $0x60] sm:$0xff] %vm8693, %v8670
          %8707 = vst.msk [vmem:[%s403 + $0x68] sm:$0xff] %vm8693, %v8672
          %8708 = vst.msk [vmem:[%s403 + $0x70] sm:$0xff] %vm8693, %v8674
          %8709 = vst.msk [vmem:[%s403 + $0x78] sm:$0xff] %vm8693, %v8676
          %v8710 = vld [vmem:[%s403] sm:$0xff]
          %v8711 = vld [vmem:[%s403 + $0x8] sm:$0xff]
          %v8712 = vld [vmem:[%s403 + $0x10] sm:$0xff]
          %v8713 = vld [vmem:[%s403 + $0x18] sm:$0xff]
          %v8714 = vld [vmem:[%s403 + $0x20] sm:$0xff]
          %v8715 = vld [vmem:[%s403 + $0x28] sm:$0xff]
          %v8716 = vld [vmem:[%s403 + $0x30] sm:$0xff]
          %v8717 = vld [vmem:[%s403 + $0x38] sm:$0xff]
          %v8718 = vld [vmem:[%s403 + $0x40] sm:$0xff]
          %v8719 = vld [vmem:[%s403 + $0x48] sm:$0xff]
          %v8720 = vld [vmem:[%s403 + $0x50] sm:$0xff]
          %v8721 = vld [vmem:[%s403 + $0x58] sm:$0xff]
          %v8722 = vld [vmem:[%s403 + $0x60] sm:$0xff]
          %v8723 = vld [vmem:[%s403 + $0x68] sm:$0xff]
          %v8724 = vld [vmem:[%s403 + $0x70] sm:$0xff]
          %v8725 = vld [vmem:[%s403 + $0x78] sm:$0xff]
          %8726 = vadd.xlane.f32.xlu0 %v8710
          %v8727 = vpop.xlane.xlu0 %8726
          %8728 = vadd.xlane.f32.xlu0 %v8711
          %v8729 = vpop.xlane.xlu0 %8728
          %8730 = vadd.xlane.f32.xlu0 %v8712
          %v8731 = vpop.xlane.xlu0 %8730
          %8732 = vadd.xlane.f32.xlu0 %v8713
          %v8733 = vpop.xlane.xlu0 %8732
          %8734 = vadd.xlane.f32.xlu0 %v8714
          %v8735 = vpop.xlane.xlu0 %8734
          %8736 = vadd.xlane.f32.xlu0 %v8715
          %v8737 = vpop.xlane.xlu0 %8736
          %8738 = vadd.xlane.f32.xlu0 %v8716
          %v8739 = vpop.xlane.xlu0 %8738
          %8740 = vadd.xlane.f32.xlu0 %v8717
          %v8741 = vpop.xlane.xlu0 %8740
          %8742 = vadd.xlane.f32.xlu0 %v8718
          %v8743 = vpop.xlane.xlu0 %8742
          %8744 = vadd.xlane.f32.xlu0 %v8719
          %v8745 = vpop.xlane.xlu0 %8744
          %8746 = vadd.xlane.f32.xlu0 %v8720
          %v8747 = vpop.xlane.xlu0 %8746
          %8748 = vadd.xlane.f32.xlu0 %v8721
          %v8749 = vpop.xlane.xlu0 %8748
          %8750 = vadd.xlane.f32.xlu0 %v8722
          %v8751 = vpop.xlane.xlu0 %8750
          %8752 = vadd.xlane.f32.xlu0 %v8723
          %v8753 = vpop.xlane.xlu0 %8752
          %8754 = vadd.xlane.f32.xlu0 %v8724
          %v8755 = vpop.xlane.xlu0 %8754
          %8756 = vadd.xlane.f32.xlu0 %v8725
          %v8757 = vpop.xlane.xlu0 %8756
          %v8758 = vrcp.pop 128.0
          %v8759 = vmul.f32 128.0, %v8758
          %v8760 = vsub.f32 1.0, %v8759
          %v8761 = vmul.f32 %v8758, %v8760
          %v8762 = vadd.f32 %v8758, %v8761
          %vm8763 = vweird.f32 %v8758
          %v8764 = vsel %vm8763, %v8758, %v8762
          %v8765 = vmul.f32 %v8727, %v8764
          %v8766 = vmul.f32 %v8729, %v8764
          %v8767 = vmul.f32 %v8731, %v8764
          %v8768 = vmul.f32 %v8733, %v8764
          %v8769 = vmul.f32 %v8735, %v8764
          %v8770 = vmul.f32 %v8737, %v8764
          %v8771 = vmul.f32 %v8739, %v8764
          %v8772 = vmul.f32 %v8741, %v8764
          %v8773 = vmul.f32 %v8743, %v8764
          %v8774 = vmul.f32 %v8745, %v8764
          %v8775 = vmul.f32 %v8747, %v8764
          %v8776 = vmul.f32 %v8749, %v8764
          %v8777 = vmul.f32 %v8751, %v8764
          %v8778 = vmul.f32 %v8753, %v8764
          %v8779 = vmul.f32 %v8755, %v8764
          %v8780 = vmul.f32 %v8757, %v8764
          %v8781 = vsub.f32 %v8710, %v8765
          %v8782 = vsub.f32 %v8711, %v8766
          %v8783 = vsub.f32 %v8712, %v8767
          %v8784 = vsub.f32 %v8713, %v8768
          %v8785 = vsub.f32 %v8714, %v8769
          %v8786 = vsub.f32 %v8715, %v8770
          %v8787 = vsub.f32 %v8716, %v8771
          %v8788 = vsub.f32 %v8717, %v8772
          %v8789 = vsub.f32 %v8718, %v8773
          %v8790 = vsub.f32 %v8719, %v8774
          %v8791 = vsub.f32 %v8720, %v8775
          %v8792 = vsub.f32 %v8721, %v8776
          %v8793 = vsub.f32 %v8722, %v8777
          %v8794 = vsub.f32 %v8723, %v8778
          %v8795 = vsub.f32 %v8724, %v8779
          %v8796 = vsub.f32 %v8725, %v8780
          %v8797 = vmul.f32 %v8781, %v8781
          %v8798 = vmul.f32 %v8782, %v8782
          %v8799 = vmul.f32 %v8783, %v8783
          %v8800 = vmul.f32 %v8784, %v8784
          %v8801 = vmul.f32 %v8785, %v8785
          %v8802 = vmul.f32 %v8786, %v8786
          %v8803 = vmul.f32 %v8787, %v8787
          %v8804 = vmul.f32 %v8788, %v8788
          %v8805 = vmul.f32 %v8789, %v8789
          %v8806 = vmul.f32 %v8790, %v8790
          %v8807 = vmul.f32 %v8791, %v8791
          %v8808 = vmul.f32 %v8792, %v8792
          %v8809 = vmul.f32 %v8793, %v8793
          %v8810 = vmul.f32 %v8794, %v8794
          %v8811 = vmul.f32 %v8795, %v8795
          %v8812 = vmul.f32 %v8796, %v8796
          %8813 = vadd.xlane.f32.xlu0 %v8797
          %v8814 = vpop.xlane.xlu0 %8813
          %8815 = vadd.xlane.f32.xlu0 %v8798
          %v8816 = vpop.xlane.xlu0 %8815
          %8817 = vadd.xlane.f32.xlu0 %v8799
          %v8818 = vpop.xlane.xlu0 %8817
          %8819 = vadd.xlane.f32.xlu0 %v8800
          %v8820 = vpop.xlane.xlu0 %8819
          %8821 = vadd.xlane.f32.xlu0 %v8801
          %v8822 = vpop.xlane.xlu0 %8821
          %8823 = vadd.xlane.f32.xlu0 %v8802
          %v8824 = vpop.xlane.xlu0 %8823
          %8825 = vadd.xlane.f32.xlu0 %v8803
          %v8826 = vpop.xlane.xlu0 %8825
          %8827 = vadd.xlane.f32.xlu0 %v8804
          %v8828 = vpop.xlane.xlu0 %8827
          %8829 = vadd.xlane.f32.xlu0 %v8805
          %v8830 = vpop.xlane.xlu0 %8829
          %8831 = vadd.xlane.f32.xlu0 %v8806
          %v8832 = vpop.xlane.xlu0 %8831
          %8833 = vadd.xlane.f32.xlu0 %v8807
          %v8834 = vpop.xlane.xlu0 %8833
          %8835 = vadd.xlane.f32.xlu0 %v8808
          %v8836 = vpop.xlane.xlu0 %8835
          %8837 = vadd.xlane.f32.xlu0 %v8809
          %v8838 = vpop.xlane.xlu0 %8837
          %8839 = vadd.xlane.f32.xlu0 %v8810
          %v8840 = vpop.xlane.xlu0 %8839
          %8841 = vadd.xlane.f32.xlu0 %v8811
          %v8842 = vpop.xlane.xlu0 %8841
          %8843 = vadd.xlane.f32.xlu0 %v8812
          %v8844 = vpop.xlane.xlu0 %8843
          %v8845 = vmul.f32 %v8814, %v8764
          %v8846 = vmul.f32 %v8816, %v8764
          %v8847 = vmul.f32 %v8818, %v8764
          %v8848 = vmul.f32 %v8820, %v8764
          %v8849 = vmul.f32 %v8822, %v8764
          %v8850 = vmul.f32 %v8824, %v8764
          %v8851 = vmul.f32 %v8826, %v8764
          %v8852 = vmul.f32 %v8828, %v8764
          %v8853 = vmul.f32 %v8830, %v8764
          %v8854 = vmul.f32 %v8832, %v8764
          %v8855 = vmul.f32 %v8834, %v8764
          %v8856 = vmul.f32 %v8836, %v8764
          %v8857 = vmul.f32 %v8838, %v8764
          %v8858 = vmul.f32 %v8840, %v8764
          %v8859 = vmul.f32 %v8842, %v8764
          %v8860 = vmul.f32 %v8844, %v8764
          %v8861 = vadd.f32 %v8845, 1e-05
          %v8862 = vadd.f32 %v8846, 1e-05
          %v8863 = vadd.f32 %v8847, 1e-05
          %v8864 = vadd.f32 %v8848, 1e-05
          %v8865 = vadd.f32 %v8849, 1e-05
          %v8866 = vadd.f32 %v8850, 1e-05
          %v8867 = vadd.f32 %v8851, 1e-05
          %v8868 = vadd.f32 %v8852, 1e-05
          %v8869 = vadd.f32 %v8853, 1e-05
          %v8870 = vadd.f32 %v8854, 1e-05
          %v8871 = vadd.f32 %v8855, 1e-05
          %v8872 = vadd.f32 %v8856, 1e-05
          %v8873 = vadd.f32 %v8857, 1e-05
          %v8874 = vadd.f32 %v8858, 1e-05
          %v8875 = vadd.f32 %v8859, 1e-05
          %v8876 = vadd.f32 %v8860, 1e-05
          %v8877 = vrsqrt.pop %v8861
          %v8878 = vmul.f32 %v8877, %v8861
          %v8879 = vmul.f32 %v8878, %v8877
          %v8880 = vmul.f32 0.5, %v8879
          %v8881 = vsub.f32 1.5, %v8880
          %v8882 = vmul.f32 %v8877, %v8881
          %vm8883 = vweird.f32 %v8861
          %vm8884 = vweird.f32 %v8877
          %vm8885 = vmor %vm8883, %vm8884
          %v8886 = vsel %vm8885, %v8877, %v8882
          %v8887 = vrsqrt.pop %v8862
          %v8888 = vmul.f32 %v8887, %v8862
          %v8889 = vmul.f32 %v8888, %v8887
          %v8890 = vmul.f32 0.5, %v8889
          %v8891 = vsub.f32 1.5, %v8890
          %v8892 = vmul.f32 %v8887, %v8891
          %vm8893 = vweird.f32 %v8862
          %vm8894 = vweird.f32 %v8887
          %vm8895 = vmor %vm8893, %vm8894
          %v8896 = vsel %vm8895, %v8887, %v8892
          %v8897 = vrsqrt.pop %v8863
          %v8898 = vmul.f32 %v8897, %v8863
          %v8899 = vmul.f32 %v8898, %v8897
          %v8900 = vmul.f32 0.5, %v8899
          %v8901 = vsub.f32 1.5, %v8900
          %v8902 = vmul.f32 %v8897, %v8901
          %vm8903 = vweird.f32 %v8863
          %vm8904 = vweird.f32 %v8897
          %vm8905 = vmor %vm8903, %vm8904
          %v8906 = vsel %vm8905, %v8897, %v8902
          %v8907 = vrsqrt.pop %v8864
          %v8908 = vmul.f32 %v8907, %v8864
          %v8909 = vmul.f32 %v8908, %v8907
          %v8910 = vmul.f32 0.5, %v8909
          %v8911 = vsub.f32 1.5, %v8910
          %v8912 = vmul.f32 %v8907, %v8911
          %vm8913 = vweird.f32 %v8864
          %vm8914 = vweird.f32 %v8907
          %vm8915 = vmor %vm8913, %vm8914
          %v8916 = vsel %vm8915, %v8907, %v8912
          %v8917 = vrsqrt.pop %v8865
          %v8918 = vmul.f32 %v8917, %v8865
          %v8919 = vmul.f32 %v8918, %v8917
          %v8920 = vmul.f32 0.5, %v8919
          %v8921 = vsub.f32 1.5, %v8920
          %v8922 = vmul.f32 %v8917, %v8921
          %vm8923 = vweird.f32 %v8865
          %vm8924 = vweird.f32 %v8917
          %vm8925 = vmor %vm8923, %vm8924
          %v8926 = vsel %vm8925, %v8917, %v8922
          %v8927 = vrsqrt.pop %v8866
          %v8928 = vmul.f32 %v8927, %v8866
          %v8929 = vmul.f32 %v8928, %v8927
          %v8930 = vmul.f32 0.5, %v8929
          %v8931 = vsub.f32 1.5, %v8930
          %v8932 = vmul.f32 %v8927, %v8931
          %vm8933 = vweird.f32 %v8866
          %vm8934 = vweird.f32 %v8927
          %vm8935 = vmor %vm8933, %vm8934
          %v8936 = vsel %vm8935, %v8927, %v8932
          %v8937 = vrsqrt.pop %v8867
          %v8938 = vmul.f32 %v8937, %v8867
          %v8939 = vmul.f32 %v8938, %v8937
          %v8940 = vmul.f32 0.5, %v8939
          %v8941 = vsub.f32 1.5, %v8940
          %v8942 = vmul.f32 %v8937, %v8941
          %vm8943 = vweird.f32 %v8867
          %vm8944 = vweird.f32 %v8937
          %vm8945 = vmor %vm8943, %vm8944
          %v8946 = vsel %vm8945, %v8937, %v8942
          %v8947 = vrsqrt.pop %v8868
          %v8948 = vmul.f32 %v8947, %v8868
          %v8949 = vmul.f32 %v8948, %v8947
          %v8950 = vmul.f32 0.5, %v8949
          %v8951 = vsub.f32 1.5, %v8950
          %v8952 = vmul.f32 %v8947, %v8951
          %vm8953 = vweird.f32 %v8868
          %vm8954 = vweird.f32 %v8947
          %vm8955 = vmor %vm8953, %vm8954
          %v8956 = vsel %vm8955, %v8947, %v8952
          %v8957 = vrsqrt.pop %v8869
          %v8958 = vmul.f32 %v8957, %v8869
          %v8959 = vmul.f32 %v8958, %v8957
          %v8960 = vmul.f32 0.5, %v8959
          %v8961 = vsub.f32 1.5, %v8960
          %v8962 = vmul.f32 %v8957, %v8961
          %vm8963 = vweird.f32 %v8869
          %vm8964 = vweird.f32 %v8957
          %vm8965 = vmor %vm8963, %vm8964
          %v8966 = vsel %vm8965, %v8957, %v8962
          %v8967 = vrsqrt.pop %v8870
          %v8968 = vmul.f32 %v8967, %v8870
          %v8969 = vmul.f32 %v8968, %v8967
          %v8970 = vmul.f32 0.5, %v8969
          %v8971 = vsub.f32 1.5, %v8970
          %v8972 = vmul.f32 %v8967, %v8971
          %vm8973 = vweird.f32 %v8870
          %vm8974 = vweird.f32 %v8967
          %vm8975 = vmor %vm8973, %vm8974
          %v8976 = vsel %vm8975, %v8967, %v8972
          %v8977 = vrsqrt.pop %v8871
          %v8978 = vmul.f32 %v8977, %v8871
          %v8979 = vmul.f32 %v8978, %v8977
          %v8980 = vmul.f32 0.5, %v8979
          %v8981 = vsub.f32 1.5, %v8980
          %v8982 = vmul.f32 %v8977, %v8981
          %vm8983 = vweird.f32 %v8871
          %vm8984 = vweird.f32 %v8977
          %vm8985 = vmor %vm8983, %vm8984
          %v8986 = vsel %vm8985, %v8977, %v8982
          %v8987 = vrsqrt.pop %v8872
          %v8988 = vmul.f32 %v8987, %v8872
          %v8989 = vmul.f32 %v8988, %v8987
          %v8990 = vmul.f32 0.5, %v8989
          %v8991 = vsub.f32 1.5, %v8990
          %v8992 = vmul.f32 %v8987, %v8991
          %vm8993 = vweird.f32 %v8872
          %vm8994 = vweird.f32 %v8987
          %vm8995 = vmor %vm8993, %vm8994
          %v8996 = vsel %vm8995, %v8987, %v8992
          %v8997 = vrsqrt.pop %v8873
          %v8998 = vmul.f32 %v8997, %v8873
          %v8999 = vmul.f32 %v8998, %v8997
          %v9000 = vmul.f32 0.5, %v8999
          %v9001 = vsub.f32 1.5, %v9000
          %v9002 = vmul.f32 %v8997, %v9001
          %vm9003 = vweird.f32 %v8873
          %vm9004 = vweird.f32 %v8997
          %vm9005 = vmor %vm9003, %vm9004
          %v9006 = vsel %vm9005, %v8997, %v9002
          %v9007 = vrsqrt.pop %v8874
          %v9008 = vmul.f32 %v9007, %v8874
          %v9009 = vmul.f32 %v9008, %v9007
          %v9010 = vmul.f32 0.5, %v9009
          %v9011 = vsub.f32 1.5, %v9010
          %v9012 = vmul.f32 %v9007, %v9011
          %vm9013 = vweird.f32 %v8874
          %vm9014 = vweird.f32 %v9007
          %vm9015 = vmor %vm9013, %vm9014
          %v9016 = vsel %vm9015, %v9007, %v9012
          %v9017 = vrsqrt.pop %v8875
          %v9018 = vmul.f32 %v9017, %v8875
          %v9019 = vmul.f32 %v9018, %v9017
          %v9020 = vmul.f32 0.5, %v9019
          %v9021 = vsub.f32 1.5, %v9020
          %v9022 = vmul.f32 %v9017, %v9021
          %vm9023 = vweird.f32 %v8875
          %vm9024 = vweird.f32 %v9017
          %vm9025 = vmor %vm9023, %vm9024
          %v9026 = vsel %vm9025, %v9017, %v9022
          %v9027 = vrsqrt.pop %v8876
          %v9028 = vmul.f32 %v9027, %v8876
          %v9029 = vmul.f32 %v9028, %v9027
          %v9030 = vmul.f32 0.5, %v9029
          %v9031 = vsub.f32 1.5, %v9030
          %v9032 = vmul.f32 %v9027, %v9031
          %vm9033 = vweird.f32 %v8876
          %vm9034 = vweird.f32 %v9027
          %vm9035 = vmor %vm9033, %vm9034
          %v9036 = vsel %vm9035, %v9027, %v9032
          %v9037 = vmul.f32 %v8781, %v8886
          %v9038 = vmul.f32 %v8782, %v8896
          %v9039 = vmul.f32 %v8783, %v8906
          %v9040 = vmul.f32 %v8784, %v8916
          %v9041 = vmul.f32 %v8785, %v8926
          %v9042 = vmul.f32 %v8786, %v8936
          %v9043 = vmul.f32 %v8787, %v8946
          %v9044 = vmul.f32 %v8788, %v8956
          %v9045 = vmul.f32 %v8789, %v8966
          %v9046 = vmul.f32 %v8790, %v8976
          %v9047 = vmul.f32 %v8791, %v8986
          %v9048 = vmul.f32 %v8792, %v8996
          %v9049 = vmul.f32 %v8793, %v9006
          %v9050 = vmul.f32 %v8794, %v9016
          %v9051 = vmul.f32 %v8795, %v9026
          %v9052 = vmul.f32 %v8796, %v9036
          %v9053 = vld [vmem:[%s5] sm:$0x1]
          %v9055 = vperm.slane %v9053, 0
          %v9057 = vmul.f32 %v9037, %v9055
          %v9058 = vmul.f32 %v9038, %v9055
          %v9059 = vmul.f32 %v9039, %v9055
          %v9060 = vmul.f32 %v9040, %v9055
          %v9061 = vmul.f32 %v9041, %v9055
          %v9062 = vmul.f32 %v9042, %v9055
          %v9063 = vmul.f32 %v9043, %v9055
          %v9064 = vmul.f32 %v9044, %v9055
          %v9065 = vmul.f32 %v9045, %v9055
          %v9066 = vmul.f32 %v9046, %v9055
          %v9067 = vmul.f32 %v9047, %v9055
          %v9068 = vmul.f32 %v9048, %v9055
          %v9069 = vmul.f32 %v9049, %v9055
          %v9070 = vmul.f32 %v9050, %v9055
          %v9071 = vmul.f32 %v9051, %v9055
          %v9072 = vmul.f32 %v9052, %v9055
          %v9073 = vld [vmem:[%s6] sm:$0x1]
          %v9075 = vperm.slane %v9073, 0
          %v9077 = vadd.f32 %v9057, %v9075
          %v9078 = vadd.f32 %v9058, %v9075
          %v9079 = vadd.f32 %v9059, %v9075
          %v9080 = vadd.f32 %v9060, %v9075
          %v9081 = vadd.f32 %v9061, %v9075
          %v9082 = vadd.f32 %v9062, %v9075
          %v9083 = vadd.f32 %v9063, %v9075
          %v9084 = vadd.f32 %v9064, %v9075
          %v9085 = vadd.f32 %v9065, %v9075
          %v9086 = vadd.f32 %v9066, %v9075
          %v9087 = vadd.f32 %v9067, %v9075
          %v9088 = vadd.f32 %v9068, %v9075
          %v9089 = vadd.f32 %v9069, %v9075
          %v9090 = vadd.f32 %v9070, %v9075
          %v9091 = vadd.f32 %v9071, %v9075
          %v9092 = vadd.f32 %v9072, %v9075
          %s9093 = ssub.f32 1.0, %s7169
          %v9094 = vstv %s9093
          %v9095 = vmul.f32 %v9094, %v9077
          %v9096 = vmul.f32 %v9094, %v9078
          %v9097 = vmul.f32 %v9094, %v9079
          %v9098 = vmul.f32 %v9094, %v9080
          %v9099 = vmul.f32 %v9094, %v9081
          %v9100 = vmul.f32 %v9094, %v9082
          %v9101 = vmul.f32 %v9094, %v9083
          %v9102 = vmul.f32 %v9094, %v9084
          %v9103 = vmul.f32 %v9094, %v9085
          %v9104 = vmul.f32 %v9094, %v9086
          %v9105 = vmul.f32 %v9094, %v9087
          %v9106 = vmul.f32 %v9094, %v9088
          %v9107 = vmul.f32 %v9094, %v9089
          %v9108 = vmul.f32 %v9094, %v9090
          %v9109 = vmul.f32 %v9094, %v9091
          %v9110 = vmul.f32 %v9094, %v9092
          %9111 = vst [vmem:[%s403] sm:$0xff] %v9095
          %9112 = vst [vmem:[%s403 + $0x8] sm:$0xff] %v9096
          %9113 = vst [vmem:[%s403 + $0x10] sm:$0xff] %v9097
          %9114 = vst [vmem:[%s403 + $0x18] sm:$0xff] %v9098
          %9115 = vst [vmem:[%s403 + $0x20] sm:$0xff] %v9099
          %9116 = vst [vmem:[%s403 + $0x28] sm:$0xff] %v9100
          %9117 = vst [vmem:[%s403 + $0x30] sm:$0xff] %v9101
          %9118 = vst [vmem:[%s403 + $0x38] sm:$0xff] %v9102
          %9119 = vst [vmem:[%s403 + $0x40] sm:$0xff] %v9103
          %9120 = vst [vmem:[%s403 + $0x48] sm:$0xff] %v9104
          %9121 = vst [vmem:[%s403 + $0x50] sm:$0xff] %v9105
          %9122 = vst [vmem:[%s403 + $0x58] sm:$0xff] %v9106
          %9123 = vst [vmem:[%s403 + $0x60] sm:$0xff] %v9107
          %9124 = vst [vmem:[%s403 + $0x68] sm:$0xff] %v9108
          %9125 = vst [vmem:[%s403 + $0x70] sm:$0xff] %v9109
          %9126 = vst [vmem:[%s403 + $0x78] sm:$0xff] %v9110
        $region72: #{tpu_custom_call.1} parent=47 // pred_fallthru
          _
        %s9127 = sand.u32 %s219, 1
        %s9128 = scalar_lea.sflag [#allocation12], %s9127
        %s9129 = sand.u32 %s219, 1
        %s9130 = smul.addr %s9129, 128
        %s9131 = scalar_lea.vmem [#allocation18], %s9130
        // Predicated region
        $region73: #{tpu_custom_call.1} parent=47 // pred_check
          %p9132 = pneg %p229
        $region74: #{tpu_custom_call.1} parent=47 // pred_check_branch
          %9134 = sbr.rel (%p9132) target = $region76
        $region75: #{tpu_custom_call.1} parent=47 // pred_region
          %s9135 = smul.u32 16, %s35
          %9137 = vsyncadd %s9128, 0
          %s9138 = smul.addr %s34, 16
          %s9139 = sadd.s32 %s9135, %s9138
          %s9140 = smul.addr %s9139, 8
          %s9141 = scalar_lea.hbm %s7, %s9140
          %s9142 = sshll.u32 %s9131, 4
          %s9143 = int_to_ptr.vmem [resolvable:$true] %s9142
          %s9144 = sshll.u32 %s9141, 4
          %s9145 = int_to_ptr.hbm [resolvable:$true] %s9144
          %9150 = dma.vmem_to_hbm [thread:$0]  %s9143, 2048, %s9145, %s9128, 128, 128, 8
        $region76: #{tpu_custom_call.1} parent=47 // pred_fallthru
          _
      $region48: #{tpu_custom_call.1} parent=5 // pred_fallthru
        _
      %p9151 = scmp.le.s32.totalorder 2, %s24
      // Predicated region
      $region77: #{tpu_custom_call.1} parent=5 // pred_check
        %p9152 = pneg %p9151
      $region78: #{tpu_custom_call.1} parent=5 // pred_check_branch
        %9154 = sbr.rel (%p9152) target = $region80
      $region79: #{tpu_custom_call.1} parent=5 // pred_region
        %s9155 = ssub.s32 %s24, 2
        // Predicated region
        $region81: #{tpu_custom_call.1} parent=79 // pred_check
          %p9156 = pneg %p235
        $region82: #{tpu_custom_call.1} parent=79 // pred_check_branch
          %9158 = sbr.rel (%p9156) target = $region84
        $region83: #{tpu_custom_call.1} parent=79 // pred_region
          %s9159 = sand.u32 %s220, 1
          %s9160 = scalar_lea.sflag [#allocation12], %s9159
          %s9161 = sand.u32 %s220, 1
          %s9162 = smul.addr %s9161, 128
          %s9163 = scalar_lea.vmem [#allocation18], %s9162
          %9165 = dma.done %s9160, 2048
        $region84: #{tpu_custom_call.1} parent=79 // pred_fallthru
          _
      $region80: #{tpu_custom_call.1} parent=5 // pred_fallthru
        _
    $region6: #{tpu_custom_call.1} parent=1 // loop_footer
      %s28 = sadd.s32 1, %s24
    $region7: #{tpu_custom_call.1} parent=1 // loop_footer_branch
      %23 = sbr.rel target = $region3
    $region8: #{tpu_custom_call.1} parent=1 // loop_exit
      _
    %9166 = vsyncpa [#allocation11], 1
    %s9167 = scalar_lea.sflag [#allocation11], 1
    %9168 = vsyncpa %s9167, 1
    %9169 = vsyncpa [#allocation14], 1
    %s9170 = scalar_lea.sflag [#allocation14], 1
    %9171 = vsyncpa %s9170, 1
    %9172 = vsyncpa [#allocation17], 1
    %9173 = vsyncpa [#allocation12], 1
    %s9174 = scalar_lea.sflag [#allocation12], 1
    %9175 = vsyncpa %s9174, 1

</llo_original>
